<compile_context>
chip_gen: v6e
topology: v6e:2x2x1
jax: 0.10.0
libtpu: 0.0.40
codegen_flags: <defaults>
</compile_context>

<pallas_src>
import functools

import jax
import jax.numpy as jnp
from jax.experimental import pallas as pl
from jax.experimental.pallas import tpu as pltpu


# --- layer dimensions straight from MultiLayerPerceptron.__init__ ---
_LAYER_DIMS = [
    (None, 512),   # dense_block1: input_dim -> 512
    (512, 768),    # dense_block2
    (768, 1024),   # dense_block3
    (1024, 768),   # dense_block4
    (768, 512),    # dense_block5
    (512, 256),    # dense_block6
    (256, 1),      # head (no activation)
]


def _round_up(x, m):
    return ((x + m - 1) // m) * m


def _fused_mlp_kernel(x_ref, *refs):
    """refs = (w1, b1, w2, b2, ..., w7, b7, o_ref).

    Chains all 7 dense layers on the current batch tile entirely in VMEM.
    Matmuls run in bf16 on the MXU with f32 accumulation; bias + ReLU in f32.
    """
    o_ref = refs[-1]
    wb_refs = refs[:-1]
    n_layers = len(wb_refs) // 2

    h = x_ref[...].astype(jnp.float32)
    for i in range(n_layers):
        w = wb_refs[2 * i][...]          # (K, N) bf16, pre-transposed
        b = wb_refs[2 * i + 1][...]      # (1, N) f32
        y = jnp.dot(h.astype(w.dtype), w, preferred_element_type=jnp.float32)
        y = y + b                        # f32 epilogue (broadcast over rows)
        if i < n_layers - 1:             # head has no activation
            y = jnp.maximum(y, 0.0)
        h = y
    o_ref[...] = h.astype(o_ref.dtype)


def init_params(key, input_dim):
    """Deterministic synthetic params, stored kernel-ready:
    weight pre-transposed to (in, out) in bf16, bias (out,) in f32."""
    params = []
    in_dim = input_dim
    for din, dout in _LAYER_DIMS:
        d_in = in_dim if din is None else din
        key, kw, kb = jax.random.split(key, 3)
        bound = 1.0 / jnp.sqrt(jnp.float32(d_in))
        w = jax.random.uniform(kw, (dout, d_in), jnp.float32, -bound, bound)
        b = jax.random.uniform(kb, (dout,), jnp.float32, -bound, bound)
        w_t = jnp.transpose(w).astype(jnp.bfloat16)   # (K, N), transposed ONCE here
        params.append((w_t, b))
        in_dim = dout
    return params


@jax.jit
def mlp_forward(x, params):
    """x: (B, input_dim) f32 -> (B,) f32 (matches PyTorch output.view(-1))."""
    B, K0 = x.shape

    # Batch tile: multiple of 8 (sublane), capped at 256 (MXU-native rows).
    TB = min(256, _round_up(max(B, 1), 8))
    padded_B = _round_up(B, TB)
    if padded_B != B:
        x = jnp.pad(x, ((0, padded_B - B), (0, 0)))
    n_tiles = padded_B // TB

    flat_inputs = []
    in_specs = [pl.BlockSpec((TB, K0), lambda i: (i, 0))]   # activation tile
    for w_t, b in params:
        Kd, Nd = w_t.shape
        flat_inputs.append(w_t)
        flat_inputs.append(b.reshape(1, Nd).astype(jnp.float32))
        # Constant block index -> weights/biases stay resident in VMEM across tiles.
        in_specs.append(pl.BlockSpec((Kd, Nd), lambda i: (0, 0)))
        in_specs.append(pl.BlockSpec((1, Nd), lambda i: (0, 0)))

    out = pl.pallas_call(
        _fused_mlp_kernel,
        out_shape=jax.ShapeDtypeStruct((padded_B, 1), jnp.float32),
        grid=(n_tiles,),
        in_specs=in_specs,
        out_specs=pl.BlockSpec((TB, 1), lambda i: (i, 0)),
        compiler_params=pltpu.CompilerParams(
            dimension_semantics=("parallel",),
            vmem_limit_bytes=32 * 1024 * 1024,   # fits weights (bf16, ~9.6 MiB dbl-buffered) on all gens
        ),
    )(x, *flat_inputs)

    return out[:B, 0]   # PyTorch: output.view(-1)


if __name__ == "__main__":
    key = jax.random.PRNGKey(0)
    kx, kp = jax.random.split(key)

    batch = 8
    input_dim = 32
    x = jax.random.normal(kx, (batch, input_dim), jnp.float32)
    params = init_params(kp, input_dim)

    out = mlp_forward(x, params)
    jax.block_until_ready(out)

    # shape matches output.view(-1) of the PyTorch module
    assert out.shape == (batch,), out.shape

    # Reference: identical mixed-precision math (bf16 matmul inputs, f32 accum,
    # f32 bias/ReLU) in plain JAX.
    h = x
    for i, (w_t, b) in enumerate(params):
        y = jnp.dot(h.astype(jnp.bfloat16), w_t,
                    preferred_element_type=jnp.float32) + b
        h = jnp.maximum(y, 0.0) if i < len(params) - 1 else y
    ref = h.reshape(-1)
    assert jnp.allclose(out, ref, atol=1e-3, rtol=1e-3), (out, ref)

    print("KERNEL_OK")
</pallas_src>

<mosaic_0001>
module attributes {stable_mosaic.version = 11 : i64} {
  func.func @_fused_mlp_kernel(%arg0: i32, %arg1: memref<8x32xf32, #tpu.memory_space<vmem>>, %arg2: memref<32x512xbf16, #tpu.memory_space<vmem>>, %arg3: memref<1x512xf32, #tpu.memory_space<vmem>>, %arg4: memref<512x768xbf16, #tpu.memory_space<vmem>>, %arg5: memref<1x768xf32, #tpu.memory_space<vmem>>, %arg6: memref<768x1024xbf16, #tpu.memory_space<vmem>>, %arg7: memref<1x1024xf32, #tpu.memory_space<vmem>>, %arg8: memref<1024x768xbf16, #tpu.memory_space<vmem>>, %arg9: memref<1x768xf32, #tpu.memory_space<vmem>>, %arg10: memref<768x512xbf16, #tpu.memory_space<vmem>>, %arg11: memref<1x512xf32, #tpu.memory_space<vmem>>, %arg12: memref<512x256xbf16, #tpu.memory_space<vmem>>, %arg13: memref<1x256xf32, #tpu.memory_space<vmem>>, %arg14: memref<256x1xbf16, #tpu.memory_space<vmem>>, %arg15: memref<1x1xf32, #tpu.memory_space<vmem>>, %arg16: memref<8x1xf32, #tpu.memory_space<vmem>>) attributes {dimension_semantics = [#tpu.dimension_semantics<parallel>], iteration_bounds = array<i64: 1>, scalar_prefetch = 0 : i64, scratch_operands = 0 : i64, tpu.core_type = #tpu.core_type<tc>, window_params = [{transform_indices = @transform_0, window_bounds = array<i64: 8, 32>}, {pipeline_mode = #tpu.pipeline_mode<synchronous>, transform_indices = @transform_1, window_bounds = array<i64: 32, 512>}, {pipeline_mode = #tpu.pipeline_mode<synchronous>, transform_indices = @transform_2, window_bounds = array<i64: 1, 512>}, {pipeline_mode = #tpu.pipeline_mode<synchronous>, transform_indices = @transform_3, window_bounds = array<i64: 512, 768>}, {pipeline_mode = #tpu.pipeline_mode<synchronous>, transform_indices = @transform_4, window_bounds = array<i64: 1, 768>}, {pipeline_mode = #tpu.pipeline_mode<synchronous>, transform_indices = @transform_5, window_bounds = array<i64: 768, 1024>}, {pipeline_mode = #tpu.pipeline_mode<synchronous>, transform_indices = @transform_6, window_bounds = array<i64: 1, 1024>}, {pipeline_mode = #tpu.pipeline_mode<synchronous>, transform_indices = @transform_7, window_bounds = array<i64: 1024, 768>}, {pipeline_mode = #tpu.pipeline_mode<synchronous>, transform_indices = @transform_8, window_bounds = array<i64: 1, 768>}, {pipeline_mode = #tpu.pipeline_mode<synchronous>, transform_indices = @transform_9, window_bounds = array<i64: 768, 512>}, {pipeline_mode = #tpu.pipeline_mode<synchronous>, transform_indices = @transform_10, window_bounds = array<i64: 1, 512>}, {pipeline_mode = #tpu.pipeline_mode<synchronous>, transform_indices = @transform_11, window_bounds = array<i64: 512, 256>}, {pipeline_mode = #tpu.pipeline_mode<synchronous>, transform_indices = @transform_12, window_bounds = array<i64: 1, 256>}, {pipeline_mode = #tpu.pipeline_mode<synchronous>, transform_indices = @transform_13, window_bounds = array<i64: 256, 1>}, {pipeline_mode = #tpu.pipeline_mode<synchronous>, transform_indices = @transform_14, window_bounds = array<i64: 1, 1>}, {transform_indices = @transform_15, window_bounds = array<i64: 8, 1>}]} {
    %c0 = arith.constant 0 : index
    %c0_0 = arith.constant 0 : index
    %0 = vector.load %arg1[%c0, %c0_0] : memref<8x32xf32, #tpu.memory_space<vmem>>, vector<8x32xf32>
    %c0_1 = arith.constant 0 : index
    %c0_2 = arith.constant 0 : index
    %1 = vector.load %arg2[%c0_1, %c0_2] : memref<32x512xbf16, #tpu.memory_space<vmem>>, vector<32x512xbf16>
    %c0_3 = arith.constant 0 : index
    %c0_4 = arith.constant 0 : index
    %2 = vector.load %arg3[%c0_3, %c0_4] : memref<1x512xf32, #tpu.memory_space<vmem>>, vector<1x512xf32>
    %3 = arith.truncf %0 : vector<8x32xf32> to vector<8x32xbf16>
    %cst = arith.constant dense<0.000000e+00> : vector<8x512xf32>
    %4 = tpu.matmul %3, %1, %cst {dimension_numbers = #tpu.dot_dimension_numbers<[1], [0], [0], [1], [0, 0, 1, 1], [], []>} : vector<8x32xbf16>, vector<32x512xbf16>, vector<8x512xf32> -> vector<8x512xf32>
    %5 = vector.broadcast %2 : vector<1x512xf32> to vector<8x512xf32>
    %6 = arith.addf %4, %5 : vector<8x512xf32>
    %cst_5 = arith.constant 0.000000e+00 : f32
    %7 = vector.broadcast %cst_5 : f32 to vector<8x512xf32>
    %8 = arith.maximumf %6, %7 : vector<8x512xf32>
    %c0_6 = arith.constant 0 : index
    %c0_7 = arith.constant 0 : index
    %9 = vector.load %arg4[%c0_6, %c0_7] : memref<512x768xbf16, #tpu.memory_space<vmem>>, vector<512x768xbf16>
    %c0_8 = arith.constant 0 : index
    %c0_9 = arith.constant 0 : index
    %10 = vector.load %arg5[%c0_8, %c0_9] : memref<1x768xf32, #tpu.memory_space<vmem>>, vector<1x768xf32>
    %11 = arith.truncf %8 : vector<8x512xf32> to vector<8x512xbf16>
    %cst_10 = arith.constant dense<0.000000e+00> : vector<8x768xf32>
    %12 = tpu.matmul %11, %9, %cst_10 {dimension_numbers = #tpu.dot_dimension_numbers<[1], [0], [0], [1], [0, 0, 1, 1], [], []>} : vector<8x512xbf16>, vector<512x768xbf16>, vector<8x768xf32> -> vector<8x768xf32>
    %13 = vector.broadcast %10 : vector<1x768xf32> to vector<8x768xf32>
    %14 = arith.addf %12, %13 : vector<8x768xf32>
    %cst_11 = arith.constant 0.000000e+00 : f32
    %15 = vector.broadcast %cst_11 : f32 to vector<8x768xf32>
    %16 = arith.maximumf %14, %15 : vector<8x768xf32>
    %c0_12 = arith.constant 0 : index
    %c0_13 = arith.constant 0 : index
    %17 = vector.load %arg6[%c0_12, %c0_13] : memref<768x1024xbf16, #tpu.memory_space<vmem>>, vector<768x1024xbf16>
    %c0_14 = arith.constant 0 : index
    %c0_15 = arith.constant 0 : index
    %18 = vector.load %arg7[%c0_14, %c0_15] : memref<1x1024xf32, #tpu.memory_space<vmem>>, vector<1x1024xf32>
    %19 = arith.truncf %16 : vector<8x768xf32> to vector<8x768xbf16>
    %cst_16 = arith.constant dense<0.000000e+00> : vector<8x1024xf32>
    %20 = tpu.matmul %19, %17, %cst_16 {dimension_numbers = #tpu.dot_dimension_numbers<[1], [0], [0], [1], [0, 0, 1, 1], [], []>} : vector<8x768xbf16>, vector<768x1024xbf16>, vector<8x1024xf32> -> vector<8x1024xf32>
    %21 = vector.broadcast %18 : vector<1x1024xf32> to vector<8x1024xf32>
    %22 = arith.addf %20, %21 : vector<8x1024xf32>
    %cst_17 = arith.constant 0.000000e+00 : f32
    %23 = vector.broadcast %cst_17 : f32 to vector<8x1024xf32>
    %24 = arith.maximumf %22, %23 : vector<8x1024xf32>
    %c0_18 = arith.constant 0 : index
    %c0_19 = arith.constant 0 : index
    %25 = vector.load %arg8[%c0_18, %c0_19] : memref<1024x768xbf16, #tpu.memory_space<vmem>>, vector<1024x768xbf16>
    %c0_20 = arith.constant 0 : index
    %c0_21 = arith.constant 0 : index
    %26 = vector.load %arg9[%c0_20, %c0_21] : memref<1x768xf32, #tpu.memory_space<vmem>>, vector<1x768xf32>
    %27 = arith.truncf %24 : vector<8x1024xf32> to vector<8x1024xbf16>
    %cst_22 = arith.constant dense<0.000000e+00> : vector<8x768xf32>
    %28 = tpu.matmul %27, %25, %cst_22 {dimension_numbers = #tpu.dot_dimension_numbers<[1], [0], [0], [1], [0, 0, 1, 1], [], []>} : vector<8x1024xbf16>, vector<1024x768xbf16>, vector<8x768xf32> -> vector<8x768xf32>
    %29 = vector.broadcast %26 : vector<1x768xf32> to vector<8x768xf32>
    %30 = arith.addf %28, %29 : vector<8x768xf32>
    %cst_23 = arith.constant 0.000000e+00 : f32
    %31 = vector.broadcast %cst_23 : f32 to vector<8x768xf32>
    %32 = arith.maximumf %30, %31 : vector<8x768xf32>
    %c0_24 = arith.constant 0 : index
    %c0_25 = arith.constant 0 : index
    %33 = vector.load %arg10[%c0_24, %c0_25] : memref<768x512xbf16, #tpu.memory_space<vmem>>, vector<768x512xbf16>
    %c0_26 = arith.constant 0 : index
    %c0_27 = arith.constant 0 : index
    %34 = vector.load %arg11[%c0_26, %c0_27] : memref<1x512xf32, #tpu.memory_space<vmem>>, vector<1x512xf32>
    %35 = arith.truncf %32 : vector<8x768xf32> to vector<8x768xbf16>
    %cst_28 = arith.constant dense<0.000000e+00> : vector<8x512xf32>
    %36 = tpu.matmul %35, %33, %cst_28 {dimension_numbers = #tpu.dot_dimension_numbers<[1], [0], [0], [1], [0, 0, 1, 1], [], []>} : vector<8x768xbf16>, vector<768x512xbf16>, vector<8x512xf32> -> vector<8x512xf32>
    %37 = vector.broadcast %34 : vector<1x512xf32> to vector<8x512xf32>
    %38 = arith.addf %36, %37 : vector<8x512xf32>
    %cst_29 = arith.constant 0.000000e+00 : f32
    %39 = vector.broadcast %cst_29 : f32 to vector<8x512xf32>
    %40 = arith.maximumf %38, %39 : vector<8x512xf32>
    %c0_30 = arith.constant 0 : index
    %c0_31 = arith.constant 0 : index
    %41 = vector.load %arg12[%c0_30, %c0_31] : memref<512x256xbf16, #tpu.memory_space<vmem>>, vector<512x256xbf16>
    %c0_32 = arith.constant 0 : index
    %c0_33 = arith.constant 0 : index
    %42 = vector.load %arg13[%c0_32, %c0_33] : memref<1x256xf32, #tpu.memory_space<vmem>>, vector<1x256xf32>
    %43 = arith.truncf %40 : vector<8x512xf32> to vector<8x512xbf16>
    %cst_34 = arith.constant dense<0.000000e+00> : vector<8x256xf32>
    %44 = tpu.matmul %43, %41, %cst_34 {dimension_numbers = #tpu.dot_dimension_numbers<[1], [0], [0], [1], [0, 0, 1, 1], [], []>} : vector<8x512xbf16>, vector<512x256xbf16>, vector<8x256xf32> -> vector<8x256xf32>
    %45 = vector.broadcast %42 : vector<1x256xf32> to vector<8x256xf32>
    %46 = arith.addf %44, %45 : vector<8x256xf32>
    %cst_35 = arith.constant 0.000000e+00 : f32
    %47 = vector.broadcast %cst_35 : f32 to vector<8x256xf32>
    %48 = arith.maximumf %46, %47 : vector<8x256xf32>
    %c0_36 = arith.constant 0 : index
    %c0_37 = arith.constant 0 : index
    %49 = vector.load %arg14[%c0_36, %c0_37] : memref<256x1xbf16, #tpu.memory_space<vmem>>, vector<256x1xbf16>
    %c0_38 = arith.constant 0 : index
    %c0_39 = arith.constant 0 : index
    %50 = vector.load %arg15[%c0_38, %c0_39] : memref<1x1xf32, #tpu.memory_space<vmem>>, vector<1x1xf32>
    %51 = arith.truncf %48 : vector<8x256xf32> to vector<8x256xbf16>
    %cst_40 = arith.constant dense<0.000000e+00> : vector<8x1xf32>
    %52 = tpu.matmul %51, %49, %cst_40 {dimension_numbers = #tpu.dot_dimension_numbers<[1], [0], [0], [1], [0, 0, 1, 1], [], []>} : vector<8x256xbf16>, vector<256x1xbf16>, vector<8x1xf32> -> vector<8x1xf32>
    %53 = vector.broadcast %50 : vector<1x1xf32> to vector<8x1xf32>
    %54 = arith.addf %52, %53 : vector<8x1xf32>
    %c0_41 = arith.constant 0 : index
    %c0_42 = arith.constant 0 : index
    %55 = vector.load %arg16[%c0_41, %c0_42] : memref<8x1xf32, #tpu.memory_space<vmem>>, vector<8x1xf32>
    tpu.vector_store %arg16[%c0_41, %c0_42], %54 {strides = array<i32>} : memref<8x1xf32, #tpu.memory_space<vmem>>, vector<8x1xf32>,
    return
  }
  func.func @transform_0(%arg0: i32) -> (i32, i32) {
    %c0_i32 = arith.constant 0 : i32
    %c0_i32_0 = arith.constant 0 : i32
    return %arg0, %c0_i32 : i32, i32
  }
  func.func @transform_1(%arg0: i32) -> (i32, i32) {
    %c0_i32 = arith.constant 0 : i32
    %c0_i32_0 = arith.constant 0 : i32
    %c0_i32_1 = arith.constant 0 : i32
    return %c0_i32, %c0_i32_0 : i32, i32
  }
  func.func @transform_2(%arg0: i32) -> (i32, i32) {
    %c0_i32 = arith.constant 0 : i32
    %c0_i32_0 = arith.constant 0 : i32
    %c0_i32_1 = arith.constant 0 : i32
    return %c0_i32, %c0_i32_0 : i32, i32
  }
  func.func @transform_3(%arg0: i32) -> (i32, i32) {
    %c0_i32 = arith.constant 0 : i32
    %c0_i32_0 = arith.constant 0 : i32
    %c0_i32_1 = arith.constant 0 : i32
    return %c0_i32, %c0_i32_0 : i32, i32
  }
  func.func @transform_4(%arg0: i32) -> (i32, i32) {
    %c0_i32 = arith.constant 0 : i32
    %c0_i32_0 = arith.constant 0 : i32
    %c0_i32_1 = arith.constant 0 : i32
    return %c0_i32, %c0_i32_0 : i32, i32
  }
  func.func @transform_5(%arg0: i32) -> (i32, i32) {
    %c0_i32 = arith.constant 0 : i32
    %c0_i32_0 = arith.constant 0 : i32
    %c0_i32_1 = arith.constant 0 : i32
    return %c0_i32, %c0_i32_0 : i32, i32
  }
  func.func @transform_6(%arg0: i32) -> (i32, i32) {
    %c0_i32 = arith.constant 0 : i32
    %c0_i32_0 = arith.constant 0 : i32
    %c0_i32_1 = arith.constant 0 : i32
    return %c0_i32, %c0_i32_0 : i32, i32
  }
  func.func @transform_7(%arg0: i32) -> (i32, i32) {
    %c0_i32 = arith.constant 0 : i32
    %c0_i32_0 = arith.constant 0 : i32
    %c0_i32_1 = arith.constant 0 : i32
    return %c0_i32, %c0_i32_0 : i32, i32
  }
  func.func @transform_8(%arg0: i32) -> (i32, i32) {
    %c0_i32 = arith.constant 0 : i32
    %c0_i32_0 = arith.constant 0 : i32
    %c0_i32_1 = arith.constant 0 : i32
    return %c0_i32, %c0_i32_0 : i32, i32
  }
  func.func @transform_9(%arg0: i32) -> (i32, i32) {
    %c0_i32 = arith.constant 0 : i32
    %c0_i32_0 = arith.constant 0 : i32
    %c0_i32_1 = arith.constant 0 : i32
    return %c0_i32, %c0_i32_0 : i32, i32
  }
  func.func @transform_10(%arg0: i32) -> (i32, i32) {
    %c0_i32 = arith.constant 0 : i32
    %c0_i32_0 = arith.constant 0 : i32
    %c0_i32_1 = arith.constant 0 : i32
    return %c0_i32, %c0_i32_0 : i32, i32
  }
  func.func @transform_11(%arg0: i32) -> (i32, i32) {
    %c0_i32 = arith.constant 0 : i32
    %c0_i32_0 = arith.constant 0 : i32
    %c0_i32_1 = arith.constant 0 : i32
    return %c0_i32, %c0_i32_0 : i32, i32
  }
  func.func @transform_12(%arg0: i32) -> (i32, i32) {
    %c0_i32 = arith.constant 0 : i32
    %c0_i32_0 = arith.constant 0 : i32
    %c0_i32_1 = arith.constant 0 : i32
    return %c0_i32, %c0_i32_0 : i32, i32
  }
  func.func @transform_13(%arg0: i32) -> (i32, i32) {
    %c0_i32 = arith.constant 0 : i32
    %c0_i32_0 = arith.constant 0 : i32
    %c0_i32_1 = arith.constant 0 : i32
    return %c0_i32, %c0_i32_0 : i32, i32
  }
  func.func @transform_14(%arg0: i32) -> (i32, i32) {
    %c0_i32 = arith.constant 0 : i32
    %c0_i32_0 = arith.constant 0 : i32
    %c0_i32_1 = arith.constant 0 : i32
    return %c0_i32, %c0_i32_0 : i32, i32
  }
  func.func @transform_15(%arg0: i32) -> (i32, i32) {
    %c0_i32 = arith.constant 0 : i32
    %c0_i32_0 = arith.constant 0 : i32
    return %arg0, %c0_i32 : i32, i32
  }
}

</mosaic_0001>

<llo_original>
// kernel: mlp_forward.1
$region0: #{mlp_forward.1}
  #allocation0 [shape = 'u32[]', space=smem, size = 0x4, offset = 0x4, fixed_abs, tag = 'smem constant byte address 0x4 - core index']
  #allocation1 [shape = 'u32[144,128]{1,0:T(1,128)}', space=vmem, size = 0x12000, scoped, tag = 'internal scratch']
  #allocation2 [shape = 'f32[1,1]{1,0:T(1,128)S(1)}', space=vmem, size = 0x200, scoped, tag = 'scoped memory for mlp_forward.1']
  %s0 = inlined_call_operand.hbm [shape: f32[8,32], index: 0, kind: input, shape index: {}]
  %s1 = inlined_call_operand.hbm [shape: bf16[32,512], index: 1, kind: input, shape index: {}]
  %s2 = inlined_call_operand.hbm [shape: f32[1,512], index: 2, kind: input, shape index: {}]
  %s3 = inlined_call_operand.hbm [shape: bf16[512,768], index: 3, kind: input, shape index: {}]
  %s4 = inlined_call_operand.vmem [shape: f32[1,768], index: 4, kind: input, shape index: {}]
  %s5 = inlined_call_operand.hbm [shape: bf16[768,1024], index: 5, kind: input, shape index: {}]
  %s6 = inlined_call_operand.hbm [shape: f32[1,1024], index: 6, kind: input, shape index: {}]
  %s7 = inlined_call_operand.hbm [shape: bf16[1024,768], index: 7, kind: input, shape index: {}]
  %s8 = inlined_call_operand.vmem [shape: f32[1,768], index: 8, kind: input, shape index: {}]
  %s9 = inlined_call_operand.hbm [shape: bf16[768,512], index: 9, kind: input, shape index: {}]
  %s10 = inlined_call_operand.hbm [shape: f32[1,512], index: 10, kind: input, shape index: {}]
  %s11 = inlined_call_operand.hbm [shape: bf16[512,256], index: 11, kind: input, shape index: {}]
  %s12 = inlined_call_operand.hbm [shape: f32[1,256], index: 12, kind: input, shape index: {}]
  %s13 = inlined_call_operand.vmem [shape: bf16[256,1], index: 13, kind: input, shape index: {}]
  %s14 = inlined_call_operand.<no memory space> [shape: f32[1,1], index: 14, kind: input, shape index: {}]
  %s15 = inlined_call_operand.vmem [shape: f32[8,1], index: 15, kind: output, shape index: {}]
  %s16 = sld [smem:[#allocation0]]
  $region114: #{mlp_forward.1} parent=0
    _
  %s18 = ssub.s32 1, %s16
  %s19 = scalar_select 0, %s18, %s16
  %v20 = vstv %s14
  %21 = vst [vmem:[#allocation2] sm:$0x1] %v20
  $region1: #{mlp_forward.1} parent=0
    #allocation3 [shape = 'u8[4096]{0}', space=vmem, size = 0x1000, scoped, tag = 'input window, operand 0, single buffered']
    #allocation4 [shape = 's32[1]{0}', space=sflag, size = 0x4, scoped, tag = 'scoped memory for mlp_forward.1']
    #allocation5 [shape = 'u8[32768]{0}', space=vmem, size = 0x8000, scoped, tag = 'input window, operand 1, single buffered']
    #allocation6 [shape = 's32[1]{0}', space=sflag, size = 0x4, scoped, tag = 'scoped memory for mlp_forward.1']
    #allocation7 [shape = 'u8[2048]{0}', space=vmem, size = 0x800, scoped, tag = 'input window, operand 2, single buffered']
    #allocation8 [shape = 'u8[786432]{0}', space=vmem, size = 0xc0000, scoped, tag = 'input window, operand 3, single buffered']
    #allocation9 [shape = 's32[1]{0}', space=sflag, size = 0x4, scoped, tag = 'scoped memory for mlp_forward.1']
    #allocation10 [shape = 'u8[1572864]{0}', space=vmem, size = 0x180000, scoped, tag = 'input window, operand 5, single buffered']
    #allocation11 [shape = 'u8[4096]{0}', space=vmem, size = 0x1000, scoped, tag = 'input window, operand 6, single buffered']
    #allocation12 [shape = 's32[1]{0}', space=sflag, size = 0x4, scoped, tag = 'scoped memory for mlp_forward.1']
    #allocation13 [shape = 'u8[1572864]{0}', space=vmem, size = 0x180000, scoped, tag = 'input window, operand 7, single buffered']
    #allocation14 [shape = 'u8[786432]{0}', space=vmem, size = 0xc0000, scoped, tag = 'input window, operand 9, single buffered']
    #allocation15 [shape = 's32[1]{0}', space=sflag, size = 0x4, scoped, tag = 'scoped memory for mlp_forward.1']
    #allocation16 [shape = 'u8[2048]{0}', space=vmem, size = 0x800, scoped, tag = 'input window, operand 10, single buffered']
    #allocation17 [shape = 'u8[262144]{0}', space=vmem, size = 0x40000, scoped, tag = 'input window, operand 11, single buffered']
    #allocation18 [shape = 's32[1]{0}', space=sflag, size = 0x4, scoped, tag = 'scoped memory for mlp_forward.1']
    #allocation19 [shape = 'u8[1024]{0}', space=vmem, size = 0x400, scoped, tag = 'input window, operand 12, single buffered']
    %22 = vsyncpa [#allocation4], 0
    %23 = vsyncpa [#allocation6], 0
    %24 = vsyncpa [#allocation9], 0
    %25 = vsyncpa [#allocation12], 0
    %26 = vsyncpa [#allocation15], 0
    %27 = vsyncpa [#allocation18], 0
    // Predicated region
    $region2: #{mlp_forward.1} parent=1 // pred_check
      _
    $region3: #{mlp_forward.1} parent=1 // pred_check_branch
      %29 = sbr.rel (0) target = $region5
    $region4: #{mlp_forward.1} parent=1 // pred_region
      %s31 = ssub.s32 128, 128
      %32 = vsyncadd [#allocation4], %s31
      %s34 = sshll.u32 [#allocation3], 4
      %s35 = int_to_ptr.vmem [resolvable:$true] %s34
      %37 = dma.hbm_to_vmem [thread:$0]  %s0, 128, %s35, [#allocation4]
    $region5: #{mlp_forward.1} parent=1 // pred_fallthru
      _
    // Predicated region
    $region6: #{mlp_forward.1} parent=1 // pred_check
      _
    $region7: #{mlp_forward.1} parent=1 // pred_check_branch
      %39 = sbr.rel (0) target = $region9
    $region8: #{mlp_forward.1} parent=1 // pred_region
      %s41 = ssub.s32 1024, 1024
      %42 = vsyncadd [#allocation6], %s41
      %s43 = sshll.u32 [#allocation5], 4
      %s44 = int_to_ptr.vmem [resolvable:$true] %s43
      %49 = dma.hbm_to_vmem [thread:$0]  %s1, 1024, %s44, [#allocation6], 256, 256, 16
    $region9: #{mlp_forward.1} parent=1 // pred_fallthru
      _
    // Predicated region
    $region10: #{mlp_forward.1} parent=1 // pred_check
      _
    $region11: #{mlp_forward.1} parent=1 // pred_check_branch
      %51 = sbr.rel (0) target = $region13
    $region12: #{mlp_forward.1} parent=1 // pred_region
      %s53 = ssub.s32 64, 64
      %54 = vsyncadd [#allocation6], %s53
      %s56 = sshll.u32 [#allocation7], 4
      %s57 = int_to_ptr.vmem [resolvable:$true] %s56
      %59 = dma.hbm_to_vmem [thread:$0]  %s2, 64, %s57, [#allocation6]
    $region13: #{mlp_forward.1} parent=1 // pred_fallthru
      _
    // Predicated region
    $region14: #{mlp_forward.1} parent=1 // pred_check
      _
    $region15: #{mlp_forward.1} parent=1 // pred_check_branch
      %61 = sbr.rel (0) target = $region17
    $region16: #{mlp_forward.1} parent=1 // pred_region
      %s63 = ssub.s32 24576, 24576
      %64 = vsyncadd [#allocation9], %s63
      %s65 = sshll.u32 [#allocation8], 4
      %s66 = int_to_ptr.vmem [resolvable:$true] %s65
      %71 = dma.hbm_to_vmem [thread:$0]  %s3, 24576, %s66, [#allocation9], 384, 384, 24
    $region17: #{mlp_forward.1} parent=1 // pred_fallthru
      _
    // Predicated region
    $region18: #{mlp_forward.1} parent=1 // pred_check
      _
    $region19: #{mlp_forward.1} parent=1 // pred_check_branch
      %73 = sbr.rel (0) target = $region21
    $region20: #{mlp_forward.1} parent=1 // pred_region
      _
    $region21: #{mlp_forward.1} parent=1 // pred_fallthru
      _
    // Predicated region
    $region22: #{mlp_forward.1} parent=1 // pred_check
      _
    $region23: #{mlp_forward.1} parent=1 // pred_check_branch
      %75 = sbr.rel (0) target = $region25
    $region24: #{mlp_forward.1} parent=1 // pred_region
      %s77 = ssub.s32 49152, 49152
      %78 = vsyncadd [#allocation9], %s77
      %s79 = sshll.u32 [#allocation10], 4
      %s80 = int_to_ptr.vmem [resolvable:$true] %s79
      %85 = dma.hbm_to_vmem [thread:$0]  %s5, 49152, %s80, [#allocation9], 512, 512, 32
    $region25: #{mlp_forward.1} parent=1 // pred_fallthru
      _
    // Predicated region
    $region26: #{mlp_forward.1} parent=1 // pred_check
      _
    $region27: #{mlp_forward.1} parent=1 // pred_check_branch
      %87 = sbr.rel (0) target = $region29
    $region28: #{mlp_forward.1} parent=1 // pred_region
      %s89 = ssub.s32 128, 128
      %90 = vsyncadd [#allocation12], %s89
      %s92 = sshll.u32 [#allocation11], 4
      %s93 = int_to_ptr.vmem [resolvable:$true] %s92
      %95 = dma.hbm_to_vmem [thread:$0]  %s6, 128, %s93, [#allocation12]
    $region29: #{mlp_forward.1} parent=1 // pred_fallthru
      _
    // Predicated region
    $region30: #{mlp_forward.1} parent=1 // pred_check
      _
    $region31: #{mlp_forward.1} parent=1 // pred_check_branch
      %97 = sbr.rel (0) target = $region33
    $region32: #{mlp_forward.1} parent=1 // pred_region
      %s99 = ssub.s32 49152, 49152
      %100 = vsyncadd [#allocation12], %s99
      %s101 = sshll.u32 [#allocation13], 4
      %s102 = int_to_ptr.vmem [resolvable:$true] %s101
      %107 = dma.hbm_to_vmem [thread:$0]  %s7, 49152, %s102, [#allocation12], 384, 384, 24
    $region33: #{mlp_forward.1} parent=1 // pred_fallthru
      _
    // Predicated region
    $region34: #{mlp_forward.1} parent=1 // pred_check
      _
    $region35: #{mlp_forward.1} parent=1 // pred_check_branch
      %109 = sbr.rel (0) target = $region37
    $region36: #{mlp_forward.1} parent=1 // pred_region
      _
    $region37: #{mlp_forward.1} parent=1 // pred_fallthru
      _
    // Predicated region
    $region38: #{mlp_forward.1} parent=1 // pred_check
      _
    $region39: #{mlp_forward.1} parent=1 // pred_check_branch
      %111 = sbr.rel (0) target = $region41
    $region40: #{mlp_forward.1} parent=1 // pred_region
      %s113 = ssub.s32 24576, 24576
      %114 = vsyncadd [#allocation15], %s113
      %s115 = sshll.u32 [#allocation14], 4
      %s116 = int_to_ptr.vmem [resolvable:$true] %s115
      %121 = dma.hbm_to_vmem [thread:$0]  %s9, 24576, %s116, [#allocation15], 256, 256, 16
    $region41: #{mlp_forward.1} parent=1 // pred_fallthru
      _
    // Predicated region
    $region42: #{mlp_forward.1} parent=1 // pred_check
      _
    $region43: #{mlp_forward.1} parent=1 // pred_check_branch
      %123 = sbr.rel (0) target = $region45
    $region44: #{mlp_forward.1} parent=1 // pred_region
      %s125 = ssub.s32 64, 64
      %126 = vsyncadd [#allocation15], %s125
      %s128 = sshll.u32 [#allocation16], 4
      %s129 = int_to_ptr.vmem [resolvable:$true] %s128
      %131 = dma.hbm_to_vmem [thread:$0]  %s10, 64, %s129, [#allocation15]
    $region45: #{mlp_forward.1} parent=1 // pred_fallthru
      _
    // Predicated region
    $region46: #{mlp_forward.1} parent=1 // pred_check
      _
    $region47: #{mlp_forward.1} parent=1 // pred_check_branch
      %133 = sbr.rel (0) target = $region49
    $region48: #{mlp_forward.1} parent=1 // pred_region
      %s135 = ssub.s32 8192, 8192
      %136 = vsyncadd [#allocation18], %s135
      %s137 = sshll.u32 [#allocation17], 4
      %s138 = int_to_ptr.vmem [resolvable:$true] %s137
      %143 = dma.hbm_to_vmem [thread:$0]  %s11, 8192, %s138, [#allocation18], 128, 128, 8
    $region49: #{mlp_forward.1} parent=1 // pred_fallthru
      _
    // Predicated region
    $region50: #{mlp_forward.1} parent=1 // pred_check
      _
    $region51: #{mlp_forward.1} parent=1 // pred_check_branch
      %145 = sbr.rel (0) target = $region53
    $region52: #{mlp_forward.1} parent=1 // pred_region
      %s147 = ssub.s32 32, 32
      %148 = vsyncadd [#allocation18], %s147
      %s150 = sshll.u32 [#allocation19], 4
      %s151 = int_to_ptr.vmem [resolvable:$true] %s150
      %153 = dma.hbm_to_vmem [thread:$0]  %s12, 32, %s151, [#allocation18]
    $region53: #{mlp_forward.1} parent=1 // pred_fallthru
      _
    // Predicated region
    $region54: #{mlp_forward.1} parent=1 // pred_check
      _
    $region55: #{mlp_forward.1} parent=1 // pred_check_branch
      %155 = sbr.rel (0) target = $region57
    $region56: #{mlp_forward.1} parent=1 // pred_region
      _
    $region57: #{mlp_forward.1} parent=1 // pred_fallthru
      _
    // Predicated region
    $region58: #{mlp_forward.1} parent=1 // pred_check
      _
    $region59: #{mlp_forward.1} parent=1 // pred_check_branch
      %157 = sbr.rel (0) target = $region61
    $region60: #{mlp_forward.1} parent=1 // pred_region
      _
    $region61: #{mlp_forward.1} parent=1 // pred_fallthru
      _
    // Predicated region
    $region62: #{mlp_forward.1} parent=1 // pred_check
      _
    $region63: #{mlp_forward.1} parent=1 // pred_check_branch
      %159 = sbr.rel (0) target = $region65
    $region64: #{mlp_forward.1} parent=1 // pred_region
      %160 = dma.done [#allocation4], 128
    $region65: #{mlp_forward.1} parent=1 // pred_fallthru
      _
    // Predicated region
    $region66: #{mlp_forward.1} parent=1 // pred_check
      _
    $region67: #{mlp_forward.1} parent=1 // pred_check_branch
      %162 = sbr.rel (0) target = $region69
    $region68: #{mlp_forward.1} parent=1 // pred_region
      %163 = dma.done [#allocation6], 1024
    $region69: #{mlp_forward.1} parent=1 // pred_fallthru
      _
    // Predicated region
    $region70: #{mlp_forward.1} parent=1 // pred_check
      _
    $region71: #{mlp_forward.1} parent=1 // pred_check_branch
      %165 = sbr.rel (0) target = $region73
    $region72: #{mlp_forward.1} parent=1 // pred_region
      %166 = dma.done [#allocation6], 64
    $region73: #{mlp_forward.1} parent=1 // pred_fallthru
      _
    // Predicated region
    $region74: #{mlp_forward.1} parent=1 // pred_check
      _
    $region75: #{mlp_forward.1} parent=1 // pred_check_branch
      %168 = sbr.rel (0) target = $region77
    $region76: #{mlp_forward.1} parent=1 // pred_region
      %169 = dma.done [#allocation9], 24576
    $region77: #{mlp_forward.1} parent=1 // pred_fallthru
      _
    // Predicated region
    $region78: #{mlp_forward.1} parent=1 // pred_check
      _
    $region79: #{mlp_forward.1} parent=1 // pred_check_branch
      %171 = sbr.rel (0) target = $region81
    $region80: #{mlp_forward.1} parent=1 // pred_region
      %172 = dma.done [#allocation9], 49152
    $region81: #{mlp_forward.1} parent=1 // pred_fallthru
      _
    // Predicated region
    $region82: #{mlp_forward.1} parent=1 // pred_check
      _
    $region83: #{mlp_forward.1} parent=1 // pred_check_branch
      %174 = sbr.rel (0) target = $region85
    $region84: #{mlp_forward.1} parent=1 // pred_region
      %175 = dma.done [#allocation12], 128
    $region85: #{mlp_forward.1} parent=1 // pred_fallthru
      _
    // Predicated region
    $region86: #{mlp_forward.1} parent=1 // pred_check
      _
    $region87: #{mlp_forward.1} parent=1 // pred_check_branch
      %177 = sbr.rel (0) target = $region89
    $region88: #{mlp_forward.1} parent=1 // pred_region
      %178 = dma.done [#allocation12], 49152
    $region89: #{mlp_forward.1} parent=1 // pred_fallthru
      _
    // Predicated region
    $region90: #{mlp_forward.1} parent=1 // pred_check
      _
    $region91: #{mlp_forward.1} parent=1 // pred_check_branch
      %180 = sbr.rel (0) target = $region93
    $region92: #{mlp_forward.1} parent=1 // pred_region
      %181 = dma.done [#allocation15], 24576
    $region93: #{mlp_forward.1} parent=1 // pred_fallthru
      _
    // Predicated region
    $region94: #{mlp_forward.1} parent=1 // pred_check
      _
    $region95: #{mlp_forward.1} parent=1 // pred_check_branch
      %183 = sbr.rel (0) target = $region97
    $region96: #{mlp_forward.1} parent=1 // pred_region
      %184 = dma.done [#allocation15], 64
    $region97: #{mlp_forward.1} parent=1 // pred_fallthru
      _
    // Predicated region
    $region98: #{mlp_forward.1} parent=1 // pred_check
      _
    $region99: #{mlp_forward.1} parent=1 // pred_check_branch
      %186 = sbr.rel (0) target = $region101
    $region100: #{mlp_forward.1} parent=1 // pred_region
      %187 = dma.done [#allocation18], 8192
    $region101: #{mlp_forward.1} parent=1 // pred_fallthru
      _
    // Predicated region
    $region102: #{mlp_forward.1} parent=1 // pred_check
      _
    $region103: #{mlp_forward.1} parent=1 // pred_check_branch
      %189 = sbr.rel (0) target = $region105
    $region104: #{mlp_forward.1} parent=1 // pred_region
      %190 = dma.done [#allocation18], 32
    $region105: #{mlp_forward.1} parent=1 // pred_fallthru
      _
    %v192 = vld [vmem:[#allocation3] sm:$0xff]
    %v193 = vld [vmem:[#allocation5] sm:$0xff]
    %v194 = vld [vmem:[#allocation5 + $0x8] sm:$0xff]
    %v195 = vld [vmem:[#allocation5 + $0x10] sm:$0xff]
    %v196 = vld [vmem:[#allocation5 + $0x18] sm:$0xff]
    %v197 = vld [vmem:[#allocation5 + $0x20] sm:$0xff]
    %v198 = vld [vmem:[#allocation5 + $0x28] sm:$0xff]
    %v199 = vld [vmem:[#allocation5 + $0x30] sm:$0xff]
    %v200 = vld [vmem:[#allocation5 + $0x38] sm:$0xff]
    %v201 = vld [vmem:[#allocation7] sm:$0xf]
    %v202 = vpack.c.bf16 %v192, %v192
    %v204 = vlaneseq
    %v205 = vshrl.u32 %v204, 7
    %v206 = vsub.s32 0, %v205
    %v207 = vrot.slane %v201, %v206
    %v208 = vlaneseq
    %v209 = vshrl.u32 %v208, 7
    %v210 = vsub.s32 1, %v209
    %v211 = vrot.slane %v201, %v210
    %v212 = vlaneseq
    %v213 = vshrl.u32 %v212, 7
    %v214 = vsub.s32 2, %v213
    %v215 = vrot.slane %v201, %v214
    %v216 = vlaneseq
    %v217 = vshrl.u32 %v216, 7
    %v218 = vsub.s32 3, %v217
    %v219 = vrot.slane %v201, %v218
    %v232 = vunpack.c.l.b16 %v193
    %v233 = vunpack.c.h.b16 %v193
    %v234 = vunpack.c.l.b16 %v194
    %v235 = vunpack.c.h.b16 %v194
    %v236 = vunpack.c.l.b16 %v195
    %v237 = vunpack.c.h.b16 %v195
    %v238 = vunpack.c.l.b16 %v196
    %v239 = vunpack.c.h.b16 %v196
    %v240 = vunpack.c.l.b16 %v197
    %v241 = vunpack.c.h.b16 %v197
    %v242 = vunpack.c.l.b16 %v198
    %v243 = vunpack.c.h.b16 %v198
    %v244 = vunpack.c.l.b16 %v199
    %v245 = vunpack.c.h.b16 %v199
    %v246 = vunpack.c.l.b16 %v200
    %v247 = vunpack.c.h.b16 %v200
    %v248 = vpack.c.b16 %v236, %v232
    %v249 = vpack.c.b16 %v237, %v233
    %v250 = vpack.c.b16 %v238, %v234
    %v251 = vpack.c.b16 %v239, %v235
    %v252 = vpack.c.b16 %v244, %v240
    %v253 = vpack.c.b16 %v245, %v241
    %v254 = vpack.c.b16 %v246, %v242
    %v255 = vpack.c.b16 %v247, %v243
    %vm264 = vcmask 261120
    %v266 = vsel %vm264, %v202, 0
    %268 = vmatprep.subr.bf16.mxu0 0
    %269 = vmatpush1.bf16.msra.mxu0 0
    %270 = vmatprep.subr.bf16.mxu0 0
    %271 = vmatpush1.bf16.msra.mxu0 0
    %272 = vmatprep.subr.bf16.mxu0 0
    %273 = vmatpush1.bf16.msra.mxu0 0
    %274 = vmatprep.subr.bf16.mxu0 0
    %275 = vmatpush1.bf16.msra.mxu0 0
    %276 = vmatprep.subr.bf16.mxu0 0
    %277 = vmatpush1.bf16.msra.mxu0 0
    %278 = vmatprep.subr.bf16.mxu0 0
    %279 = vmatpush1.bf16.msra.mxu0 0
    %280 = vmatprep.subr.bf16.mxu0 %v253
    %281 = vmatpush1.bf16.msra.mxu0 %v252
    %282 = vmatprep.subr.bf16.mxu0 %v249
    %283 = vmatpush1.bf16.msra.mxu0 %v248
    %284 = vmatprep.subr.bf16.mxu0 0
    %285 = vmatpush2.bf16.msra.mxu0 0
    %286 = vmatprep.subr.bf16.mxu0 0
    %287 = vmatpush2.bf16.msra.mxu0 0
    %288 = vmatprep.subr.bf16.mxu0 0
    %289 = vmatpush2.bf16.msra.mxu0 0
    %290 = vmatprep.subr.bf16.mxu0 0
    %291 = vmatpush2.bf16.msra.mxu0 0
    %292 = vmatprep.subr.bf16.mxu0 0
    %293 = vmatpush2.bf16.msra.mxu0 0
    %294 = vmatprep.subr.bf16.mxu0 0
    %295 = vmatpush2.bf16.msra.mxu0 0
    %296 = vmatprep.subr.bf16.mxu0 0
    %297 = vmatpush2.bf16.msra.mxu0 0
    %298 = vmatprep.subr.bf16.mxu0 0
    %299 = vmatpush2.bf16.msra.mxu0 0
    %300 = vmatprep.mubr.bf16.mxu0 0
    %301 = vmatmul.mubr.bf16.gmra.mxu0 %v266
    %v302 = vpop.f32.mrf.mxu0
    %v303 = vadd.f32 %v207, %v302
    %v304 = vpop.f32.mrf.mxu0
    %v305 = vadd.f32 %v211, %v304
    %v306 = vpop.f32.mrf.mxu0
    %v307 = vpop.f32.mrf.mxu0
    %308 = vdwg.mxu0
    %309 = vmatprep.subr.bf16.mxu0 0
    %310 = vmatpush1.bf16.msra.mxu0 0
    %311 = vmatprep.subr.bf16.mxu0 0
    %312 = vmatpush1.bf16.msra.mxu0 0
    %313 = vmatprep.subr.bf16.mxu0 0
    %314 = vmatpush1.bf16.msra.mxu0 0
    %315 = vmatprep.subr.bf16.mxu0 0
    %316 = vmatpush1.bf16.msra.mxu0 0
    %317 = vmatprep.subr.bf16.mxu0 0
    %318 = vmatpush1.bf16.msra.mxu0 0
    %319 = vmatprep.subr.bf16.mxu0 0
    %320 = vmatpush1.bf16.msra.mxu0 0
    %321 = vmatprep.subr.bf16.mxu0 %v255
    %322 = vmatpush1.bf16.msra.mxu0 %v254
    %323 = vmatprep.subr.bf16.mxu0 %v251
    %324 = vmatpush1.bf16.msra.mxu0 %v250
    %325 = vmatprep.subr.bf16.mxu0 0
    %326 = vmatpush2.bf16.msra.mxu0 0
    %327 = vmatprep.subr.bf16.mxu0 0
    %328 = vmatpush2.bf16.msra.mxu0 0
    %329 = vmatprep.subr.bf16.mxu0 0
    %330 = vmatpush2.bf16.msra.mxu0 0
    %331 = vmatprep.subr.bf16.mxu0 0
    %332 = vmatpush2.bf16.msra.mxu0 0
    %333 = vmatprep.subr.bf16.mxu0 0
    %334 = vmatpush2.bf16.msra.mxu0 0
    %335 = vmatprep.subr.bf16.mxu0 0
    %336 = vmatpush2.bf16.msra.mxu0 0
    %337 = vmatprep.subr.bf16.mxu0 0
    %338 = vmatpush2.bf16.msra.mxu0 0
    %339 = vmatprep.subr.bf16.mxu0 0
    %340 = vmatpush2.bf16.msra.mxu0 0
    %341 = vmatprep.mubr.bf16.mxu0 0
    %342 = vmatmul.mubr.bf16.gmra.mxu0 %v266
    %v343 = vpop.f32.mrf.mxu0
    %v344 = vadd.f32 %v215, %v343
    %v345 = vpop.f32.mrf.mxu0
    %v346 = vadd.f32 %v219, %v345
    %v347 = vpop.f32.mrf.mxu0
    %v348 = vpop.f32.mrf.mxu0
    %349 = vdwg.mxu0
    %v350 = vmax.f32 %v303, 0.0
    %v351 = vmax.f32 %v305, 0.0
    %v352 = vmax.f32 %v344, 0.0
    %v353 = vmax.f32 %v346, 0.0
    %v354 = vld [vmem:[#allocation8] sm:$0xff]
    %v355 = vld [vmem:[#allocation8 + $0x8] sm:$0xff]
    %v356 = vld [vmem:[#allocation8 + $0x10] sm:$0xff]
    %v357 = vld [vmem:[#allocation8 + $0x18] sm:$0xff]
    %v358 = vld [vmem:[#allocation8 + $0x20] sm:$0xff]
    %v359 = vld [vmem:[#allocation8 + $0x28] sm:$0xff]
    %v360 = vld [vmem:[#allocation8 + $0x30] sm:$0xff]
    %v361 = vld [vmem:[#allocation8 + $0x38] sm:$0xff]
    %v362 = vld [vmem:[#allocation8 + $0x40] sm:$0xff]
    %v363 = vld [vmem:[#allocation8 + $0x48] sm:$0xff]
    %v364 = vld [vmem:[#allocation8 + $0x50] sm:$0xff]
    %v365 = vld [vmem:[#allocation8 + $0x58] sm:$0xff]
    %v366 = vld [vmem:[#allocation8 + $0x60] sm:$0xff]
    %v367 = vld [vmem:[#allocation8 + $0x68] sm:$0xff]
    %v368 = vld [vmem:[#allocation8 + $0x70] sm:$0xff]
    %v369 = vld [vmem:[#allocation8 + $0x78] sm:$0xff]
    %v370 = vld [vmem:[#allocation8 + $0x80] sm:$0xff]
    %v371 = vld [vmem:[#allocation8 + $0x88] sm:$0xff]
    %v372 = vld [vmem:[#allocation8 + $0x90] sm:$0xff]
    %v373 = vld [vmem:[#allocation8 + $0x98] sm:$0xff]
    %v374 = vld [vmem:[#allocation8 + $0xa0] sm:$0xff]
    %v375 = vld [vmem:[#allocation8 + $0xa8] sm:$0xff]
    %v376 = vld [vmem:[#allocation8 + $0xb0] sm:$0xff]
    %v377 = vld [vmem:[#allocation8 + $0xb8] sm:$0xff]
    %v378 = vld [vmem:[#allocation8 + $0xc0] sm:$0xff]
    %v379 = vld [vmem:[#allocation8 + $0xc8] sm:$0xff]
    %v380 = vld [vmem:[#allocation8 + $0xd0] sm:$0xff]
    %v381 = vld [vmem:[#allocation8 + $0xd8] sm:$0xff]
    %v382 = vld [vmem:[#allocation8 + $0xe0] sm:$0xff]
    %v383 = vld [vmem:[#allocation8 + $0xe8] sm:$0xff]
    %v384 = vld [vmem:[#allocation8 + $0xf0] sm:$0xff]
    %v385 = vld [vmem:[#allocation8 + $0xf8] sm:$0xff]
    %v386 = vld [vmem:[#allocation8 + $0x100] sm:$0xff]
    %v387 = vld [vmem:[#allocation8 + $0x108] sm:$0xff]
    %v388 = vld [vmem:[#allocation8 + $0x110] sm:$0xff]
    %v389 = vld [vmem:[#allocation8 + $0x118] sm:$0xff]
    %v390 = vld [vmem:[#allocation8 + $0x120] sm:$0xff]
    %v391 = vld [vmem:[#allocation8 + $0x128] sm:$0xff]
    %v392 = vld [vmem:[#allocation8 + $0x130] sm:$0xff]
    %v393 = vld [vmem:[#allocation8 + $0x138] sm:$0xff]
    %v394 = vld [vmem:[#allocation8 + $0x140] sm:$0xff]
    %v395 = vld [vmem:[#allocation8 + $0x148] sm:$0xff]
    %v396 = vld [vmem:[#allocation8 + $0x150] sm:$0xff]
    %v397 = vld [vmem:[#allocation8 + $0x158] sm:$0xff]
    %v398 = vld [vmem:[#allocation8 + $0x160] sm:$0xff]
    %v399 = vld [vmem:[#allocation8 + $0x168] sm:$0xff]
    %v400 = vld [vmem:[#allocation8 + $0x170] sm:$0xff]
    %v401 = vld [vmem:[#allocation8 + $0x178] sm:$0xff]
    %v402 = vld [vmem:[#allocation8 + $0x180] sm:$0xff]
    %v403 = vld [vmem:[#allocation8 + $0x188] sm:$0xff]
    %v404 = vld [vmem:[#allocation8 + $0x190] sm:$0xff]
    %v405 = vld [vmem:[#allocation8 + $0x198] sm:$0xff]
    %v406 = vld [vmem:[#allocation8 + $0x1a0] sm:$0xff]
    %v407 = vld [vmem:[#allocation8 + $0x1a8] sm:$0xff]
    %v408 = vld [vmem:[#allocation8 + $0x1b0] sm:$0xff]
    %v409 = vld [vmem:[#allocation8 + $0x1b8] sm:$0xff]
    %v410 = vld [vmem:[#allocation8 + $0x1c0] sm:$0xff]
    %v411 = vld [vmem:[#allocation8 + $0x1c8] sm:$0xff]
    %v412 = vld [vmem:[#allocation8 + $0x1d0] sm:$0xff]
    %v413 = vld [vmem:[#allocation8 + $0x1d8] sm:$0xff]
    %v414 = vld [vmem:[#allocation8 + $0x1e0] sm:$0xff]
    %v415 = vld [vmem:[#allocation8 + $0x1e8] sm:$0xff]
    %v416 = vld [vmem:[#allocation8 + $0x1f0] sm:$0xff]
    %v417 = vld [vmem:[#allocation8 + $0x1f8] sm:$0xff]
    %v418 = vld [vmem:[#allocation8 + $0x200] sm:$0xff]
    %v419 = vld [vmem:[#allocation8 + $0x208] sm:$0xff]
    %v420 = vld [vmem:[#allocation8 + $0x210] sm:$0xff]
    %v421 = vld [vmem:[#allocation8 + $0x218] sm:$0xff]
    %v422 = vld [vmem:[#allocation8 + $0x220] sm:$0xff]
    %v423 = vld [vmem:[#allocation8 + $0x228] sm:$0xff]
    %v424 = vld [vmem:[#allocation8 + $0x230] sm:$0xff]
    %v425 = vld [vmem:[#allocation8 + $0x238] sm:$0xff]
    %v426 = vld [vmem:[#allocation8 + $0x240] sm:$0xff]
    %v427 = vld [vmem:[#allocation8 + $0x248] sm:$0xff]
    %v428 = vld [vmem:[#allocation8 + $0x250] sm:$0xff]
    %v429 = vld [vmem:[#allocation8 + $0x258] sm:$0xff]
    %v430 = vld [vmem:[#allocation8 + $0x260] sm:$0xff]
    %v431 = vld [vmem:[#allocation8 + $0x268] sm:$0xff]
    %v432 = vld [vmem:[#allocation8 + $0x270] sm:$0xff]
    %v433 = vld [vmem:[#allocation8 + $0x278] sm:$0xff]
    %v434 = vld [vmem:[#allocation8 + $0x280] sm:$0xff]
    %v435 = vld [vmem:[#allocation8 + $0x288] sm:$0xff]
    %v436 = vld [vmem:[#allocation8 + $0x290] sm:$0xff]
    %v437 = vld [vmem:[#allocation8 + $0x298] sm:$0xff]
    %v438 = vld [vmem:[#allocation8 + $0x2a0] sm:$0xff]
    %v439 = vld [vmem:[#allocation8 + $0x2a8] sm:$0xff]
    %v440 = vld [vmem:[#allocation8 + $0x2b0] sm:$0xff]
    %v441 = vld [vmem:[#allocation8 + $0x2b8] sm:$0xff]
    %v442 = vld [vmem:[#allocation8 + $0x2c0] sm:$0xff]
    %v443 = vld [vmem:[#allocation8 + $0x2c8] sm:$0xff]
    %v444 = vld [vmem:[#allocation8 + $0x2d0] sm:$0xff]
    %v445 = vld [vmem:[#allocation8 + $0x2d8] sm:$0xff]
    %v446 = vld [vmem:[#allocation8 + $0x2e0] sm:$0xff]
    %v447 = vld [vmem:[#allocation8 + $0x2e8] sm:$0xff]
    %v448 = vld [vmem:[#allocation8 + $0x2f0] sm:$0xff]
    %v449 = vld [vmem:[#allocation8 + $0x2f8] sm:$0xff]
    %v450 = vld [vmem:[#allocation8 + $0x300] sm:$0xff]
    %v451 = vld [vmem:[#allocation8 + $0x308] sm:$0xff]
    %v452 = vld [vmem:[#allocation8 + $0x310] sm:$0xff]
    %v453 = vld [vmem:[#allocation8 + $0x318] sm:$0xff]
    %v454 = vld [vmem:[#allocation8 + $0x320] sm:$0xff]
    %v455 = vld [vmem:[#allocation8 + $0x328] sm:$0xff]
    %v456 = vld [vmem:[#allocation8 + $0x330] sm:$0xff]
    %v457 = vld [vmem:[#allocation8 + $0x338] sm:$0xff]
    %v458 = vld [vmem:[#allocation8 + $0x340] sm:$0xff]
    %v459 = vld [vmem:[#allocation8 + $0x348] sm:$0xff]
    %v460 = vld [vmem:[#allocation8 + $0x350] sm:$0xff]
    %v461 = vld [vmem:[#allocation8 + $0x358] sm:$0xff]
    %v462 = vld [vmem:[#allocation8 + $0x360] sm:$0xff]
    %v463 = vld [vmem:[#allocation8 + $0x368] sm:$0xff]
    %v464 = vld [vmem:[#allocation8 + $0x370] sm:$0xff]
    %v465 = vld [vmem:[#allocation8 + $0x378] sm:$0xff]
    %v466 = vld [vmem:[#allocation8 + $0x380] sm:$0xff]
    %v467 = vld [vmem:[#allocation8 + $0x388] sm:$0xff]
    %v468 = vld [vmem:[#allocation8 + $0x390] sm:$0xff]
    %v469 = vld [vmem:[#allocation8 + $0x398] sm:$0xff]
    %v470 = vld [vmem:[#allocation8 + $0x3a0] sm:$0xff]
    %v471 = vld [vmem:[#allocation8 + $0x3a8] sm:$0xff]
    %v472 = vld [vmem:[#allocation8 + $0x3b0] sm:$0xff]
    %v473 = vld [vmem:[#allocation8 + $0x3b8] sm:$0xff]
    %v474 = vld [vmem:[#allocation8 + $0x3c0] sm:$0xff]
    %v475 = vld [vmem:[#allocation8 + $0x3c8] sm:$0xff]
    %v476 = vld [vmem:[#allocation8 + $0x3d0] sm:$0xff]
    %v477 = vld [vmem:[#allocation8 + $0x3d8] sm:$0xff]
    %v478 = vld [vmem:[#allocation8 + $0x3e0] sm:$0xff]
    %v479 = vld [vmem:[#allocation8 + $0x3e8] sm:$0xff]
    %v480 = vld [vmem:[#allocation8 + $0x3f0] sm:$0xff]
    %v481 = vld [vmem:[#allocation8 + $0x3f8] sm:$0xff]
    %v482 = vld [vmem:[#allocation8 + $0x400] sm:$0xff]
    %v483 = vld [vmem:[#allocation8 + $0x408] sm:$0xff]
    %v484 = vld [vmem:[#allocation8 + $0x410] sm:$0xff]
    %v485 = vld [vmem:[#allocation8 + $0x418] sm:$0xff]
    %v486 = vld [vmem:[#allocation8 + $0x420] sm:$0xff]
    %v487 = vld [vmem:[#allocation8 + $0x428] sm:$0xff]
    %v488 = vld [vmem:[#allocation8 + $0x430] sm:$0xff]
    %v489 = vld [vmem:[#allocation8 + $0x438] sm:$0xff]
    %v490 = vld [vmem:[#allocation8 + $0x440] sm:$0xff]
    %v491 = vld [vmem:[#allocation8 + $0x448] sm:$0xff]
    %v492 = vld [vmem:[#allocation8 + $0x450] sm:$0xff]
    %v493 = vld [vmem:[#allocation8 + $0x458] sm:$0xff]
    %v494 = vld [vmem:[#allocation8 + $0x460] sm:$0xff]
    %v495 = vld [vmem:[#allocation8 + $0x468] sm:$0xff]
    %v496 = vld [vmem:[#allocation8 + $0x470] sm:$0xff]
    %v497 = vld [vmem:[#allocation8 + $0x478] sm:$0xff]
    %v498 = vld [vmem:[#allocation8 + $0x480] sm:$0xff]
    %v499 = vld [vmem:[#allocation8 + $0x488] sm:$0xff]
    %v500 = vld [vmem:[#allocation8 + $0x490] sm:$0xff]
    %v501 = vld [vmem:[#allocation8 + $0x498] sm:$0xff]
    %v502 = vld [vmem:[#allocation8 + $0x4a0] sm:$0xff]
    %v503 = vld [vmem:[#allocation8 + $0x4a8] sm:$0xff]
    %v504 = vld [vmem:[#allocation8 + $0x4b0] sm:$0xff]
    %v505 = vld [vmem:[#allocation8 + $0x4b8] sm:$0xff]
    %v506 = vld [vmem:[#allocation8 + $0x4c0] sm:$0xff]
    %v507 = vld [vmem:[#allocation8 + $0x4c8] sm:$0xff]
    %v508 = vld [vmem:[#allocation8 + $0x4d0] sm:$0xff]
    %v509 = vld [vmem:[#allocation8 + $0x4d8] sm:$0xff]
    %v510 = vld [vmem:[#allocation8 + $0x4e0] sm:$0xff]
    %v511 = vld [vmem:[#allocation8 + $0x4e8] sm:$0xff]
    %v512 = vld [vmem:[#allocation8 + $0x4f0] sm:$0xff]
    %v513 = vld [vmem:[#allocation8 + $0x4f8] sm:$0xff]
    %v514 = vld [vmem:[#allocation8 + $0x500] sm:$0xff]
    %v515 = vld [vmem:[#allocation8 + $0x508] sm:$0xff]
    %v516 = vld [vmem:[#allocation8 + $0x510] sm:$0xff]
    %v517 = vld [vmem:[#allocation8 + $0x518] sm:$0xff]
    %v518 = vld [vmem:[#allocation8 + $0x520] sm:$0xff]
    %v519 = vld [vmem:[#allocation8 + $0x528] sm:$0xff]
    %v520 = vld [vmem:[#allocation8 + $0x530] sm:$0xff]
    %v521 = vld [vmem:[#allocation8 + $0x538] sm:$0xff]
    %v522 = vld [vmem:[#allocation8 + $0x540] sm:$0xff]
    %v523 = vld [vmem:[#allocation8 + $0x548] sm:$0xff]
    %v524 = vld [vmem:[#allocation8 + $0x550] sm:$0xff]
    %v525 = vld [vmem:[#allocation8 + $0x558] sm:$0xff]
    %v526 = vld [vmem:[#allocation8 + $0x560] sm:$0xff]
    %v527 = vld [vmem:[#allocation8 + $0x568] sm:$0xff]
    %v528 = vld [vmem:[#allocation8 + $0x570] sm:$0xff]
    %v529 = vld [vmem:[#allocation8 + $0x578] sm:$0xff]
    %v530 = vld [vmem:[#allocation8 + $0x580] sm:$0xff]
    %v531 = vld [vmem:[#allocation8 + $0x588] sm:$0xff]
    %v532 = vld [vmem:[#allocation8 + $0x590] sm:$0xff]
    %v533 = vld [vmem:[#allocation8 + $0x598] sm:$0xff]
    %v534 = vld [vmem:[#allocation8 + $0x5a0] sm:$0xff]
    %v535 = vld [vmem:[#allocation8 + $0x5a8] sm:$0xff]
    %v536 = vld [vmem:[#allocation8 + $0x5b0] sm:$0xff]
    %v537 = vld [vmem:[#allocation8 + $0x5b8] sm:$0xff]
    %v538 = vld [vmem:[#allocation8 + $0x5c0] sm:$0xff]
    %v539 = vld [vmem:[#allocation8 + $0x5c8] sm:$0xff]
    %v540 = vld [vmem:[#allocation8 + $0x5d0] sm:$0xff]
    %v541 = vld [vmem:[#allocation8 + $0x5d8] sm:$0xff]
    %v542 = vld [vmem:[#allocation8 + $0x5e0] sm:$0xff]
    %v543 = vld [vmem:[#allocation8 + $0x5e8] sm:$0xff]
    %v544 = vld [vmem:[#allocation8 + $0x5f0] sm:$0xff]
    %v545 = vld [vmem:[#allocation8 + $0x5f8] sm:$0xff]
    %v546 = vld [vmem:[%s4] sm:$0x3f]
    %v547 = vpack.c.bf16 %v350, %v350
    %v548 = vpack.c.bf16 %v351, %v351
    %v549 = vpack.c.bf16 %v352, %v352
    %v550 = vpack.c.bf16 %v353, %v353
    %v552 = vlaneseq
    %v553 = vshrl.u32 %v552, 7
    %v554 = vsub.s32 0, %v553
    %v555 = vrot.slane %v546, %v554
    %v556 = vlaneseq
    %v557 = vshrl.u32 %v556, 7
    %v558 = vsub.s32 1, %v557
    %v559 = vrot.slane %v546, %v558
    %v560 = vlaneseq
    %v561 = vshrl.u32 %v560, 7
    %v562 = vsub.s32 2, %v561
    %v563 = vrot.slane %v546, %v562
    %v564 = vlaneseq
    %v565 = vshrl.u32 %v564, 7
    %v566 = vsub.s32 3, %v565
    %v567 = vrot.slane %v546, %v566
    %v568 = vlaneseq
    %v569 = vshrl.u32 %v568, 7
    %v570 = vsub.s32 4, %v569
    %v571 = vrot.slane %v546, %v570
    %v572 = vlaneseq
    %v573 = vshrl.u32 %v572, 7
    %v574 = vsub.s32 5, %v573
    %v575 = vrot.slane %v546, %v574
    %v774 = vunpack.c.l.b16 %v354
    %v775 = vunpack.c.h.b16 %v354
    %v776 = vunpack.c.l.b16 %v355
    %v777 = vunpack.c.h.b16 %v355
    %v778 = vunpack.c.l.b16 %v356
    %v779 = vunpack.c.h.b16 %v356
    %v780 = vunpack.c.l.b16 %v357
    %v781 = vunpack.c.h.b16 %v357
    %v782 = vunpack.c.l.b16 %v358
    %v783 = vunpack.c.h.b16 %v358
    %v784 = vunpack.c.l.b16 %v359
    %v785 = vunpack.c.h.b16 %v359
    %v786 = vunpack.c.l.b16 %v360
    %v787 = vunpack.c.h.b16 %v360
    %v788 = vunpack.c.l.b16 %v361
    %v789 = vunpack.c.h.b16 %v361
    %v790 = vunpack.c.l.b16 %v362
    %v791 = vunpack.c.h.b16 %v362
    %v792 = vunpack.c.l.b16 %v363
    %v793 = vunpack.c.h.b16 %v363
    %v794 = vunpack.c.l.b16 %v364
    %v795 = vunpack.c.h.b16 %v364
    %v796 = vunpack.c.l.b16 %v365
    %v797 = vunpack.c.h.b16 %v365
    %v798 = vunpack.c.l.b16 %v366
    %v799 = vunpack.c.h.b16 %v366
    %v800 = vunpack.c.l.b16 %v367
    %v801 = vunpack.c.h.b16 %v367
    %v802 = vunpack.c.l.b16 %v368
    %v803 = vunpack.c.h.b16 %v368
    %v804 = vunpack.c.l.b16 %v369
    %v805 = vunpack.c.h.b16 %v369
    %v806 = vunpack.c.l.b16 %v370
    %v807 = vunpack.c.h.b16 %v370
    %v808 = vunpack.c.l.b16 %v371
    %v809 = vunpack.c.h.b16 %v371
    %v810 = vunpack.c.l.b16 %v372
    %v811 = vunpack.c.h.b16 %v372
    %v812 = vunpack.c.l.b16 %v373
    %v813 = vunpack.c.h.b16 %v373
    %v814 = vunpack.c.l.b16 %v374
    %v815 = vunpack.c.h.b16 %v374
    %v816 = vunpack.c.l.b16 %v375
    %v817 = vunpack.c.h.b16 %v375
    %v818 = vunpack.c.l.b16 %v376
    %v819 = vunpack.c.h.b16 %v376
    %v820 = vunpack.c.l.b16 %v377
    %v821 = vunpack.c.h.b16 %v377
    %v822 = vunpack.c.l.b16 %v378
    %v823 = vunpack.c.h.b16 %v378
    %v824 = vunpack.c.l.b16 %v379
    %v825 = vunpack.c.h.b16 %v379
    %v826 = vunpack.c.l.b16 %v380
    %v827 = vunpack.c.h.b16 %v380
    %v828 = vunpack.c.l.b16 %v381
    %v829 = vunpack.c.h.b16 %v381
    %v830 = vunpack.c.l.b16 %v382
    %v831 = vunpack.c.h.b16 %v382
    %v832 = vunpack.c.l.b16 %v383
    %v833 = vunpack.c.h.b16 %v383
    %v834 = vunpack.c.l.b16 %v384
    %v835 = vunpack.c.h.b16 %v384
    %v836 = vunpack.c.l.b16 %v385
    %v837 = vunpack.c.h.b16 %v385
    %v838 = vunpack.c.l.b16 %v386
    %v839 = vunpack.c.h.b16 %v386
    %v840 = vunpack.c.l.b16 %v387
    %v841 = vunpack.c.h.b16 %v387
    %v842 = vunpack.c.l.b16 %v388
    %v843 = vunpack.c.h.b16 %v388
    %v844 = vunpack.c.l.b16 %v389
    %v845 = vunpack.c.h.b16 %v389
    %v846 = vunpack.c.l.b16 %v390
    %v847 = vunpack.c.h.b16 %v390
    %v848 = vunpack.c.l.b16 %v391
    %v849 = vunpack.c.h.b16 %v391
    %v850 = vunpack.c.l.b16 %v392
    %v851 = vunpack.c.h.b16 %v392
    %v852 = vunpack.c.l.b16 %v393
    %v853 = vunpack.c.h.b16 %v393
    %v854 = vunpack.c.l.b16 %v394
    %v855 = vunpack.c.h.b16 %v394
    %v856 = vunpack.c.l.b16 %v395
    %v857 = vunpack.c.h.b16 %v395
    %v858 = vunpack.c.l.b16 %v396
    %v859 = vunpack.c.h.b16 %v396
    %v860 = vunpack.c.l.b16 %v397
    %v861 = vunpack.c.h.b16 %v397
    %v862 = vunpack.c.l.b16 %v398
    %v863 = vunpack.c.h.b16 %v398
    %v864 = vunpack.c.l.b16 %v399
    %v865 = vunpack.c.h.b16 %v399
    %v866 = vunpack.c.l.b16 %v400
    %v867 = vunpack.c.h.b16 %v400
    %v868 = vunpack.c.l.b16 %v401
    %v869 = vunpack.c.h.b16 %v401
    %v870 = vunpack.c.l.b16 %v402
    %v871 = vunpack.c.h.b16 %v402
    %v872 = vunpack.c.l.b16 %v403
    %v873 = vunpack.c.h.b16 %v403
    %v874 = vunpack.c.l.b16 %v404
    %v875 = vunpack.c.h.b16 %v404
    %v876 = vunpack.c.l.b16 %v405
    %v877 = vunpack.c.h.b16 %v405
    %v878 = vunpack.c.l.b16 %v406
    %v879 = vunpack.c.h.b16 %v406
    %v880 = vunpack.c.l.b16 %v407
    %v881 = vunpack.c.h.b16 %v407
    %v882 = vunpack.c.l.b16 %v408
    %v883 = vunpack.c.h.b16 %v408
    %v884 = vunpack.c.l.b16 %v409
    %v885 = vunpack.c.h.b16 %v409
    %v886 = vunpack.c.l.b16 %v410
    %v887 = vunpack.c.h.b16 %v410
    %v888 = vunpack.c.l.b16 %v411
    %v889 = vunpack.c.h.b16 %v411
    %v890 = vunpack.c.l.b16 %v412
    %v891 = vunpack.c.h.b16 %v412
    %v892 = vunpack.c.l.b16 %v413
    %v893 = vunpack.c.h.b16 %v413
    %v894 = vunpack.c.l.b16 %v414
    %v895 = vunpack.c.h.b16 %v414
    %v896 = vunpack.c.l.b16 %v415
    %v897 = vunpack.c.h.b16 %v415
    %v898 = vunpack.c.l.b16 %v416
    %v899 = vunpack.c.h.b16 %v416
    %v900 = vunpack.c.l.b16 %v417
    %v901 = vunpack.c.h.b16 %v417
    %v902 = vunpack.c.l.b16 %v418
    %v903 = vunpack.c.h.b16 %v418
    %v904 = vunpack.c.l.b16 %v419
    %v905 = vunpack.c.h.b16 %v419
    %v906 = vunpack.c.l.b16 %v420
    %v907 = vunpack.c.h.b16 %v420
    %v908 = vunpack.c.l.b16 %v421
    %v909 = vunpack.c.h.b16 %v421
    %v910 = vunpack.c.l.b16 %v422
    %v911 = vunpack.c.h.b16 %v422
    %v912 = vunpack.c.l.b16 %v423
    %v913 = vunpack.c.h.b16 %v423
    %v914 = vunpack.c.l.b16 %v424
    %v915 = vunpack.c.h.b16 %v424
    %v916 = vunpack.c.l.b16 %v425
    %v917 = vunpack.c.h.b16 %v425
    %v918 = vunpack.c.l.b16 %v426
    %v919 = vunpack.c.h.b16 %v426
    %v920 = vunpack.c.l.b16 %v427
    %v921 = vunpack.c.h.b16 %v427
    %v922 = vunpack.c.l.b16 %v428
    %v923 = vunpack.c.h.b16 %v428
    %v924 = vunpack.c.l.b16 %v429
    %v925 = vunpack.c.h.b16 %v429
    %v926 = vunpack.c.l.b16 %v430
    %v927 = vunpack.c.h.b16 %v430
    %v928 = vunpack.c.l.b16 %v431
    %v929 = vunpack.c.h.b16 %v431
    %v930 = vunpack.c.l.b16 %v432
    %v931 = vunpack.c.h.b16 %v432
    %v932 = vunpack.c.l.b16 %v433
    %v933 = vunpack.c.h.b16 %v433
    %v934 = vunpack.c.l.b16 %v434
    %v935 = vunpack.c.h.b16 %v434
    %v936 = vunpack.c.l.b16 %v435
    %v937 = vunpack.c.h.b16 %v435
    %v938 = vunpack.c.l.b16 %v436
    %v939 = vunpack.c.h.b16 %v436
    %v940 = vunpack.c.l.b16 %v437
    %v941 = vunpack.c.h.b16 %v437
    %v942 = vunpack.c.l.b16 %v438
    %v943 = vunpack.c.h.b16 %v438
    %v944 = vunpack.c.l.b16 %v439
    %v945 = vunpack.c.h.b16 %v439
    %v946 = vunpack.c.l.b16 %v440
    %v947 = vunpack.c.h.b16 %v440
    %v948 = vunpack.c.l.b16 %v441
    %v949 = vunpack.c.h.b16 %v441
    %v950 = vunpack.c.l.b16 %v442
    %v951 = vunpack.c.h.b16 %v442
    %v952 = vunpack.c.l.b16 %v443
    %v953 = vunpack.c.h.b16 %v443
    %v954 = vunpack.c.l.b16 %v444
    %v955 = vunpack.c.h.b16 %v444
    %v956 = vunpack.c.l.b16 %v445
    %v957 = vunpack.c.h.b16 %v445
    %v958 = vunpack.c.l.b16 %v446
    %v959 = vunpack.c.h.b16 %v446
    %v960 = vunpack.c.l.b16 %v447
    %v961 = vunpack.c.h.b16 %v447
    %v962 = vunpack.c.l.b16 %v448
    %v963 = vunpack.c.h.b16 %v448
    %v964 = vunpack.c.l.b16 %v449
    %v965 = vunpack.c.h.b16 %v449
    %v966 = vunpack.c.l.b16 %v450
    %v967 = vunpack.c.h.b16 %v450
    %v968 = vunpack.c.l.b16 %v451
    %v969 = vunpack.c.h.b16 %v451
    %v970 = vunpack.c.l.b16 %v452
    %v971 = vunpack.c.h.b16 %v452
    %v972 = vunpack.c.l.b16 %v453
    %v973 = vunpack.c.h.b16 %v453
    %v974 = vunpack.c.l.b16 %v454
    %v975 = vunpack.c.h.b16 %v454
    %v976 = vunpack.c.l.b16 %v455
    %v977 = vunpack.c.h.b16 %v455
    %v978 = vunpack.c.l.b16 %v456
    %v979 = vunpack.c.h.b16 %v456
    %v980 = vunpack.c.l.b16 %v457
    %v981 = vunpack.c.h.b16 %v457
    %v982 = vunpack.c.l.b16 %v458
    %v983 = vunpack.c.h.b16 %v458
    %v984 = vunpack.c.l.b16 %v459
    %v985 = vunpack.c.h.b16 %v459
    %v986 = vunpack.c.l.b16 %v460
    %v987 = vunpack.c.h.b16 %v460
    %v988 = vunpack.c.l.b16 %v461
    %v989 = vunpack.c.h.b16 %v461
    %v990 = vunpack.c.l.b16 %v462
    %v991 = vunpack.c.h.b16 %v462
    %v992 = vunpack.c.l.b16 %v463
    %v993 = vunpack.c.h.b16 %v463
    %v994 = vunpack.c.l.b16 %v464
    %v995 = vunpack.c.h.b16 %v464
    %v996 = vunpack.c.l.b16 %v465
    %v997 = vunpack.c.h.b16 %v465
    %v998 = vunpack.c.l.b16 %v466
    %v999 = vunpack.c.h.b16 %v466
    %v1000 = vunpack.c.l.b16 %v467
    %v1001 = vunpack.c.h.b16 %v467
    %v1002 = vunpack.c.l.b16 %v468
    %v1003 = vunpack.c.h.b16 %v468
    %v1004 = vunpack.c.l.b16 %v469
    %v1005 = vunpack.c.h.b16 %v469
    %v1006 = vunpack.c.l.b16 %v470
    %v1007 = vunpack.c.h.b16 %v470
    %v1008 = vunpack.c.l.b16 %v471
    %v1009 = vunpack.c.h.b16 %v471
    %v1010 = vunpack.c.l.b16 %v472
    %v1011 = vunpack.c.h.b16 %v472
    %v1012 = vunpack.c.l.b16 %v473
    %v1013 = vunpack.c.h.b16 %v473
    %v1014 = vunpack.c.l.b16 %v474
    %v1015 = vunpack.c.h.b16 %v474
    %v1016 = vunpack.c.l.b16 %v475
    %v1017 = vunpack.c.h.b16 %v475
    %v1018 = vunpack.c.l.b16 %v476
    %v1019 = vunpack.c.h.b16 %v476
    %v1020 = vunpack.c.l.b16 %v477
    %v1021 = vunpack.c.h.b16 %v477
    %v1022 = vunpack.c.l.b16 %v478
    %v1023 = vunpack.c.h.b16 %v478
    %v1024 = vunpack.c.l.b16 %v479
    %v1025 = vunpack.c.h.b16 %v479
    %v1026 = vunpack.c.l.b16 %v480
    %v1027 = vunpack.c.h.b16 %v480
    %v1028 = vunpack.c.l.b16 %v481
    %v1029 = vunpack.c.h.b16 %v481
    %v1030 = vunpack.c.l.b16 %v482
    %v1031 = vunpack.c.h.b16 %v482
    %v1032 = vunpack.c.l.b16 %v483
    %v1033 = vunpack.c.h.b16 %v483
    %v1034 = vunpack.c.l.b16 %v484
    %v1035 = vunpack.c.h.b16 %v484
    %v1036 = vunpack.c.l.b16 %v485
    %v1037 = vunpack.c.h.b16 %v485
    %v1038 = vunpack.c.l.b16 %v486
    %v1039 = vunpack.c.h.b16 %v486
    %v1040 = vunpack.c.l.b16 %v487
    %v1041 = vunpack.c.h.b16 %v487
    %v1042 = vunpack.c.l.b16 %v488
    %v1043 = vunpack.c.h.b16 %v488
    %v1044 = vunpack.c.l.b16 %v489
    %v1045 = vunpack.c.h.b16 %v489
    %v1046 = vunpack.c.l.b16 %v490
    %v1047 = vunpack.c.h.b16 %v490
    %v1048 = vunpack.c.l.b16 %v491
    %v1049 = vunpack.c.h.b16 %v491
    %v1050 = vunpack.c.l.b16 %v492
    %v1051 = vunpack.c.h.b16 %v492
    %v1052 = vunpack.c.l.b16 %v493
    %v1053 = vunpack.c.h.b16 %v493
    %v1054 = vunpack.c.l.b16 %v494
    %v1055 = vunpack.c.h.b16 %v494
    %v1056 = vunpack.c.l.b16 %v495
    %v1057 = vunpack.c.h.b16 %v495
    %v1058 = vunpack.c.l.b16 %v496
    %v1059 = vunpack.c.h.b16 %v496
    %v1060 = vunpack.c.l.b16 %v497
    %v1061 = vunpack.c.h.b16 %v497
    %v1062 = vunpack.c.l.b16 %v498
    %v1063 = vunpack.c.h.b16 %v498
    %v1064 = vunpack.c.l.b16 %v499
    %v1065 = vunpack.c.h.b16 %v499
    %v1066 = vunpack.c.l.b16 %v500
    %v1067 = vunpack.c.h.b16 %v500
    %v1068 = vunpack.c.l.b16 %v501
    %v1069 = vunpack.c.h.b16 %v501
    %v1070 = vunpack.c.l.b16 %v502
    %v1071 = vunpack.c.h.b16 %v502
    %v1072 = vunpack.c.l.b16 %v503
    %v1073 = vunpack.c.h.b16 %v503
    %v1074 = vunpack.c.l.b16 %v504
    %v1075 = vunpack.c.h.b16 %v504
    %v1076 = vunpack.c.l.b16 %v505
    %v1077 = vunpack.c.h.b16 %v505
    %v1078 = vunpack.c.l.b16 %v506
    %v1079 = vunpack.c.h.b16 %v506
    %v1080 = vunpack.c.l.b16 %v507
    %v1081 = vunpack.c.h.b16 %v507
    %v1082 = vunpack.c.l.b16 %v508
    %v1083 = vunpack.c.h.b16 %v508
    %v1084 = vunpack.c.l.b16 %v509
    %v1085 = vunpack.c.h.b16 %v509
    %v1086 = vunpack.c.l.b16 %v510
    %v1087 = vunpack.c.h.b16 %v510
    %v1088 = vunpack.c.l.b16 %v511
    %v1089 = vunpack.c.h.b16 %v511
    %v1090 = vunpack.c.l.b16 %v512
    %v1091 = vunpack.c.h.b16 %v512
    %v1092 = vunpack.c.l.b16 %v513
    %v1093 = vunpack.c.h.b16 %v513
    %v1094 = vunpack.c.l.b16 %v514
    %v1095 = vunpack.c.h.b16 %v514
    %v1096 = vunpack.c.l.b16 %v515
    %v1097 = vunpack.c.h.b16 %v515
    %v1098 = vunpack.c.l.b16 %v516
    %v1099 = vunpack.c.h.b16 %v516
    %v1100 = vunpack.c.l.b16 %v517
    %v1101 = vunpack.c.h.b16 %v517
    %v1102 = vunpack.c.l.b16 %v518
    %v1103 = vunpack.c.h.b16 %v518
    %v1104 = vunpack.c.l.b16 %v519
    %v1105 = vunpack.c.h.b16 %v519
    %v1106 = vunpack.c.l.b16 %v520
    %v1107 = vunpack.c.h.b16 %v520
    %v1108 = vunpack.c.l.b16 %v521
    %v1109 = vunpack.c.h.b16 %v521
    %v1110 = vunpack.c.l.b16 %v522
    %v1111 = vunpack.c.h.b16 %v522
    %v1112 = vunpack.c.l.b16 %v523
    %v1113 = vunpack.c.h.b16 %v523
    %v1114 = vunpack.c.l.b16 %v524
    %v1115 = vunpack.c.h.b16 %v524
    %v1116 = vunpack.c.l.b16 %v525
    %v1117 = vunpack.c.h.b16 %v525
    %v1118 = vunpack.c.l.b16 %v526
    %v1119 = vunpack.c.h.b16 %v526
    %v1120 = vunpack.c.l.b16 %v527
    %v1121 = vunpack.c.h.b16 %v527
    %v1122 = vunpack.c.l.b16 %v528
    %v1123 = vunpack.c.h.b16 %v528
    %v1124 = vunpack.c.l.b16 %v529
    %v1125 = vunpack.c.h.b16 %v529
    %v1126 = vunpack.c.l.b16 %v530
    %v1127 = vunpack.c.h.b16 %v530
    %v1128 = vunpack.c.l.b16 %v531
    %v1129 = vunpack.c.h.b16 %v531
    %v1130 = vunpack.c.l.b16 %v532
    %v1131 = vunpack.c.h.b16 %v532
    %v1132 = vunpack.c.l.b16 %v533
    %v1133 = vunpack.c.h.b16 %v533
    %v1134 = vunpack.c.l.b16 %v534
    %v1135 = vunpack.c.h.b16 %v534
    %v1136 = vunpack.c.l.b16 %v535
    %v1137 = vunpack.c.h.b16 %v535
    %v1138 = vunpack.c.l.b16 %v536
    %v1139 = vunpack.c.h.b16 %v536
    %v1140 = vunpack.c.l.b16 %v537
    %v1141 = vunpack.c.h.b16 %v537
    %v1142 = vunpack.c.l.b16 %v538
    %v1143 = vunpack.c.h.b16 %v538
    %v1144 = vunpack.c.l.b16 %v539
    %v1145 = vunpack.c.h.b16 %v539
    %v1146 = vunpack.c.l.b16 %v540
    %v1147 = vunpack.c.h.b16 %v540
    %v1148 = vunpack.c.l.b16 %v541
    %v1149 = vunpack.c.h.b16 %v541
    %v1150 = vunpack.c.l.b16 %v542
    %v1151 = vunpack.c.h.b16 %v542
    %v1152 = vunpack.c.l.b16 %v543
    %v1153 = vunpack.c.h.b16 %v543
    %v1154 = vunpack.c.l.b16 %v544
    %v1155 = vunpack.c.h.b16 %v544
    %v1156 = vunpack.c.l.b16 %v545
    %v1157 = vunpack.c.h.b16 %v545
    %v1158 = vpack.c.b16 %v780, %v774
    %v1159 = vpack.c.b16 %v781, %v775
    %v1160 = vpack.c.b16 %v782, %v776
    %v1161 = vpack.c.b16 %v783, %v777
    %v1162 = vpack.c.b16 %v784, %v778
    %v1163 = vpack.c.b16 %v785, %v779
    %v1164 = vpack.c.b16 %v792, %v786
    %v1165 = vpack.c.b16 %v793, %v787
    %v1166 = vpack.c.b16 %v794, %v788
    %v1167 = vpack.c.b16 %v795, %v789
    %v1168 = vpack.c.b16 %v796, %v790
    %v1169 = vpack.c.b16 %v797, %v791
    %v1170 = vpack.c.b16 %v804, %v798
    %v1171 = vpack.c.b16 %v805, %v799
    %v1172 = vpack.c.b16 %v806, %v800
    %v1173 = vpack.c.b16 %v807, %v801
    %v1174 = vpack.c.b16 %v808, %v802
    %v1175 = vpack.c.b16 %v809, %v803
    %v1176 = vpack.c.b16 %v816, %v810
    %v1177 = vpack.c.b16 %v817, %v811
    %v1178 = vpack.c.b16 %v818, %v812
    %v1179 = vpack.c.b16 %v819, %v813
    %v1180 = vpack.c.b16 %v820, %v814
    %v1181 = vpack.c.b16 %v821, %v815
    %v1182 = vpack.c.b16 %v828, %v822
    %v1183 = vpack.c.b16 %v829, %v823
    %v1184 = vpack.c.b16 %v830, %v824
    %v1185 = vpack.c.b16 %v831, %v825
    %v1186 = vpack.c.b16 %v832, %v826
    %v1187 = vpack.c.b16 %v833, %v827
    %v1188 = vpack.c.b16 %v840, %v834
    %v1189 = vpack.c.b16 %v841, %v835
    %v1190 = vpack.c.b16 %v842, %v836
    %v1191 = vpack.c.b16 %v843, %v837
    %v1192 = vpack.c.b16 %v844, %v838
    %v1193 = vpack.c.b16 %v845, %v839
    %v1194 = vpack.c.b16 %v852, %v846
    %v1195 = vpack.c.b16 %v853, %v847
    %v1196 = vpack.c.b16 %v854, %v848
    %v1197 = vpack.c.b16 %v855, %v849
    %v1198 = vpack.c.b16 %v856, %v850
    %v1199 = vpack.c.b16 %v857, %v851
    %v1200 = vpack.c.b16 %v864, %v858
    %v1201 = vpack.c.b16 %v865, %v859
    %v1202 = vpack.c.b16 %v866, %v860
    %v1203 = vpack.c.b16 %v867, %v861
    %v1204 = vpack.c.b16 %v868, %v862
    %v1205 = vpack.c.b16 %v869, %v863
    %v1206 = vpack.c.b16 %v876, %v870
    %v1207 = vpack.c.b16 %v877, %v871
    %v1208 = vpack.c.b16 %v878, %v872
    %v1209 = vpack.c.b16 %v879, %v873
    %v1210 = vpack.c.b16 %v880, %v874
    %v1211 = vpack.c.b16 %v881, %v875
    %v1212 = vpack.c.b16 %v888, %v882
    %v1213 = vpack.c.b16 %v889, %v883
    %v1214 = vpack.c.b16 %v890, %v884
    %v1215 = vpack.c.b16 %v891, %v885
    %v1216 = vpack.c.b16 %v892, %v886
    %v1217 = vpack.c.b16 %v893, %v887
    %v1218 = vpack.c.b16 %v900, %v894
    %v1219 = vpack.c.b16 %v901, %v895
    %v1220 = vpack.c.b16 %v902, %v896
    %v1221 = vpack.c.b16 %v903, %v897
    %v1222 = vpack.c.b16 %v904, %v898
    %v1223 = vpack.c.b16 %v905, %v899
    %v1224 = vpack.c.b16 %v912, %v906
    %v1225 = vpack.c.b16 %v913, %v907
    %v1226 = vpack.c.b16 %v914, %v908
    %v1227 = vpack.c.b16 %v915, %v909
    %v1228 = vpack.c.b16 %v916, %v910
    %v1229 = vpack.c.b16 %v917, %v911
    %v1230 = vpack.c.b16 %v924, %v918
    %v1231 = vpack.c.b16 %v925, %v919
    %v1232 = vpack.c.b16 %v926, %v920
    %v1233 = vpack.c.b16 %v927, %v921
    %v1234 = vpack.c.b16 %v928, %v922
    %v1235 = vpack.c.b16 %v929, %v923
    %v1236 = vpack.c.b16 %v936, %v930
    %v1237 = vpack.c.b16 %v937, %v931
    %v1238 = vpack.c.b16 %v938, %v932
    %v1239 = vpack.c.b16 %v939, %v933
    %v1240 = vpack.c.b16 %v940, %v934
    %v1241 = vpack.c.b16 %v941, %v935
    %v1242 = vpack.c.b16 %v948, %v942
    %v1243 = vpack.c.b16 %v949, %v943
    %v1244 = vpack.c.b16 %v950, %v944
    %v1245 = vpack.c.b16 %v951, %v945
    %v1246 = vpack.c.b16 %v952, %v946
    %v1247 = vpack.c.b16 %v953, %v947
    %v1248 = vpack.c.b16 %v960, %v954
    %v1249 = vpack.c.b16 %v961, %v955
    %v1250 = vpack.c.b16 %v962, %v956
    %v1251 = vpack.c.b16 %v963, %v957
    %v1252 = vpack.c.b16 %v964, %v958
    %v1253 = vpack.c.b16 %v965, %v959
    %v1254 = vpack.c.b16 %v972, %v966
    %v1255 = vpack.c.b16 %v973, %v967
    %v1256 = vpack.c.b16 %v974, %v968
    %v1257 = vpack.c.b16 %v975, %v969
    %v1258 = vpack.c.b16 %v976, %v970
    %v1259 = vpack.c.b16 %v977, %v971
    %v1260 = vpack.c.b16 %v984, %v978
    %v1261 = vpack.c.b16 %v985, %v979
    %v1262 = vpack.c.b16 %v986, %v980
    %v1263 = vpack.c.b16 %v987, %v981
    %v1264 = vpack.c.b16 %v988, %v982
    %v1265 = vpack.c.b16 %v989, %v983
    %v1266 = vpack.c.b16 %v996, %v990
    %v1267 = vpack.c.b16 %v997, %v991
    %v1268 = vpack.c.b16 %v998, %v992
    %v1269 = vpack.c.b16 %v999, %v993
    %v1270 = vpack.c.b16 %v1000, %v994
    %v1271 = vpack.c.b16 %v1001, %v995
    %v1272 = vpack.c.b16 %v1008, %v1002
    %v1273 = vpack.c.b16 %v1009, %v1003
    %v1274 = vpack.c.b16 %v1010, %v1004
    %v1275 = vpack.c.b16 %v1011, %v1005
    %v1276 = vpack.c.b16 %v1012, %v1006
    %v1277 = vpack.c.b16 %v1013, %v1007
    %v1278 = vpack.c.b16 %v1020, %v1014
    %v1279 = vpack.c.b16 %v1021, %v1015
    %v1280 = vpack.c.b16 %v1022, %v1016
    %v1281 = vpack.c.b16 %v1023, %v1017
    %v1282 = vpack.c.b16 %v1024, %v1018
    %v1283 = vpack.c.b16 %v1025, %v1019
    %v1284 = vpack.c.b16 %v1032, %v1026
    %v1285 = vpack.c.b16 %v1033, %v1027
    %v1286 = vpack.c.b16 %v1034, %v1028
    %v1287 = vpack.c.b16 %v1035, %v1029
    %v1288 = vpack.c.b16 %v1036, %v1030
    %v1289 = vpack.c.b16 %v1037, %v1031
    %v1290 = vpack.c.b16 %v1044, %v1038
    %v1291 = vpack.c.b16 %v1045, %v1039
    %v1292 = vpack.c.b16 %v1046, %v1040
    %v1293 = vpack.c.b16 %v1047, %v1041
    %v1294 = vpack.c.b16 %v1048, %v1042
    %v1295 = vpack.c.b16 %v1049, %v1043
    %v1296 = vpack.c.b16 %v1056, %v1050
    %v1297 = vpack.c.b16 %v1057, %v1051
    %v1298 = vpack.c.b16 %v1058, %v1052
    %v1299 = vpack.c.b16 %v1059, %v1053
    %v1300 = vpack.c.b16 %v1060, %v1054
    %v1301 = vpack.c.b16 %v1061, %v1055
    %v1302 = vpack.c.b16 %v1068, %v1062
    %v1303 = vpack.c.b16 %v1069, %v1063
    %v1304 = vpack.c.b16 %v1070, %v1064
    %v1305 = vpack.c.b16 %v1071, %v1065
    %v1306 = vpack.c.b16 %v1072, %v1066
    %v1307 = vpack.c.b16 %v1073, %v1067
    %v1308 = vpack.c.b16 %v1080, %v1074
    %v1309 = vpack.c.b16 %v1081, %v1075
    %v1310 = vpack.c.b16 %v1082, %v1076
    %v1311 = vpack.c.b16 %v1083, %v1077
    %v1312 = vpack.c.b16 %v1084, %v1078
    %v1313 = vpack.c.b16 %v1085, %v1079
    %v1314 = vpack.c.b16 %v1092, %v1086
    %v1315 = vpack.c.b16 %v1093, %v1087
    %v1316 = vpack.c.b16 %v1094, %v1088
    %v1317 = vpack.c.b16 %v1095, %v1089
    %v1318 = vpack.c.b16 %v1096, %v1090
    %v1319 = vpack.c.b16 %v1097, %v1091
    %v1320 = vpack.c.b16 %v1104, %v1098
    %v1321 = vpack.c.b16 %v1105, %v1099
    %v1322 = vpack.c.b16 %v1106, %v1100
    %v1323 = vpack.c.b16 %v1107, %v1101
    %v1324 = vpack.c.b16 %v1108, %v1102
    %v1325 = vpack.c.b16 %v1109, %v1103
    %v1326 = vpack.c.b16 %v1116, %v1110
    %v1327 = vpack.c.b16 %v1117, %v1111
    %v1328 = vpack.c.b16 %v1118, %v1112
    %v1329 = vpack.c.b16 %v1119, %v1113
    %v1330 = vpack.c.b16 %v1120, %v1114
    %v1331 = vpack.c.b16 %v1121, %v1115
    %v1332 = vpack.c.b16 %v1128, %v1122
    %v1333 = vpack.c.b16 %v1129, %v1123
    %v1334 = vpack.c.b16 %v1130, %v1124
    %v1335 = vpack.c.b16 %v1131, %v1125
    %v1336 = vpack.c.b16 %v1132, %v1126
    %v1337 = vpack.c.b16 %v1133, %v1127
    %v1338 = vpack.c.b16 %v1140, %v1134
    %v1339 = vpack.c.b16 %v1141, %v1135
    %v1340 = vpack.c.b16 %v1142, %v1136
    %v1341 = vpack.c.b16 %v1143, %v1137
    %v1342 = vpack.c.b16 %v1144, %v1138
    %v1343 = vpack.c.b16 %v1145, %v1139
    %v1344 = vpack.c.b16 %v1152, %v1146
    %v1345 = vpack.c.b16 %v1153, %v1147
    %v1346 = vpack.c.b16 %v1154, %v1148
    %v1347 = vpack.c.b16 %v1155, %v1149
    %v1348 = vpack.c.b16 %v1156, %v1150
    %v1349 = vpack.c.b16 %v1157, %v1151
    %1542 = vmatprep.subr.bf16.mxu0 %v1201
    %1543 = vmatpush1.bf16.msra.mxu0 %v1200
    %1544 = vmatprep.subr.bf16.mxu0 %v1195
    %1545 = vmatpush1.bf16.msra.mxu0 %v1194
    %1546 = vmatprep.subr.bf16.mxu0 %v1189
    %1547 = vmatpush1.bf16.msra.mxu0 %v1188
    %1548 = vmatprep.subr.bf16.mxu0 %v1183
    %1549 = vmatpush1.bf16.msra.mxu0 %v1182
    %1550 = vmatprep.subr.bf16.mxu0 %v1177
    %1551 = vmatpush1.bf16.msra.mxu0 %v1176
    %1552 = vmatprep.subr.bf16.mxu0 %v1171
    %1553 = vmatpush1.bf16.msra.mxu0 %v1170
    %1554 = vmatprep.subr.bf16.mxu0 %v1165
    %1555 = vmatpush1.bf16.msra.mxu0 %v1164
    %1556 = vmatprep.subr.bf16.mxu0 %v1159
    %1557 = vmatpush1.bf16.msra.mxu0 %v1158
    %1558 = vmatprep.subr.bf16.mxu0 %v1249
    %1559 = vmatpush2.bf16.msra.mxu0 %v1248
    %1560 = vmatprep.subr.bf16.mxu0 %v1243
    %1561 = vmatpush2.bf16.msra.mxu0 %v1242
    %1562 = vmatprep.subr.bf16.mxu0 %v1237
    %1563 = vmatpush2.bf16.msra.mxu0 %v1236
    %1564 = vmatprep.subr.bf16.mxu0 %v1231
    %1565 = vmatpush2.bf16.msra.mxu0 %v1230
    %1566 = vmatprep.subr.bf16.mxu0 %v1225
    %1567 = vmatpush2.bf16.msra.mxu0 %v1224
    %1568 = vmatprep.subr.bf16.mxu0 %v1219
    %1569 = vmatpush2.bf16.msra.mxu0 %v1218
    %1570 = vmatprep.subr.bf16.mxu0 %v1213
    %1571 = vmatpush2.bf16.msra.mxu0 %v1212
    %1572 = vmatprep.subr.bf16.mxu0 %v1207
    %1573 = vmatpush2.bf16.msra.mxu0 %v1206
    %1574 = vmatprep.mubr.bf16.mxu0 %v548
    %1575 = vmatmul.mubr.bf16.gmra.mxu0 %v547
    %v1576 = vpop.f32.mrf.mxu0
    %v1577 = vadd.f32 %v555, %v1576
    %v1578 = vpop.f32.mrf.mxu0
    %v1579 = vadd.f32 %v559, %v1578
    %v1580 = vpop.f32.mrf.mxu0
    %v1581 = vpop.f32.mrf.mxu0
    %1582 = vdwg.mxu0
    %1583 = vmatprep.subr.bf16.mxu0 %v1297
    %1584 = vmatpush1.bf16.msra.mxu0 %v1296
    %1585 = vmatprep.subr.bf16.mxu0 %v1291
    %1586 = vmatpush1.bf16.msra.mxu0 %v1290
    %1587 = vmatprep.subr.bf16.mxu0 %v1285
    %1588 = vmatpush1.bf16.msra.mxu0 %v1284
    %1589 = vmatprep.subr.bf16.mxu0 %v1279
    %1590 = vmatpush1.bf16.msra.mxu0 %v1278
    %1591 = vmatprep.subr.bf16.mxu0 %v1273
    %1592 = vmatpush1.bf16.msra.mxu0 %v1272
    %1593 = vmatprep.subr.bf16.mxu0 %v1267
    %1594 = vmatpush1.bf16.msra.mxu0 %v1266
    %1595 = vmatprep.subr.bf16.mxu0 %v1261
    %1596 = vmatpush1.bf16.msra.mxu0 %v1260
    %1597 = vmatprep.subr.bf16.mxu0 %v1255
    %1598 = vmatpush1.bf16.msra.mxu0 %v1254
    %1599 = vmatprep.subr.bf16.mxu0 %v1345
    %1600 = vmatpush2.bf16.msra.mxu0 %v1344
    %1601 = vmatprep.subr.bf16.mxu0 %v1339
    %1602 = vmatpush2.bf16.msra.mxu0 %v1338
    %1603 = vmatprep.subr.bf16.mxu0 %v1333
    %1604 = vmatpush2.bf16.msra.mxu0 %v1332
    %1605 = vmatprep.subr.bf16.mxu0 %v1327
    %1606 = vmatpush2.bf16.msra.mxu0 %v1326
    %1607 = vmatprep.subr.bf16.mxu0 %v1321
    %1608 = vmatpush2.bf16.msra.mxu0 %v1320
    %1609 = vmatprep.subr.bf16.mxu0 %v1315
    %1610 = vmatpush2.bf16.msra.mxu0 %v1314
    %1611 = vmatprep.subr.bf16.mxu0 %v1309
    %1612 = vmatpush2.bf16.msra.mxu0 %v1308
    %1613 = vmatprep.subr.bf16.mxu0 %v1303
    %1614 = vmatpush2.bf16.msra.mxu0 %v1302
    %1615 = vmatprep.mubr.bf16.mxu0 %v550
    %1616 = vmatmul.mubr.bf16.gmra.mxu0 %v549
    %v1617 = vpop.f32.mrf.mxu0
    %v1618 = vadd.f32 %v1577, %v1617
    %v1619 = vpop.f32.mrf.mxu0
    %v1620 = vadd.f32 %v1579, %v1619
    %v1621 = vpop.f32.mrf.mxu0
    %v1622 = vpop.f32.mrf.mxu0
    %1623 = vdwg.mxu0
    %1624 = vmatprep.subr.bf16.mxu0 %v1203
    %1625 = vmatpush1.bf16.msra.mxu0 %v1202
    %1626 = vmatprep.subr.bf16.mxu0 %v1197
    %1627 = vmatpush1.bf16.msra.mxu0 %v1196
    %1628 = vmatprep.subr.bf16.mxu0 %v1191
    %1629 = vmatpush1.bf16.msra.mxu0 %v1190
    %1630 = vmatprep.subr.bf16.mxu0 %v1185
    %1631 = vmatpush1.bf16.msra.mxu0 %v1184
    %1632 = vmatprep.subr.bf16.mxu0 %v1179
    %1633 = vmatpush1.bf16.msra.mxu0 %v1178
    %1634 = vmatprep.subr.bf16.mxu0 %v1173
    %1635 = vmatpush1.bf16.msra.mxu0 %v1172
    %1636 = vmatprep.subr.bf16.mxu0 %v1167
    %1637 = vmatpush1.bf16.msra.mxu0 %v1166
    %1638 = vmatprep.subr.bf16.mxu0 %v1161
    %1639 = vmatpush1.bf16.msra.mxu0 %v1160
    %1640 = vmatprep.subr.bf16.mxu0 %v1251
    %1641 = vmatpush2.bf16.msra.mxu0 %v1250
    %1642 = vmatprep.subr.bf16.mxu0 %v1245
    %1643 = vmatpush2.bf16.msra.mxu0 %v1244
    %1644 = vmatprep.subr.bf16.mxu0 %v1239
    %1645 = vmatpush2.bf16.msra.mxu0 %v1238
    %1646 = vmatprep.subr.bf16.mxu0 %v1233
    %1647 = vmatpush2.bf16.msra.mxu0 %v1232
    %1648 = vmatprep.subr.bf16.mxu0 %v1227
    %1649 = vmatpush2.bf16.msra.mxu0 %v1226
    %1650 = vmatprep.subr.bf16.mxu0 %v1221
    %1651 = vmatpush2.bf16.msra.mxu0 %v1220
    %1652 = vmatprep.subr.bf16.mxu0 %v1215
    %1653 = vmatpush2.bf16.msra.mxu0 %v1214
    %1654 = vmatprep.subr.bf16.mxu0 %v1209
    %1655 = vmatpush2.bf16.msra.mxu0 %v1208
    %1656 = vmatprep.mubr.bf16.mxu0 %v548
    %1657 = vmatmul.mubr.bf16.gmra.mxu0 %v547
    %v1658 = vpop.f32.mrf.mxu0
    %v1659 = vadd.f32 %v563, %v1658
    %v1660 = vpop.f32.mrf.mxu0
    %v1661 = vadd.f32 %v567, %v1660
    %v1662 = vpop.f32.mrf.mxu0
    %v1663 = vpop.f32.mrf.mxu0
    %1664 = vdwg.mxu0
    %1665 = vmatprep.subr.bf16.mxu0 %v1299
    %1666 = vmatpush1.bf16.msra.mxu0 %v1298
    %1667 = vmatprep.subr.bf16.mxu0 %v1293
    %1668 = vmatpush1.bf16.msra.mxu0 %v1292
    %1669 = vmatprep.subr.bf16.mxu0 %v1287
    %1670 = vmatpush1.bf16.msra.mxu0 %v1286
    %1671 = vmatprep.subr.bf16.mxu0 %v1281
    %1672 = vmatpush1.bf16.msra.mxu0 %v1280
    %1673 = vmatprep.subr.bf16.mxu0 %v1275
    %1674 = vmatpush1.bf16.msra.mxu0 %v1274
    %1675 = vmatprep.subr.bf16.mxu0 %v1269
    %1676 = vmatpush1.bf16.msra.mxu0 %v1268
    %1677 = vmatprep.subr.bf16.mxu0 %v1263
    %1678 = vmatpush1.bf16.msra.mxu0 %v1262
    %1679 = vmatprep.subr.bf16.mxu0 %v1257
    %1680 = vmatpush1.bf16.msra.mxu0 %v1256
    %1681 = vmatprep.subr.bf16.mxu0 %v1347
    %1682 = vmatpush2.bf16.msra.mxu0 %v1346
    %1683 = vmatprep.subr.bf16.mxu0 %v1341
    %1684 = vmatpush2.bf16.msra.mxu0 %v1340
    %1685 = vmatprep.subr.bf16.mxu0 %v1335
    %1686 = vmatpush2.bf16.msra.mxu0 %v1334
    %1687 = vmatprep.subr.bf16.mxu0 %v1329
    %1688 = vmatpush2.bf16.msra.mxu0 %v1328
    %1689 = vmatprep.subr.bf16.mxu0 %v1323
    %1690 = vmatpush2.bf16.msra.mxu0 %v1322
    %1691 = vmatprep.subr.bf16.mxu0 %v1317
    %1692 = vmatpush2.bf16.msra.mxu0 %v1316
    %1693 = vmatprep.subr.bf16.mxu0 %v1311
    %1694 = vmatpush2.bf16.msra.mxu0 %v1310
    %1695 = vmatprep.subr.bf16.mxu0 %v1305
    %1696 = vmatpush2.bf16.msra.mxu0 %v1304
    %1697 = vmatprep.mubr.bf16.mxu0 %v550
    %1698 = vmatmul.mubr.bf16.gmra.mxu0 %v549
    %v1699 = vpop.f32.mrf.mxu0
    %v1700 = vadd.f32 %v1659, %v1699
    %v1701 = vpop.f32.mrf.mxu0
    %v1702 = vadd.f32 %v1661, %v1701
    %v1703 = vpop.f32.mrf.mxu0
    %v1704 = vpop.f32.mrf.mxu0
    %1705 = vdwg.mxu0
    %1706 = vmatprep.subr.bf16.mxu0 %v1205
    %1707 = vmatpush1.bf16.msra.mxu0 %v1204
    %1708 = vmatprep.subr.bf16.mxu0 %v1199
    %1709 = vmatpush1.bf16.msra.mxu0 %v1198
    %1710 = vmatprep.subr.bf16.mxu0 %v1193
    %1711 = vmatpush1.bf16.msra.mxu0 %v1192
    %1712 = vmatprep.subr.bf16.mxu0 %v1187
    %1713 = vmatpush1.bf16.msra.mxu0 %v1186
    %1714 = vmatprep.subr.bf16.mxu0 %v1181
    %1715 = vmatpush1.bf16.msra.mxu0 %v1180
    %1716 = vmatprep.subr.bf16.mxu0 %v1175
    %1717 = vmatpush1.bf16.msra.mxu0 %v1174
    %1718 = vmatprep.subr.bf16.mxu0 %v1169
    %1719 = vmatpush1.bf16.msra.mxu0 %v1168
    %1720 = vmatprep.subr.bf16.mxu0 %v1163
    %1721 = vmatpush1.bf16.msra.mxu0 %v1162
    %1722 = vmatprep.subr.bf16.mxu0 %v1253
    %1723 = vmatpush2.bf16.msra.mxu0 %v1252
    %1724 = vmatprep.subr.bf16.mxu0 %v1247
    %1725 = vmatpush2.bf16.msra.mxu0 %v1246
    %1726 = vmatprep.subr.bf16.mxu0 %v1241
    %1727 = vmatpush2.bf16.msra.mxu0 %v1240
    %1728 = vmatprep.subr.bf16.mxu0 %v1235
    %1729 = vmatpush2.bf16.msra.mxu0 %v1234
    %1730 = vmatprep.subr.bf16.mxu0 %v1229
    %1731 = vmatpush2.bf16.msra.mxu0 %v1228
    %1732 = vmatprep.subr.bf16.mxu0 %v1223
    %1733 = vmatpush2.bf16.msra.mxu0 %v1222
    %1734 = vmatprep.subr.bf16.mxu0 %v1217
    %1735 = vmatpush2.bf16.msra.mxu0 %v1216
    %1736 = vmatprep.subr.bf16.mxu0 %v1211
    %1737 = vmatpush2.bf16.msra.mxu0 %v1210
    %1738 = vmatprep.mubr.bf16.mxu0 %v548
    %1739 = vmatmul.mubr.bf16.gmra.mxu0 %v547
    %v1740 = vpop.f32.mrf.mxu0
    %v1741 = vadd.f32 %v571, %v1740
    %v1742 = vpop.f32.mrf.mxu0
    %v1743 = vadd.f32 %v575, %v1742
    %v1744 = vpop.f32.mrf.mxu0
    %v1745 = vpop.f32.mrf.mxu0
    %1746 = vdwg.mxu0
    %1747 = vmatprep.subr.bf16.mxu0 %v1301
    %1748 = vmatpush1.bf16.msra.mxu0 %v1300
    %1749 = vmatprep.subr.bf16.mxu0 %v1295
    %1750 = vmatpush1.bf16.msra.mxu0 %v1294
    %1751 = vmatprep.subr.bf16.mxu0 %v1289
    %1752 = vmatpush1.bf16.msra.mxu0 %v1288
    %1753 = vmatprep.subr.bf16.mxu0 %v1283
    %1754 = vmatpush1.bf16.msra.mxu0 %v1282
    %1755 = vmatprep.subr.bf16.mxu0 %v1277
    %1756 = vmatpush1.bf16.msra.mxu0 %v1276
    %1757 = vmatprep.subr.bf16.mxu0 %v1271
    %1758 = vmatpush1.bf16.msra.mxu0 %v1270
    %1759 = vmatprep.subr.bf16.mxu0 %v1265
    %1760 = vmatpush1.bf16.msra.mxu0 %v1264
    %1761 = vmatprep.subr.bf16.mxu0 %v1259
    %1762 = vmatpush1.bf16.msra.mxu0 %v1258
    %1763 = vmatprep.subr.bf16.mxu0 %v1349
    %1764 = vmatpush2.bf16.msra.mxu0 %v1348
    %1765 = vmatprep.subr.bf16.mxu0 %v1343
    %1766 = vmatpush2.bf16.msra.mxu0 %v1342
    %1767 = vmatprep.subr.bf16.mxu0 %v1337
    %1768 = vmatpush2.bf16.msra.mxu0 %v1336
    %1769 = vmatprep.subr.bf16.mxu0 %v1331
    %1770 = vmatpush2.bf16.msra.mxu0 %v1330
    %1771 = vmatprep.subr.bf16.mxu0 %v1325
    %1772 = vmatpush2.bf16.msra.mxu0 %v1324
    %1773 = vmatprep.subr.bf16.mxu0 %v1319
    %1774 = vmatpush2.bf16.msra.mxu0 %v1318
    %1775 = vmatprep.subr.bf16.mxu0 %v1313
    %1776 = vmatpush2.bf16.msra.mxu0 %v1312
    %1777 = vmatprep.subr.bf16.mxu0 %v1307
    %1778 = vmatpush2.bf16.msra.mxu0 %v1306
    %1779 = vmatprep.mubr.bf16.mxu0 %v550
    %1780 = vmatmul.mubr.bf16.gmra.mxu0 %v549
    %v1781 = vpop.f32.mrf.mxu0
    %v1782 = vadd.f32 %v1741, %v1781
    %v1783 = vpop.f32.mrf.mxu0
    %v1784 = vadd.f32 %v1743, %v1783
    %v1785 = vpop.f32.mrf.mxu0
    %v1786 = vpop.f32.mrf.mxu0
    %1787 = vdwg.mxu0
    %v1788 = vmax.f32 %v1618, 0.0
    %v1789 = vmax.f32 %v1620, 0.0
    %v1790 = vmax.f32 %v1700, 0.0
    %v1791 = vmax.f32 %v1702, 0.0
    %v1792 = vmax.f32 %v1782, 0.0
    %v1793 = vmax.f32 %v1784, 0.0
    %v1794 = vld [vmem:[#allocation10] sm:$0xff]
    %v1795 = vld [vmem:[#allocation10 + $0x8] sm:$0xff]
    %v1796 = vld [vmem:[#allocation10 + $0x10] sm:$0xff]
    %v1797 = vld [vmem:[#allocation10 + $0x18] sm:$0xff]
    %v1798 = vld [vmem:[#allocation10 + $0x20] sm:$0xff]
    %v1799 = vld [vmem:[#allocation10 + $0x28] sm:$0xff]
    %v1800 = vld [vmem:[#allocation10 + $0x30] sm:$0xff]
    %v1801 = vld [vmem:[#allocation10 + $0x38] sm:$0xff]
    %v1802 = vld [vmem:[#allocation10 + $0x40] sm:$0xff]
    %v1803 = vld [vmem:[#allocation10 + $0x48] sm:$0xff]
    %v1804 = vld [vmem:[#allocation10 + $0x50] sm:$0xff]
    %v1805 = vld [vmem:[#allocation10 + $0x58] sm:$0xff]
    %v1806 = vld [vmem:[#allocation10 + $0x60] sm:$0xff]
    %v1807 = vld [vmem:[#allocation10 + $0x68] sm:$0xff]
    %v1808 = vld [vmem:[#allocation10 + $0x70] sm:$0xff]
    %v1809 = vld [vmem:[#allocation10 + $0x78] sm:$0xff]
    %v1810 = vld [vmem:[#allocation10 + $0x80] sm:$0xff]
    %v1811 = vld [vmem:[#allocation10 + $0x88] sm:$0xff]
    %v1812 = vld [vmem:[#allocation10 + $0x90] sm:$0xff]
    %v1813 = vld [vmem:[#allocation10 + $0x98] sm:$0xff]
    %v1814 = vld [vmem:[#allocation10 + $0xa0] sm:$0xff]
    %v1815 = vld [vmem:[#allocation10 + $0xa8] sm:$0xff]
    %v1816 = vld [vmem:[#allocation10 + $0xb0] sm:$0xff]
    %v1817 = vld [vmem:[#allocation10 + $0xb8] sm:$0xff]
    %v1818 = vld [vmem:[#allocation10 + $0xc0] sm:$0xff]
    %v1819 = vld [vmem:[#allocation10 + $0xc8] sm:$0xff]
    %v1820 = vld [vmem:[#allocation10 + $0xd0] sm:$0xff]
    %v1821 = vld [vmem:[#allocation10 + $0xd8] sm:$0xff]
    %v1822 = vld [vmem:[#allocation10 + $0xe0] sm:$0xff]
    %v1823 = vld [vmem:[#allocation10 + $0xe8] sm:$0xff]
    %v1824 = vld [vmem:[#allocation10 + $0xf0] sm:$0xff]
    %v1825 = vld [vmem:[#allocation10 + $0xf8] sm:$0xff]
    %v1826 = vld [vmem:[#allocation10 + $0x100] sm:$0xff]
    %v1827 = vld [vmem:[#allocation10 + $0x108] sm:$0xff]
    %v1828 = vld [vmem:[#allocation10 + $0x110] sm:$0xff]
    %v1829 = vld [vmem:[#allocation10 + $0x118] sm:$0xff]
    %v1830 = vld [vmem:[#allocation10 + $0x120] sm:$0xff]
    %v1831 = vld [vmem:[#allocation10 + $0x128] sm:$0xff]
    %v1832 = vld [vmem:[#allocation10 + $0x130] sm:$0xff]
    %v1833 = vld [vmem:[#allocation10 + $0x138] sm:$0xff]
    %v1834 = vld [vmem:[#allocation10 + $0x140] sm:$0xff]
    %v1835 = vld [vmem:[#allocation10 + $0x148] sm:$0xff]
    %v1836 = vld [vmem:[#allocation10 + $0x150] sm:$0xff]
    %v1837 = vld [vmem:[#allocation10 + $0x158] sm:$0xff]
    %v1838 = vld [vmem:[#allocation10 + $0x160] sm:$0xff]
    %v1839 = vld [vmem:[#allocation10 + $0x168] sm:$0xff]
    %v1840 = vld [vmem:[#allocation10 + $0x170] sm:$0xff]
    %v1841 = vld [vmem:[#allocation10 + $0x178] sm:$0xff]
    %v1842 = vld [vmem:[#allocation10 + $0x180] sm:$0xff]
    %v1843 = vld [vmem:[#allocation10 + $0x188] sm:$0xff]
    %v1844 = vld [vmem:[#allocation10 + $0x190] sm:$0xff]
    %v1845 = vld [vmem:[#allocation10 + $0x198] sm:$0xff]
    %v1846 = vld [vmem:[#allocation10 + $0x1a0] sm:$0xff]
    %v1847 = vld [vmem:[#allocation10 + $0x1a8] sm:$0xff]
    %v1848 = vld [vmem:[#allocation10 + $0x1b0] sm:$0xff]
    %v1849 = vld [vmem:[#allocation10 + $0x1b8] sm:$0xff]
    %v1850 = vld [vmem:[#allocation10 + $0x1c0] sm:$0xff]
    %v1851 = vld [vmem:[#allocation10 + $0x1c8] sm:$0xff]
    %v1852 = vld [vmem:[#allocation10 + $0x1d0] sm:$0xff]
    %v1853 = vld [vmem:[#allocation10 + $0x1d8] sm:$0xff]
    %v1854 = vld [vmem:[#allocation10 + $0x1e0] sm:$0xff]
    %v1855 = vld [vmem:[#allocation10 + $0x1e8] sm:$0xff]
    %v1856 = vld [vmem:[#allocation10 + $0x1f0] sm:$0xff]
    %v1857 = vld [vmem:[#allocation10 + $0x1f8] sm:$0xff]
    %v1858 = vld [vmem:[#allocation10 + $0x200] sm:$0xff]
    %v1859 = vld [vmem:[#allocation10 + $0x208] sm:$0xff]
    %v1860 = vld [vmem:[#allocation10 + $0x210] sm:$0xff]
    %v1861 = vld [vmem:[#allocation10 + $0x218] sm:$0xff]
    %v1862 = vld [vmem:[#allocation10 + $0x220] sm:$0xff]
    %v1863 = vld [vmem:[#allocation10 + $0x228] sm:$0xff]
    %v1864 = vld [vmem:[#allocation10 + $0x230] sm:$0xff]
    %v1865 = vld [vmem:[#allocation10 + $0x238] sm:$0xff]
    %v1866 = vld [vmem:[#allocation10 + $0x240] sm:$0xff]
    %v1867 = vld [vmem:[#allocation10 + $0x248] sm:$0xff]
    %v1868 = vld [vmem:[#allocation10 + $0x250] sm:$0xff]
    %v1869 = vld [vmem:[#allocation10 + $0x258] sm:$0xff]
    %v1870 = vld [vmem:[#allocation10 + $0x260] sm:$0xff]
    %v1871 = vld [vmem:[#allocation10 + $0x268] sm:$0xff]
    %v1872 = vld [vmem:[#allocation10 + $0x270] sm:$0xff]
    %v1873 = vld [vmem:[#allocation10 + $0x278] sm:$0xff]
    %v1874 = vld [vmem:[#allocation10 + $0x280] sm:$0xff]
    %v1875 = vld [vmem:[#allocation10 + $0x288] sm:$0xff]
    %v1876 = vld [vmem:[#allocation10 + $0x290] sm:$0xff]
    %v1877 = vld [vmem:[#allocation10 + $0x298] sm:$0xff]
    %v1878 = vld [vmem:[#allocation10 + $0x2a0] sm:$0xff]
    %v1879 = vld [vmem:[#allocation10 + $0x2a8] sm:$0xff]
    %v1880 = vld [vmem:[#allocation10 + $0x2b0] sm:$0xff]
    %v1881 = vld [vmem:[#allocation10 + $0x2b8] sm:$0xff]
    %v1882 = vld [vmem:[#allocation10 + $0x2c0] sm:$0xff]
    %v1883 = vld [vmem:[#allocation10 + $0x2c8] sm:$0xff]
    %v1884 = vld [vmem:[#allocation10 + $0x2d0] sm:$0xff]
    %v1885 = vld [vmem:[#allocation10 + $0x2d8] sm:$0xff]
    %v1886 = vld [vmem:[#allocation10 + $0x2e0] sm:$0xff]
    %v1887 = vld [vmem:[#allocation10 + $0x2e8] sm:$0xff]
    %v1888 = vld [vmem:[#allocation10 + $0x2f0] sm:$0xff]
    %v1889 = vld [vmem:[#allocation10 + $0x2f8] sm:$0xff]
    %v1890 = vld [vmem:[#allocation10 + $0x300] sm:$0xff]
    %v1891 = vld [vmem:[#allocation10 + $0x308] sm:$0xff]
    %v1892 = vld [vmem:[#allocation10 + $0x310] sm:$0xff]
    %v1893 = vld [vmem:[#allocation10 + $0x318] sm:$0xff]
    %v1894 = vld [vmem:[#allocation10 + $0x320] sm:$0xff]
    %v1895 = vld [vmem:[#allocation10 + $0x328] sm:$0xff]
    %v1896 = vld [vmem:[#allocation10 + $0x330] sm:$0xff]
    %v1897 = vld [vmem:[#allocation10 + $0x338] sm:$0xff]
    %v1898 = vld [vmem:[#allocation10 + $0x340] sm:$0xff]
    %v1899 = vld [vmem:[#allocation10 + $0x348] sm:$0xff]
    %v1900 = vld [vmem:[#allocation10 + $0x350] sm:$0xff]
    %v1901 = vld [vmem:[#allocation10 + $0x358] sm:$0xff]
    %v1902 = vld [vmem:[#allocation10 + $0x360] sm:$0xff]
    %v1903 = vld [vmem:[#allocation10 + $0x368] sm:$0xff]
    %v1904 = vld [vmem:[#allocation10 + $0x370] sm:$0xff]
    %v1905 = vld [vmem:[#allocation10 + $0x378] sm:$0xff]
    %v1906 = vld [vmem:[#allocation10 + $0x380] sm:$0xff]
    %v1907 = vld [vmem:[#allocation10 + $0x388] sm:$0xff]
    %v1908 = vld [vmem:[#allocation10 + $0x390] sm:$0xff]
    %v1909 = vld [vmem:[#allocation10 + $0x398] sm:$0xff]
    %v1910 = vld [vmem:[#allocation10 + $0x3a0] sm:$0xff]
    %v1911 = vld [vmem:[#allocation10 + $0x3a8] sm:$0xff]
    %v1912 = vld [vmem:[#allocation10 + $0x3b0] sm:$0xff]
    %v1913 = vld [vmem:[#allocation10 + $0x3b8] sm:$0xff]
    %v1914 = vld [vmem:[#allocation10 + $0x3c0] sm:$0xff]
    %v1915 = vld [vmem:[#allocation10 + $0x3c8] sm:$0xff]
    %v1916 = vld [vmem:[#allocation10 + $0x3d0] sm:$0xff]
    %v1917 = vld [vmem:[#allocation10 + $0x3d8] sm:$0xff]
    %v1918 = vld [vmem:[#allocation10 + $0x3e0] sm:$0xff]
    %v1919 = vld [vmem:[#allocation10 + $0x3e8] sm:$0xff]
    %v1920 = vld [vmem:[#allocation10 + $0x3f0] sm:$0xff]
    %v1921 = vld [vmem:[#allocation10 + $0x3f8] sm:$0xff]
    %v1922 = vld [vmem:[#allocation10 + $0x400] sm:$0xff]
    %v1923 = vld [vmem:[#allocation10 + $0x408] sm:$0xff]
    %v1924 = vld [vmem:[#allocation10 + $0x410] sm:$0xff]
    %v1925 = vld [vmem:[#allocation10 + $0x418] sm:$0xff]
    %v1926 = vld [vmem:[#allocation10 + $0x420] sm:$0xff]
    %v1927 = vld [vmem:[#allocation10 + $0x428] sm:$0xff]
    %v1928 = vld [vmem:[#allocation10 + $0x430] sm:$0xff]
    %v1929 = vld [vmem:[#allocation10 + $0x438] sm:$0xff]
    %v1930 = vld [vmem:[#allocation10 + $0x440] sm:$0xff]
    %v1931 = vld [vmem:[#allocation10 + $0x448] sm:$0xff]
    %v1932 = vld [vmem:[#allocation10 + $0x450] sm:$0xff]
    %v1933 = vld [vmem:[#allocation10 + $0x458] sm:$0xff]
    %v1934 = vld [vmem:[#allocation10 + $0x460] sm:$0xff]
    %v1935 = vld [vmem:[#allocation10 + $0x468] sm:$0xff]
    %v1936 = vld [vmem:[#allocation10 + $0x470] sm:$0xff]
    %v1937 = vld [vmem:[#allocation10 + $0x478] sm:$0xff]
    %v1938 = vld [vmem:[#allocation10 + $0x480] sm:$0xff]
    %v1939 = vld [vmem:[#allocation10 + $0x488] sm:$0xff]
    %v1940 = vld [vmem:[#allocation10 + $0x490] sm:$0xff]
    %v1941 = vld [vmem:[#allocation10 + $0x498] sm:$0xff]
    %v1942 = vld [vmem:[#allocation10 + $0x4a0] sm:$0xff]
    %v1943 = vld [vmem:[#allocation10 + $0x4a8] sm:$0xff]
    %v1944 = vld [vmem:[#allocation10 + $0x4b0] sm:$0xff]
    %v1945 = vld [vmem:[#allocation10 + $0x4b8] sm:$0xff]
    %v1946 = vld [vmem:[#allocation10 + $0x4c0] sm:$0xff]
    %v1947 = vld [vmem:[#allocation10 + $0x4c8] sm:$0xff]
    %v1948 = vld [vmem:[#allocation10 + $0x4d0] sm:$0xff]
    %v1949 = vld [vmem:[#allocation10 + $0x4d8] sm:$0xff]
    %v1950 = vld [vmem:[#allocation10 + $0x4e0] sm:$0xff]
    %v1951 = vld [vmem:[#allocation10 + $0x4e8] sm:$0xff]
    %v1952 = vld [vmem:[#allocation10 + $0x4f0] sm:$0xff]
    %v1953 = vld [vmem:[#allocation10 + $0x4f8] sm:$0xff]
    %v1954 = vld [vmem:[#allocation10 + $0x500] sm:$0xff]
    %v1955 = vld [vmem:[#allocation10 + $0x508] sm:$0xff]
    %v1956 = vld [vmem:[#allocation10 + $0x510] sm:$0xff]
    %v1957 = vld [vmem:[#allocation10 + $0x518] sm:$0xff]
    %v1958 = vld [vmem:[#allocation10 + $0x520] sm:$0xff]
    %v1959 = vld [vmem:[#allocation10 + $0x528] sm:$0xff]
    %v1960 = vld [vmem:[#allocation10 + $0x530] sm:$0xff]
    %v1961 = vld [vmem:[#allocation10 + $0x538] sm:$0xff]
    %v1962 = vld [vmem:[#allocation10 + $0x540] sm:$0xff]
    %v1963 = vld [vmem:[#allocation10 + $0x548] sm:$0xff]
    %v1964 = vld [vmem:[#allocation10 + $0x550] sm:$0xff]
    %v1965 = vld [vmem:[#allocation10 + $0x558] sm:$0xff]
    %v1966 = vld [vmem:[#allocation10 + $0x560] sm:$0xff]
    %v1967 = vld [vmem:[#allocation10 + $0x568] sm:$0xff]
    %v1968 = vld [vmem:[#allocation10 + $0x570] sm:$0xff]
    %v1969 = vld [vmem:[#allocation10 + $0x578] sm:$0xff]
    %v1970 = vld [vmem:[#allocation10 + $0x580] sm:$0xff]
    %v1971 = vld [vmem:[#allocation10 + $0x588] sm:$0xff]
    %v1972 = vld [vmem:[#allocation10 + $0x590] sm:$0xff]
    %v1973 = vld [vmem:[#allocation10 + $0x598] sm:$0xff]
    %v1974 = vld [vmem:[#allocation10 + $0x5a0] sm:$0xff]
    %v1975 = vld [vmem:[#allocation10 + $0x5a8] sm:$0xff]
    %v1976 = vld [vmem:[#allocation10 + $0x5b0] sm:$0xff]
    %v1977 = vld [vmem:[#allocation10 + $0x5b8] sm:$0xff]
    %v1978 = vld [vmem:[#allocation10 + $0x5c0] sm:$0xff]
    %v1979 = vld [vmem:[#allocation10 + $0x5c8] sm:$0xff]
    %v1980 = vld [vmem:[#allocation10 + $0x5d0] sm:$0xff]
    %v1981 = vld [vmem:[#allocation10 + $0x5d8] sm:$0xff]
    %v1982 = vld [vmem:[#allocation10 + $0x5e0] sm:$0xff]
    %v1983 = vld [vmem:[#allocation10 + $0x5e8] sm:$0xff]
    %v1984 = vld [vmem:[#allocation10 + $0x5f0] sm:$0xff]
    %v1985 = vld [vmem:[#allocation10 + $0x5f8] sm:$0xff]
    %v1986 = vld [vmem:[#allocation10 + $0x600] sm:$0xff]
    %v1987 = vld [vmem:[#allocation10 + $0x608] sm:$0xff]
    %v1988 = vld [vmem:[#allocation10 + $0x610] sm:$0xff]
    %v1989 = vld [vmem:[#allocation10 + $0x618] sm:$0xff]
    %v1990 = vld [vmem:[#allocation10 + $0x620] sm:$0xff]
    %v1991 = vld [vmem:[#allocation10 + $0x628] sm:$0xff]
    %v1992 = vld [vmem:[#allocation10 + $0x630] sm:$0xff]
    %v1993 = vld [vmem:[#allocation10 + $0x638] sm:$0xff]
    %v1994 = vld [vmem:[#allocation10 + $0x640] sm:$0xff]
    %v1995 = vld [vmem:[#allocation10 + $0x648] sm:$0xff]
    %v1996 = vld [vmem:[#allocation10 + $0x650] sm:$0xff]
    %v1997 = vld [vmem:[#allocation10 + $0x658] sm:$0xff]
    %v1998 = vld [vmem:[#allocation10 + $0x660] sm:$0xff]
    %v1999 = vld [vmem:[#allocation10 + $0x668] sm:$0xff]
    %v2000 = vld [vmem:[#allocation10 + $0x670] sm:$0xff]
    %v2001 = vld [vmem:[#allocation10 + $0x678] sm:$0xff]
    %v2002 = vld [vmem:[#allocation10 + $0x680] sm:$0xff]
    %v2003 = vld [vmem:[#allocation10 + $0x688] sm:$0xff]
    %v2004 = vld [vmem:[#allocation10 + $0x690] sm:$0xff]
    %v2005 = vld [vmem:[#allocation10 + $0x698] sm:$0xff]
    %v2006 = vld [vmem:[#allocation10 + $0x6a0] sm:$0xff]
    %v2007 = vld [vmem:[#allocation10 + $0x6a8] sm:$0xff]
    %v2008 = vld [vmem:[#allocation10 + $0x6b0] sm:$0xff]
    %v2009 = vld [vmem:[#allocation10 + $0x6b8] sm:$0xff]
    %v2010 = vld [vmem:[#allocation10 + $0x6c0] sm:$0xff]
    %v2011 = vld [vmem:[#allocation10 + $0x6c8] sm:$0xff]
    %v2012 = vld [vmem:[#allocation10 + $0x6d0] sm:$0xff]
    %v2013 = vld [vmem:[#allocation10 + $0x6d8] sm:$0xff]
    %v2014 = vld [vmem:[#allocation10 + $0x6e0] sm:$0xff]
    %v2015 = vld [vmem:[#allocation10 + $0x6e8] sm:$0xff]
    %v2016 = vld [vmem:[#allocation10 + $0x6f0] sm:$0xff]
    %v2017 = vld [vmem:[#allocation10 + $0x6f8] sm:$0xff]
    %v2018 = vld [vmem:[#allocation10 + $0x700] sm:$0xff]
    %v2019 = vld [vmem:[#allocation10 + $0x708] sm:$0xff]
    %v2020 = vld [vmem:[#allocation10 + $0x710] sm:$0xff]
    %v2021 = vld [vmem:[#allocation10 + $0x718] sm:$0xff]
    %v2022 = vld [vmem:[#allocation10 + $0x720] sm:$0xff]
    %v2023 = vld [vmem:[#allocation10 + $0x728] sm:$0xff]
    %v2024 = vld [vmem:[#allocation10 + $0x730] sm:$0xff]
    %v2025 = vld [vmem:[#allocation10 + $0x738] sm:$0xff]
    %v2026 = vld [vmem:[#allocation10 + $0x740] sm:$0xff]
    %v2027 = vld [vmem:[#allocation10 + $0x748] sm:$0xff]
    %v2028 = vld [vmem:[#allocation10 + $0x750] sm:$0xff]
    %v2029 = vld [vmem:[#allocation10 + $0x758] sm:$0xff]
    %v2030 = vld [vmem:[#allocation10 + $0x760] sm:$0xff]
    %v2031 = vld [vmem:[#allocation10 + $0x768] sm:$0xff]
    %v2032 = vld [vmem:[#allocation10 + $0x770] sm:$0xff]
    %v2033 = vld [vmem:[#allocation10 + $0x778] sm:$0xff]
    %v2034 = vld [vmem:[#allocation10 + $0x780] sm:$0xff]
    %v2035 = vld [vmem:[#allocation10 + $0x788] sm:$0xff]
    %v2036 = vld [vmem:[#allocation10 + $0x790] sm:$0xff]
    %v2037 = vld [vmem:[#allocation10 + $0x798] sm:$0xff]
    %v2038 = vld [vmem:[#allocation10 + $0x7a0] sm:$0xff]
    %v2039 = vld [vmem:[#allocation10 + $0x7a8] sm:$0xff]
    %v2040 = vld [vmem:[#allocation10 + $0x7b0] sm:$0xff]
    %v2041 = vld [vmem:[#allocation10 + $0x7b8] sm:$0xff]
    %v2042 = vld [vmem:[#allocation10 + $0x7c0] sm:$0xff]
    %v2043 = vld [vmem:[#allocation10 + $0x7c8] sm:$0xff]
    %v2044 = vld [vmem:[#allocation10 + $0x7d0] sm:$0xff]
    %v2045 = vld [vmem:[#allocation10 + $0x7d8] sm:$0xff]
    %v2046 = vld [vmem:[#allocation10 + $0x7e0] sm:$0xff]
    %v2047 = vld [vmem:[#allocation10 + $0x7e8] sm:$0xff]
    %v2048 = vld [vmem:[#allocation10 + $0x7f0] sm:$0xff]
    %v2049 = vld [vmem:[#allocation10 + $0x7f8] sm:$0xff]
    %v2050 = vld [vmem:[#allocation10 + $0x800] sm:$0xff]
    %v2051 = vld [vmem:[#allocation10 + $0x808] sm:$0xff]
    %v2052 = vld [vmem:[#allocation10 + $0x810] sm:$0xff]
    %v2053 = vld [vmem:[#allocation10 + $0x818] sm:$0xff]
    %v2054 = vld [vmem:[#allocation10 + $0x820] sm:$0xff]
    %v2055 = vld [vmem:[#allocation10 + $0x828] sm:$0xff]
    %v2056 = vld [vmem:[#allocation10 + $0x830] sm:$0xff]
    %v2057 = vld [vmem:[#allocation10 + $0x838] sm:$0xff]
    %v2058 = vld [vmem:[#allocation10 + $0x840] sm:$0xff]
    %v2059 = vld [vmem:[#allocation10 + $0x848] sm:$0xff]
    %v2060 = vld [vmem:[#allocation10 + $0x850] sm:$0xff]
    %v2061 = vld [vmem:[#allocation10 + $0x858] sm:$0xff]
    %v2062 = vld [vmem:[#allocation10 + $0x860] sm:$0xff]
    %v2063 = vld [vmem:[#allocation10 + $0x868] sm:$0xff]
    %v2064 = vld [vmem:[#allocation10 + $0x870] sm:$0xff]
    %v2065 = vld [vmem:[#allocation10 + $0x878] sm:$0xff]
    %v2066 = vld [vmem:[#allocation10 + $0x880] sm:$0xff]
    %v2067 = vld [vmem:[#allocation10 + $0x888] sm:$0xff]
    %v2068 = vld [vmem:[#allocation10 + $0x890] sm:$0xff]
    %v2069 = vld [vmem:[#allocation10 + $0x898] sm:$0xff]
    %v2070 = vld [vmem:[#allocation10 + $0x8a0] sm:$0xff]
    %v2071 = vld [vmem:[#allocation10 + $0x8a8] sm:$0xff]
    %v2072 = vld [vmem:[#allocation10 + $0x8b0] sm:$0xff]
    %v2073 = vld [vmem:[#allocation10 + $0x8b8] sm:$0xff]
    %v2074 = vld [vmem:[#allocation10 + $0x8c0] sm:$0xff]
    %v2075 = vld [vmem:[#allocation10 + $0x8c8] sm:$0xff]
    %v2076 = vld [vmem:[#allocation10 + $0x8d0] sm:$0xff]
    %v2077 = vld [vmem:[#allocation10 + $0x8d8] sm:$0xff]
    %v2078 = vld [vmem:[#allocation10 + $0x8e0] sm:$0xff]
    %v2079 = vld [vmem:[#allocation10 + $0x8e8] sm:$0xff]
    %v2080 = vld [vmem:[#allocation10 + $0x8f0] sm:$0xff]
    %v2081 = vld [vmem:[#allocation10 + $0x8f8] sm:$0xff]
    %v2082 = vld [vmem:[#allocation10 + $0x900] sm:$0xff]
    %v2083 = vld [vmem:[#allocation10 + $0x908] sm:$0xff]
    %v2084 = vld [vmem:[#allocation10 + $0x910] sm:$0xff]
    %v2085 = vld [vmem:[#allocation10 + $0x918] sm:$0xff]
    %v2086 = vld [vmem:[#allocation10 + $0x920] sm:$0xff]
    %v2087 = vld [vmem:[#allocation10 + $0x928] sm:$0xff]
    %v2088 = vld [vmem:[#allocation10 + $0x930] sm:$0xff]
    %v2089 = vld [vmem:[#allocation10 + $0x938] sm:$0xff]
    %v2090 = vld [vmem:[#allocation10 + $0x940] sm:$0xff]
    %v2091 = vld [vmem:[#allocation10 + $0x948] sm:$0xff]
    %v2092 = vld [vmem:[#allocation10 + $0x950] sm:$0xff]
    %v2093 = vld [vmem:[#allocation10 + $0x958] sm:$0xff]
    %v2094 = vld [vmem:[#allocation10 + $0x960] sm:$0xff]
    %v2095 = vld [vmem:[#allocation10 + $0x968] sm:$0xff]
    %v2096 = vld [vmem:[#allocation10 + $0x970] sm:$0xff]
    %v2097 = vld [vmem:[#allocation10 + $0x978] sm:$0xff]
    %v2098 = vld [vmem:[#allocation10 + $0x980] sm:$0xff]
    %v2099 = vld [vmem:[#allocation10 + $0x988] sm:$0xff]
    %v2100 = vld [vmem:[#allocation10 + $0x990] sm:$0xff]
    %v2101 = vld [vmem:[#allocation10 + $0x998] sm:$0xff]
    %v2102 = vld [vmem:[#allocation10 + $0x9a0] sm:$0xff]
    %v2103 = vld [vmem:[#allocation10 + $0x9a8] sm:$0xff]
    %v2104 = vld [vmem:[#allocation10 + $0x9b0] sm:$0xff]
    %v2105 = vld [vmem:[#allocation10 + $0x9b8] sm:$0xff]
    %v2106 = vld [vmem:[#allocation10 + $0x9c0] sm:$0xff]
    %v2107 = vld [vmem:[#allocation10 + $0x9c8] sm:$0xff]
    %v2108 = vld [vmem:[#allocation10 + $0x9d0] sm:$0xff]
    %v2109 = vld [vmem:[#allocation10 + $0x9d8] sm:$0xff]
    %v2110 = vld [vmem:[#allocation10 + $0x9e0] sm:$0xff]
    %v2111 = vld [vmem:[#allocation10 + $0x9e8] sm:$0xff]
    %v2112 = vld [vmem:[#allocation10 + $0x9f0] sm:$0xff]
    %v2113 = vld [vmem:[#allocation10 + $0x9f8] sm:$0xff]
    %v2114 = vld [vmem:[#allocation10 + $0xa00] sm:$0xff]
    %v2115 = vld [vmem:[#allocation10 + $0xa08] sm:$0xff]
    %v2116 = vld [vmem:[#allocation10 + $0xa10] sm:$0xff]
    %v2117 = vld [vmem:[#allocation10 + $0xa18] sm:$0xff]
    %v2118 = vld [vmem:[#allocation10 + $0xa20] sm:$0xff]
    %v2119 = vld [vmem:[#allocation10 + $0xa28] sm:$0xff]
    %v2120 = vld [vmem:[#allocation10 + $0xa30] sm:$0xff]
    %v2121 = vld [vmem:[#allocation10 + $0xa38] sm:$0xff]
    %v2122 = vld [vmem:[#allocation10 + $0xa40] sm:$0xff]
    %v2123 = vld [vmem:[#allocation10 + $0xa48] sm:$0xff]
    %v2124 = vld [vmem:[#allocation10 + $0xa50] sm:$0xff]
    %v2125 = vld [vmem:[#allocation10 + $0xa58] sm:$0xff]
    %v2126 = vld [vmem:[#allocation10 + $0xa60] sm:$0xff]
    %v2127 = vld [vmem:[#allocation10 + $0xa68] sm:$0xff]
    %v2128 = vld [vmem:[#allocation10 + $0xa70] sm:$0xff]
    %v2129 = vld [vmem:[#allocation10 + $0xa78] sm:$0xff]
    %v2130 = vld [vmem:[#allocation10 + $0xa80] sm:$0xff]
    %v2131 = vld [vmem:[#allocation10 + $0xa88] sm:$0xff]
    %v2132 = vld [vmem:[#allocation10 + $0xa90] sm:$0xff]
    %v2133 = vld [vmem:[#allocation10 + $0xa98] sm:$0xff]
    %v2134 = vld [vmem:[#allocation10 + $0xaa0] sm:$0xff]
    %v2135 = vld [vmem:[#allocation10 + $0xaa8] sm:$0xff]
    %v2136 = vld [vmem:[#allocation10 + $0xab0] sm:$0xff]
    %v2137 = vld [vmem:[#allocation10 + $0xab8] sm:$0xff]
    %v2138 = vld [vmem:[#allocation10 + $0xac0] sm:$0xff]
    %v2139 = vld [vmem:[#allocation10 + $0xac8] sm:$0xff]
    %v2140 = vld [vmem:[#allocation10 + $0xad0] sm:$0xff]
    %v2141 = vld [vmem:[#allocation10 + $0xad8] sm:$0xff]
    %v2142 = vld [vmem:[#allocation10 + $0xae0] sm:$0xff]
    %v2143 = vld [vmem:[#allocation10 + $0xae8] sm:$0xff]
    %v2144 = vld [vmem:[#allocation10 + $0xaf0] sm:$0xff]
    %v2145 = vld [vmem:[#allocation10 + $0xaf8] sm:$0xff]
    %v2146 = vld [vmem:[#allocation10 + $0xb00] sm:$0xff]
    %v2147 = vld [vmem:[#allocation10 + $0xb08] sm:$0xff]
    %v2148 = vld [vmem:[#allocation10 + $0xb10] sm:$0xff]
    %v2149 = vld [vmem:[#allocation10 + $0xb18] sm:$0xff]
    %v2150 = vld [vmem:[#allocation10 + $0xb20] sm:$0xff]
    %v2151 = vld [vmem:[#allocation10 + $0xb28] sm:$0xff]
    %v2152 = vld [vmem:[#allocation10 + $0xb30] sm:$0xff]
    %v2153 = vld [vmem:[#allocation10 + $0xb38] sm:$0xff]
    %v2154 = vld [vmem:[#allocation10 + $0xb40] sm:$0xff]
    %v2155 = vld [vmem:[#allocation10 + $0xb48] sm:$0xff]
    %v2156 = vld [vmem:[#allocation10 + $0xb50] sm:$0xff]
    %v2157 = vld [vmem:[#allocation10 + $0xb58] sm:$0xff]
    %v2158 = vld [vmem:[#allocation10 + $0xb60] sm:$0xff]
    %v2159 = vld [vmem:[#allocation10 + $0xb68] sm:$0xff]
    %v2160 = vld [vmem:[#allocation10 + $0xb70] sm:$0xff]
    %v2161 = vld [vmem:[#allocation10 + $0xb78] sm:$0xff]
    %v2162 = vld [vmem:[#allocation10 + $0xb80] sm:$0xff]
    %v2163 = vld [vmem:[#allocation10 + $0xb88] sm:$0xff]
    %v2164 = vld [vmem:[#allocation10 + $0xb90] sm:$0xff]
    %v2165 = vld [vmem:[#allocation10 + $0xb98] sm:$0xff]
    %v2166 = vld [vmem:[#allocation10 + $0xba0] sm:$0xff]
    %v2167 = vld [vmem:[#allocation10 + $0xba8] sm:$0xff]
    %v2168 = vld [vmem:[#allocation10 + $0xbb0] sm:$0xff]
    %v2169 = vld [vmem:[#allocation10 + $0xbb8] sm:$0xff]
    %v2170 = vld [vmem:[#allocation10 + $0xbc0] sm:$0xff]
    %v2171 = vld [vmem:[#allocation10 + $0xbc8] sm:$0xff]
    %v2172 = vld [vmem:[#allocation10 + $0xbd0] sm:$0xff]
    %v2173 = vld [vmem:[#allocation10 + $0xbd8] sm:$0xff]
    %v2174 = vld [vmem:[#allocation10 + $0xbe0] sm:$0xff]
    %v2175 = vld [vmem:[#allocation10 + $0xbe8] sm:$0xff]
    %v2176 = vld [vmem:[#allocation10 + $0xbf0] sm:$0xff]
    %v2177 = vld [vmem:[#allocation10 + $0xbf8] sm:$0xff]
    %v2178 = vld [vmem:[#allocation11] sm:$0xff]
    %v2179 = vpack.c.bf16 %v1788, %v1788
    %v2180 = vpack.c.bf16 %v1789, %v1789
    %v2181 = vpack.c.bf16 %v1790, %v1790
    %v2182 = vpack.c.bf16 %v1791, %v1791
    %v2183 = vpack.c.bf16 %v1792, %v1792
    %v2184 = vpack.c.bf16 %v1793, %v1793
    %v2186 = vlaneseq
    %v2187 = vshrl.u32 %v2186, 7
    %v2188 = vsub.s32 0, %v2187
    %v2189 = vrot.slane %v2178, %v2188
    %v2190 = vlaneseq
    %v2191 = vshrl.u32 %v2190, 7
    %v2192 = vsub.s32 1, %v2191
    %v2193 = vrot.slane %v2178, %v2192
    %v2194 = vlaneseq
    %v2195 = vshrl.u32 %v2194, 7
    %v2196 = vsub.s32 2, %v2195
    %v2197 = vrot.slane %v2178, %v2196
    %v2198 = vlaneseq
    %v2199 = vshrl.u32 %v2198, 7
    %v2200 = vsub.s32 3, %v2199
    %v2201 = vrot.slane %v2178, %v2200
    %v2202 = vlaneseq
    %v2203 = vshrl.u32 %v2202, 7
    %v2204 = vsub.s32 4, %v2203
    %v2205 = vrot.slane %v2178, %v2204
    %v2206 = vlaneseq
    %v2207 = vshrl.u32 %v2206, 7
    %v2208 = vsub.s32 5, %v2207
    %v2209 = vrot.slane %v2178, %v2208
    %v2210 = vlaneseq
    %v2211 = vshrl.u32 %v2210, 7
    %v2212 = vsub.s32 6, %v2211
    %v2213 = vrot.slane %v2178, %v2212
    %v2214 = vlaneseq
    %v2215 = vshrl.u32 %v2214, 7
    %v2216 = vsub.s32 7, %v2215
    %v2217 = vrot.slane %v2178, %v2216
    %v2610 = vunpack.c.l.b16 %v1794
    %v2611 = vunpack.c.h.b16 %v1794
    %v2612 = vunpack.c.l.b16 %v1795
    %v2613 = vunpack.c.h.b16 %v1795
    %v2614 = vunpack.c.l.b16 %v1796
    %v2615 = vunpack.c.h.b16 %v1796
    %v2616 = vunpack.c.l.b16 %v1797
    %v2617 = vunpack.c.h.b16 %v1797
    %v2618 = vunpack.c.l.b16 %v1798
    %v2619 = vunpack.c.h.b16 %v1798
    %v2620 = vunpack.c.l.b16 %v1799
    %v2621 = vunpack.c.h.b16 %v1799
    %v2622 = vunpack.c.l.b16 %v1800
    %v2623 = vunpack.c.h.b16 %v1800
    %v2624 = vunpack.c.l.b16 %v1801
    %v2625 = vunpack.c.h.b16 %v1801
    %v2626 = vunpack.c.l.b16 %v1802
    %v2627 = vunpack.c.h.b16 %v1802
    %v2628 = vunpack.c.l.b16 %v1803
    %v2629 = vunpack.c.h.b16 %v1803
    %v2630 = vunpack.c.l.b16 %v1804
    %v2631 = vunpack.c.h.b16 %v1804
    %v2632 = vunpack.c.l.b16 %v1805
    %v2633 = vunpack.c.h.b16 %v1805
    %v2634 = vunpack.c.l.b16 %v1806
    %v2635 = vunpack.c.h.b16 %v1806
    %v2636 = vunpack.c.l.b16 %v1807
    %v2637 = vunpack.c.h.b16 %v1807
    %v2638 = vunpack.c.l.b16 %v1808
    %v2639 = vunpack.c.h.b16 %v1808
    %v2640 = vunpack.c.l.b16 %v1809
    %v2641 = vunpack.c.h.b16 %v1809
    %v2642 = vunpack.c.l.b16 %v1810
    %v2643 = vunpack.c.h.b16 %v1810
    %v2644 = vunpack.c.l.b16 %v1811
    %v2645 = vunpack.c.h.b16 %v1811
    %v2646 = vunpack.c.l.b16 %v1812
    %v2647 = vunpack.c.h.b16 %v1812
    %v2648 = vunpack.c.l.b16 %v1813
    %v2649 = vunpack.c.h.b16 %v1813
    %v2650 = vunpack.c.l.b16 %v1814
    %v2651 = vunpack.c.h.b16 %v1814
    %v2652 = vunpack.c.l.b16 %v1815
    %v2653 = vunpack.c.h.b16 %v1815
    %v2654 = vunpack.c.l.b16 %v1816
    %v2655 = vunpack.c.h.b16 %v1816
    %v2656 = vunpack.c.l.b16 %v1817
    %v2657 = vunpack.c.h.b16 %v1817
    %v2658 = vunpack.c.l.b16 %v1818
    %v2659 = vunpack.c.h.b16 %v1818
    %v2660 = vunpack.c.l.b16 %v1819
    %v2661 = vunpack.c.h.b16 %v1819
    %v2662 = vunpack.c.l.b16 %v1820
    %v2663 = vunpack.c.h.b16 %v1820
    %v2664 = vunpack.c.l.b16 %v1821
    %v2665 = vunpack.c.h.b16 %v1821
    %v2666 = vunpack.c.l.b16 %v1822
    %v2667 = vunpack.c.h.b16 %v1822
    %v2668 = vunpack.c.l.b16 %v1823
    %v2669 = vunpack.c.h.b16 %v1823
    %v2670 = vunpack.c.l.b16 %v1824
    %v2671 = vunpack.c.h.b16 %v1824
    %v2672 = vunpack.c.l.b16 %v1825
    %v2673 = vunpack.c.h.b16 %v1825
    %v2674 = vunpack.c.l.b16 %v1826
    %v2675 = vunpack.c.h.b16 %v1826
    %v2676 = vunpack.c.l.b16 %v1827
    %v2677 = vunpack.c.h.b16 %v1827
    %v2678 = vunpack.c.l.b16 %v1828
    %v2679 = vunpack.c.h.b16 %v1828
    %v2680 = vunpack.c.l.b16 %v1829
    %v2681 = vunpack.c.h.b16 %v1829
    %v2682 = vunpack.c.l.b16 %v1830
    %v2683 = vunpack.c.h.b16 %v1830
    %v2684 = vunpack.c.l.b16 %v1831
    %v2685 = vunpack.c.h.b16 %v1831
    %v2686 = vunpack.c.l.b16 %v1832
    %v2687 = vunpack.c.h.b16 %v1832
    %v2688 = vunpack.c.l.b16 %v1833
    %v2689 = vunpack.c.h.b16 %v1833
    %v2690 = vunpack.c.l.b16 %v1834
    %v2691 = vunpack.c.h.b16 %v1834
    %v2692 = vunpack.c.l.b16 %v1835
    %v2693 = vunpack.c.h.b16 %v1835
    %v2694 = vunpack.c.l.b16 %v1836
    %v2695 = vunpack.c.h.b16 %v1836
    %v2696 = vunpack.c.l.b16 %v1837
    %v2697 = vunpack.c.h.b16 %v1837
    %v2698 = vunpack.c.l.b16 %v1838
    %v2699 = vunpack.c.h.b16 %v1838
    %v2700 = vunpack.c.l.b16 %v1839
    %v2701 = vunpack.c.h.b16 %v1839
    %v2702 = vunpack.c.l.b16 %v1840
    %v2703 = vunpack.c.h.b16 %v1840
    %v2704 = vunpack.c.l.b16 %v1841
    %v2705 = vunpack.c.h.b16 %v1841
    %v2706 = vunpack.c.l.b16 %v1842
    %v2707 = vunpack.c.h.b16 %v1842
    %v2708 = vunpack.c.l.b16 %v1843
    %v2709 = vunpack.c.h.b16 %v1843
    %v2710 = vunpack.c.l.b16 %v1844
    %v2711 = vunpack.c.h.b16 %v1844
    %v2712 = vunpack.c.l.b16 %v1845
    %v2713 = vunpack.c.h.b16 %v1845
    %v2714 = vunpack.c.l.b16 %v1846
    %v2715 = vunpack.c.h.b16 %v1846
    %v2716 = vunpack.c.l.b16 %v1847
    %v2717 = vunpack.c.h.b16 %v1847
    %v2718 = vunpack.c.l.b16 %v1848
    %v2719 = vunpack.c.h.b16 %v1848
    %v2720 = vunpack.c.l.b16 %v1849
    %v2721 = vunpack.c.h.b16 %v1849
    %v2722 = vunpack.c.l.b16 %v1850
    %v2723 = vunpack.c.h.b16 %v1850
    %v2724 = vunpack.c.l.b16 %v1851
    %v2725 = vunpack.c.h.b16 %v1851
    %v2726 = vunpack.c.l.b16 %v1852
    %v2727 = vunpack.c.h.b16 %v1852
    %v2728 = vunpack.c.l.b16 %v1853
    %v2729 = vunpack.c.h.b16 %v1853
    %v2730 = vunpack.c.l.b16 %v1854
    %v2731 = vunpack.c.h.b16 %v1854
    %v2732 = vunpack.c.l.b16 %v1855
    %v2733 = vunpack.c.h.b16 %v1855
    %v2734 = vunpack.c.l.b16 %v1856
    %v2735 = vunpack.c.h.b16 %v1856
    %v2736 = vunpack.c.l.b16 %v1857
    %v2737 = vunpack.c.h.b16 %v1857
    %v2738 = vunpack.c.l.b16 %v1858
    %v2739 = vunpack.c.h.b16 %v1858
    %v2740 = vunpack.c.l.b16 %v1859
    %v2741 = vunpack.c.h.b16 %v1859
    %v2742 = vunpack.c.l.b16 %v1860
    %v2743 = vunpack.c.h.b16 %v1860
    %v2744 = vunpack.c.l.b16 %v1861
    %v2745 = vunpack.c.h.b16 %v1861
    %v2746 = vunpack.c.l.b16 %v1862
    %v2747 = vunpack.c.h.b16 %v1862
    %v2748 = vunpack.c.l.b16 %v1863
    %v2749 = vunpack.c.h.b16 %v1863
    %v2750 = vunpack.c.l.b16 %v1864
    %v2751 = vunpack.c.h.b16 %v1864
    %v2752 = vunpack.c.l.b16 %v1865
    %v2753 = vunpack.c.h.b16 %v1865
    %v2754 = vunpack.c.l.b16 %v1866
    %v2755 = vunpack.c.h.b16 %v1866
    %v2756 = vunpack.c.l.b16 %v1867
    %v2757 = vunpack.c.h.b16 %v1867
    %v2758 = vunpack.c.l.b16 %v1868
    %v2759 = vunpack.c.h.b16 %v1868
    %v2760 = vunpack.c.l.b16 %v1869
    %v2761 = vunpack.c.h.b16 %v1869
    %v2762 = vunpack.c.l.b16 %v1870
    %v2763 = vunpack.c.h.b16 %v1870
    %v2764 = vunpack.c.l.b16 %v1871
    %v2765 = vunpack.c.h.b16 %v1871
    %v2766 = vunpack.c.l.b16 %v1872
    %v2767 = vunpack.c.h.b16 %v1872
    %v2768 = vunpack.c.l.b16 %v1873
    %v2769 = vunpack.c.h.b16 %v1873
    %v2770 = vunpack.c.l.b16 %v1874
    %v2771 = vunpack.c.h.b16 %v1874
    %v2772 = vunpack.c.l.b16 %v1875
    %v2773 = vunpack.c.h.b16 %v1875
    %v2774 = vunpack.c.l.b16 %v1876
    %v2775 = vunpack.c.h.b16 %v1876
    %v2776 = vunpack.c.l.b16 %v1877
    %v2777 = vunpack.c.h.b16 %v1877
    %v2778 = vunpack.c.l.b16 %v1878
    %v2779 = vunpack.c.h.b16 %v1878
    %v2780 = vunpack.c.l.b16 %v1879
    %v2781 = vunpack.c.h.b16 %v1879
    %v2782 = vunpack.c.l.b16 %v1880
    %v2783 = vunpack.c.h.b16 %v1880
    %v2784 = vunpack.c.l.b16 %v1881
    %v2785 = vunpack.c.h.b16 %v1881
    %v2786 = vunpack.c.l.b16 %v1882
    %v2787 = vunpack.c.h.b16 %v1882
    %v2788 = vunpack.c.l.b16 %v1883
    %v2789 = vunpack.c.h.b16 %v1883
    %v2790 = vunpack.c.l.b16 %v1884
    %v2791 = vunpack.c.h.b16 %v1884
    %v2792 = vunpack.c.l.b16 %v1885
    %v2793 = vunpack.c.h.b16 %v1885
    %v2794 = vunpack.c.l.b16 %v1886
    %v2795 = vunpack.c.h.b16 %v1886
    %v2796 = vunpack.c.l.b16 %v1887
    %v2797 = vunpack.c.h.b16 %v1887
    %v2798 = vunpack.c.l.b16 %v1888
    %v2799 = vunpack.c.h.b16 %v1888
    %v2800 = vunpack.c.l.b16 %v1889
    %v2801 = vunpack.c.h.b16 %v1889
    %v2802 = vunpack.c.l.b16 %v1890
    %v2803 = vunpack.c.h.b16 %v1890
    %v2804 = vunpack.c.l.b16 %v1891
    %v2805 = vunpack.c.h.b16 %v1891
    %v2806 = vunpack.c.l.b16 %v1892
    %v2807 = vunpack.c.h.b16 %v1892
    %v2808 = vunpack.c.l.b16 %v1893
    %v2809 = vunpack.c.h.b16 %v1893
    %v2810 = vunpack.c.l.b16 %v1894
    %v2811 = vunpack.c.h.b16 %v1894
    %v2812 = vunpack.c.l.b16 %v1895
    %v2813 = vunpack.c.h.b16 %v1895
    %v2814 = vunpack.c.l.b16 %v1896
    %v2815 = vunpack.c.h.b16 %v1896
    %v2816 = vunpack.c.l.b16 %v1897
    %v2817 = vunpack.c.h.b16 %v1897
    %v2818 = vunpack.c.l.b16 %v1898
    %v2819 = vunpack.c.h.b16 %v1898
    %v2820 = vunpack.c.l.b16 %v1899
    %v2821 = vunpack.c.h.b16 %v1899
    %v2822 = vunpack.c.l.b16 %v1900
    %v2823 = vunpack.c.h.b16 %v1900
    %v2824 = vunpack.c.l.b16 %v1901
    %v2825 = vunpack.c.h.b16 %v1901
    %v2826 = vunpack.c.l.b16 %v1902
    %v2827 = vunpack.c.h.b16 %v1902
    %v2828 = vunpack.c.l.b16 %v1903
    %v2829 = vunpack.c.h.b16 %v1903
    %v2830 = vunpack.c.l.b16 %v1904
    %v2831 = vunpack.c.h.b16 %v1904
    %v2832 = vunpack.c.l.b16 %v1905
    %v2833 = vunpack.c.h.b16 %v1905
    %v2834 = vunpack.c.l.b16 %v1906
    %v2835 = vunpack.c.h.b16 %v1906
    %v2836 = vunpack.c.l.b16 %v1907
    %v2837 = vunpack.c.h.b16 %v1907
    %v2838 = vunpack.c.l.b16 %v1908
    %v2839 = vunpack.c.h.b16 %v1908
    %v2840 = vunpack.c.l.b16 %v1909
    %v2841 = vunpack.c.h.b16 %v1909
    %v2842 = vunpack.c.l.b16 %v1910
    %v2843 = vunpack.c.h.b16 %v1910
    %v2844 = vunpack.c.l.b16 %v1911
    %v2845 = vunpack.c.h.b16 %v1911
    %v2846 = vunpack.c.l.b16 %v1912
    %v2847 = vunpack.c.h.b16 %v1912
    %v2848 = vunpack.c.l.b16 %v1913
    %v2849 = vunpack.c.h.b16 %v1913
    %v2850 = vunpack.c.l.b16 %v1914
    %v2851 = vunpack.c.h.b16 %v1914
    %v2852 = vunpack.c.l.b16 %v1915
    %v2853 = vunpack.c.h.b16 %v1915
    %v2854 = vunpack.c.l.b16 %v1916
    %v2855 = vunpack.c.h.b16 %v1916
    %v2856 = vunpack.c.l.b16 %v1917
    %v2857 = vunpack.c.h.b16 %v1917
    %v2858 = vunpack.c.l.b16 %v1918
    %v2859 = vunpack.c.h.b16 %v1918
    %v2860 = vunpack.c.l.b16 %v1919
    %v2861 = vunpack.c.h.b16 %v1919
    %v2862 = vunpack.c.l.b16 %v1920
    %v2863 = vunpack.c.h.b16 %v1920
    %v2864 = vunpack.c.l.b16 %v1921
    %v2865 = vunpack.c.h.b16 %v1921
    %v2866 = vunpack.c.l.b16 %v1922
    %v2867 = vunpack.c.h.b16 %v1922
    %v2868 = vunpack.c.l.b16 %v1923
    %v2869 = vunpack.c.h.b16 %v1923
    %v2870 = vunpack.c.l.b16 %v1924
    %v2871 = vunpack.c.h.b16 %v1924
    %v2872 = vunpack.c.l.b16 %v1925
    %v2873 = vunpack.c.h.b16 %v1925
    %v2874 = vunpack.c.l.b16 %v1926
    %v2875 = vunpack.c.h.b16 %v1926
    %v2876 = vunpack.c.l.b16 %v1927
    %v2877 = vunpack.c.h.b16 %v1927
    %v2878 = vunpack.c.l.b16 %v1928
    %v2879 = vunpack.c.h.b16 %v1928
    %v2880 = vunpack.c.l.b16 %v1929
    %v2881 = vunpack.c.h.b16 %v1929
    %v2882 = vunpack.c.l.b16 %v1930
    %v2883 = vunpack.c.h.b16 %v1930
    %v2884 = vunpack.c.l.b16 %v1931
    %v2885 = vunpack.c.h.b16 %v1931
    %v2886 = vunpack.c.l.b16 %v1932
    %v2887 = vunpack.c.h.b16 %v1932
    %v2888 = vunpack.c.l.b16 %v1933
    %v2889 = vunpack.c.h.b16 %v1933
    %v2890 = vunpack.c.l.b16 %v1934
    %v2891 = vunpack.c.h.b16 %v1934
    %v2892 = vunpack.c.l.b16 %v1935
    %v2893 = vunpack.c.h.b16 %v1935
    %v2894 = vunpack.c.l.b16 %v1936
    %v2895 = vunpack.c.h.b16 %v1936
    %v2896 = vunpack.c.l.b16 %v1937
    %v2897 = vunpack.c.h.b16 %v1937
    %v2898 = vunpack.c.l.b16 %v1938
    %v2899 = vunpack.c.h.b16 %v1938
    %v2900 = vunpack.c.l.b16 %v1939
    %v2901 = vunpack.c.h.b16 %v1939
    %v2902 = vunpack.c.l.b16 %v1940
    %v2903 = vunpack.c.h.b16 %v1940
    %v2904 = vunpack.c.l.b16 %v1941
    %v2905 = vunpack.c.h.b16 %v1941
    %v2906 = vunpack.c.l.b16 %v1942
    %v2907 = vunpack.c.h.b16 %v1942
    %v2908 = vunpack.c.l.b16 %v1943
    %v2909 = vunpack.c.h.b16 %v1943
    %v2910 = vunpack.c.l.b16 %v1944
    %v2911 = vunpack.c.h.b16 %v1944
    %v2912 = vunpack.c.l.b16 %v1945
    %v2913 = vunpack.c.h.b16 %v1945
    %v2914 = vunpack.c.l.b16 %v1946
    %v2915 = vunpack.c.h.b16 %v1946
    %v2916 = vunpack.c.l.b16 %v1947
    %v2917 = vunpack.c.h.b16 %v1947
    %v2918 = vunpack.c.l.b16 %v1948
    %v2919 = vunpack.c.h.b16 %v1948
    %v2920 = vunpack.c.l.b16 %v1949
    %v2921 = vunpack.c.h.b16 %v1949
    %v2922 = vunpack.c.l.b16 %v1950
    %v2923 = vunpack.c.h.b16 %v1950
    %v2924 = vunpack.c.l.b16 %v1951
    %v2925 = vunpack.c.h.b16 %v1951
    %v2926 = vunpack.c.l.b16 %v1952
    %v2927 = vunpack.c.h.b16 %v1952
    %v2928 = vunpack.c.l.b16 %v1953
    %v2929 = vunpack.c.h.b16 %v1953
    %v2930 = vunpack.c.l.b16 %v1954
    %v2931 = vunpack.c.h.b16 %v1954
    %v2932 = vunpack.c.l.b16 %v1955
    %v2933 = vunpack.c.h.b16 %v1955
    %v2934 = vunpack.c.l.b16 %v1956
    %v2935 = vunpack.c.h.b16 %v1956
    %v2936 = vunpack.c.l.b16 %v1957
    %v2937 = vunpack.c.h.b16 %v1957
    %v2938 = vunpack.c.l.b16 %v1958
    %v2939 = vunpack.c.h.b16 %v1958
    %v2940 = vunpack.c.l.b16 %v1959
    %v2941 = vunpack.c.h.b16 %v1959
    %v2942 = vunpack.c.l.b16 %v1960
    %v2943 = vunpack.c.h.b16 %v1960
    %v2944 = vunpack.c.l.b16 %v1961
    %v2945 = vunpack.c.h.b16 %v1961
    %v2946 = vunpack.c.l.b16 %v1962
    %v2947 = vunpack.c.h.b16 %v1962
    %v2948 = vunpack.c.l.b16 %v1963
    %v2949 = vunpack.c.h.b16 %v1963
    %v2950 = vunpack.c.l.b16 %v1964
    %v2951 = vunpack.c.h.b16 %v1964
    %v2952 = vunpack.c.l.b16 %v1965
    %v2953 = vunpack.c.h.b16 %v1965
    %v2954 = vunpack.c.l.b16 %v1966
    %v2955 = vunpack.c.h.b16 %v1966
    %v2956 = vunpack.c.l.b16 %v1967
    %v2957 = vunpack.c.h.b16 %v1967
    %v2958 = vunpack.c.l.b16 %v1968
    %v2959 = vunpack.c.h.b16 %v1968
    %v2960 = vunpack.c.l.b16 %v1969
    %v2961 = vunpack.c.h.b16 %v1969
    %v2962 = vunpack.c.l.b16 %v1970
    %v2963 = vunpack.c.h.b16 %v1970
    %v2964 = vunpack.c.l.b16 %v1971
    %v2965 = vunpack.c.h.b16 %v1971
    %v2966 = vunpack.c.l.b16 %v1972
    %v2967 = vunpack.c.h.b16 %v1972
    %v2968 = vunpack.c.l.b16 %v1973
    %v2969 = vunpack.c.h.b16 %v1973
    %v2970 = vunpack.c.l.b16 %v1974
    %v2971 = vunpack.c.h.b16 %v1974
    %v2972 = vunpack.c.l.b16 %v1975
    %v2973 = vunpack.c.h.b16 %v1975
    %v2974 = vunpack.c.l.b16 %v1976
    %v2975 = vunpack.c.h.b16 %v1976
    %v2976 = vunpack.c.l.b16 %v1977
    %v2977 = vunpack.c.h.b16 %v1977
    %v2978 = vunpack.c.l.b16 %v1978
    %v2979 = vunpack.c.h.b16 %v1978
    %v2980 = vunpack.c.l.b16 %v1979
    %v2981 = vunpack.c.h.b16 %v1979
    %v2982 = vunpack.c.l.b16 %v1980
    %v2983 = vunpack.c.h.b16 %v1980
    %v2984 = vunpack.c.l.b16 %v1981
    %v2985 = vunpack.c.h.b16 %v1981
    %v2986 = vunpack.c.l.b16 %v1982
    %v2987 = vunpack.c.h.b16 %v1982
    %v2988 = vunpack.c.l.b16 %v1983
    %v2989 = vunpack.c.h.b16 %v1983
    %v2990 = vunpack.c.l.b16 %v1984
    %v2991 = vunpack.c.h.b16 %v1984
    %v2992 = vunpack.c.l.b16 %v1985
    %v2993 = vunpack.c.h.b16 %v1985
    %v2994 = vunpack.c.l.b16 %v1986
    %v2995 = vunpack.c.h.b16 %v1986
    %v2996 = vunpack.c.l.b16 %v1987
    %v2997 = vunpack.c.h.b16 %v1987
    %v2998 = vunpack.c.l.b16 %v1988
    %v2999 = vunpack.c.h.b16 %v1988
    %v3000 = vunpack.c.l.b16 %v1989
    %v3001 = vunpack.c.h.b16 %v1989
    %v3002 = vunpack.c.l.b16 %v1990
    %v3003 = vunpack.c.h.b16 %v1990
    %v3004 = vunpack.c.l.b16 %v1991
    %v3005 = vunpack.c.h.b16 %v1991
    %v3006 = vunpack.c.l.b16 %v1992
    %v3007 = vunpack.c.h.b16 %v1992
    %v3008 = vunpack.c.l.b16 %v1993
    %v3009 = vunpack.c.h.b16 %v1993
    %v3010 = vunpack.c.l.b16 %v1994
    %v3011 = vunpack.c.h.b16 %v1994
    %v3012 = vunpack.c.l.b16 %v1995
    %v3013 = vunpack.c.h.b16 %v1995
    %v3014 = vunpack.c.l.b16 %v1996
    %v3015 = vunpack.c.h.b16 %v1996
    %v3016 = vunpack.c.l.b16 %v1997
    %v3017 = vunpack.c.h.b16 %v1997
    %v3018 = vunpack.c.l.b16 %v1998
    %v3019 = vunpack.c.h.b16 %v1998
    %v3020 = vunpack.c.l.b16 %v1999
    %v3021 = vunpack.c.h.b16 %v1999
    %v3022 = vunpack.c.l.b16 %v2000
    %v3023 = vunpack.c.h.b16 %v2000
    %v3024 = vunpack.c.l.b16 %v2001
    %v3025 = vunpack.c.h.b16 %v2001
    %v3026 = vunpack.c.l.b16 %v2002
    %v3027 = vunpack.c.h.b16 %v2002
    %v3028 = vunpack.c.l.b16 %v2003
    %v3029 = vunpack.c.h.b16 %v2003
    %v3030 = vunpack.c.l.b16 %v2004
    %v3031 = vunpack.c.h.b16 %v2004
    %v3032 = vunpack.c.l.b16 %v2005
    %v3033 = vunpack.c.h.b16 %v2005
    %v3034 = vunpack.c.l.b16 %v2006
    %v3035 = vunpack.c.h.b16 %v2006
    %v3036 = vunpack.c.l.b16 %v2007
    %v3037 = vunpack.c.h.b16 %v2007
    %v3038 = vunpack.c.l.b16 %v2008
    %v3039 = vunpack.c.h.b16 %v2008
    %v3040 = vunpack.c.l.b16 %v2009
    %v3041 = vunpack.c.h.b16 %v2009
    %v3042 = vunpack.c.l.b16 %v2010
    %v3043 = vunpack.c.h.b16 %v2010
    %v3044 = vunpack.c.l.b16 %v2011
    %v3045 = vunpack.c.h.b16 %v2011
    %v3046 = vunpack.c.l.b16 %v2012
    %v3047 = vunpack.c.h.b16 %v2012
    %v3048 = vunpack.c.l.b16 %v2013
    %v3049 = vunpack.c.h.b16 %v2013
    %v3050 = vunpack.c.l.b16 %v2014
    %v3051 = vunpack.c.h.b16 %v2014
    %v3052 = vunpack.c.l.b16 %v2015
    %v3053 = vunpack.c.h.b16 %v2015
    %v3054 = vunpack.c.l.b16 %v2016
    %v3055 = vunpack.c.h.b16 %v2016
    %v3056 = vunpack.c.l.b16 %v2017
    %v3057 = vunpack.c.h.b16 %v2017
    %v3058 = vunpack.c.l.b16 %v2018
    %v3059 = vunpack.c.h.b16 %v2018
    %v3060 = vunpack.c.l.b16 %v2019
    %v3061 = vunpack.c.h.b16 %v2019
    %v3062 = vunpack.c.l.b16 %v2020
    %v3063 = vunpack.c.h.b16 %v2020
    %v3064 = vunpack.c.l.b16 %v2021
    %v3065 = vunpack.c.h.b16 %v2021
    %v3066 = vunpack.c.l.b16 %v2022
    %v3067 = vunpack.c.h.b16 %v2022
    %v3068 = vunpack.c.l.b16 %v2023
    %v3069 = vunpack.c.h.b16 %v2023
    %v3070 = vunpack.c.l.b16 %v2024
    %v3071 = vunpack.c.h.b16 %v2024
    %v3072 = vunpack.c.l.b16 %v2025
    %v3073 = vunpack.c.h.b16 %v2025
    %v3074 = vunpack.c.l.b16 %v2026
    %v3075 = vunpack.c.h.b16 %v2026
    %v3076 = vunpack.c.l.b16 %v2027
    %v3077 = vunpack.c.h.b16 %v2027
    %v3078 = vunpack.c.l.b16 %v2028
    %v3079 = vunpack.c.h.b16 %v2028
    %v3080 = vunpack.c.l.b16 %v2029
    %v3081 = vunpack.c.h.b16 %v2029
    %v3082 = vunpack.c.l.b16 %v2030
    %v3083 = vunpack.c.h.b16 %v2030
    %v3084 = vunpack.c.l.b16 %v2031
    %v3085 = vunpack.c.h.b16 %v2031
    %v3086 = vunpack.c.l.b16 %v2032
    %v3087 = vunpack.c.h.b16 %v2032
    %v3088 = vunpack.c.l.b16 %v2033
    %v3089 = vunpack.c.h.b16 %v2033
    %v3090 = vunpack.c.l.b16 %v2034
    %v3091 = vunpack.c.h.b16 %v2034
    %v3092 = vunpack.c.l.b16 %v2035
    %v3093 = vunpack.c.h.b16 %v2035
    %v3094 = vunpack.c.l.b16 %v2036
    %v3095 = vunpack.c.h.b16 %v2036
    %v3096 = vunpack.c.l.b16 %v2037
    %v3097 = vunpack.c.h.b16 %v2037
    %v3098 = vunpack.c.l.b16 %v2038
    %v3099 = vunpack.c.h.b16 %v2038
    %v3100 = vunpack.c.l.b16 %v2039
    %v3101 = vunpack.c.h.b16 %v2039
    %v3102 = vunpack.c.l.b16 %v2040
    %v3103 = vunpack.c.h.b16 %v2040
    %v3104 = vunpack.c.l.b16 %v2041
    %v3105 = vunpack.c.h.b16 %v2041
    %v3106 = vunpack.c.l.b16 %v2042
    %v3107 = vunpack.c.h.b16 %v2042
    %v3108 = vunpack.c.l.b16 %v2043
    %v3109 = vunpack.c.h.b16 %v2043
    %v3110 = vunpack.c.l.b16 %v2044
    %v3111 = vunpack.c.h.b16 %v2044
    %v3112 = vunpack.c.l.b16 %v2045
    %v3113 = vunpack.c.h.b16 %v2045
    %v3114 = vunpack.c.l.b16 %v2046
    %v3115 = vunpack.c.h.b16 %v2046
    %v3116 = vunpack.c.l.b16 %v2047
    %v3117 = vunpack.c.h.b16 %v2047
    %v3118 = vunpack.c.l.b16 %v2048
    %v3119 = vunpack.c.h.b16 %v2048
    %v3120 = vunpack.c.l.b16 %v2049
    %v3121 = vunpack.c.h.b16 %v2049
    %v3122 = vunpack.c.l.b16 %v2050
    %v3123 = vunpack.c.h.b16 %v2050
    %v3124 = vunpack.c.l.b16 %v2051
    %v3125 = vunpack.c.h.b16 %v2051
    %v3126 = vunpack.c.l.b16 %v2052
    %v3127 = vunpack.c.h.b16 %v2052
    %v3128 = vunpack.c.l.b16 %v2053
    %v3129 = vunpack.c.h.b16 %v2053
    %v3130 = vunpack.c.l.b16 %v2054
    %v3131 = vunpack.c.h.b16 %v2054
    %v3132 = vunpack.c.l.b16 %v2055
    %v3133 = vunpack.c.h.b16 %v2055
    %v3134 = vunpack.c.l.b16 %v2056
    %v3135 = vunpack.c.h.b16 %v2056
    %v3136 = vunpack.c.l.b16 %v2057
    %v3137 = vunpack.c.h.b16 %v2057
    %v3138 = vunpack.c.l.b16 %v2058
    %v3139 = vunpack.c.h.b16 %v2058
    %v3140 = vunpack.c.l.b16 %v2059
    %v3141 = vunpack.c.h.b16 %v2059
    %v3142 = vunpack.c.l.b16 %v2060
    %v3143 = vunpack.c.h.b16 %v2060
    %v3144 = vunpack.c.l.b16 %v2061
    %v3145 = vunpack.c.h.b16 %v2061
    %v3146 = vunpack.c.l.b16 %v2062
    %v3147 = vunpack.c.h.b16 %v2062
    %v3148 = vunpack.c.l.b16 %v2063
    %v3149 = vunpack.c.h.b16 %v2063
    %v3150 = vunpack.c.l.b16 %v2064
    %v3151 = vunpack.c.h.b16 %v2064
    %v3152 = vunpack.c.l.b16 %v2065
    %v3153 = vunpack.c.h.b16 %v2065
    %v3154 = vunpack.c.l.b16 %v2066
    %v3155 = vunpack.c.h.b16 %v2066
    %v3156 = vunpack.c.l.b16 %v2067
    %v3157 = vunpack.c.h.b16 %v2067
    %v3158 = vunpack.c.l.b16 %v2068
    %v3159 = vunpack.c.h.b16 %v2068
    %v3160 = vunpack.c.l.b16 %v2069
    %v3161 = vunpack.c.h.b16 %v2069
    %v3162 = vunpack.c.l.b16 %v2070
    %v3163 = vunpack.c.h.b16 %v2070
    %v3164 = vunpack.c.l.b16 %v2071
    %v3165 = vunpack.c.h.b16 %v2071
    %v3166 = vunpack.c.l.b16 %v2072
    %v3167 = vunpack.c.h.b16 %v2072
    %v3168 = vunpack.c.l.b16 %v2073
    %v3169 = vunpack.c.h.b16 %v2073
    %v3170 = vunpack.c.l.b16 %v2074
    %v3171 = vunpack.c.h.b16 %v2074
    %v3172 = vunpack.c.l.b16 %v2075
    %v3173 = vunpack.c.h.b16 %v2075
    %v3174 = vunpack.c.l.b16 %v2076
    %v3175 = vunpack.c.h.b16 %v2076
    %v3176 = vunpack.c.l.b16 %v2077
    %v3177 = vunpack.c.h.b16 %v2077
    %v3178 = vunpack.c.l.b16 %v2078
    %v3179 = vunpack.c.h.b16 %v2078
    %v3180 = vunpack.c.l.b16 %v2079
    %v3181 = vunpack.c.h.b16 %v2079
    %v3182 = vunpack.c.l.b16 %v2080
    %v3183 = vunpack.c.h.b16 %v2080
    %v3184 = vunpack.c.l.b16 %v2081
    %v3185 = vunpack.c.h.b16 %v2081
    %v3186 = vunpack.c.l.b16 %v2082
    %v3187 = vunpack.c.h.b16 %v2082
    %v3188 = vunpack.c.l.b16 %v2083
    %v3189 = vunpack.c.h.b16 %v2083
    %v3190 = vunpack.c.l.b16 %v2084
    %v3191 = vunpack.c.h.b16 %v2084
    %v3192 = vunpack.c.l.b16 %v2085
    %v3193 = vunpack.c.h.b16 %v2085
    %v3194 = vunpack.c.l.b16 %v2086
    %v3195 = vunpack.c.h.b16 %v2086
    %v3196 = vunpack.c.l.b16 %v2087
    %v3197 = vunpack.c.h.b16 %v2087
    %v3198 = vunpack.c.l.b16 %v2088
    %v3199 = vunpack.c.h.b16 %v2088
    %v3200 = vunpack.c.l.b16 %v2089
    %v3201 = vunpack.c.h.b16 %v2089
    %v3202 = vunpack.c.l.b16 %v2090
    %v3203 = vunpack.c.h.b16 %v2090
    %v3204 = vunpack.c.l.b16 %v2091
    %v3205 = vunpack.c.h.b16 %v2091
    %v3206 = vunpack.c.l.b16 %v2092
    %v3207 = vunpack.c.h.b16 %v2092
    %v3208 = vunpack.c.l.b16 %v2093
    %v3209 = vunpack.c.h.b16 %v2093
    %v3210 = vunpack.c.l.b16 %v2094
    %v3211 = vunpack.c.h.b16 %v2094
    %v3212 = vunpack.c.l.b16 %v2095
    %v3213 = vunpack.c.h.b16 %v2095
    %v3214 = vunpack.c.l.b16 %v2096
    %v3215 = vunpack.c.h.b16 %v2096
    %v3216 = vunpack.c.l.b16 %v2097
    %v3217 = vunpack.c.h.b16 %v2097
    %v3218 = vunpack.c.l.b16 %v2098
    %v3219 = vunpack.c.h.b16 %v2098
    %v3220 = vunpack.c.l.b16 %v2099
    %v3221 = vunpack.c.h.b16 %v2099
    %v3222 = vunpack.c.l.b16 %v2100
    %v3223 = vunpack.c.h.b16 %v2100
    %v3224 = vunpack.c.l.b16 %v2101
    %v3225 = vunpack.c.h.b16 %v2101
    %v3226 = vunpack.c.l.b16 %v2102
    %v3227 = vunpack.c.h.b16 %v2102
    %v3228 = vunpack.c.l.b16 %v2103
    %v3229 = vunpack.c.h.b16 %v2103
    %v3230 = vunpack.c.l.b16 %v2104
    %v3231 = vunpack.c.h.b16 %v2104
    %v3232 = vunpack.c.l.b16 %v2105
    %v3233 = vunpack.c.h.b16 %v2105
    %v3234 = vunpack.c.l.b16 %v2106
    %v3235 = vunpack.c.h.b16 %v2106
    %v3236 = vunpack.c.l.b16 %v2107
    %v3237 = vunpack.c.h.b16 %v2107
    %v3238 = vunpack.c.l.b16 %v2108
    %v3239 = vunpack.c.h.b16 %v2108
    %v3240 = vunpack.c.l.b16 %v2109
    %v3241 = vunpack.c.h.b16 %v2109
    %v3242 = vunpack.c.l.b16 %v2110
    %v3243 = vunpack.c.h.b16 %v2110
    %v3244 = vunpack.c.l.b16 %v2111
    %v3245 = vunpack.c.h.b16 %v2111
    %v3246 = vunpack.c.l.b16 %v2112
    %v3247 = vunpack.c.h.b16 %v2112
    %v3248 = vunpack.c.l.b16 %v2113
    %v3249 = vunpack.c.h.b16 %v2113
    %v3250 = vunpack.c.l.b16 %v2114
    %v3251 = vunpack.c.h.b16 %v2114
    %v3252 = vunpack.c.l.b16 %v2115
    %v3253 = vunpack.c.h.b16 %v2115
    %v3254 = vunpack.c.l.b16 %v2116
    %v3255 = vunpack.c.h.b16 %v2116
    %v3256 = vunpack.c.l.b16 %v2117
    %v3257 = vunpack.c.h.b16 %v2117
    %v3258 = vunpack.c.l.b16 %v2118
    %v3259 = vunpack.c.h.b16 %v2118
    %v3260 = vunpack.c.l.b16 %v2119
    %v3261 = vunpack.c.h.b16 %v2119
    %v3262 = vunpack.c.l.b16 %v2120
    %v3263 = vunpack.c.h.b16 %v2120
    %v3264 = vunpack.c.l.b16 %v2121
    %v3265 = vunpack.c.h.b16 %v2121
    %v3266 = vunpack.c.l.b16 %v2122
    %v3267 = vunpack.c.h.b16 %v2122
    %v3268 = vunpack.c.l.b16 %v2123
    %v3269 = vunpack.c.h.b16 %v2123
    %v3270 = vunpack.c.l.b16 %v2124
    %v3271 = vunpack.c.h.b16 %v2124
    %v3272 = vunpack.c.l.b16 %v2125
    %v3273 = vunpack.c.h.b16 %v2125
    %v3274 = vunpack.c.l.b16 %v2126
    %v3275 = vunpack.c.h.b16 %v2126
    %v3276 = vunpack.c.l.b16 %v2127
    %v3277 = vunpack.c.h.b16 %v2127
    %v3278 = vunpack.c.l.b16 %v2128
    %v3279 = vunpack.c.h.b16 %v2128
    %v3280 = vunpack.c.l.b16 %v2129
    %v3281 = vunpack.c.h.b16 %v2129
    %v3282 = vunpack.c.l.b16 %v2130
    %v3283 = vunpack.c.h.b16 %v2130
    %v3284 = vunpack.c.l.b16 %v2131
    %v3285 = vunpack.c.h.b16 %v2131
    %v3286 = vunpack.c.l.b16 %v2132
    %v3287 = vunpack.c.h.b16 %v2132
    %v3288 = vunpack.c.l.b16 %v2133
    %v3289 = vunpack.c.h.b16 %v2133
    %v3290 = vunpack.c.l.b16 %v2134
    %v3291 = vunpack.c.h.b16 %v2134
    %v3292 = vunpack.c.l.b16 %v2135
    %v3293 = vunpack.c.h.b16 %v2135
    %v3294 = vunpack.c.l.b16 %v2136
    %v3295 = vunpack.c.h.b16 %v2136
    %v3296 = vunpack.c.l.b16 %v2137
    %v3297 = vunpack.c.h.b16 %v2137
    %v3298 = vunpack.c.l.b16 %v2138
    %v3299 = vunpack.c.h.b16 %v2138
    %v3300 = vunpack.c.l.b16 %v2139
    %v3301 = vunpack.c.h.b16 %v2139
    %v3302 = vunpack.c.l.b16 %v2140
    %v3303 = vunpack.c.h.b16 %v2140
    %v3304 = vunpack.c.l.b16 %v2141
    %v3305 = vunpack.c.h.b16 %v2141
    %v3306 = vunpack.c.l.b16 %v2142
    %v3307 = vunpack.c.h.b16 %v2142
    %v3308 = vunpack.c.l.b16 %v2143
    %v3309 = vunpack.c.h.b16 %v2143
    %v3310 = vunpack.c.l.b16 %v2144
    %v3311 = vunpack.c.h.b16 %v2144
    %v3312 = vunpack.c.l.b16 %v2145
    %v3313 = vunpack.c.h.b16 %v2145
    %v3314 = vunpack.c.l.b16 %v2146
    %v3315 = vunpack.c.h.b16 %v2146
    %v3316 = vunpack.c.l.b16 %v2147
    %v3317 = vunpack.c.h.b16 %v2147
    %v3318 = vunpack.c.l.b16 %v2148
    %v3319 = vunpack.c.h.b16 %v2148
    %v3320 = vunpack.c.l.b16 %v2149
    %v3321 = vunpack.c.h.b16 %v2149
    %v3322 = vunpack.c.l.b16 %v2150
    %v3323 = vunpack.c.h.b16 %v2150
    %v3324 = vunpack.c.l.b16 %v2151
    %v3325 = vunpack.c.h.b16 %v2151
    %v3326 = vunpack.c.l.b16 %v2152
    %v3327 = vunpack.c.h.b16 %v2152
    %v3328 = vunpack.c.l.b16 %v2153
    %v3329 = vunpack.c.h.b16 %v2153
    %v3330 = vunpack.c.l.b16 %v2154
    %v3331 = vunpack.c.h.b16 %v2154
    %v3332 = vunpack.c.l.b16 %v2155
    %v3333 = vunpack.c.h.b16 %v2155
    %v3334 = vunpack.c.l.b16 %v2156
    %v3335 = vunpack.c.h.b16 %v2156
    %v3336 = vunpack.c.l.b16 %v2157
    %v3337 = vunpack.c.h.b16 %v2157
    %v3338 = vunpack.c.l.b16 %v2158
    %v3339 = vunpack.c.h.b16 %v2158
    %v3340 = vunpack.c.l.b16 %v2159
    %v3341 = vunpack.c.h.b16 %v2159
    %v3342 = vunpack.c.l.b16 %v2160
    %v3343 = vunpack.c.h.b16 %v2160
    %v3344 = vunpack.c.l.b16 %v2161
    %v3345 = vunpack.c.h.b16 %v2161
    %v3346 = vunpack.c.l.b16 %v2162
    %v3347 = vunpack.c.h.b16 %v2162
    %v3348 = vunpack.c.l.b16 %v2163
    %v3349 = vunpack.c.h.b16 %v2163
    %v3350 = vunpack.c.l.b16 %v2164
    %v3351 = vunpack.c.h.b16 %v2164
    %v3352 = vunpack.c.l.b16 %v2165
    %v3353 = vunpack.c.h.b16 %v2165
    %v3354 = vunpack.c.l.b16 %v2166
    %v3355 = vunpack.c.h.b16 %v2166
    %v3356 = vunpack.c.l.b16 %v2167
    %v3357 = vunpack.c.h.b16 %v2167
    %v3358 = vunpack.c.l.b16 %v2168
    %v3359 = vunpack.c.h.b16 %v2168
    %v3360 = vunpack.c.l.b16 %v2169
    %v3361 = vunpack.c.h.b16 %v2169
    %v3362 = vunpack.c.l.b16 %v2170
    %v3363 = vunpack.c.h.b16 %v2170
    %v3364 = vunpack.c.l.b16 %v2171
    %v3365 = vunpack.c.h.b16 %v2171
    %v3366 = vunpack.c.l.b16 %v2172
    %v3367 = vunpack.c.h.b16 %v2172
    %v3368 = vunpack.c.l.b16 %v2173
    %v3369 = vunpack.c.h.b16 %v2173
    %v3370 = vunpack.c.l.b16 %v2174
    %v3371 = vunpack.c.h.b16 %v2174
    %v3372 = vunpack.c.l.b16 %v2175
    %v3373 = vunpack.c.h.b16 %v2175
    %v3374 = vunpack.c.l.b16 %v2176
    %v3375 = vunpack.c.h.b16 %v2176
    %v3376 = vunpack.c.l.b16 %v2177
    %v3377 = vunpack.c.h.b16 %v2177
    %v3378 = vpack.c.b16 %v2618, %v2610
    %v3379 = vpack.c.b16 %v2619, %v2611
    %v3380 = vpack.c.b16 %v2620, %v2612
    %v3381 = vpack.c.b16 %v2621, %v2613
    %v3382 = vpack.c.b16 %v2622, %v2614
    %v3383 = vpack.c.b16 %v2623, %v2615
    %v3384 = vpack.c.b16 %v2624, %v2616
    %v3385 = vpack.c.b16 %v2625, %v2617
    %v3386 = vpack.c.b16 %v2634, %v2626
    %v3387 = vpack.c.b16 %v2635, %v2627
    %v3388 = vpack.c.b16 %v2636, %v2628
    %v3389 = vpack.c.b16 %v2637, %v2629
    %v3390 = vpack.c.b16 %v2638, %v2630
    %v3391 = vpack.c.b16 %v2639, %v2631
    %v3392 = vpack.c.b16 %v2640, %v2632
    %v3393 = vpack.c.b16 %v2641, %v2633
    %v3394 = vpack.c.b16 %v2650, %v2642
    %v3395 = vpack.c.b16 %v2651, %v2643
    %v3396 = vpack.c.b16 %v2652, %v2644
    %v3397 = vpack.c.b16 %v2653, %v2645
    %v3398 = vpack.c.b16 %v2654, %v2646
    %v3399 = vpack.c.b16 %v2655, %v2647
    %v3400 = vpack.c.b16 %v2656, %v2648
    %v3401 = vpack.c.b16 %v2657, %v2649
    %v3402 = vpack.c.b16 %v2666, %v2658
    %v3403 = vpack.c.b16 %v2667, %v2659
    %v3404 = vpack.c.b16 %v2668, %v2660
    %v3405 = vpack.c.b16 %v2669, %v2661
    %v3406 = vpack.c.b16 %v2670, %v2662
    %v3407 = vpack.c.b16 %v2671, %v2663
    %v3408 = vpack.c.b16 %v2672, %v2664
    %v3409 = vpack.c.b16 %v2673, %v2665
    %v3410 = vpack.c.b16 %v2682, %v2674
    %v3411 = vpack.c.b16 %v2683, %v2675
    %v3412 = vpack.c.b16 %v2684, %v2676
    %v3413 = vpack.c.b16 %v2685, %v2677
    %v3414 = vpack.c.b16 %v2686, %v2678
    %v3415 = vpack.c.b16 %v2687, %v2679
    %v3416 = vpack.c.b16 %v2688, %v2680
    %v3417 = vpack.c.b16 %v2689, %v2681
    %v3418 = vpack.c.b16 %v2698, %v2690
    %v3419 = vpack.c.b16 %v2699, %v2691
    %v3420 = vpack.c.b16 %v2700, %v2692
    %v3421 = vpack.c.b16 %v2701, %v2693
    %v3422 = vpack.c.b16 %v2702, %v2694
    %v3423 = vpack.c.b16 %v2703, %v2695
    %v3424 = vpack.c.b16 %v2704, %v2696
    %v3425 = vpack.c.b16 %v2705, %v2697
    %v3426 = vpack.c.b16 %v2714, %v2706
    %v3427 = vpack.c.b16 %v2715, %v2707
    %v3428 = vpack.c.b16 %v2716, %v2708
    %v3429 = vpack.c.b16 %v2717, %v2709
    %v3430 = vpack.c.b16 %v2718, %v2710
    %v3431 = vpack.c.b16 %v2719, %v2711
    %v3432 = vpack.c.b16 %v2720, %v2712
    %v3433 = vpack.c.b16 %v2721, %v2713
    %v3434 = vpack.c.b16 %v2730, %v2722
    %v3435 = vpack.c.b16 %v2731, %v2723
    %v3436 = vpack.c.b16 %v2732, %v2724
    %v3437 = vpack.c.b16 %v2733, %v2725
    %v3438 = vpack.c.b16 %v2734, %v2726
    %v3439 = vpack.c.b16 %v2735, %v2727
    %v3440 = vpack.c.b16 %v2736, %v2728
    %v3441 = vpack.c.b16 %v2737, %v2729
    %v3442 = vpack.c.b16 %v2746, %v2738
    %v3443 = vpack.c.b16 %v2747, %v2739
    %v3444 = vpack.c.b16 %v2748, %v2740
    %v3445 = vpack.c.b16 %v2749, %v2741
    %v3446 = vpack.c.b16 %v2750, %v2742
    %v3447 = vpack.c.b16 %v2751, %v2743
    %v3448 = vpack.c.b16 %v2752, %v2744
    %v3449 = vpack.c.b16 %v2753, %v2745
    %v3450 = vpack.c.b16 %v2762, %v2754
    %v3451 = vpack.c.b16 %v2763, %v2755
    %v3452 = vpack.c.b16 %v2764, %v2756
    %v3453 = vpack.c.b16 %v2765, %v2757
    %v3454 = vpack.c.b16 %v2766, %v2758
    %v3455 = vpack.c.b16 %v2767, %v2759
    %v3456 = vpack.c.b16 %v2768, %v2760
    %v3457 = vpack.c.b16 %v2769, %v2761
    %v3458 = vpack.c.b16 %v2778, %v2770
    %v3459 = vpack.c.b16 %v2779, %v2771
    %v3460 = vpack.c.b16 %v2780, %v2772
    %v3461 = vpack.c.b16 %v2781, %v2773
    %v3462 = vpack.c.b16 %v2782, %v2774
    %v3463 = vpack.c.b16 %v2783, %v2775
    %v3464 = vpack.c.b16 %v2784, %v2776
    %v3465 = vpack.c.b16 %v2785, %v2777
    %v3466 = vpack.c.b16 %v2794, %v2786
    %v3467 = vpack.c.b16 %v2795, %v2787
    %v3468 = vpack.c.b16 %v2796, %v2788
    %v3469 = vpack.c.b16 %v2797, %v2789
    %v3470 = vpack.c.b16 %v2798, %v2790
    %v3471 = vpack.c.b16 %v2799, %v2791
    %v3472 = vpack.c.b16 %v2800, %v2792
    %v3473 = vpack.c.b16 %v2801, %v2793
    %v3474 = vpack.c.b16 %v2810, %v2802
    %v3475 = vpack.c.b16 %v2811, %v2803
    %v3476 = vpack.c.b16 %v2812, %v2804
    %v3477 = vpack.c.b16 %v2813, %v2805
    %v3478 = vpack.c.b16 %v2814, %v2806
    %v3479 = vpack.c.b16 %v2815, %v2807
    %v3480 = vpack.c.b16 %v2816, %v2808
    %v3481 = vpack.c.b16 %v2817, %v2809
    %v3482 = vpack.c.b16 %v2826, %v2818
    %v3483 = vpack.c.b16 %v2827, %v2819
    %v3484 = vpack.c.b16 %v2828, %v2820
    %v3485 = vpack.c.b16 %v2829, %v2821
    %v3486 = vpack.c.b16 %v2830, %v2822
    %v3487 = vpack.c.b16 %v2831, %v2823
    %v3488 = vpack.c.b16 %v2832, %v2824
    %v3489 = vpack.c.b16 %v2833, %v2825
    %v3490 = vpack.c.b16 %v2842, %v2834
    %v3491 = vpack.c.b16 %v2843, %v2835
    %v3492 = vpack.c.b16 %v2844, %v2836
    %v3493 = vpack.c.b16 %v2845, %v2837
    %v3494 = vpack.c.b16 %v2846, %v2838
    %v3495 = vpack.c.b16 %v2847, %v2839
    %v3496 = vpack.c.b16 %v2848, %v2840
    %v3497 = vpack.c.b16 %v2849, %v2841
    %v3498 = vpack.c.b16 %v2858, %v2850
    %v3499 = vpack.c.b16 %v2859, %v2851
    %v3500 = vpack.c.b16 %v2860, %v2852
    %v3501 = vpack.c.b16 %v2861, %v2853
    %v3502 = vpack.c.b16 %v2862, %v2854
    %v3503 = vpack.c.b16 %v2863, %v2855
    %v3504 = vpack.c.b16 %v2864, %v2856
    %v3505 = vpack.c.b16 %v2865, %v2857
    %v3506 = vpack.c.b16 %v2874, %v2866
    %v3507 = vpack.c.b16 %v2875, %v2867
    %v3508 = vpack.c.b16 %v2876, %v2868
    %v3509 = vpack.c.b16 %v2877, %v2869
    %v3510 = vpack.c.b16 %v2878, %v2870
    %v3511 = vpack.c.b16 %v2879, %v2871
    %v3512 = vpack.c.b16 %v2880, %v2872
    %v3513 = vpack.c.b16 %v2881, %v2873
    %v3514 = vpack.c.b16 %v2890, %v2882
    %v3515 = vpack.c.b16 %v2891, %v2883
    %v3516 = vpack.c.b16 %v2892, %v2884
    %v3517 = vpack.c.b16 %v2893, %v2885
    %v3518 = vpack.c.b16 %v2894, %v2886
    %v3519 = vpack.c.b16 %v2895, %v2887
    %v3520 = vpack.c.b16 %v2896, %v2888
    %v3521 = vpack.c.b16 %v2897, %v2889
    %v3522 = vpack.c.b16 %v2906, %v2898
    %v3523 = vpack.c.b16 %v2907, %v2899
    %v3524 = vpack.c.b16 %v2908, %v2900
    %v3525 = vpack.c.b16 %v2909, %v2901
    %v3526 = vpack.c.b16 %v2910, %v2902
    %v3527 = vpack.c.b16 %v2911, %v2903
    %v3528 = vpack.c.b16 %v2912, %v2904
    %v3529 = vpack.c.b16 %v2913, %v2905
    %v3530 = vpack.c.b16 %v2922, %v2914
    %v3531 = vpack.c.b16 %v2923, %v2915
    %v3532 = vpack.c.b16 %v2924, %v2916
    %v3533 = vpack.c.b16 %v2925, %v2917
    %v3534 = vpack.c.b16 %v2926, %v2918
    %v3535 = vpack.c.b16 %v2927, %v2919
    %v3536 = vpack.c.b16 %v2928, %v2920
    %v3537 = vpack.c.b16 %v2929, %v2921
    %v3538 = vpack.c.b16 %v2938, %v2930
    %v3539 = vpack.c.b16 %v2939, %v2931
    %v3540 = vpack.c.b16 %v2940, %v2932
    %v3541 = vpack.c.b16 %v2941, %v2933
    %v3542 = vpack.c.b16 %v2942, %v2934
    %v3543 = vpack.c.b16 %v2943, %v2935
    %v3544 = vpack.c.b16 %v2944, %v2936
    %v3545 = vpack.c.b16 %v2945, %v2937
    %v3546 = vpack.c.b16 %v2954, %v2946
    %v3547 = vpack.c.b16 %v2955, %v2947
    %v3548 = vpack.c.b16 %v2956, %v2948
    %v3549 = vpack.c.b16 %v2957, %v2949
    %v3550 = vpack.c.b16 %v2958, %v2950
    %v3551 = vpack.c.b16 %v2959, %v2951
    %v3552 = vpack.c.b16 %v2960, %v2952
    %v3553 = vpack.c.b16 %v2961, %v2953
    %v3554 = vpack.c.b16 %v2970, %v2962
    %v3555 = vpack.c.b16 %v2971, %v2963
    %v3556 = vpack.c.b16 %v2972, %v2964
    %v3557 = vpack.c.b16 %v2973, %v2965
    %v3558 = vpack.c.b16 %v2974, %v2966
    %v3559 = vpack.c.b16 %v2975, %v2967
    %v3560 = vpack.c.b16 %v2976, %v2968
    %v3561 = vpack.c.b16 %v2977, %v2969
    %v3562 = vpack.c.b16 %v2986, %v2978
    %v3563 = vpack.c.b16 %v2987, %v2979
    %v3564 = vpack.c.b16 %v2988, %v2980
    %v3565 = vpack.c.b16 %v2989, %v2981
    %v3566 = vpack.c.b16 %v2990, %v2982
    %v3567 = vpack.c.b16 %v2991, %v2983
    %v3568 = vpack.c.b16 %v2992, %v2984
    %v3569 = vpack.c.b16 %v2993, %v2985
    %v3570 = vpack.c.b16 %v3002, %v2994
    %v3571 = vpack.c.b16 %v3003, %v2995
    %v3572 = vpack.c.b16 %v3004, %v2996
    %v3573 = vpack.c.b16 %v3005, %v2997
    %v3574 = vpack.c.b16 %v3006, %v2998
    %v3575 = vpack.c.b16 %v3007, %v2999
    %v3576 = vpack.c.b16 %v3008, %v3000
    %v3577 = vpack.c.b16 %v3009, %v3001
    %v3578 = vpack.c.b16 %v3018, %v3010
    %v3579 = vpack.c.b16 %v3019, %v3011
    %v3580 = vpack.c.b16 %v3020, %v3012
    %v3581 = vpack.c.b16 %v3021, %v3013
    %v3582 = vpack.c.b16 %v3022, %v3014
    %v3583 = vpack.c.b16 %v3023, %v3015
    %v3584 = vpack.c.b16 %v3024, %v3016
    %v3585 = vpack.c.b16 %v3025, %v3017
    %v3586 = vpack.c.b16 %v3034, %v3026
    %v3587 = vpack.c.b16 %v3035, %v3027
    %v3588 = vpack.c.b16 %v3036, %v3028
    %v3589 = vpack.c.b16 %v3037, %v3029
    %v3590 = vpack.c.b16 %v3038, %v3030
    %v3591 = vpack.c.b16 %v3039, %v3031
    %v3592 = vpack.c.b16 %v3040, %v3032
    %v3593 = vpack.c.b16 %v3041, %v3033
    %v3594 = vpack.c.b16 %v3050, %v3042
    %v3595 = vpack.c.b16 %v3051, %v3043
    %v3596 = vpack.c.b16 %v3052, %v3044
    %v3597 = vpack.c.b16 %v3053, %v3045
    %v3598 = vpack.c.b16 %v3054, %v3046
    %v3599 = vpack.c.b16 %v3055, %v3047
    %v3600 = vpack.c.b16 %v3056, %v3048
    %v3601 = vpack.c.b16 %v3057, %v3049
    %v3602 = vpack.c.b16 %v3066, %v3058
    %v3603 = vpack.c.b16 %v3067, %v3059
    %v3604 = vpack.c.b16 %v3068, %v3060
    %v3605 = vpack.c.b16 %v3069, %v3061
    %v3606 = vpack.c.b16 %v3070, %v3062
    %v3607 = vpack.c.b16 %v3071, %v3063
    %v3608 = vpack.c.b16 %v3072, %v3064
    %v3609 = vpack.c.b16 %v3073, %v3065
    %v3610 = vpack.c.b16 %v3082, %v3074
    %v3611 = vpack.c.b16 %v3083, %v3075
    %v3612 = vpack.c.b16 %v3084, %v3076
    %v3613 = vpack.c.b16 %v3085, %v3077
    %v3614 = vpack.c.b16 %v3086, %v3078
    %v3615 = vpack.c.b16 %v3087, %v3079
    %v3616 = vpack.c.b16 %v3088, %v3080
    %v3617 = vpack.c.b16 %v3089, %v3081
    %v3618 = vpack.c.b16 %v3098, %v3090
    %v3619 = vpack.c.b16 %v3099, %v3091
    %v3620 = vpack.c.b16 %v3100, %v3092
    %v3621 = vpack.c.b16 %v3101, %v3093
    %v3622 = vpack.c.b16 %v3102, %v3094
    %v3623 = vpack.c.b16 %v3103, %v3095
    %v3624 = vpack.c.b16 %v3104, %v3096
    %v3625 = vpack.c.b16 %v3105, %v3097
    %v3626 = vpack.c.b16 %v3114, %v3106
    %v3627 = vpack.c.b16 %v3115, %v3107
    %v3628 = vpack.c.b16 %v3116, %v3108
    %v3629 = vpack.c.b16 %v3117, %v3109
    %v3630 = vpack.c.b16 %v3118, %v3110
    %v3631 = vpack.c.b16 %v3119, %v3111
    %v3632 = vpack.c.b16 %v3120, %v3112
    %v3633 = vpack.c.b16 %v3121, %v3113
    %v3634 = vpack.c.b16 %v3130, %v3122
    %v3635 = vpack.c.b16 %v3131, %v3123
    %v3636 = vpack.c.b16 %v3132, %v3124
    %v3637 = vpack.c.b16 %v3133, %v3125
    %v3638 = vpack.c.b16 %v3134, %v3126
    %v3639 = vpack.c.b16 %v3135, %v3127
    %v3640 = vpack.c.b16 %v3136, %v3128
    %v3641 = vpack.c.b16 %v3137, %v3129
    %v3642 = vpack.c.b16 %v3146, %v3138
    %v3643 = vpack.c.b16 %v3147, %v3139
    %v3644 = vpack.c.b16 %v3148, %v3140
    %v3645 = vpack.c.b16 %v3149, %v3141
    %v3646 = vpack.c.b16 %v3150, %v3142
    %v3647 = vpack.c.b16 %v3151, %v3143
    %v3648 = vpack.c.b16 %v3152, %v3144
    %v3649 = vpack.c.b16 %v3153, %v3145
    %v3650 = vpack.c.b16 %v3162, %v3154
    %v3651 = vpack.c.b16 %v3163, %v3155
    %v3652 = vpack.c.b16 %v3164, %v3156
    %v3653 = vpack.c.b16 %v3165, %v3157
    %v3654 = vpack.c.b16 %v3166, %v3158
    %v3655 = vpack.c.b16 %v3167, %v3159
    %v3656 = vpack.c.b16 %v3168, %v3160
    %v3657 = vpack.c.b16 %v3169, %v3161
    %v3658 = vpack.c.b16 %v3178, %v3170
    %v3659 = vpack.c.b16 %v3179, %v3171
    %v3660 = vpack.c.b16 %v3180, %v3172
    %v3661 = vpack.c.b16 %v3181, %v3173
    %v3662 = vpack.c.b16 %v3182, %v3174
    %v3663 = vpack.c.b16 %v3183, %v3175
    %v3664 = vpack.c.b16 %v3184, %v3176
    %v3665 = vpack.c.b16 %v3185, %v3177
    %v3666 = vpack.c.b16 %v3194, %v3186
    %v3667 = vpack.c.b16 %v3195, %v3187
    %v3668 = vpack.c.b16 %v3196, %v3188
    %v3669 = vpack.c.b16 %v3197, %v3189
    %v3670 = vpack.c.b16 %v3198, %v3190
    %v3671 = vpack.c.b16 %v3199, %v3191
    %v3672 = vpack.c.b16 %v3200, %v3192
    %v3673 = vpack.c.b16 %v3201, %v3193
    %v3674 = vpack.c.b16 %v3210, %v3202
    %v3675 = vpack.c.b16 %v3211, %v3203
    %v3676 = vpack.c.b16 %v3212, %v3204
    %v3677 = vpack.c.b16 %v3213, %v3205
    %v3678 = vpack.c.b16 %v3214, %v3206
    %v3679 = vpack.c.b16 %v3215, %v3207
    %v3680 = vpack.c.b16 %v3216, %v3208
    %v3681 = vpack.c.b16 %v3217, %v3209
    %v3682 = vpack.c.b16 %v3226, %v3218
    %v3683 = vpack.c.b16 %v3227, %v3219
    %v3684 = vpack.c.b16 %v3228, %v3220
    %v3685 = vpack.c.b16 %v3229, %v3221
    %v3686 = vpack.c.b16 %v3230, %v3222
    %v3687 = vpack.c.b16 %v3231, %v3223
    %v3688 = vpack.c.b16 %v3232, %v3224
    %v3689 = vpack.c.b16 %v3233, %v3225
    %v3690 = vpack.c.b16 %v3242, %v3234
    %v3691 = vpack.c.b16 %v3243, %v3235
    %v3692 = vpack.c.b16 %v3244, %v3236
    %v3693 = vpack.c.b16 %v3245, %v3237
    %v3694 = vpack.c.b16 %v3246, %v3238
    %v3695 = vpack.c.b16 %v3247, %v3239
    %v3696 = vpack.c.b16 %v3248, %v3240
    %v3697 = vpack.c.b16 %v3249, %v3241
    %v3698 = vpack.c.b16 %v3258, %v3250
    %v3699 = vpack.c.b16 %v3259, %v3251
    %v3700 = vpack.c.b16 %v3260, %v3252
    %v3701 = vpack.c.b16 %v3261, %v3253
    %v3702 = vpack.c.b16 %v3262, %v3254
    %v3703 = vpack.c.b16 %v3263, %v3255
    %v3704 = vpack.c.b16 %v3264, %v3256
    %v3705 = vpack.c.b16 %v3265, %v3257
    %v3706 = vpack.c.b16 %v3274, %v3266
    %v3707 = vpack.c.b16 %v3275, %v3267
    %v3708 = vpack.c.b16 %v3276, %v3268
    %v3709 = vpack.c.b16 %v3277, %v3269
    %v3710 = vpack.c.b16 %v3278, %v3270
    %v3711 = vpack.c.b16 %v3279, %v3271
    %v3712 = vpack.c.b16 %v3280, %v3272
    %v3713 = vpack.c.b16 %v3281, %v3273
    %v3714 = vpack.c.b16 %v3290, %v3282
    %v3715 = vpack.c.b16 %v3291, %v3283
    %v3716 = vpack.c.b16 %v3292, %v3284
    %v3717 = vpack.c.b16 %v3293, %v3285
    %v3718 = vpack.c.b16 %v3294, %v3286
    %v3719 = vpack.c.b16 %v3295, %v3287
    %v3720 = vpack.c.b16 %v3296, %v3288
    %v3721 = vpack.c.b16 %v3297, %v3289
    %v3722 = vpack.c.b16 %v3306, %v3298
    %v3723 = vpack.c.b16 %v3307, %v3299
    %v3724 = vpack.c.b16 %v3308, %v3300
    %v3725 = vpack.c.b16 %v3309, %v3301
    %v3726 = vpack.c.b16 %v3310, %v3302
    %v3727 = vpack.c.b16 %v3311, %v3303
    %v3728 = vpack.c.b16 %v3312, %v3304
    %v3729 = vpack.c.b16 %v3313, %v3305
    %v3730 = vpack.c.b16 %v3322, %v3314
    %v3731 = vpack.c.b16 %v3323, %v3315
    %v3732 = vpack.c.b16 %v3324, %v3316
    %v3733 = vpack.c.b16 %v3325, %v3317
    %v3734 = vpack.c.b16 %v3326, %v3318
    %v3735 = vpack.c.b16 %v3327, %v3319
    %v3736 = vpack.c.b16 %v3328, %v3320
    %v3737 = vpack.c.b16 %v3329, %v3321
    %v3738 = vpack.c.b16 %v3338, %v3330
    %v3739 = vpack.c.b16 %v3339, %v3331
    %v3740 = vpack.c.b16 %v3340, %v3332
    %v3741 = vpack.c.b16 %v3341, %v3333
    %v3742 = vpack.c.b16 %v3342, %v3334
    %v3743 = vpack.c.b16 %v3343, %v3335
    %v3744 = vpack.c.b16 %v3344, %v3336
    %v3745 = vpack.c.b16 %v3345, %v3337
    %v3746 = vpack.c.b16 %v3354, %v3346
    %v3747 = vpack.c.b16 %v3355, %v3347
    %v3748 = vpack.c.b16 %v3356, %v3348
    %v3749 = vpack.c.b16 %v3357, %v3349
    %v3750 = vpack.c.b16 %v3358, %v3350
    %v3751 = vpack.c.b16 %v3359, %v3351
    %v3752 = vpack.c.b16 %v3360, %v3352
    %v3753 = vpack.c.b16 %v3361, %v3353
    %v3754 = vpack.c.b16 %v3370, %v3362
    %v3755 = vpack.c.b16 %v3371, %v3363
    %v3756 = vpack.c.b16 %v3372, %v3364
    %v3757 = vpack.c.b16 %v3373, %v3365
    %v3758 = vpack.c.b16 %v3374, %v3366
    %v3759 = vpack.c.b16 %v3375, %v3367
    %v3760 = vpack.c.b16 %v3376, %v3368
    %v3761 = vpack.c.b16 %v3377, %v3369
    %4146 = vmatprep.subr.bf16.mxu0 %v3435
    %4147 = vmatpush1.bf16.msra.mxu0 %v3434
    %4148 = vmatprep.subr.bf16.mxu0 %v3427
    %4149 = vmatpush1.bf16.msra.mxu0 %v3426
    %4150 = vmatprep.subr.bf16.mxu0 %v3419
    %4151 = vmatpush1.bf16.msra.mxu0 %v3418
    %4152 = vmatprep.subr.bf16.mxu0 %v3411
    %4153 = vmatpush1.bf16.msra.mxu0 %v3410
    %4154 = vmatprep.subr.bf16.mxu0 %v3403
    %4155 = vmatpush1.bf16.msra.mxu0 %v3402
    %4156 = vmatprep.subr.bf16.mxu0 %v3395
    %4157 = vmatpush1.bf16.msra.mxu0 %v3394
    %4158 = vmatprep.subr.bf16.mxu0 %v3387
    %4159 = vmatpush1.bf16.msra.mxu0 %v3386
    %4160 = vmatprep.subr.bf16.mxu0 %v3379
    %4161 = vmatpush1.bf16.msra.mxu0 %v3378
    %4162 = vmatprep.subr.bf16.mxu0 %v3499
    %4163 = vmatpush2.bf16.msra.mxu0 %v3498
    %4164 = vmatprep.subr.bf16.mxu0 %v3491
    %4165 = vmatpush2.bf16.msra.mxu0 %v3490
    %4166 = vmatprep.subr.bf16.mxu0 %v3483
    %4167 = vmatpush2.bf16.msra.mxu0 %v3482
    %4168 = vmatprep.subr.bf16.mxu0 %v3475
    %4169 = vmatpush2.bf16.msra.mxu0 %v3474
    %4170 = vmatprep.subr.bf16.mxu0 %v3467
    %4171 = vmatpush2.bf16.msra.mxu0 %v3466
    %4172 = vmatprep.subr.bf16.mxu0 %v3459
    %4173 = vmatpush2.bf16.msra.mxu0 %v3458
    %4174 = vmatprep.subr.bf16.mxu0 %v3451
    %4175 = vmatpush2.bf16.msra.mxu0 %v3450
    %4176 = vmatprep.subr.bf16.mxu0 %v3443
    %4177 = vmatpush2.bf16.msra.mxu0 %v3442
    %4178 = vmatprep.mubr.bf16.mxu0 %v2180
    %4179 = vmatmul.mubr.bf16.gmra.mxu0 %v2179
    %v4180 = vpop.f32.mrf.mxu0
    %v4181 = vadd.f32 %v2189, %v4180
    %v4182 = vpop.f32.mrf.mxu0
    %v4183 = vadd.f32 %v2193, %v4182
    %v4184 = vpop.f32.mrf.mxu0
    %v4185 = vpop.f32.mrf.mxu0
    %4186 = vdwg.mxu0
    %4187 = vmatprep.subr.bf16.mxu0 %v3563
    %4188 = vmatpush1.bf16.msra.mxu0 %v3562
    %4189 = vmatprep.subr.bf16.mxu0 %v3555
    %4190 = vmatpush1.bf16.msra.mxu0 %v3554
    %4191 = vmatprep.subr.bf16.mxu0 %v3547
    %4192 = vmatpush1.bf16.msra.mxu0 %v3546
    %4193 = vmatprep.subr.bf16.mxu0 %v3539
    %4194 = vmatpush1.bf16.msra.mxu0 %v3538
    %4195 = vmatprep.subr.bf16.mxu0 %v3531
    %4196 = vmatpush1.bf16.msra.mxu0 %v3530
    %4197 = vmatprep.subr.bf16.mxu0 %v3523
    %4198 = vmatpush1.bf16.msra.mxu0 %v3522
    %4199 = vmatprep.subr.bf16.mxu0 %v3515
    %4200 = vmatpush1.bf16.msra.mxu0 %v3514
    %4201 = vmatprep.subr.bf16.mxu0 %v3507
    %4202 = vmatpush1.bf16.msra.mxu0 %v3506
    %4203 = vmatprep.subr.bf16.mxu0 %v3627
    %4204 = vmatpush2.bf16.msra.mxu0 %v3626
    %4205 = vmatprep.subr.bf16.mxu0 %v3619
    %4206 = vmatpush2.bf16.msra.mxu0 %v3618
    %4207 = vmatprep.subr.bf16.mxu0 %v3611
    %4208 = vmatpush2.bf16.msra.mxu0 %v3610
    %4209 = vmatprep.subr.bf16.mxu0 %v3603
    %4210 = vmatpush2.bf16.msra.mxu0 %v3602
    %4211 = vmatprep.subr.bf16.mxu0 %v3595
    %4212 = vmatpush2.bf16.msra.mxu0 %v3594
    %4213 = vmatprep.subr.bf16.mxu0 %v3587
    %4214 = vmatpush2.bf16.msra.mxu0 %v3586
    %4215 = vmatprep.subr.bf16.mxu0 %v3579
    %4216 = vmatpush2.bf16.msra.mxu0 %v3578
    %4217 = vmatprep.subr.bf16.mxu0 %v3571
    %4218 = vmatpush2.bf16.msra.mxu0 %v3570
    %4219 = vmatprep.mubr.bf16.mxu0 %v2182
    %4220 = vmatmul.mubr.bf16.gmra.mxu0 %v2181
    %v4221 = vpop.f32.mrf.mxu0
    %v4222 = vadd.f32 %v4181, %v4221
    %v4223 = vpop.f32.mrf.mxu0
    %v4224 = vadd.f32 %v4183, %v4223
    %v4225 = vpop.f32.mrf.mxu0
    %v4226 = vpop.f32.mrf.mxu0
    %4227 = vdwg.mxu0
    %4228 = vmatprep.subr.bf16.mxu0 %v3691
    %4229 = vmatpush1.bf16.msra.mxu0 %v3690
    %4230 = vmatprep.subr.bf16.mxu0 %v3683
    %4231 = vmatpush1.bf16.msra.mxu0 %v3682
    %4232 = vmatprep.subr.bf16.mxu0 %v3675
    %4233 = vmatpush1.bf16.msra.mxu0 %v3674
    %4234 = vmatprep.subr.bf16.mxu0 %v3667
    %4235 = vmatpush1.bf16.msra.mxu0 %v3666
    %4236 = vmatprep.subr.bf16.mxu0 %v3659
    %4237 = vmatpush1.bf16.msra.mxu0 %v3658
    %4238 = vmatprep.subr.bf16.mxu0 %v3651
    %4239 = vmatpush1.bf16.msra.mxu0 %v3650
    %4240 = vmatprep.subr.bf16.mxu0 %v3643
    %4241 = vmatpush1.bf16.msra.mxu0 %v3642
    %4242 = vmatprep.subr.bf16.mxu0 %v3635
    %4243 = vmatpush1.bf16.msra.mxu0 %v3634
    %4244 = vmatprep.subr.bf16.mxu0 %v3755
    %4245 = vmatpush2.bf16.msra.mxu0 %v3754
    %4246 = vmatprep.subr.bf16.mxu0 %v3747
    %4247 = vmatpush2.bf16.msra.mxu0 %v3746
    %4248 = vmatprep.subr.bf16.mxu0 %v3739
    %4249 = vmatpush2.bf16.msra.mxu0 %v3738
    %4250 = vmatprep.subr.bf16.mxu0 %v3731
    %4251 = vmatpush2.bf16.msra.mxu0 %v3730
    %4252 = vmatprep.subr.bf16.mxu0 %v3723
    %4253 = vmatpush2.bf16.msra.mxu0 %v3722
    %4254 = vmatprep.subr.bf16.mxu0 %v3715
    %4255 = vmatpush2.bf16.msra.mxu0 %v3714
    %4256 = vmatprep.subr.bf16.mxu0 %v3707
    %4257 = vmatpush2.bf16.msra.mxu0 %v3706
    %4258 = vmatprep.subr.bf16.mxu0 %v3699
    %4259 = vmatpush2.bf16.msra.mxu0 %v3698
    %4260 = vmatprep.mubr.bf16.mxu0 %v2184
    %4261 = vmatmul.mubr.bf16.gmra.mxu0 %v2183
    %v4262 = vpop.f32.mrf.mxu0
    %v4263 = vadd.f32 %v4222, %v4262
    %v4264 = vpop.f32.mrf.mxu0
    %v4265 = vadd.f32 %v4224, %v4264
    %v4266 = vpop.f32.mrf.mxu0
    %v4267 = vpop.f32.mrf.mxu0
    %4268 = vdwg.mxu0
    %4269 = vmatprep.subr.bf16.mxu0 %v3437
    %4270 = vmatpush1.bf16.msra.mxu0 %v3436
    %4271 = vmatprep.subr.bf16.mxu0 %v3429
    %4272 = vmatpush1.bf16.msra.mxu0 %v3428
    %4273 = vmatprep.subr.bf16.mxu0 %v3421
    %4274 = vmatpush1.bf16.msra.mxu0 %v3420
    %4275 = vmatprep.subr.bf16.mxu0 %v3413
    %4276 = vmatpush1.bf16.msra.mxu0 %v3412
    %4277 = vmatprep.subr.bf16.mxu0 %v3405
    %4278 = vmatpush1.bf16.msra.mxu0 %v3404
    %4279 = vmatprep.subr.bf16.mxu0 %v3397
    %4280 = vmatpush1.bf16.msra.mxu0 %v3396
    %4281 = vmatprep.subr.bf16.mxu0 %v3389
    %4282 = vmatpush1.bf16.msra.mxu0 %v3388
    %4283 = vmatprep.subr.bf16.mxu0 %v3381
    %4284 = vmatpush1.bf16.msra.mxu0 %v3380
    %4285 = vmatprep.subr.bf16.mxu0 %v3501
    %4286 = vmatpush2.bf16.msra.mxu0 %v3500
    %4287 = vmatprep.subr.bf16.mxu0 %v3493
    %4288 = vmatpush2.bf16.msra.mxu0 %v3492
    %4289 = vmatprep.subr.bf16.mxu0 %v3485
    %4290 = vmatpush2.bf16.msra.mxu0 %v3484
    %4291 = vmatprep.subr.bf16.mxu0 %v3477
    %4292 = vmatpush2.bf16.msra.mxu0 %v3476
    %4293 = vmatprep.subr.bf16.mxu0 %v3469
    %4294 = vmatpush2.bf16.msra.mxu0 %v3468
    %4295 = vmatprep.subr.bf16.mxu0 %v3461
    %4296 = vmatpush2.bf16.msra.mxu0 %v3460
    %4297 = vmatprep.subr.bf16.mxu0 %v3453
    %4298 = vmatpush2.bf16.msra.mxu0 %v3452
    %4299 = vmatprep.subr.bf16.mxu0 %v3445
    %4300 = vmatpush2.bf16.msra.mxu0 %v3444
    %4301 = vmatprep.mubr.bf16.mxu0 %v2180
    %4302 = vmatmul.mubr.bf16.gmra.mxu0 %v2179
    %v4303 = vpop.f32.mrf.mxu0
    %v4304 = vadd.f32 %v2197, %v4303
    %v4305 = vpop.f32.mrf.mxu0
    %v4306 = vadd.f32 %v2201, %v4305
    %v4307 = vpop.f32.mrf.mxu0
    %v4308 = vpop.f32.mrf.mxu0
    %4309 = vdwg.mxu0
    %4310 = vmatprep.subr.bf16.mxu0 %v3565
    %4311 = vmatpush1.bf16.msra.mxu0 %v3564
    %4312 = vmatprep.subr.bf16.mxu0 %v3557
    %4313 = vmatpush1.bf16.msra.mxu0 %v3556
    %4314 = vmatprep.subr.bf16.mxu0 %v3549
    %4315 = vmatpush1.bf16.msra.mxu0 %v3548
    %4316 = vmatprep.subr.bf16.mxu0 %v3541
    %4317 = vmatpush1.bf16.msra.mxu0 %v3540
    %4318 = vmatprep.subr.bf16.mxu0 %v3533
    %4319 = vmatpush1.bf16.msra.mxu0 %v3532
    %4320 = vmatprep.subr.bf16.mxu0 %v3525
    %4321 = vmatpush1.bf16.msra.mxu0 %v3524
    %4322 = vmatprep.subr.bf16.mxu0 %v3517
    %4323 = vmatpush1.bf16.msra.mxu0 %v3516
    %4324 = vmatprep.subr.bf16.mxu0 %v3509
    %4325 = vmatpush1.bf16.msra.mxu0 %v3508
    %4326 = vmatprep.subr.bf16.mxu0 %v3629
    %4327 = vmatpush2.bf16.msra.mxu0 %v3628
    %4328 = vmatprep.subr.bf16.mxu0 %v3621
    %4329 = vmatpush2.bf16.msra.mxu0 %v3620
    %4330 = vmatprep.subr.bf16.mxu0 %v3613
    %4331 = vmatpush2.bf16.msra.mxu0 %v3612
    %4332 = vmatprep.subr.bf16.mxu0 %v3605
    %4333 = vmatpush2.bf16.msra.mxu0 %v3604
    %4334 = vmatprep.subr.bf16.mxu0 %v3597
    %4335 = vmatpush2.bf16.msra.mxu0 %v3596
    %4336 = vmatprep.subr.bf16.mxu0 %v3589
    %4337 = vmatpush2.bf16.msra.mxu0 %v3588
    %4338 = vmatprep.subr.bf16.mxu0 %v3581
    %4339 = vmatpush2.bf16.msra.mxu0 %v3580
    %4340 = vmatprep.subr.bf16.mxu0 %v3573
    %4341 = vmatpush2.bf16.msra.mxu0 %v3572
    %4342 = vmatprep.mubr.bf16.mxu0 %v2182
    %4343 = vmatmul.mubr.bf16.gmra.mxu0 %v2181
    %v4344 = vpop.f32.mrf.mxu0
    %v4345 = vadd.f32 %v4304, %v4344
    %v4346 = vpop.f32.mrf.mxu0
    %v4347 = vadd.f32 %v4306, %v4346
    %v4348 = vpop.f32.mrf.mxu0
    %v4349 = vpop.f32.mrf.mxu0
    %4350 = vdwg.mxu0
    %4351 = vmatprep.subr.bf16.mxu0 %v3693
    %4352 = vmatpush1.bf16.msra.mxu0 %v3692
    %4353 = vmatprep.subr.bf16.mxu0 %v3685
    %4354 = vmatpush1.bf16.msra.mxu0 %v3684
    %4355 = vmatprep.subr.bf16.mxu0 %v3677
    %4356 = vmatpush1.bf16.msra.mxu0 %v3676
    %4357 = vmatprep.subr.bf16.mxu0 %v3669
    %4358 = vmatpush1.bf16.msra.mxu0 %v3668
    %4359 = vmatprep.subr.bf16.mxu0 %v3661
    %4360 = vmatpush1.bf16.msra.mxu0 %v3660
    %4361 = vmatprep.subr.bf16.mxu0 %v3653
    %4362 = vmatpush1.bf16.msra.mxu0 %v3652
    %4363 = vmatprep.subr.bf16.mxu0 %v3645
    %4364 = vmatpush1.bf16.msra.mxu0 %v3644
    %4365 = vmatprep.subr.bf16.mxu0 %v3637
    %4366 = vmatpush1.bf16.msra.mxu0 %v3636
    %4367 = vmatprep.subr.bf16.mxu0 %v3757
    %4368 = vmatpush2.bf16.msra.mxu0 %v3756
    %4369 = vmatprep.subr.bf16.mxu0 %v3749
    %4370 = vmatpush2.bf16.msra.mxu0 %v3748
    %4371 = vmatprep.subr.bf16.mxu0 %v3741
    %4372 = vmatpush2.bf16.msra.mxu0 %v3740
    %4373 = vmatprep.subr.bf16.mxu0 %v3733
    %4374 = vmatpush2.bf16.msra.mxu0 %v3732
    %4375 = vmatprep.subr.bf16.mxu0 %v3725
    %4376 = vmatpush2.bf16.msra.mxu0 %v3724
    %4377 = vmatprep.subr.bf16.mxu0 %v3717
    %4378 = vmatpush2.bf16.msra.mxu0 %v3716
    %4379 = vmatprep.subr.bf16.mxu0 %v3709
    %4380 = vmatpush2.bf16.msra.mxu0 %v3708
    %4381 = vmatprep.subr.bf16.mxu0 %v3701
    %4382 = vmatpush2.bf16.msra.mxu0 %v3700
    %4383 = vmatprep.mubr.bf16.mxu0 %v2184
    %4384 = vmatmul.mubr.bf16.gmra.mxu0 %v2183
    %v4385 = vpop.f32.mrf.mxu0
    %v4386 = vadd.f32 %v4345, %v4385
    %v4387 = vpop.f32.mrf.mxu0
    %v4388 = vadd.f32 %v4347, %v4387
    %v4389 = vpop.f32.mrf.mxu0
    %v4390 = vpop.f32.mrf.mxu0
    %4391 = vdwg.mxu0
    %4392 = vmatprep.subr.bf16.mxu0 %v3439
    %4393 = vmatpush1.bf16.msra.mxu0 %v3438
    %4394 = vmatprep.subr.bf16.mxu0 %v3431
    %4395 = vmatpush1.bf16.msra.mxu0 %v3430
    %4396 = vmatprep.subr.bf16.mxu0 %v3423
    %4397 = vmatpush1.bf16.msra.mxu0 %v3422
    %4398 = vmatprep.subr.bf16.mxu0 %v3415
    %4399 = vmatpush1.bf16.msra.mxu0 %v3414
    %4400 = vmatprep.subr.bf16.mxu0 %v3407
    %4401 = vmatpush1.bf16.msra.mxu0 %v3406
    %4402 = vmatprep.subr.bf16.mxu0 %v3399
    %4403 = vmatpush1.bf16.msra.mxu0 %v3398
    %4404 = vmatprep.subr.bf16.mxu0 %v3391
    %4405 = vmatpush1.bf16.msra.mxu0 %v3390
    %4406 = vmatprep.subr.bf16.mxu0 %v3383
    %4407 = vmatpush1.bf16.msra.mxu0 %v3382
    %4408 = vmatprep.subr.bf16.mxu0 %v3503
    %4409 = vmatpush2.bf16.msra.mxu0 %v3502
    %4410 = vmatprep.subr.bf16.mxu0 %v3495
    %4411 = vmatpush2.bf16.msra.mxu0 %v3494
    %4412 = vmatprep.subr.bf16.mxu0 %v3487
    %4413 = vmatpush2.bf16.msra.mxu0 %v3486
    %4414 = vmatprep.subr.bf16.mxu0 %v3479
    %4415 = vmatpush2.bf16.msra.mxu0 %v3478
    %4416 = vmatprep.subr.bf16.mxu0 %v3471
    %4417 = vmatpush2.bf16.msra.mxu0 %v3470
    %4418 = vmatprep.subr.bf16.mxu0 %v3463
    %4419 = vmatpush2.bf16.msra.mxu0 %v3462
    %4420 = vmatprep.subr.bf16.mxu0 %v3455
    %4421 = vmatpush2.bf16.msra.mxu0 %v3454
    %4422 = vmatprep.subr.bf16.mxu0 %v3447
    %4423 = vmatpush2.bf16.msra.mxu0 %v3446
    %4424 = vmatprep.mubr.bf16.mxu0 %v2180
    %4425 = vmatmul.mubr.bf16.gmra.mxu0 %v2179
    %v4426 = vpop.f32.mrf.mxu0
    %v4427 = vadd.f32 %v2205, %v4426
    %v4428 = vpop.f32.mrf.mxu0
    %v4429 = vadd.f32 %v2209, %v4428
    %v4430 = vpop.f32.mrf.mxu0
    %v4431 = vpop.f32.mrf.mxu0
    %4432 = vdwg.mxu0
    %4433 = vmatprep.subr.bf16.mxu0 %v3567
    %4434 = vmatpush1.bf16.msra.mxu0 %v3566
    %4435 = vmatprep.subr.bf16.mxu0 %v3559
    %4436 = vmatpush1.bf16.msra.mxu0 %v3558
    %4437 = vmatprep.subr.bf16.mxu0 %v3551
    %4438 = vmatpush1.bf16.msra.mxu0 %v3550
    %4439 = vmatprep.subr.bf16.mxu0 %v3543
    %4440 = vmatpush1.bf16.msra.mxu0 %v3542
    %4441 = vmatprep.subr.bf16.mxu0 %v3535
    %4442 = vmatpush1.bf16.msra.mxu0 %v3534
    %4443 = vmatprep.subr.bf16.mxu0 %v3527
    %4444 = vmatpush1.bf16.msra.mxu0 %v3526
    %4445 = vmatprep.subr.bf16.mxu0 %v3519
    %4446 = vmatpush1.bf16.msra.mxu0 %v3518
    %4447 = vmatprep.subr.bf16.mxu0 %v3511
    %4448 = vmatpush1.bf16.msra.mxu0 %v3510
    %4449 = vmatprep.subr.bf16.mxu0 %v3631
    %4450 = vmatpush2.bf16.msra.mxu0 %v3630
    %4451 = vmatprep.subr.bf16.mxu0 %v3623
    %4452 = vmatpush2.bf16.msra.mxu0 %v3622
    %4453 = vmatprep.subr.bf16.mxu0 %v3615
    %4454 = vmatpush2.bf16.msra.mxu0 %v3614
    %4455 = vmatprep.subr.bf16.mxu0 %v3607
    %4456 = vmatpush2.bf16.msra.mxu0 %v3606
    %4457 = vmatprep.subr.bf16.mxu0 %v3599
    %4458 = vmatpush2.bf16.msra.mxu0 %v3598
    %4459 = vmatprep.subr.bf16.mxu0 %v3591
    %4460 = vmatpush2.bf16.msra.mxu0 %v3590
    %4461 = vmatprep.subr.bf16.mxu0 %v3583
    %4462 = vmatpush2.bf16.msra.mxu0 %v3582
    %4463 = vmatprep.subr.bf16.mxu0 %v3575
    %4464 = vmatpush2.bf16.msra.mxu0 %v3574
    %4465 = vmatprep.mubr.bf16.mxu0 %v2182
    %4466 = vmatmul.mubr.bf16.gmra.mxu0 %v2181
    %v4467 = vpop.f32.mrf.mxu0
    %v4468 = vadd.f32 %v4427, %v4467
    %v4469 = vpop.f32.mrf.mxu0
    %v4470 = vadd.f32 %v4429, %v4469
    %v4471 = vpop.f32.mrf.mxu0
    %v4472 = vpop.f32.mrf.mxu0
    %4473 = vdwg.mxu0
    %4474 = vmatprep.subr.bf16.mxu0 %v3695
    %4475 = vmatpush1.bf16.msra.mxu0 %v3694
    %4476 = vmatprep.subr.bf16.mxu0 %v3687
    %4477 = vmatpush1.bf16.msra.mxu0 %v3686
    %4478 = vmatprep.subr.bf16.mxu0 %v3679
    %4479 = vmatpush1.bf16.msra.mxu0 %v3678
    %4480 = vmatprep.subr.bf16.mxu0 %v3671
    %4481 = vmatpush1.bf16.msra.mxu0 %v3670
    %4482 = vmatprep.subr.bf16.mxu0 %v3663
    %4483 = vmatpush1.bf16.msra.mxu0 %v3662
    %4484 = vmatprep.subr.bf16.mxu0 %v3655
    %4485 = vmatpush1.bf16.msra.mxu0 %v3654
    %4486 = vmatprep.subr.bf16.mxu0 %v3647
    %4487 = vmatpush1.bf16.msra.mxu0 %v3646
    %4488 = vmatprep.subr.bf16.mxu0 %v3639
    %4489 = vmatpush1.bf16.msra.mxu0 %v3638
    %4490 = vmatprep.subr.bf16.mxu0 %v3759
    %4491 = vmatpush2.bf16.msra.mxu0 %v3758
    %4492 = vmatprep.subr.bf16.mxu0 %v3751
    %4493 = vmatpush2.bf16.msra.mxu0 %v3750
    %4494 = vmatprep.subr.bf16.mxu0 %v3743
    %4495 = vmatpush2.bf16.msra.mxu0 %v3742
    %4496 = vmatprep.subr.bf16.mxu0 %v3735
    %4497 = vmatpush2.bf16.msra.mxu0 %v3734
    %4498 = vmatprep.subr.bf16.mxu0 %v3727
    %4499 = vmatpush2.bf16.msra.mxu0 %v3726
    %4500 = vmatprep.subr.bf16.mxu0 %v3719
    %4501 = vmatpush2.bf16.msra.mxu0 %v3718
    %4502 = vmatprep.subr.bf16.mxu0 %v3711
    %4503 = vmatpush2.bf16.msra.mxu0 %v3710
    %4504 = vmatprep.subr.bf16.mxu0 %v3703
    %4505 = vmatpush2.bf16.msra.mxu0 %v3702
    %4506 = vmatprep.mubr.bf16.mxu0 %v2184
    %4507 = vmatmul.mubr.bf16.gmra.mxu0 %v2183
    %v4508 = vpop.f32.mrf.mxu0
    %v4509 = vadd.f32 %v4468, %v4508
    %v4510 = vpop.f32.mrf.mxu0
    %v4511 = vadd.f32 %v4470, %v4510
    %v4512 = vpop.f32.mrf.mxu0
    %v4513 = vpop.f32.mrf.mxu0
    %4514 = vdwg.mxu0
    %4515 = vmatprep.subr.bf16.mxu0 %v3441
    %4516 = vmatpush1.bf16.msra.mxu0 %v3440
    %4517 = vmatprep.subr.bf16.mxu0 %v3433
    %4518 = vmatpush1.bf16.msra.mxu0 %v3432
    %4519 = vmatprep.subr.bf16.mxu0 %v3425
    %4520 = vmatpush1.bf16.msra.mxu0 %v3424
    %4521 = vmatprep.subr.bf16.mxu0 %v3417
    %4522 = vmatpush1.bf16.msra.mxu0 %v3416
    %4523 = vmatprep.subr.bf16.mxu0 %v3409
    %4524 = vmatpush1.bf16.msra.mxu0 %v3408
    %4525 = vmatprep.subr.bf16.mxu0 %v3401
    %4526 = vmatpush1.bf16.msra.mxu0 %v3400
    %4527 = vmatprep.subr.bf16.mxu0 %v3393
    %4528 = vmatpush1.bf16.msra.mxu0 %v3392
    %4529 = vmatprep.subr.bf16.mxu0 %v3385
    %4530 = vmatpush1.bf16.msra.mxu0 %v3384
    %4531 = vmatprep.subr.bf16.mxu0 %v3505
    %4532 = vmatpush2.bf16.msra.mxu0 %v3504
    %4533 = vmatprep.subr.bf16.mxu0 %v3497
    %4534 = vmatpush2.bf16.msra.mxu0 %v3496
    %4535 = vmatprep.subr.bf16.mxu0 %v3489
    %4536 = vmatpush2.bf16.msra.mxu0 %v3488
    %4537 = vmatprep.subr.bf16.mxu0 %v3481
    %4538 = vmatpush2.bf16.msra.mxu0 %v3480
    %4539 = vmatprep.subr.bf16.mxu0 %v3473
    %4540 = vmatpush2.bf16.msra.mxu0 %v3472
    %4541 = vmatprep.subr.bf16.mxu0 %v3465
    %4542 = vmatpush2.bf16.msra.mxu0 %v3464
    %4543 = vmatprep.subr.bf16.mxu0 %v3457
    %4544 = vmatpush2.bf16.msra.mxu0 %v3456
    %4545 = vmatprep.subr.bf16.mxu0 %v3449
    %4546 = vmatpush2.bf16.msra.mxu0 %v3448
    %4547 = vmatprep.mubr.bf16.mxu0 %v2180
    %4548 = vmatmul.mubr.bf16.gmra.mxu0 %v2179
    %v4549 = vpop.f32.mrf.mxu0
    %v4550 = vadd.f32 %v2213, %v4549
    %v4551 = vpop.f32.mrf.mxu0
    %v4552 = vadd.f32 %v2217, %v4551
    %v4553 = vpop.f32.mrf.mxu0
    %v4554 = vpop.f32.mrf.mxu0
    %4555 = vdwg.mxu0
    %4556 = vmatprep.subr.bf16.mxu0 %v3569
    %4557 = vmatpush1.bf16.msra.mxu0 %v3568
    %4558 = vmatprep.subr.bf16.mxu0 %v3561
    %4559 = vmatpush1.bf16.msra.mxu0 %v3560
    %4560 = vmatprep.subr.bf16.mxu0 %v3553
    %4561 = vmatpush1.bf16.msra.mxu0 %v3552
    %4562 = vmatprep.subr.bf16.mxu0 %v3545
    %4563 = vmatpush1.bf16.msra.mxu0 %v3544
    %4564 = vmatprep.subr.bf16.mxu0 %v3537
    %4565 = vmatpush1.bf16.msra.mxu0 %v3536
    %4566 = vmatprep.subr.bf16.mxu0 %v3529
    %4567 = vmatpush1.bf16.msra.mxu0 %v3528
    %4568 = vmatprep.subr.bf16.mxu0 %v3521
    %4569 = vmatpush1.bf16.msra.mxu0 %v3520
    %4570 = vmatprep.subr.bf16.mxu0 %v3513
    %4571 = vmatpush1.bf16.msra.mxu0 %v3512
    %4572 = vmatprep.subr.bf16.mxu0 %v3633
    %4573 = vmatpush2.bf16.msra.mxu0 %v3632
    %4574 = vmatprep.subr.bf16.mxu0 %v3625
    %4575 = vmatpush2.bf16.msra.mxu0 %v3624
    %4576 = vmatprep.subr.bf16.mxu0 %v3617
    %4577 = vmatpush2.bf16.msra.mxu0 %v3616
    %4578 = vmatprep.subr.bf16.mxu0 %v3609
    %4579 = vmatpush2.bf16.msra.mxu0 %v3608
    %4580 = vmatprep.subr.bf16.mxu0 %v3601
    %4581 = vmatpush2.bf16.msra.mxu0 %v3600
    %4582 = vmatprep.subr.bf16.mxu0 %v3593
    %4583 = vmatpush2.bf16.msra.mxu0 %v3592
    %4584 = vmatprep.subr.bf16.mxu0 %v3585
    %4585 = vmatpush2.bf16.msra.mxu0 %v3584
    %4586 = vmatprep.subr.bf16.mxu0 %v3577
    %4587 = vmatpush2.bf16.msra.mxu0 %v3576
    %4588 = vmatprep.mubr.bf16.mxu0 %v2182
    %4589 = vmatmul.mubr.bf16.gmra.mxu0 %v2181
    %v4590 = vpop.f32.mrf.mxu0
    %v4591 = vadd.f32 %v4550, %v4590
    %v4592 = vpop.f32.mrf.mxu0
    %v4593 = vadd.f32 %v4552, %v4592
    %v4594 = vpop.f32.mrf.mxu0
    %v4595 = vpop.f32.mrf.mxu0
    %4596 = vdwg.mxu0
    %4597 = vmatprep.subr.bf16.mxu0 %v3697
    %4598 = vmatpush1.bf16.msra.mxu0 %v3696
    %4599 = vmatprep.subr.bf16.mxu0 %v3689
    %4600 = vmatpush1.bf16.msra.mxu0 %v3688
    %4601 = vmatprep.subr.bf16.mxu0 %v3681
    %4602 = vmatpush1.bf16.msra.mxu0 %v3680
    %4603 = vmatprep.subr.bf16.mxu0 %v3673
    %4604 = vmatpush1.bf16.msra.mxu0 %v3672
    %4605 = vmatprep.subr.bf16.mxu0 %v3665
    %4606 = vmatpush1.bf16.msra.mxu0 %v3664
    %4607 = vmatprep.subr.bf16.mxu0 %v3657
    %4608 = vmatpush1.bf16.msra.mxu0 %v3656
    %4609 = vmatprep.subr.bf16.mxu0 %v3649
    %4610 = vmatpush1.bf16.msra.mxu0 %v3648
    %4611 = vmatprep.subr.bf16.mxu0 %v3641
    %4612 = vmatpush1.bf16.msra.mxu0 %v3640
    %4613 = vmatprep.subr.bf16.mxu0 %v3761
    %4614 = vmatpush2.bf16.msra.mxu0 %v3760
    %4615 = vmatprep.subr.bf16.mxu0 %v3753
    %4616 = vmatpush2.bf16.msra.mxu0 %v3752
    %4617 = vmatprep.subr.bf16.mxu0 %v3745
    %4618 = vmatpush2.bf16.msra.mxu0 %v3744
    %4619 = vmatprep.subr.bf16.mxu0 %v3737
    %4620 = vmatpush2.bf16.msra.mxu0 %v3736
    %4621 = vmatprep.subr.bf16.mxu0 %v3729
    %4622 = vmatpush2.bf16.msra.mxu0 %v3728
    %4623 = vmatprep.subr.bf16.mxu0 %v3721
    %4624 = vmatpush2.bf16.msra.mxu0 %v3720
    %4625 = vmatprep.subr.bf16.mxu0 %v3713
    %4626 = vmatpush2.bf16.msra.mxu0 %v3712
    %4627 = vmatprep.subr.bf16.mxu0 %v3705
    %4628 = vmatpush2.bf16.msra.mxu0 %v3704
    %4629 = vmatprep.mubr.bf16.mxu0 %v2184
    %4630 = vmatmul.mubr.bf16.gmra.mxu0 %v2183
    %v4631 = vpop.f32.mrf.mxu0
    %v4632 = vadd.f32 %v4591, %v4631
    %v4633 = vpop.f32.mrf.mxu0
    %v4634 = vadd.f32 %v4593, %v4633
    %v4635 = vpop.f32.mrf.mxu0
    %v4636 = vpop.f32.mrf.mxu0
    %4637 = vdwg.mxu0
    %v4638 = vmax.f32 %v4263, 0.0
    %v4639 = vmax.f32 %v4265, 0.0
    %v4640 = vmax.f32 %v4386, 0.0
    %v4641 = vmax.f32 %v4388, 0.0
    %v4642 = vmax.f32 %v4509, 0.0
    %v4643 = vmax.f32 %v4511, 0.0
    %v4644 = vmax.f32 %v4632, 0.0
    %v4645 = vmax.f32 %v4634, 0.0
    %v4646 = vld [vmem:[#allocation13] sm:$0xff]
    %v4647 = vld [vmem:[#allocation13 + $0x8] sm:$0xff]
    %v4648 = vld [vmem:[#allocation13 + $0x10] sm:$0xff]
    %v4649 = vld [vmem:[#allocation13 + $0x18] sm:$0xff]
    %v4650 = vld [vmem:[#allocation13 + $0x20] sm:$0xff]
    %v4651 = vld [vmem:[#allocation13 + $0x28] sm:$0xff]
    %v4652 = vld [vmem:[#allocation13 + $0x30] sm:$0xff]
    %v4653 = vld [vmem:[#allocation13 + $0x38] sm:$0xff]
    %v4654 = vld [vmem:[#allocation13 + $0x40] sm:$0xff]
    %v4655 = vld [vmem:[#allocation13 + $0x48] sm:$0xff]
    %v4656 = vld [vmem:[#allocation13 + $0x50] sm:$0xff]
    %v4657 = vld [vmem:[#allocation13 + $0x58] sm:$0xff]
    %v4658 = vld [vmem:[#allocation13 + $0x60] sm:$0xff]
    %v4659 = vld [vmem:[#allocation13 + $0x68] sm:$0xff]
    %v4660 = vld [vmem:[#allocation13 + $0x70] sm:$0xff]
    %v4661 = vld [vmem:[#allocation13 + $0x78] sm:$0xff]
    %v4662 = vld [vmem:[#allocation13 + $0x80] sm:$0xff]
    %v4663 = vld [vmem:[#allocation13 + $0x88] sm:$0xff]
    %v4664 = vld [vmem:[#allocation13 + $0x90] sm:$0xff]
    %v4665 = vld [vmem:[#allocation13 + $0x98] sm:$0xff]
    %v4666 = vld [vmem:[#allocation13 + $0xa0] sm:$0xff]
    %v4667 = vld [vmem:[#allocation13 + $0xa8] sm:$0xff]
    %v4668 = vld [vmem:[#allocation13 + $0xb0] sm:$0xff]
    %v4669 = vld [vmem:[#allocation13 + $0xb8] sm:$0xff]
    %v4670 = vld [vmem:[#allocation13 + $0xc0] sm:$0xff]
    %v4671 = vld [vmem:[#allocation13 + $0xc8] sm:$0xff]
    %v4672 = vld [vmem:[#allocation13 + $0xd0] sm:$0xff]
    %v4673 = vld [vmem:[#allocation13 + $0xd8] sm:$0xff]
    %v4674 = vld [vmem:[#allocation13 + $0xe0] sm:$0xff]
    %v4675 = vld [vmem:[#allocation13 + $0xe8] sm:$0xff]
    %v4676 = vld [vmem:[#allocation13 + $0xf0] sm:$0xff]
    %v4677 = vld [vmem:[#allocation13 + $0xf8] sm:$0xff]
    %v4678 = vld [vmem:[#allocation13 + $0x100] sm:$0xff]
    %v4679 = vld [vmem:[#allocation13 + $0x108] sm:$0xff]
    %v4680 = vld [vmem:[#allocation13 + $0x110] sm:$0xff]
    %v4681 = vld [vmem:[#allocation13 + $0x118] sm:$0xff]
    %v4682 = vld [vmem:[#allocation13 + $0x120] sm:$0xff]
    %v4683 = vld [vmem:[#allocation13 + $0x128] sm:$0xff]
    %v4684 = vld [vmem:[#allocation13 + $0x130] sm:$0xff]
    %v4685 = vld [vmem:[#allocation13 + $0x138] sm:$0xff]
    %v4686 = vld [vmem:[#allocation13 + $0x140] sm:$0xff]
    %v4687 = vld [vmem:[#allocation13 + $0x148] sm:$0xff]
    %v4688 = vld [vmem:[#allocation13 + $0x150] sm:$0xff]
    %v4689 = vld [vmem:[#allocation13 + $0x158] sm:$0xff]
    %v4690 = vld [vmem:[#allocation13 + $0x160] sm:$0xff]
    %v4691 = vld [vmem:[#allocation13 + $0x168] sm:$0xff]
    %v4692 = vld [vmem:[#allocation13 + $0x170] sm:$0xff]
    %v4693 = vld [vmem:[#allocation13 + $0x178] sm:$0xff]
    %v4694 = vld [vmem:[#allocation13 + $0x180] sm:$0xff]
    %v4695 = vld [vmem:[#allocation13 + $0x188] sm:$0xff]
    %v4696 = vld [vmem:[#allocation13 + $0x190] sm:$0xff]
    %v4697 = vld [vmem:[#allocation13 + $0x198] sm:$0xff]
    %v4698 = vld [vmem:[#allocation13 + $0x1a0] sm:$0xff]
    %v4699 = vld [vmem:[#allocation13 + $0x1a8] sm:$0xff]
    %v4700 = vld [vmem:[#allocation13 + $0x1b0] sm:$0xff]
    %v4701 = vld [vmem:[#allocation13 + $0x1b8] sm:$0xff]
    %v4702 = vld [vmem:[#allocation13 + $0x1c0] sm:$0xff]
    %v4703 = vld [vmem:[#allocation13 + $0x1c8] sm:$0xff]
    %v4704 = vld [vmem:[#allocation13 + $0x1d0] sm:$0xff]
    %v4705 = vld [vmem:[#allocation13 + $0x1d8] sm:$0xff]
    %v4706 = vld [vmem:[#allocation13 + $0x1e0] sm:$0xff]
    %v4707 = vld [vmem:[#allocation13 + $0x1e8] sm:$0xff]
    %v4708 = vld [vmem:[#allocation13 + $0x1f0] sm:$0xff]
    %v4709 = vld [vmem:[#allocation13 + $0x1f8] sm:$0xff]
    %v4710 = vld [vmem:[#allocation13 + $0x200] sm:$0xff]
    %v4711 = vld [vmem:[#allocation13 + $0x208] sm:$0xff]
    %v4712 = vld [vmem:[#allocation13 + $0x210] sm:$0xff]
    %v4713 = vld [vmem:[#allocation13 + $0x218] sm:$0xff]
    %v4714 = vld [vmem:[#allocation13 + $0x220] sm:$0xff]
    %v4715 = vld [vmem:[#allocation13 + $0x228] sm:$0xff]
    %v4716 = vld [vmem:[#allocation13 + $0x230] sm:$0xff]
    %v4717 = vld [vmem:[#allocation13 + $0x238] sm:$0xff]
    %v4718 = vld [vmem:[#allocation13 + $0x240] sm:$0xff]
    %v4719 = vld [vmem:[#allocation13 + $0x248] sm:$0xff]
    %v4720 = vld [vmem:[#allocation13 + $0x250] sm:$0xff]
    %v4721 = vld [vmem:[#allocation13 + $0x258] sm:$0xff]
    %v4722 = vld [vmem:[#allocation13 + $0x260] sm:$0xff]
    %v4723 = vld [vmem:[#allocation13 + $0x268] sm:$0xff]
    %v4724 = vld [vmem:[#allocation13 + $0x270] sm:$0xff]
    %v4725 = vld [vmem:[#allocation13 + $0x278] sm:$0xff]
    %v4726 = vld [vmem:[#allocation13 + $0x280] sm:$0xff]
    %v4727 = vld [vmem:[#allocation13 + $0x288] sm:$0xff]
    %v4728 = vld [vmem:[#allocation13 + $0x290] sm:$0xff]
    %v4729 = vld [vmem:[#allocation13 + $0x298] sm:$0xff]
    %v4730 = vld [vmem:[#allocation13 + $0x2a0] sm:$0xff]
    %v4731 = vld [vmem:[#allocation13 + $0x2a8] sm:$0xff]
    %v4732 = vld [vmem:[#allocation13 + $0x2b0] sm:$0xff]
    %v4733 = vld [vmem:[#allocation13 + $0x2b8] sm:$0xff]
    %v4734 = vld [vmem:[#allocation13 + $0x2c0] sm:$0xff]
    %v4735 = vld [vmem:[#allocation13 + $0x2c8] sm:$0xff]
    %v4736 = vld [vmem:[#allocation13 + $0x2d0] sm:$0xff]
    %v4737 = vld [vmem:[#allocation13 + $0x2d8] sm:$0xff]
    %v4738 = vld [vmem:[#allocation13 + $0x2e0] sm:$0xff]
    %v4739 = vld [vmem:[#allocation13 + $0x2e8] sm:$0xff]
    %v4740 = vld [vmem:[#allocation13 + $0x2f0] sm:$0xff]
    %v4741 = vld [vmem:[#allocation13 + $0x2f8] sm:$0xff]
    %v4742 = vld [vmem:[#allocation13 + $0x300] sm:$0xff]
    %v4743 = vld [vmem:[#allocation13 + $0x308] sm:$0xff]
    %v4744 = vld [vmem:[#allocation13 + $0x310] sm:$0xff]
    %v4745 = vld [vmem:[#allocation13 + $0x318] sm:$0xff]
    %v4746 = vld [vmem:[#allocation13 + $0x320] sm:$0xff]
    %v4747 = vld [vmem:[#allocation13 + $0x328] sm:$0xff]
    %v4748 = vld [vmem:[#allocation13 + $0x330] sm:$0xff]
    %v4749 = vld [vmem:[#allocation13 + $0x338] sm:$0xff]
    %v4750 = vld [vmem:[#allocation13 + $0x340] sm:$0xff]
    %v4751 = vld [vmem:[#allocation13 + $0x348] sm:$0xff]
    %v4752 = vld [vmem:[#allocation13 + $0x350] sm:$0xff]
    %v4753 = vld [vmem:[#allocation13 + $0x358] sm:$0xff]
    %v4754 = vld [vmem:[#allocation13 + $0x360] sm:$0xff]
    %v4755 = vld [vmem:[#allocation13 + $0x368] sm:$0xff]
    %v4756 = vld [vmem:[#allocation13 + $0x370] sm:$0xff]
    %v4757 = vld [vmem:[#allocation13 + $0x378] sm:$0xff]
    %v4758 = vld [vmem:[#allocation13 + $0x380] sm:$0xff]
    %v4759 = vld [vmem:[#allocation13 + $0x388] sm:$0xff]
    %v4760 = vld [vmem:[#allocation13 + $0x390] sm:$0xff]
    %v4761 = vld [vmem:[#allocation13 + $0x398] sm:$0xff]
    %v4762 = vld [vmem:[#allocation13 + $0x3a0] sm:$0xff]
    %v4763 = vld [vmem:[#allocation13 + $0x3a8] sm:$0xff]
    %v4764 = vld [vmem:[#allocation13 + $0x3b0] sm:$0xff]
    %v4765 = vld [vmem:[#allocation13 + $0x3b8] sm:$0xff]
    %v4766 = vld [vmem:[#allocation13 + $0x3c0] sm:$0xff]
    %v4767 = vld [vmem:[#allocation13 + $0x3c8] sm:$0xff]
    %v4768 = vld [vmem:[#allocation13 + $0x3d0] sm:$0xff]
    %v4769 = vld [vmem:[#allocation13 + $0x3d8] sm:$0xff]
    %v4770 = vld [vmem:[#allocation13 + $0x3e0] sm:$0xff]
    %v4771 = vld [vmem:[#allocation13 + $0x3e8] sm:$0xff]
    %v4772 = vld [vmem:[#allocation13 + $0x3f0] sm:$0xff]
    %v4773 = vld [vmem:[#allocation13 + $0x3f8] sm:$0xff]
    %v4774 = vld [vmem:[#allocation13 + $0x400] sm:$0xff]
    %v4775 = vld [vmem:[#allocation13 + $0x408] sm:$0xff]
    %v4776 = vld [vmem:[#allocation13 + $0x410] sm:$0xff]
    %v4777 = vld [vmem:[#allocation13 + $0x418] sm:$0xff]
    %v4778 = vld [vmem:[#allocation13 + $0x420] sm:$0xff]
    %v4779 = vld [vmem:[#allocation13 + $0x428] sm:$0xff]
    %v4780 = vld [vmem:[#allocation13 + $0x430] sm:$0xff]
    %v4781 = vld [vmem:[#allocation13 + $0x438] sm:$0xff]
    %v4782 = vld [vmem:[#allocation13 + $0x440] sm:$0xff]
    %v4783 = vld [vmem:[#allocation13 + $0x448] sm:$0xff]
    %v4784 = vld [vmem:[#allocation13 + $0x450] sm:$0xff]
    %v4785 = vld [vmem:[#allocation13 + $0x458] sm:$0xff]
    %v4786 = vld [vmem:[#allocation13 + $0x460] sm:$0xff]
    %v4787 = vld [vmem:[#allocation13 + $0x468] sm:$0xff]
    %v4788 = vld [vmem:[#allocation13 + $0x470] sm:$0xff]
    %v4789 = vld [vmem:[#allocation13 + $0x478] sm:$0xff]
    %v4790 = vld [vmem:[#allocation13 + $0x480] sm:$0xff]
    %v4791 = vld [vmem:[#allocation13 + $0x488] sm:$0xff]
    %v4792 = vld [vmem:[#allocation13 + $0x490] sm:$0xff]
    %v4793 = vld [vmem:[#allocation13 + $0x498] sm:$0xff]
    %v4794 = vld [vmem:[#allocation13 + $0x4a0] sm:$0xff]
    %v4795 = vld [vmem:[#allocation13 + $0x4a8] sm:$0xff]
    %v4796 = vld [vmem:[#allocation13 + $0x4b0] sm:$0xff]
    %v4797 = vld [vmem:[#allocation13 + $0x4b8] sm:$0xff]
    %v4798 = vld [vmem:[#allocation13 + $0x4c0] sm:$0xff]
    %v4799 = vld [vmem:[#allocation13 + $0x4c8] sm:$0xff]
    %v4800 = vld [vmem:[#allocation13 + $0x4d0] sm:$0xff]
    %v4801 = vld [vmem:[#allocation13 + $0x4d8] sm:$0xff]
    %v4802 = vld [vmem:[#allocation13 + $0x4e0] sm:$0xff]
    %v4803 = vld [vmem:[#allocation13 + $0x4e8] sm:$0xff]
    %v4804 = vld [vmem:[#allocation13 + $0x4f0] sm:$0xff]
    %v4805 = vld [vmem:[#allocation13 + $0x4f8] sm:$0xff]
    %v4806 = vld [vmem:[#allocation13 + $0x500] sm:$0xff]
    %v4807 = vld [vmem:[#allocation13 + $0x508] sm:$0xff]
    %v4808 = vld [vmem:[#allocation13 + $0x510] sm:$0xff]
    %v4809 = vld [vmem:[#allocation13 + $0x518] sm:$0xff]
    %v4810 = vld [vmem:[#allocation13 + $0x520] sm:$0xff]
    %v4811 = vld [vmem:[#allocation13 + $0x528] sm:$0xff]
    %v4812 = vld [vmem:[#allocation13 + $0x530] sm:$0xff]
    %v4813 = vld [vmem:[#allocation13 + $0x538] sm:$0xff]
    %v4814 = vld [vmem:[#allocation13 + $0x540] sm:$0xff]
    %v4815 = vld [vmem:[#allocation13 + $0x548] sm:$0xff]
    %v4816 = vld [vmem:[#allocation13 + $0x550] sm:$0xff]
    %v4817 = vld [vmem:[#allocation13 + $0x558] sm:$0xff]
    %v4818 = vld [vmem:[#allocation13 + $0x560] sm:$0xff]
    %v4819 = vld [vmem:[#allocation13 + $0x568] sm:$0xff]
    %v4820 = vld [vmem:[#allocation13 + $0x570] sm:$0xff]
    %v4821 = vld [vmem:[#allocation13 + $0x578] sm:$0xff]
    %v4822 = vld [vmem:[#allocation13 + $0x580] sm:$0xff]
    %v4823 = vld [vmem:[#allocation13 + $0x588] sm:$0xff]
    %v4824 = vld [vmem:[#allocation13 + $0x590] sm:$0xff]
    %v4825 = vld [vmem:[#allocation13 + $0x598] sm:$0xff]
    %v4826 = vld [vmem:[#allocation13 + $0x5a0] sm:$0xff]
    %v4827 = vld [vmem:[#allocation13 + $0x5a8] sm:$0xff]
    %v4828 = vld [vmem:[#allocation13 + $0x5b0] sm:$0xff]
    %v4829 = vld [vmem:[#allocation13 + $0x5b8] sm:$0xff]
    %v4830 = vld [vmem:[#allocation13 + $0x5c0] sm:$0xff]
    %v4831 = vld [vmem:[#allocation13 + $0x5c8] sm:$0xff]
    %v4832 = vld [vmem:[#allocation13 + $0x5d0] sm:$0xff]
    %v4833 = vld [vmem:[#allocation13 + $0x5d8] sm:$0xff]
    %v4834 = vld [vmem:[#allocation13 + $0x5e0] sm:$0xff]
    %v4835 = vld [vmem:[#allocation13 + $0x5e8] sm:$0xff]
    %v4836 = vld [vmem:[#allocation13 + $0x5f0] sm:$0xff]
    %v4837 = vld [vmem:[#allocation13 + $0x5f8] sm:$0xff]
    %v4838 = vld [vmem:[#allocation13 + $0x600] sm:$0xff]
    %v4839 = vld [vmem:[#allocation13 + $0x608] sm:$0xff]
    %v4840 = vld [vmem:[#allocation13 + $0x610] sm:$0xff]
    %v4841 = vld [vmem:[#allocation13 + $0x618] sm:$0xff]
    %v4842 = vld [vmem:[#allocation13 + $0x620] sm:$0xff]
    %v4843 = vld [vmem:[#allocation13 + $0x628] sm:$0xff]
    %v4844 = vld [vmem:[#allocation13 + $0x630] sm:$0xff]
    %v4845 = vld [vmem:[#allocation13 + $0x638] sm:$0xff]
    %v4846 = vld [vmem:[#allocation13 + $0x640] sm:$0xff]
    %v4847 = vld [vmem:[#allocation13 + $0x648] sm:$0xff]
    %v4848 = vld [vmem:[#allocation13 + $0x650] sm:$0xff]
    %v4849 = vld [vmem:[#allocation13 + $0x658] sm:$0xff]
    %v4850 = vld [vmem:[#allocation13 + $0x660] sm:$0xff]
    %v4851 = vld [vmem:[#allocation13 + $0x668] sm:$0xff]
    %v4852 = vld [vmem:[#allocation13 + $0x670] sm:$0xff]
    %v4853 = vld [vmem:[#allocation13 + $0x678] sm:$0xff]
    %v4854 = vld [vmem:[#allocation13 + $0x680] sm:$0xff]
    %v4855 = vld [vmem:[#allocation13 + $0x688] sm:$0xff]
    %v4856 = vld [vmem:[#allocation13 + $0x690] sm:$0xff]
    %v4857 = vld [vmem:[#allocation13 + $0x698] sm:$0xff]
    %v4858 = vld [vmem:[#allocation13 + $0x6a0] sm:$0xff]
    %v4859 = vld [vmem:[#allocation13 + $0x6a8] sm:$0xff]
    %v4860 = vld [vmem:[#allocation13 + $0x6b0] sm:$0xff]
    %v4861 = vld [vmem:[#allocation13 + $0x6b8] sm:$0xff]
    %v4862 = vld [vmem:[#allocation13 + $0x6c0] sm:$0xff]
    %v4863 = vld [vmem:[#allocation13 + $0x6c8] sm:$0xff]
    %v4864 = vld [vmem:[#allocation13 + $0x6d0] sm:$0xff]
    %v4865 = vld [vmem:[#allocation13 + $0x6d8] sm:$0xff]
    %v4866 = vld [vmem:[#allocation13 + $0x6e0] sm:$0xff]
    %v4867 = vld [vmem:[#allocation13 + $0x6e8] sm:$0xff]
    %v4868 = vld [vmem:[#allocation13 + $0x6f0] sm:$0xff]
    %v4869 = vld [vmem:[#allocation13 + $0x6f8] sm:$0xff]
    %v4870 = vld [vmem:[#allocation13 + $0x700] sm:$0xff]
    %v4871 = vld [vmem:[#allocation13 + $0x708] sm:$0xff]
    %v4872 = vld [vmem:[#allocation13 + $0x710] sm:$0xff]
    %v4873 = vld [vmem:[#allocation13 + $0x718] sm:$0xff]
    %v4874 = vld [vmem:[#allocation13 + $0x720] sm:$0xff]
    %v4875 = vld [vmem:[#allocation13 + $0x728] sm:$0xff]
    %v4876 = vld [vmem:[#allocation13 + $0x730] sm:$0xff]
    %v4877 = vld [vmem:[#allocation13 + $0x738] sm:$0xff]
    %v4878 = vld [vmem:[#allocation13 + $0x740] sm:$0xff]
    %v4879 = vld [vmem:[#allocation13 + $0x748] sm:$0xff]
    %v4880 = vld [vmem:[#allocation13 + $0x750] sm:$0xff]
    %v4881 = vld [vmem:[#allocation13 + $0x758] sm:$0xff]
    %v4882 = vld [vmem:[#allocation13 + $0x760] sm:$0xff]
    %v4883 = vld [vmem:[#allocation13 + $0x768] sm:$0xff]
    %v4884 = vld [vmem:[#allocation13 + $0x770] sm:$0xff]
    %v4885 = vld [vmem:[#allocation13 + $0x778] sm:$0xff]
    %v4886 = vld [vmem:[#allocation13 + $0x780] sm:$0xff]
    %v4887 = vld [vmem:[#allocation13 + $0x788] sm:$0xff]
    %v4888 = vld [vmem:[#allocation13 + $0x790] sm:$0xff]
    %v4889 = vld [vmem:[#allocation13 + $0x798] sm:$0xff]
    %v4890 = vld [vmem:[#allocation13 + $0x7a0] sm:$0xff]
    %v4891 = vld [vmem:[#allocation13 + $0x7a8] sm:$0xff]
    %v4892 = vld [vmem:[#allocation13 + $0x7b0] sm:$0xff]
    %v4893 = vld [vmem:[#allocation13 + $0x7b8] sm:$0xff]
    %v4894 = vld [vmem:[#allocation13 + $0x7c0] sm:$0xff]
    %v4895 = vld [vmem:[#allocation13 + $0x7c8] sm:$0xff]
    %v4896 = vld [vmem:[#allocation13 + $0x7d0] sm:$0xff]
    %v4897 = vld [vmem:[#allocation13 + $0x7d8] sm:$0xff]
    %v4898 = vld [vmem:[#allocation13 + $0x7e0] sm:$0xff]
    %v4899 = vld [vmem:[#allocation13 + $0x7e8] sm:$0xff]
    %v4900 = vld [vmem:[#allocation13 + $0x7f0] sm:$0xff]
    %v4901 = vld [vmem:[#allocation13 + $0x7f8] sm:$0xff]
    %v4902 = vld [vmem:[#allocation13 + $0x800] sm:$0xff]
    %v4903 = vld [vmem:[#allocation13 + $0x808] sm:$0xff]
    %v4904 = vld [vmem:[#allocation13 + $0x810] sm:$0xff]
    %v4905 = vld [vmem:[#allocation13 + $0x818] sm:$0xff]
    %v4906 = vld [vmem:[#allocation13 + $0x820] sm:$0xff]
    %v4907 = vld [vmem:[#allocation13 + $0x828] sm:$0xff]
    %v4908 = vld [vmem:[#allocation13 + $0x830] sm:$0xff]
    %v4909 = vld [vmem:[#allocation13 + $0x838] sm:$0xff]
    %v4910 = vld [vmem:[#allocation13 + $0x840] sm:$0xff]
    %v4911 = vld [vmem:[#allocation13 + $0x848] sm:$0xff]
    %v4912 = vld [vmem:[#allocation13 + $0x850] sm:$0xff]
    %v4913 = vld [vmem:[#allocation13 + $0x858] sm:$0xff]
    %v4914 = vld [vmem:[#allocation13 + $0x860] sm:$0xff]
    %v4915 = vld [vmem:[#allocation13 + $0x868] sm:$0xff]
    %v4916 = vld [vmem:[#allocation13 + $0x870] sm:$0xff]
    %v4917 = vld [vmem:[#allocation13 + $0x878] sm:$0xff]
    %v4918 = vld [vmem:[#allocation13 + $0x880] sm:$0xff]
    %v4919 = vld [vmem:[#allocation13 + $0x888] sm:$0xff]
    %v4920 = vld [vmem:[#allocation13 + $0x890] sm:$0xff]
    %v4921 = vld [vmem:[#allocation13 + $0x898] sm:$0xff]
    %v4922 = vld [vmem:[#allocation13 + $0x8a0] sm:$0xff]
    %v4923 = vld [vmem:[#allocation13 + $0x8a8] sm:$0xff]
    %v4924 = vld [vmem:[#allocation13 + $0x8b0] sm:$0xff]
    %v4925 = vld [vmem:[#allocation13 + $0x8b8] sm:$0xff]
    %v4926 = vld [vmem:[#allocation13 + $0x8c0] sm:$0xff]
    %v4927 = vld [vmem:[#allocation13 + $0x8c8] sm:$0xff]
    %v4928 = vld [vmem:[#allocation13 + $0x8d0] sm:$0xff]
    %v4929 = vld [vmem:[#allocation13 + $0x8d8] sm:$0xff]
    %v4930 = vld [vmem:[#allocation13 + $0x8e0] sm:$0xff]
    %v4931 = vld [vmem:[#allocation13 + $0x8e8] sm:$0xff]
    %v4932 = vld [vmem:[#allocation13 + $0x8f0] sm:$0xff]
    %v4933 = vld [vmem:[#allocation13 + $0x8f8] sm:$0xff]
    %v4934 = vld [vmem:[#allocation13 + $0x900] sm:$0xff]
    %v4935 = vld [vmem:[#allocation13 + $0x908] sm:$0xff]
    %v4936 = vld [vmem:[#allocation13 + $0x910] sm:$0xff]
    %v4937 = vld [vmem:[#allocation13 + $0x918] sm:$0xff]
    %v4938 = vld [vmem:[#allocation13 + $0x920] sm:$0xff]
    %v4939 = vld [vmem:[#allocation13 + $0x928] sm:$0xff]
    %v4940 = vld [vmem:[#allocation13 + $0x930] sm:$0xff]
    %v4941 = vld [vmem:[#allocation13 + $0x938] sm:$0xff]
    %v4942 = vld [vmem:[#allocation13 + $0x940] sm:$0xff]
    %v4943 = vld [vmem:[#allocation13 + $0x948] sm:$0xff]
    %v4944 = vld [vmem:[#allocation13 + $0x950] sm:$0xff]
    %v4945 = vld [vmem:[#allocation13 + $0x958] sm:$0xff]
    %v4946 = vld [vmem:[#allocation13 + $0x960] sm:$0xff]
    %v4947 = vld [vmem:[#allocation13 + $0x968] sm:$0xff]
    %v4948 = vld [vmem:[#allocation13 + $0x970] sm:$0xff]
    %v4949 = vld [vmem:[#allocation13 + $0x978] sm:$0xff]
    %v4950 = vld [vmem:[#allocation13 + $0x980] sm:$0xff]
    %v4951 = vld [vmem:[#allocation13 + $0x988] sm:$0xff]
    %v4952 = vld [vmem:[#allocation13 + $0x990] sm:$0xff]
    %v4953 = vld [vmem:[#allocation13 + $0x998] sm:$0xff]
    %v4954 = vld [vmem:[#allocation13 + $0x9a0] sm:$0xff]
    %v4955 = vld [vmem:[#allocation13 + $0x9a8] sm:$0xff]
    %v4956 = vld [vmem:[#allocation13 + $0x9b0] sm:$0xff]
    %v4957 = vld [vmem:[#allocation13 + $0x9b8] sm:$0xff]
    %v4958 = vld [vmem:[#allocation13 + $0x9c0] sm:$0xff]
    %v4959 = vld [vmem:[#allocation13 + $0x9c8] sm:$0xff]
    %v4960 = vld [vmem:[#allocation13 + $0x9d0] sm:$0xff]
    %v4961 = vld [vmem:[#allocation13 + $0x9d8] sm:$0xff]
    %v4962 = vld [vmem:[#allocation13 + $0x9e0] sm:$0xff]
    %v4963 = vld [vmem:[#allocation13 + $0x9e8] sm:$0xff]
    %v4964 = vld [vmem:[#allocation13 + $0x9f0] sm:$0xff]
    %v4965 = vld [vmem:[#allocation13 + $0x9f8] sm:$0xff]
    %v4966 = vld [vmem:[#allocation13 + $0xa00] sm:$0xff]
    %v4967 = vld [vmem:[#allocation13 + $0xa08] sm:$0xff]
    %v4968 = vld [vmem:[#allocation13 + $0xa10] sm:$0xff]
    %v4969 = vld [vmem:[#allocation13 + $0xa18] sm:$0xff]
    %v4970 = vld [vmem:[#allocation13 + $0xa20] sm:$0xff]
    %v4971 = vld [vmem:[#allocation13 + $0xa28] sm:$0xff]
    %v4972 = vld [vmem:[#allocation13 + $0xa30] sm:$0xff]
    %v4973 = vld [vmem:[#allocation13 + $0xa38] sm:$0xff]
    %v4974 = vld [vmem:[#allocation13 + $0xa40] sm:$0xff]
    %v4975 = vld [vmem:[#allocation13 + $0xa48] sm:$0xff]
    %v4976 = vld [vmem:[#allocation13 + $0xa50] sm:$0xff]
    %v4977 = vld [vmem:[#allocation13 + $0xa58] sm:$0xff]
    %v4978 = vld [vmem:[#allocation13 + $0xa60] sm:$0xff]
    %v4979 = vld [vmem:[#allocation13 + $0xa68] sm:$0xff]
    %v4980 = vld [vmem:[#allocation13 + $0xa70] sm:$0xff]
    %v4981 = vld [vmem:[#allocation13 + $0xa78] sm:$0xff]
    %v4982 = vld [vmem:[#allocation13 + $0xa80] sm:$0xff]
    %v4983 = vld [vmem:[#allocation13 + $0xa88] sm:$0xff]
    %v4984 = vld [vmem:[#allocation13 + $0xa90] sm:$0xff]
    %v4985 = vld [vmem:[#allocation13 + $0xa98] sm:$0xff]
    %v4986 = vld [vmem:[#allocation13 + $0xaa0] sm:$0xff]
    %v4987 = vld [vmem:[#allocation13 + $0xaa8] sm:$0xff]
    %v4988 = vld [vmem:[#allocation13 + $0xab0] sm:$0xff]
    %v4989 = vld [vmem:[#allocation13 + $0xab8] sm:$0xff]
    %v4990 = vld [vmem:[#allocation13 + $0xac0] sm:$0xff]
    %v4991 = vld [vmem:[#allocation13 + $0xac8] sm:$0xff]
    %v4992 = vld [vmem:[#allocation13 + $0xad0] sm:$0xff]
    %v4993 = vld [vmem:[#allocation13 + $0xad8] sm:$0xff]
    %v4994 = vld [vmem:[#allocation13 + $0xae0] sm:$0xff]
    %v4995 = vld [vmem:[#allocation13 + $0xae8] sm:$0xff]
    %v4996 = vld [vmem:[#allocation13 + $0xaf0] sm:$0xff]
    %v4997 = vld [vmem:[#allocation13 + $0xaf8] sm:$0xff]
    %v4998 = vld [vmem:[#allocation13 + $0xb00] sm:$0xff]
    %v4999 = vld [vmem:[#allocation13 + $0xb08] sm:$0xff]
    %v5000 = vld [vmem:[#allocation13 + $0xb10] sm:$0xff]
    %v5001 = vld [vmem:[#allocation13 + $0xb18] sm:$0xff]
    %v5002 = vld [vmem:[#allocation13 + $0xb20] sm:$0xff]
    %v5003 = vld [vmem:[#allocation13 + $0xb28] sm:$0xff]
    %v5004 = vld [vmem:[#allocation13 + $0xb30] sm:$0xff]
    %v5005 = vld [vmem:[#allocation13 + $0xb38] sm:$0xff]
    %v5006 = vld [vmem:[#allocation13 + $0xb40] sm:$0xff]
    %v5007 = vld [vmem:[#allocation13 + $0xb48] sm:$0xff]
    %v5008 = vld [vmem:[#allocation13 + $0xb50] sm:$0xff]
    %v5009 = vld [vmem:[#allocation13 + $0xb58] sm:$0xff]
    %v5010 = vld [vmem:[#allocation13 + $0xb60] sm:$0xff]
    %v5011 = vld [vmem:[#allocation13 + $0xb68] sm:$0xff]
    %v5012 = vld [vmem:[#allocation13 + $0xb70] sm:$0xff]
    %v5013 = vld [vmem:[#allocation13 + $0xb78] sm:$0xff]
    %v5014 = vld [vmem:[#allocation13 + $0xb80] sm:$0xff]
    %v5015 = vld [vmem:[#allocation13 + $0xb88] sm:$0xff]
    %v5016 = vld [vmem:[#allocation13 + $0xb90] sm:$0xff]
    %v5017 = vld [vmem:[#allocation13 + $0xb98] sm:$0xff]
    %v5018 = vld [vmem:[#allocation13 + $0xba0] sm:$0xff]
    %v5019 = vld [vmem:[#allocation13 + $0xba8] sm:$0xff]
    %v5020 = vld [vmem:[#allocation13 + $0xbb0] sm:$0xff]
    %v5021 = vld [vmem:[#allocation13 + $0xbb8] sm:$0xff]
    %v5022 = vld [vmem:[#allocation13 + $0xbc0] sm:$0xff]
    %v5023 = vld [vmem:[#allocation13 + $0xbc8] sm:$0xff]
    %v5024 = vld [vmem:[#allocation13 + $0xbd0] sm:$0xff]
    %v5025 = vld [vmem:[#allocation13 + $0xbd8] sm:$0xff]
    %v5026 = vld [vmem:[#allocation13 + $0xbe0] sm:$0xff]
    %v5027 = vld [vmem:[#allocation13 + $0xbe8] sm:$0xff]
    %v5028 = vld [vmem:[#allocation13 + $0xbf0] sm:$0xff]
    %v5029 = vld [vmem:[#allocation13 + $0xbf8] sm:$0xff]
    %v5030 = vld [vmem:[%s8] sm:$0x3f]
    %v5031 = vpack.c.bf16 %v4638, %v4638
    %v5032 = vpack.c.bf16 %v4639, %v4639
    %v5033 = vpack.c.bf16 %v4640, %v4640
    %v5034 = vpack.c.bf16 %v4641, %v4641
    %v5035 = vpack.c.bf16 %v4642, %v4642
    %v5036 = vpack.c.bf16 %v4643, %v4643
    %v5037 = vpack.c.bf16 %v4644, %v4644
    %v5038 = vpack.c.bf16 %v4645, %v4645
    %v5040 = vlaneseq
    %v5041 = vshrl.u32 %v5040, 7
    %v5042 = vsub.s32 0, %v5041
    %v5043 = vrot.slane %v5030, %v5042
    %v5044 = vlaneseq
    %v5045 = vshrl.u32 %v5044, 7
    %v5046 = vsub.s32 1, %v5045
    %v5047 = vrot.slane %v5030, %v5046
    %v5048 = vlaneseq
    %v5049 = vshrl.u32 %v5048, 7
    %v5050 = vsub.s32 2, %v5049
    %v5051 = vrot.slane %v5030, %v5050
    %v5052 = vlaneseq
    %v5053 = vshrl.u32 %v5052, 7
    %v5054 = vsub.s32 3, %v5053
    %v5055 = vrot.slane %v5030, %v5054
    %v5056 = vlaneseq
    %v5057 = vshrl.u32 %v5056, 7
    %v5058 = vsub.s32 4, %v5057
    %v5059 = vrot.slane %v5030, %v5058
    %v5060 = vlaneseq
    %v5061 = vshrl.u32 %v5060, 7
    %v5062 = vsub.s32 5, %v5061
    %v5063 = vrot.slane %v5030, %v5062
    %v5454 = vunpack.c.l.b16 %v4646
    %v5455 = vunpack.c.h.b16 %v4646
    %v5456 = vunpack.c.l.b16 %v4647
    %v5457 = vunpack.c.h.b16 %v4647
    %v5458 = vunpack.c.l.b16 %v4648
    %v5459 = vunpack.c.h.b16 %v4648
    %v5460 = vunpack.c.l.b16 %v4649
    %v5461 = vunpack.c.h.b16 %v4649
    %v5462 = vunpack.c.l.b16 %v4650
    %v5463 = vunpack.c.h.b16 %v4650
    %v5464 = vunpack.c.l.b16 %v4651
    %v5465 = vunpack.c.h.b16 %v4651
    %v5466 = vunpack.c.l.b16 %v4652
    %v5467 = vunpack.c.h.b16 %v4652
    %v5468 = vunpack.c.l.b16 %v4653
    %v5469 = vunpack.c.h.b16 %v4653
    %v5470 = vunpack.c.l.b16 %v4654
    %v5471 = vunpack.c.h.b16 %v4654
    %v5472 = vunpack.c.l.b16 %v4655
    %v5473 = vunpack.c.h.b16 %v4655
    %v5474 = vunpack.c.l.b16 %v4656
    %v5475 = vunpack.c.h.b16 %v4656
    %v5476 = vunpack.c.l.b16 %v4657
    %v5477 = vunpack.c.h.b16 %v4657
    %v5478 = vunpack.c.l.b16 %v4658
    %v5479 = vunpack.c.h.b16 %v4658
    %v5480 = vunpack.c.l.b16 %v4659
    %v5481 = vunpack.c.h.b16 %v4659
    %v5482 = vunpack.c.l.b16 %v4660
    %v5483 = vunpack.c.h.b16 %v4660
    %v5484 = vunpack.c.l.b16 %v4661
    %v5485 = vunpack.c.h.b16 %v4661
    %v5486 = vunpack.c.l.b16 %v4662
    %v5487 = vunpack.c.h.b16 %v4662
    %v5488 = vunpack.c.l.b16 %v4663
    %v5489 = vunpack.c.h.b16 %v4663
    %v5490 = vunpack.c.l.b16 %v4664
    %v5491 = vunpack.c.h.b16 %v4664
    %v5492 = vunpack.c.l.b16 %v4665
    %v5493 = vunpack.c.h.b16 %v4665
    %v5494 = vunpack.c.l.b16 %v4666
    %v5495 = vunpack.c.h.b16 %v4666
    %v5496 = vunpack.c.l.b16 %v4667
    %v5497 = vunpack.c.h.b16 %v4667
    %v5498 = vunpack.c.l.b16 %v4668
    %v5499 = vunpack.c.h.b16 %v4668
    %v5500 = vunpack.c.l.b16 %v4669
    %v5501 = vunpack.c.h.b16 %v4669
    %v5502 = vunpack.c.l.b16 %v4670
    %v5503 = vunpack.c.h.b16 %v4670
    %v5504 = vunpack.c.l.b16 %v4671
    %v5505 = vunpack.c.h.b16 %v4671
    %v5506 = vunpack.c.l.b16 %v4672
    %v5507 = vunpack.c.h.b16 %v4672
    %v5508 = vunpack.c.l.b16 %v4673
    %v5509 = vunpack.c.h.b16 %v4673
    %v5510 = vunpack.c.l.b16 %v4674
    %v5511 = vunpack.c.h.b16 %v4674
    %v5512 = vunpack.c.l.b16 %v4675
    %v5513 = vunpack.c.h.b16 %v4675
    %v5514 = vunpack.c.l.b16 %v4676
    %v5515 = vunpack.c.h.b16 %v4676
    %v5516 = vunpack.c.l.b16 %v4677
    %v5517 = vunpack.c.h.b16 %v4677
    %v5518 = vunpack.c.l.b16 %v4678
    %v5519 = vunpack.c.h.b16 %v4678
    %v5520 = vunpack.c.l.b16 %v4679
    %v5521 = vunpack.c.h.b16 %v4679
    %v5522 = vunpack.c.l.b16 %v4680
    %v5523 = vunpack.c.h.b16 %v4680
    %v5524 = vunpack.c.l.b16 %v4681
    %v5525 = vunpack.c.h.b16 %v4681
    %v5526 = vunpack.c.l.b16 %v4682
    %v5527 = vunpack.c.h.b16 %v4682
    %v5528 = vunpack.c.l.b16 %v4683
    %v5529 = vunpack.c.h.b16 %v4683
    %v5530 = vunpack.c.l.b16 %v4684
    %v5531 = vunpack.c.h.b16 %v4684
    %v5532 = vunpack.c.l.b16 %v4685
    %v5533 = vunpack.c.h.b16 %v4685
    %v5534 = vunpack.c.l.b16 %v4686
    %v5535 = vunpack.c.h.b16 %v4686
    %v5536 = vunpack.c.l.b16 %v4687
    %v5537 = vunpack.c.h.b16 %v4687
    %v5538 = vunpack.c.l.b16 %v4688
    %v5539 = vunpack.c.h.b16 %v4688
    %v5540 = vunpack.c.l.b16 %v4689
    %v5541 = vunpack.c.h.b16 %v4689
    %v5542 = vunpack.c.l.b16 %v4690
    %v5543 = vunpack.c.h.b16 %v4690
    %v5544 = vunpack.c.l.b16 %v4691
    %v5545 = vunpack.c.h.b16 %v4691
    %v5546 = vunpack.c.l.b16 %v4692
    %v5547 = vunpack.c.h.b16 %v4692
    %v5548 = vunpack.c.l.b16 %v4693
    %v5549 = vunpack.c.h.b16 %v4693
    %v5550 = vunpack.c.l.b16 %v4694
    %v5551 = vunpack.c.h.b16 %v4694
    %v5552 = vunpack.c.l.b16 %v4695
    %v5553 = vunpack.c.h.b16 %v4695
    %v5554 = vunpack.c.l.b16 %v4696
    %v5555 = vunpack.c.h.b16 %v4696
    %v5556 = vunpack.c.l.b16 %v4697
    %v5557 = vunpack.c.h.b16 %v4697
    %v5558 = vunpack.c.l.b16 %v4698
    %v5559 = vunpack.c.h.b16 %v4698
    %v5560 = vunpack.c.l.b16 %v4699
    %v5561 = vunpack.c.h.b16 %v4699
    %v5562 = vunpack.c.l.b16 %v4700
    %v5563 = vunpack.c.h.b16 %v4700
    %v5564 = vunpack.c.l.b16 %v4701
    %v5565 = vunpack.c.h.b16 %v4701
    %v5566 = vunpack.c.l.b16 %v4702
    %v5567 = vunpack.c.h.b16 %v4702
    %v5568 = vunpack.c.l.b16 %v4703
    %v5569 = vunpack.c.h.b16 %v4703
    %v5570 = vunpack.c.l.b16 %v4704
    %v5571 = vunpack.c.h.b16 %v4704
    %v5572 = vunpack.c.l.b16 %v4705
    %v5573 = vunpack.c.h.b16 %v4705
    %v5574 = vunpack.c.l.b16 %v4706
    %v5575 = vunpack.c.h.b16 %v4706
    %v5576 = vunpack.c.l.b16 %v4707
    %v5577 = vunpack.c.h.b16 %v4707
    %v5578 = vunpack.c.l.b16 %v4708
    %v5579 = vunpack.c.h.b16 %v4708
    %v5580 = vunpack.c.l.b16 %v4709
    %v5581 = vunpack.c.h.b16 %v4709
    %v5582 = vunpack.c.l.b16 %v4710
    %v5583 = vunpack.c.h.b16 %v4710
    %v5584 = vunpack.c.l.b16 %v4711
    %v5585 = vunpack.c.h.b16 %v4711
    %v5586 = vunpack.c.l.b16 %v4712
    %v5587 = vunpack.c.h.b16 %v4712
    %v5588 = vunpack.c.l.b16 %v4713
    %v5589 = vunpack.c.h.b16 %v4713
    %v5590 = vunpack.c.l.b16 %v4714
    %v5591 = vunpack.c.h.b16 %v4714
    %v5592 = vunpack.c.l.b16 %v4715
    %v5593 = vunpack.c.h.b16 %v4715
    %v5594 = vunpack.c.l.b16 %v4716
    %v5595 = vunpack.c.h.b16 %v4716
    %v5596 = vunpack.c.l.b16 %v4717
    %v5597 = vunpack.c.h.b16 %v4717
    %v5598 = vunpack.c.l.b16 %v4718
    %v5599 = vunpack.c.h.b16 %v4718
    %v5600 = vunpack.c.l.b16 %v4719
    %v5601 = vunpack.c.h.b16 %v4719
    %v5602 = vunpack.c.l.b16 %v4720
    %v5603 = vunpack.c.h.b16 %v4720
    %v5604 = vunpack.c.l.b16 %v4721
    %v5605 = vunpack.c.h.b16 %v4721
    %v5606 = vunpack.c.l.b16 %v4722
    %v5607 = vunpack.c.h.b16 %v4722
    %v5608 = vunpack.c.l.b16 %v4723
    %v5609 = vunpack.c.h.b16 %v4723
    %v5610 = vunpack.c.l.b16 %v4724
    %v5611 = vunpack.c.h.b16 %v4724
    %v5612 = vunpack.c.l.b16 %v4725
    %v5613 = vunpack.c.h.b16 %v4725
    %v5614 = vunpack.c.l.b16 %v4726
    %v5615 = vunpack.c.h.b16 %v4726
    %v5616 = vunpack.c.l.b16 %v4727
    %v5617 = vunpack.c.h.b16 %v4727
    %v5618 = vunpack.c.l.b16 %v4728
    %v5619 = vunpack.c.h.b16 %v4728
    %v5620 = vunpack.c.l.b16 %v4729
    %v5621 = vunpack.c.h.b16 %v4729
    %v5622 = vunpack.c.l.b16 %v4730
    %v5623 = vunpack.c.h.b16 %v4730
    %v5624 = vunpack.c.l.b16 %v4731
    %v5625 = vunpack.c.h.b16 %v4731
    %v5626 = vunpack.c.l.b16 %v4732
    %v5627 = vunpack.c.h.b16 %v4732
    %v5628 = vunpack.c.l.b16 %v4733
    %v5629 = vunpack.c.h.b16 %v4733
    %v5630 = vunpack.c.l.b16 %v4734
    %v5631 = vunpack.c.h.b16 %v4734
    %v5632 = vunpack.c.l.b16 %v4735
    %v5633 = vunpack.c.h.b16 %v4735
    %v5634 = vunpack.c.l.b16 %v4736
    %v5635 = vunpack.c.h.b16 %v4736
    %v5636 = vunpack.c.l.b16 %v4737
    %v5637 = vunpack.c.h.b16 %v4737
    %v5638 = vunpack.c.l.b16 %v4738
    %v5639 = vunpack.c.h.b16 %v4738
    %v5640 = vunpack.c.l.b16 %v4739
    %v5641 = vunpack.c.h.b16 %v4739
    %v5642 = vunpack.c.l.b16 %v4740
    %v5643 = vunpack.c.h.b16 %v4740
    %v5644 = vunpack.c.l.b16 %v4741
    %v5645 = vunpack.c.h.b16 %v4741
    %v5646 = vunpack.c.l.b16 %v4742
    %v5647 = vunpack.c.h.b16 %v4742
    %v5648 = vunpack.c.l.b16 %v4743
    %v5649 = vunpack.c.h.b16 %v4743
    %v5650 = vunpack.c.l.b16 %v4744
    %v5651 = vunpack.c.h.b16 %v4744
    %v5652 = vunpack.c.l.b16 %v4745
    %v5653 = vunpack.c.h.b16 %v4745
    %v5654 = vunpack.c.l.b16 %v4746
    %v5655 = vunpack.c.h.b16 %v4746
    %v5656 = vunpack.c.l.b16 %v4747
    %v5657 = vunpack.c.h.b16 %v4747
    %v5658 = vunpack.c.l.b16 %v4748
    %v5659 = vunpack.c.h.b16 %v4748
    %v5660 = vunpack.c.l.b16 %v4749
    %v5661 = vunpack.c.h.b16 %v4749
    %v5662 = vunpack.c.l.b16 %v4750
    %v5663 = vunpack.c.h.b16 %v4750
    %v5664 = vunpack.c.l.b16 %v4751
    %v5665 = vunpack.c.h.b16 %v4751
    %v5666 = vunpack.c.l.b16 %v4752
    %v5667 = vunpack.c.h.b16 %v4752
    %v5668 = vunpack.c.l.b16 %v4753
    %v5669 = vunpack.c.h.b16 %v4753
    %v5670 = vunpack.c.l.b16 %v4754
    %v5671 = vunpack.c.h.b16 %v4754
    %v5672 = vunpack.c.l.b16 %v4755
    %v5673 = vunpack.c.h.b16 %v4755
    %v5674 = vunpack.c.l.b16 %v4756
    %v5675 = vunpack.c.h.b16 %v4756
    %v5676 = vunpack.c.l.b16 %v4757
    %v5677 = vunpack.c.h.b16 %v4757
    %v5678 = vunpack.c.l.b16 %v4758
    %v5679 = vunpack.c.h.b16 %v4758
    %v5680 = vunpack.c.l.b16 %v4759
    %v5681 = vunpack.c.h.b16 %v4759
    %v5682 = vunpack.c.l.b16 %v4760
    %v5683 = vunpack.c.h.b16 %v4760
    %v5684 = vunpack.c.l.b16 %v4761
    %v5685 = vunpack.c.h.b16 %v4761
    %v5686 = vunpack.c.l.b16 %v4762
    %v5687 = vunpack.c.h.b16 %v4762
    %v5688 = vunpack.c.l.b16 %v4763
    %v5689 = vunpack.c.h.b16 %v4763
    %v5690 = vunpack.c.l.b16 %v4764
    %v5691 = vunpack.c.h.b16 %v4764
    %v5692 = vunpack.c.l.b16 %v4765
    %v5693 = vunpack.c.h.b16 %v4765
    %v5694 = vunpack.c.l.b16 %v4766
    %v5695 = vunpack.c.h.b16 %v4766
    %v5696 = vunpack.c.l.b16 %v4767
    %v5697 = vunpack.c.h.b16 %v4767
    %v5698 = vunpack.c.l.b16 %v4768
    %v5699 = vunpack.c.h.b16 %v4768
    %v5700 = vunpack.c.l.b16 %v4769
    %v5701 = vunpack.c.h.b16 %v4769
    %v5702 = vunpack.c.l.b16 %v4770
    %v5703 = vunpack.c.h.b16 %v4770
    %v5704 = vunpack.c.l.b16 %v4771
    %v5705 = vunpack.c.h.b16 %v4771
    %v5706 = vunpack.c.l.b16 %v4772
    %v5707 = vunpack.c.h.b16 %v4772
    %v5708 = vunpack.c.l.b16 %v4773
    %v5709 = vunpack.c.h.b16 %v4773
    %v5710 = vunpack.c.l.b16 %v4774
    %v5711 = vunpack.c.h.b16 %v4774
    %v5712 = vunpack.c.l.b16 %v4775
    %v5713 = vunpack.c.h.b16 %v4775
    %v5714 = vunpack.c.l.b16 %v4776
    %v5715 = vunpack.c.h.b16 %v4776
    %v5716 = vunpack.c.l.b16 %v4777
    %v5717 = vunpack.c.h.b16 %v4777
    %v5718 = vunpack.c.l.b16 %v4778
    %v5719 = vunpack.c.h.b16 %v4778
    %v5720 = vunpack.c.l.b16 %v4779
    %v5721 = vunpack.c.h.b16 %v4779
    %v5722 = vunpack.c.l.b16 %v4780
    %v5723 = vunpack.c.h.b16 %v4780
    %v5724 = vunpack.c.l.b16 %v4781
    %v5725 = vunpack.c.h.b16 %v4781
    %v5726 = vunpack.c.l.b16 %v4782
    %v5727 = vunpack.c.h.b16 %v4782
    %v5728 = vunpack.c.l.b16 %v4783
    %v5729 = vunpack.c.h.b16 %v4783
    %v5730 = vunpack.c.l.b16 %v4784
    %v5731 = vunpack.c.h.b16 %v4784
    %v5732 = vunpack.c.l.b16 %v4785
    %v5733 = vunpack.c.h.b16 %v4785
    %v5734 = vunpack.c.l.b16 %v4786
    %v5735 = vunpack.c.h.b16 %v4786
    %v5736 = vunpack.c.l.b16 %v4787
    %v5737 = vunpack.c.h.b16 %v4787
    %v5738 = vunpack.c.l.b16 %v4788
    %v5739 = vunpack.c.h.b16 %v4788
    %v5740 = vunpack.c.l.b16 %v4789
    %v5741 = vunpack.c.h.b16 %v4789
    %v5742 = vunpack.c.l.b16 %v4790
    %v5743 = vunpack.c.h.b16 %v4790
    %v5744 = vunpack.c.l.b16 %v4791
    %v5745 = vunpack.c.h.b16 %v4791
    %v5746 = vunpack.c.l.b16 %v4792
    %v5747 = vunpack.c.h.b16 %v4792
    %v5748 = vunpack.c.l.b16 %v4793
    %v5749 = vunpack.c.h.b16 %v4793
    %v5750 = vunpack.c.l.b16 %v4794
    %v5751 = vunpack.c.h.b16 %v4794
    %v5752 = vunpack.c.l.b16 %v4795
    %v5753 = vunpack.c.h.b16 %v4795
    %v5754 = vunpack.c.l.b16 %v4796
    %v5755 = vunpack.c.h.b16 %v4796
    %v5756 = vunpack.c.l.b16 %v4797
    %v5757 = vunpack.c.h.b16 %v4797
    %v5758 = vunpack.c.l.b16 %v4798
    %v5759 = vunpack.c.h.b16 %v4798
    %v5760 = vunpack.c.l.b16 %v4799
    %v5761 = vunpack.c.h.b16 %v4799
    %v5762 = vunpack.c.l.b16 %v4800
    %v5763 = vunpack.c.h.b16 %v4800
    %v5764 = vunpack.c.l.b16 %v4801
    %v5765 = vunpack.c.h.b16 %v4801
    %v5766 = vunpack.c.l.b16 %v4802
    %v5767 = vunpack.c.h.b16 %v4802
    %v5768 = vunpack.c.l.b16 %v4803
    %v5769 = vunpack.c.h.b16 %v4803
    %v5770 = vunpack.c.l.b16 %v4804
    %v5771 = vunpack.c.h.b16 %v4804
    %v5772 = vunpack.c.l.b16 %v4805
    %v5773 = vunpack.c.h.b16 %v4805
    %v5774 = vunpack.c.l.b16 %v4806
    %v5775 = vunpack.c.h.b16 %v4806
    %v5776 = vunpack.c.l.b16 %v4807
    %v5777 = vunpack.c.h.b16 %v4807
    %v5778 = vunpack.c.l.b16 %v4808
    %v5779 = vunpack.c.h.b16 %v4808
    %v5780 = vunpack.c.l.b16 %v4809
    %v5781 = vunpack.c.h.b16 %v4809
    %v5782 = vunpack.c.l.b16 %v4810
    %v5783 = vunpack.c.h.b16 %v4810
    %v5784 = vunpack.c.l.b16 %v4811
    %v5785 = vunpack.c.h.b16 %v4811
    %v5786 = vunpack.c.l.b16 %v4812
    %v5787 = vunpack.c.h.b16 %v4812
    %v5788 = vunpack.c.l.b16 %v4813
    %v5789 = vunpack.c.h.b16 %v4813
    %v5790 = vunpack.c.l.b16 %v4814
    %v5791 = vunpack.c.h.b16 %v4814
    %v5792 = vunpack.c.l.b16 %v4815
    %v5793 = vunpack.c.h.b16 %v4815
    %v5794 = vunpack.c.l.b16 %v4816
    %v5795 = vunpack.c.h.b16 %v4816
    %v5796 = vunpack.c.l.b16 %v4817
    %v5797 = vunpack.c.h.b16 %v4817
    %v5798 = vunpack.c.l.b16 %v4818
    %v5799 = vunpack.c.h.b16 %v4818
    %v5800 = vunpack.c.l.b16 %v4819
    %v5801 = vunpack.c.h.b16 %v4819
    %v5802 = vunpack.c.l.b16 %v4820
    %v5803 = vunpack.c.h.b16 %v4820
    %v5804 = vunpack.c.l.b16 %v4821
    %v5805 = vunpack.c.h.b16 %v4821
    %v5806 = vunpack.c.l.b16 %v4822
    %v5807 = vunpack.c.h.b16 %v4822
    %v5808 = vunpack.c.l.b16 %v4823
    %v5809 = vunpack.c.h.b16 %v4823
    %v5810 = vunpack.c.l.b16 %v4824
    %v5811 = vunpack.c.h.b16 %v4824
    %v5812 = vunpack.c.l.b16 %v4825
    %v5813 = vunpack.c.h.b16 %v4825
    %v5814 = vunpack.c.l.b16 %v4826
    %v5815 = vunpack.c.h.b16 %v4826
    %v5816 = vunpack.c.l.b16 %v4827
    %v5817 = vunpack.c.h.b16 %v4827
    %v5818 = vunpack.c.l.b16 %v4828
    %v5819 = vunpack.c.h.b16 %v4828
    %v5820 = vunpack.c.l.b16 %v4829
    %v5821 = vunpack.c.h.b16 %v4829
    %v5822 = vunpack.c.l.b16 %v4830
    %v5823 = vunpack.c.h.b16 %v4830
    %v5824 = vunpack.c.l.b16 %v4831
    %v5825 = vunpack.c.h.b16 %v4831
    %v5826 = vunpack.c.l.b16 %v4832
    %v5827 = vunpack.c.h.b16 %v4832
    %v5828 = vunpack.c.l.b16 %v4833
    %v5829 = vunpack.c.h.b16 %v4833
    %v5830 = vunpack.c.l.b16 %v4834
    %v5831 = vunpack.c.h.b16 %v4834
    %v5832 = vunpack.c.l.b16 %v4835
    %v5833 = vunpack.c.h.b16 %v4835
    %v5834 = vunpack.c.l.b16 %v4836
    %v5835 = vunpack.c.h.b16 %v4836
    %v5836 = vunpack.c.l.b16 %v4837
    %v5837 = vunpack.c.h.b16 %v4837
    %v5838 = vunpack.c.l.b16 %v4838
    %v5839 = vunpack.c.h.b16 %v4838
    %v5840 = vunpack.c.l.b16 %v4839
    %v5841 = vunpack.c.h.b16 %v4839
    %v5842 = vunpack.c.l.b16 %v4840
    %v5843 = vunpack.c.h.b16 %v4840
    %v5844 = vunpack.c.l.b16 %v4841
    %v5845 = vunpack.c.h.b16 %v4841
    %v5846 = vunpack.c.l.b16 %v4842
    %v5847 = vunpack.c.h.b16 %v4842
    %v5848 = vunpack.c.l.b16 %v4843
    %v5849 = vunpack.c.h.b16 %v4843
    %v5850 = vunpack.c.l.b16 %v4844
    %v5851 = vunpack.c.h.b16 %v4844
    %v5852 = vunpack.c.l.b16 %v4845
    %v5853 = vunpack.c.h.b16 %v4845
    %v5854 = vunpack.c.l.b16 %v4846
    %v5855 = vunpack.c.h.b16 %v4846
    %v5856 = vunpack.c.l.b16 %v4847
    %v5857 = vunpack.c.h.b16 %v4847
    %v5858 = vunpack.c.l.b16 %v4848
    %v5859 = vunpack.c.h.b16 %v4848
    %v5860 = vunpack.c.l.b16 %v4849
    %v5861 = vunpack.c.h.b16 %v4849
    %v5862 = vunpack.c.l.b16 %v4850
    %v5863 = vunpack.c.h.b16 %v4850
    %v5864 = vunpack.c.l.b16 %v4851
    %v5865 = vunpack.c.h.b16 %v4851
    %v5866 = vunpack.c.l.b16 %v4852
    %v5867 = vunpack.c.h.b16 %v4852
    %v5868 = vunpack.c.l.b16 %v4853
    %v5869 = vunpack.c.h.b16 %v4853
    %v5870 = vunpack.c.l.b16 %v4854
    %v5871 = vunpack.c.h.b16 %v4854
    %v5872 = vunpack.c.l.b16 %v4855
    %v5873 = vunpack.c.h.b16 %v4855
    %v5874 = vunpack.c.l.b16 %v4856
    %v5875 = vunpack.c.h.b16 %v4856
    %v5876 = vunpack.c.l.b16 %v4857
    %v5877 = vunpack.c.h.b16 %v4857
    %v5878 = vunpack.c.l.b16 %v4858
    %v5879 = vunpack.c.h.b16 %v4858
    %v5880 = vunpack.c.l.b16 %v4859
    %v5881 = vunpack.c.h.b16 %v4859
    %v5882 = vunpack.c.l.b16 %v4860
    %v5883 = vunpack.c.h.b16 %v4860
    %v5884 = vunpack.c.l.b16 %v4861
    %v5885 = vunpack.c.h.b16 %v4861
    %v5886 = vunpack.c.l.b16 %v4862
    %v5887 = vunpack.c.h.b16 %v4862
    %v5888 = vunpack.c.l.b16 %v4863
    %v5889 = vunpack.c.h.b16 %v4863
    %v5890 = vunpack.c.l.b16 %v4864
    %v5891 = vunpack.c.h.b16 %v4864
    %v5892 = vunpack.c.l.b16 %v4865
    %v5893 = vunpack.c.h.b16 %v4865
    %v5894 = vunpack.c.l.b16 %v4866
    %v5895 = vunpack.c.h.b16 %v4866
    %v5896 = vunpack.c.l.b16 %v4867
    %v5897 = vunpack.c.h.b16 %v4867
    %v5898 = vunpack.c.l.b16 %v4868
    %v5899 = vunpack.c.h.b16 %v4868
    %v5900 = vunpack.c.l.b16 %v4869
    %v5901 = vunpack.c.h.b16 %v4869
    %v5902 = vunpack.c.l.b16 %v4870
    %v5903 = vunpack.c.h.b16 %v4870
    %v5904 = vunpack.c.l.b16 %v4871
    %v5905 = vunpack.c.h.b16 %v4871
    %v5906 = vunpack.c.l.b16 %v4872
    %v5907 = vunpack.c.h.b16 %v4872
    %v5908 = vunpack.c.l.b16 %v4873
    %v5909 = vunpack.c.h.b16 %v4873
    %v5910 = vunpack.c.l.b16 %v4874
    %v5911 = vunpack.c.h.b16 %v4874
    %v5912 = vunpack.c.l.b16 %v4875
    %v5913 = vunpack.c.h.b16 %v4875
    %v5914 = vunpack.c.l.b16 %v4876
    %v5915 = vunpack.c.h.b16 %v4876
    %v5916 = vunpack.c.l.b16 %v4877
    %v5917 = vunpack.c.h.b16 %v4877
    %v5918 = vunpack.c.l.b16 %v4878
    %v5919 = vunpack.c.h.b16 %v4878
    %v5920 = vunpack.c.l.b16 %v4879
    %v5921 = vunpack.c.h.b16 %v4879
    %v5922 = vunpack.c.l.b16 %v4880
    %v5923 = vunpack.c.h.b16 %v4880
    %v5924 = vunpack.c.l.b16 %v4881
    %v5925 = vunpack.c.h.b16 %v4881
    %v5926 = vunpack.c.l.b16 %v4882
    %v5927 = vunpack.c.h.b16 %v4882
    %v5928 = vunpack.c.l.b16 %v4883
    %v5929 = vunpack.c.h.b16 %v4883
    %v5930 = vunpack.c.l.b16 %v4884
    %v5931 = vunpack.c.h.b16 %v4884
    %v5932 = vunpack.c.l.b16 %v4885
    %v5933 = vunpack.c.h.b16 %v4885
    %v5934 = vunpack.c.l.b16 %v4886
    %v5935 = vunpack.c.h.b16 %v4886
    %v5936 = vunpack.c.l.b16 %v4887
    %v5937 = vunpack.c.h.b16 %v4887
    %v5938 = vunpack.c.l.b16 %v4888
    %v5939 = vunpack.c.h.b16 %v4888
    %v5940 = vunpack.c.l.b16 %v4889
    %v5941 = vunpack.c.h.b16 %v4889
    %v5942 = vunpack.c.l.b16 %v4890
    %v5943 = vunpack.c.h.b16 %v4890
    %v5944 = vunpack.c.l.b16 %v4891
    %v5945 = vunpack.c.h.b16 %v4891
    %v5946 = vunpack.c.l.b16 %v4892
    %v5947 = vunpack.c.h.b16 %v4892
    %v5948 = vunpack.c.l.b16 %v4893
    %v5949 = vunpack.c.h.b16 %v4893
    %v5950 = vunpack.c.l.b16 %v4894
    %v5951 = vunpack.c.h.b16 %v4894
    %v5952 = vunpack.c.l.b16 %v4895
    %v5953 = vunpack.c.h.b16 %v4895
    %v5954 = vunpack.c.l.b16 %v4896
    %v5955 = vunpack.c.h.b16 %v4896
    %v5956 = vunpack.c.l.b16 %v4897
    %v5957 = vunpack.c.h.b16 %v4897
    %v5958 = vunpack.c.l.b16 %v4898
    %v5959 = vunpack.c.h.b16 %v4898
    %v5960 = vunpack.c.l.b16 %v4899
    %v5961 = vunpack.c.h.b16 %v4899
    %v5962 = vunpack.c.l.b16 %v4900
    %v5963 = vunpack.c.h.b16 %v4900
    %v5964 = vunpack.c.l.b16 %v4901
    %v5965 = vunpack.c.h.b16 %v4901
    %v5966 = vunpack.c.l.b16 %v4902
    %v5967 = vunpack.c.h.b16 %v4902
    %v5968 = vunpack.c.l.b16 %v4903
    %v5969 = vunpack.c.h.b16 %v4903
    %v5970 = vunpack.c.l.b16 %v4904
    %v5971 = vunpack.c.h.b16 %v4904
    %v5972 = vunpack.c.l.b16 %v4905
    %v5973 = vunpack.c.h.b16 %v4905
    %v5974 = vunpack.c.l.b16 %v4906
    %v5975 = vunpack.c.h.b16 %v4906
    %v5976 = vunpack.c.l.b16 %v4907
    %v5977 = vunpack.c.h.b16 %v4907
    %v5978 = vunpack.c.l.b16 %v4908
    %v5979 = vunpack.c.h.b16 %v4908
    %v5980 = vunpack.c.l.b16 %v4909
    %v5981 = vunpack.c.h.b16 %v4909
    %v5982 = vunpack.c.l.b16 %v4910
    %v5983 = vunpack.c.h.b16 %v4910
    %v5984 = vunpack.c.l.b16 %v4911
    %v5985 = vunpack.c.h.b16 %v4911
    %v5986 = vunpack.c.l.b16 %v4912
    %v5987 = vunpack.c.h.b16 %v4912
    %v5988 = vunpack.c.l.b16 %v4913
    %v5989 = vunpack.c.h.b16 %v4913
    %v5990 = vunpack.c.l.b16 %v4914
    %v5991 = vunpack.c.h.b16 %v4914
    %v5992 = vunpack.c.l.b16 %v4915
    %v5993 = vunpack.c.h.b16 %v4915
    %v5994 = vunpack.c.l.b16 %v4916
    %v5995 = vunpack.c.h.b16 %v4916
    %v5996 = vunpack.c.l.b16 %v4917
    %v5997 = vunpack.c.h.b16 %v4917
    %v5998 = vunpack.c.l.b16 %v4918
    %v5999 = vunpack.c.h.b16 %v4918
    %v6000 = vunpack.c.l.b16 %v4919
    %v6001 = vunpack.c.h.b16 %v4919
    %v6002 = vunpack.c.l.b16 %v4920
    %v6003 = vunpack.c.h.b16 %v4920
    %v6004 = vunpack.c.l.b16 %v4921
    %v6005 = vunpack.c.h.b16 %v4921
    %v6006 = vunpack.c.l.b16 %v4922
    %v6007 = vunpack.c.h.b16 %v4922
    %v6008 = vunpack.c.l.b16 %v4923
    %v6009 = vunpack.c.h.b16 %v4923
    %v6010 = vunpack.c.l.b16 %v4924
    %v6011 = vunpack.c.h.b16 %v4924
    %v6012 = vunpack.c.l.b16 %v4925
    %v6013 = vunpack.c.h.b16 %v4925
    %v6014 = vunpack.c.l.b16 %v4926
    %v6015 = vunpack.c.h.b16 %v4926
    %v6016 = vunpack.c.l.b16 %v4927
    %v6017 = vunpack.c.h.b16 %v4927
    %v6018 = vunpack.c.l.b16 %v4928
    %v6019 = vunpack.c.h.b16 %v4928
    %v6020 = vunpack.c.l.b16 %v4929
    %v6021 = vunpack.c.h.b16 %v4929
    %v6022 = vunpack.c.l.b16 %v4930
    %v6023 = vunpack.c.h.b16 %v4930
    %v6024 = vunpack.c.l.b16 %v4931
    %v6025 = vunpack.c.h.b16 %v4931
    %v6026 = vunpack.c.l.b16 %v4932
    %v6027 = vunpack.c.h.b16 %v4932
    %v6028 = vunpack.c.l.b16 %v4933
    %v6029 = vunpack.c.h.b16 %v4933
    %v6030 = vunpack.c.l.b16 %v4934
    %v6031 = vunpack.c.h.b16 %v4934
    %v6032 = vunpack.c.l.b16 %v4935
    %v6033 = vunpack.c.h.b16 %v4935
    %v6034 = vunpack.c.l.b16 %v4936
    %v6035 = vunpack.c.h.b16 %v4936
    %v6036 = vunpack.c.l.b16 %v4937
    %v6037 = vunpack.c.h.b16 %v4937
    %v6038 = vunpack.c.l.b16 %v4938
    %v6039 = vunpack.c.h.b16 %v4938
    %v6040 = vunpack.c.l.b16 %v4939
    %v6041 = vunpack.c.h.b16 %v4939
    %v6042 = vunpack.c.l.b16 %v4940
    %v6043 = vunpack.c.h.b16 %v4940
    %v6044 = vunpack.c.l.b16 %v4941
    %v6045 = vunpack.c.h.b16 %v4941
    %v6046 = vunpack.c.l.b16 %v4942
    %v6047 = vunpack.c.h.b16 %v4942
    %v6048 = vunpack.c.l.b16 %v4943
    %v6049 = vunpack.c.h.b16 %v4943
    %v6050 = vunpack.c.l.b16 %v4944
    %v6051 = vunpack.c.h.b16 %v4944
    %v6052 = vunpack.c.l.b16 %v4945
    %v6053 = vunpack.c.h.b16 %v4945
    %v6054 = vunpack.c.l.b16 %v4946
    %v6055 = vunpack.c.h.b16 %v4946
    %v6056 = vunpack.c.l.b16 %v4947
    %v6057 = vunpack.c.h.b16 %v4947
    %v6058 = vunpack.c.l.b16 %v4948
    %v6059 = vunpack.c.h.b16 %v4948
    %v6060 = vunpack.c.l.b16 %v4949
    %v6061 = vunpack.c.h.b16 %v4949
    %v6062 = vunpack.c.l.b16 %v4950
    %v6063 = vunpack.c.h.b16 %v4950
    %v6064 = vunpack.c.l.b16 %v4951
    %v6065 = vunpack.c.h.b16 %v4951
    %v6066 = vunpack.c.l.b16 %v4952
    %v6067 = vunpack.c.h.b16 %v4952
    %v6068 = vunpack.c.l.b16 %v4953
    %v6069 = vunpack.c.h.b16 %v4953
    %v6070 = vunpack.c.l.b16 %v4954
    %v6071 = vunpack.c.h.b16 %v4954
    %v6072 = vunpack.c.l.b16 %v4955
    %v6073 = vunpack.c.h.b16 %v4955
    %v6074 = vunpack.c.l.b16 %v4956
    %v6075 = vunpack.c.h.b16 %v4956
    %v6076 = vunpack.c.l.b16 %v4957
    %v6077 = vunpack.c.h.b16 %v4957
    %v6078 = vunpack.c.l.b16 %v4958
    %v6079 = vunpack.c.h.b16 %v4958
    %v6080 = vunpack.c.l.b16 %v4959
    %v6081 = vunpack.c.h.b16 %v4959
    %v6082 = vunpack.c.l.b16 %v4960
    %v6083 = vunpack.c.h.b16 %v4960
    %v6084 = vunpack.c.l.b16 %v4961
    %v6085 = vunpack.c.h.b16 %v4961
    %v6086 = vunpack.c.l.b16 %v4962
    %v6087 = vunpack.c.h.b16 %v4962
    %v6088 = vunpack.c.l.b16 %v4963
    %v6089 = vunpack.c.h.b16 %v4963
    %v6090 = vunpack.c.l.b16 %v4964
    %v6091 = vunpack.c.h.b16 %v4964
    %v6092 = vunpack.c.l.b16 %v4965
    %v6093 = vunpack.c.h.b16 %v4965
    %v6094 = vunpack.c.l.b16 %v4966
    %v6095 = vunpack.c.h.b16 %v4966
    %v6096 = vunpack.c.l.b16 %v4967
    %v6097 = vunpack.c.h.b16 %v4967
    %v6098 = vunpack.c.l.b16 %v4968
    %v6099 = vunpack.c.h.b16 %v4968
    %v6100 = vunpack.c.l.b16 %v4969
    %v6101 = vunpack.c.h.b16 %v4969
    %v6102 = vunpack.c.l.b16 %v4970
    %v6103 = vunpack.c.h.b16 %v4970
    %v6104 = vunpack.c.l.b16 %v4971
    %v6105 = vunpack.c.h.b16 %v4971
    %v6106 = vunpack.c.l.b16 %v4972
    %v6107 = vunpack.c.h.b16 %v4972
    %v6108 = vunpack.c.l.b16 %v4973
    %v6109 = vunpack.c.h.b16 %v4973
    %v6110 = vunpack.c.l.b16 %v4974
    %v6111 = vunpack.c.h.b16 %v4974
    %v6112 = vunpack.c.l.b16 %v4975
    %v6113 = vunpack.c.h.b16 %v4975
    %v6114 = vunpack.c.l.b16 %v4976
    %v6115 = vunpack.c.h.b16 %v4976
    %v6116 = vunpack.c.l.b16 %v4977
    %v6117 = vunpack.c.h.b16 %v4977
    %v6118 = vunpack.c.l.b16 %v4978
    %v6119 = vunpack.c.h.b16 %v4978
    %v6120 = vunpack.c.l.b16 %v4979
    %v6121 = vunpack.c.h.b16 %v4979
    %v6122 = vunpack.c.l.b16 %v4980
    %v6123 = vunpack.c.h.b16 %v4980
    %v6124 = vunpack.c.l.b16 %v4981
    %v6125 = vunpack.c.h.b16 %v4981
    %v6126 = vunpack.c.l.b16 %v4982
    %v6127 = vunpack.c.h.b16 %v4982
    %v6128 = vunpack.c.l.b16 %v4983
    %v6129 = vunpack.c.h.b16 %v4983
    %v6130 = vunpack.c.l.b16 %v4984
    %v6131 = vunpack.c.h.b16 %v4984
    %v6132 = vunpack.c.l.b16 %v4985
    %v6133 = vunpack.c.h.b16 %v4985
    %v6134 = vunpack.c.l.b16 %v4986
    %v6135 = vunpack.c.h.b16 %v4986
    %v6136 = vunpack.c.l.b16 %v4987
    %v6137 = vunpack.c.h.b16 %v4987
    %v6138 = vunpack.c.l.b16 %v4988
    %v6139 = vunpack.c.h.b16 %v4988
    %v6140 = vunpack.c.l.b16 %v4989
    %v6141 = vunpack.c.h.b16 %v4989
    %v6142 = vunpack.c.l.b16 %v4990
    %v6143 = vunpack.c.h.b16 %v4990
    %v6144 = vunpack.c.l.b16 %v4991
    %v6145 = vunpack.c.h.b16 %v4991
    %v6146 = vunpack.c.l.b16 %v4992
    %v6147 = vunpack.c.h.b16 %v4992
    %v6148 = vunpack.c.l.b16 %v4993
    %v6149 = vunpack.c.h.b16 %v4993
    %v6150 = vunpack.c.l.b16 %v4994
    %v6151 = vunpack.c.h.b16 %v4994
    %v6152 = vunpack.c.l.b16 %v4995
    %v6153 = vunpack.c.h.b16 %v4995
    %v6154 = vunpack.c.l.b16 %v4996
    %v6155 = vunpack.c.h.b16 %v4996
    %v6156 = vunpack.c.l.b16 %v4997
    %v6157 = vunpack.c.h.b16 %v4997
    %v6158 = vunpack.c.l.b16 %v4998
    %v6159 = vunpack.c.h.b16 %v4998
    %v6160 = vunpack.c.l.b16 %v4999
    %v6161 = vunpack.c.h.b16 %v4999
    %v6162 = vunpack.c.l.b16 %v5000
    %v6163 = vunpack.c.h.b16 %v5000
    %v6164 = vunpack.c.l.b16 %v5001
    %v6165 = vunpack.c.h.b16 %v5001
    %v6166 = vunpack.c.l.b16 %v5002
    %v6167 = vunpack.c.h.b16 %v5002
    %v6168 = vunpack.c.l.b16 %v5003
    %v6169 = vunpack.c.h.b16 %v5003
    %v6170 = vunpack.c.l.b16 %v5004
    %v6171 = vunpack.c.h.b16 %v5004
    %v6172 = vunpack.c.l.b16 %v5005
    %v6173 = vunpack.c.h.b16 %v5005
    %v6174 = vunpack.c.l.b16 %v5006
    %v6175 = vunpack.c.h.b16 %v5006
    %v6176 = vunpack.c.l.b16 %v5007
    %v6177 = vunpack.c.h.b16 %v5007
    %v6178 = vunpack.c.l.b16 %v5008
    %v6179 = vunpack.c.h.b16 %v5008
    %v6180 = vunpack.c.l.b16 %v5009
    %v6181 = vunpack.c.h.b16 %v5009
    %v6182 = vunpack.c.l.b16 %v5010
    %v6183 = vunpack.c.h.b16 %v5010
    %v6184 = vunpack.c.l.b16 %v5011
    %v6185 = vunpack.c.h.b16 %v5011
    %v6186 = vunpack.c.l.b16 %v5012
    %v6187 = vunpack.c.h.b16 %v5012
    %v6188 = vunpack.c.l.b16 %v5013
    %v6189 = vunpack.c.h.b16 %v5013
    %v6190 = vunpack.c.l.b16 %v5014
    %v6191 = vunpack.c.h.b16 %v5014
    %v6192 = vunpack.c.l.b16 %v5015
    %v6193 = vunpack.c.h.b16 %v5015
    %v6194 = vunpack.c.l.b16 %v5016
    %v6195 = vunpack.c.h.b16 %v5016
    %v6196 = vunpack.c.l.b16 %v5017
    %v6197 = vunpack.c.h.b16 %v5017
    %v6198 = vunpack.c.l.b16 %v5018
    %v6199 = vunpack.c.h.b16 %v5018
    %v6200 = vunpack.c.l.b16 %v5019
    %v6201 = vunpack.c.h.b16 %v5019
    %v6202 = vunpack.c.l.b16 %v5020
    %v6203 = vunpack.c.h.b16 %v5020
    %v6204 = vunpack.c.l.b16 %v5021
    %v6205 = vunpack.c.h.b16 %v5021
    %v6206 = vunpack.c.l.b16 %v5022
    %v6207 = vunpack.c.h.b16 %v5022
    %v6208 = vunpack.c.l.b16 %v5023
    %v6209 = vunpack.c.h.b16 %v5023
    %v6210 = vunpack.c.l.b16 %v5024
    %v6211 = vunpack.c.h.b16 %v5024
    %v6212 = vunpack.c.l.b16 %v5025
    %v6213 = vunpack.c.h.b16 %v5025
    %v6214 = vunpack.c.l.b16 %v5026
    %v6215 = vunpack.c.h.b16 %v5026
    %v6216 = vunpack.c.l.b16 %v5027
    %v6217 = vunpack.c.h.b16 %v5027
    %v6218 = vunpack.c.l.b16 %v5028
    %v6219 = vunpack.c.h.b16 %v5028
    %v6220 = vunpack.c.l.b16 %v5029
    %v6221 = vunpack.c.h.b16 %v5029
    %v6222 = vpack.c.b16 %v5460, %v5454
    %v6223 = vpack.c.b16 %v5461, %v5455
    %v6224 = vpack.c.b16 %v5462, %v5456
    %v6225 = vpack.c.b16 %v5463, %v5457
    %v6226 = vpack.c.b16 %v5464, %v5458
    %v6227 = vpack.c.b16 %v5465, %v5459
    %v6228 = vpack.c.b16 %v5472, %v5466
    %v6229 = vpack.c.b16 %v5473, %v5467
    %v6230 = vpack.c.b16 %v5474, %v5468
    %v6231 = vpack.c.b16 %v5475, %v5469
    %v6232 = vpack.c.b16 %v5476, %v5470
    %v6233 = vpack.c.b16 %v5477, %v5471
    %v6234 = vpack.c.b16 %v5484, %v5478
    %v6235 = vpack.c.b16 %v5485, %v5479
    %v6236 = vpack.c.b16 %v5486, %v5480
    %v6237 = vpack.c.b16 %v5487, %v5481
    %v6238 = vpack.c.b16 %v5488, %v5482
    %v6239 = vpack.c.b16 %v5489, %v5483
    %v6240 = vpack.c.b16 %v5496, %v5490
    %v6241 = vpack.c.b16 %v5497, %v5491
    %v6242 = vpack.c.b16 %v5498, %v5492
    %v6243 = vpack.c.b16 %v5499, %v5493
    %v6244 = vpack.c.b16 %v5500, %v5494
    %v6245 = vpack.c.b16 %v5501, %v5495
    %v6246 = vpack.c.b16 %v5508, %v5502
    %v6247 = vpack.c.b16 %v5509, %v5503
    %v6248 = vpack.c.b16 %v5510, %v5504
    %v6249 = vpack.c.b16 %v5511, %v5505
    %v6250 = vpack.c.b16 %v5512, %v5506
    %v6251 = vpack.c.b16 %v5513, %v5507
    %v6252 = vpack.c.b16 %v5520, %v5514
    %v6253 = vpack.c.b16 %v5521, %v5515
    %v6254 = vpack.c.b16 %v5522, %v5516
    %v6255 = vpack.c.b16 %v5523, %v5517
    %v6256 = vpack.c.b16 %v5524, %v5518
    %v6257 = vpack.c.b16 %v5525, %v5519
    %v6258 = vpack.c.b16 %v5532, %v5526
    %v6259 = vpack.c.b16 %v5533, %v5527
    %v6260 = vpack.c.b16 %v5534, %v5528
    %v6261 = vpack.c.b16 %v5535, %v5529
    %v6262 = vpack.c.b16 %v5536, %v5530
    %v6263 = vpack.c.b16 %v5537, %v5531
    %v6264 = vpack.c.b16 %v5544, %v5538
    %v6265 = vpack.c.b16 %v5545, %v5539
    %v6266 = vpack.c.b16 %v5546, %v5540
    %v6267 = vpack.c.b16 %v5547, %v5541
    %v6268 = vpack.c.b16 %v5548, %v5542
    %v6269 = vpack.c.b16 %v5549, %v5543
    %v6270 = vpack.c.b16 %v5556, %v5550
    %v6271 = vpack.c.b16 %v5557, %v5551
    %v6272 = vpack.c.b16 %v5558, %v5552
    %v6273 = vpack.c.b16 %v5559, %v5553
    %v6274 = vpack.c.b16 %v5560, %v5554
    %v6275 = vpack.c.b16 %v5561, %v5555
    %v6276 = vpack.c.b16 %v5568, %v5562
    %v6277 = vpack.c.b16 %v5569, %v5563
    %v6278 = vpack.c.b16 %v5570, %v5564
    %v6279 = vpack.c.b16 %v5571, %v5565
    %v6280 = vpack.c.b16 %v5572, %v5566
    %v6281 = vpack.c.b16 %v5573, %v5567
    %v6282 = vpack.c.b16 %v5580, %v5574
    %v6283 = vpack.c.b16 %v5581, %v5575
    %v6284 = vpack.c.b16 %v5582, %v5576
    %v6285 = vpack.c.b16 %v5583, %v5577
    %v6286 = vpack.c.b16 %v5584, %v5578
    %v6287 = vpack.c.b16 %v5585, %v5579
    %v6288 = vpack.c.b16 %v5592, %v5586
    %v6289 = vpack.c.b16 %v5593, %v5587
    %v6290 = vpack.c.b16 %v5594, %v5588
    %v6291 = vpack.c.b16 %v5595, %v5589
    %v6292 = vpack.c.b16 %v5596, %v5590
    %v6293 = vpack.c.b16 %v5597, %v5591
    %v6294 = vpack.c.b16 %v5604, %v5598
    %v6295 = vpack.c.b16 %v5605, %v5599
    %v6296 = vpack.c.b16 %v5606, %v5600
    %v6297 = vpack.c.b16 %v5607, %v5601
    %v6298 = vpack.c.b16 %v5608, %v5602
    %v6299 = vpack.c.b16 %v5609, %v5603
    %v6300 = vpack.c.b16 %v5616, %v5610
    %v6301 = vpack.c.b16 %v5617, %v5611
    %v6302 = vpack.c.b16 %v5618, %v5612
    %v6303 = vpack.c.b16 %v5619, %v5613
    %v6304 = vpack.c.b16 %v5620, %v5614
    %v6305 = vpack.c.b16 %v5621, %v5615
    %v6306 = vpack.c.b16 %v5628, %v5622
    %v6307 = vpack.c.b16 %v5629, %v5623
    %v6308 = vpack.c.b16 %v5630, %v5624
    %v6309 = vpack.c.b16 %v5631, %v5625
    %v6310 = vpack.c.b16 %v5632, %v5626
    %v6311 = vpack.c.b16 %v5633, %v5627
    %v6312 = vpack.c.b16 %v5640, %v5634
    %v6313 = vpack.c.b16 %v5641, %v5635
    %v6314 = vpack.c.b16 %v5642, %v5636
    %v6315 = vpack.c.b16 %v5643, %v5637
    %v6316 = vpack.c.b16 %v5644, %v5638
    %v6317 = vpack.c.b16 %v5645, %v5639
    %v6318 = vpack.c.b16 %v5652, %v5646
    %v6319 = vpack.c.b16 %v5653, %v5647
    %v6320 = vpack.c.b16 %v5654, %v5648
    %v6321 = vpack.c.b16 %v5655, %v5649
    %v6322 = vpack.c.b16 %v5656, %v5650
    %v6323 = vpack.c.b16 %v5657, %v5651
    %v6324 = vpack.c.b16 %v5664, %v5658
    %v6325 = vpack.c.b16 %v5665, %v5659
    %v6326 = vpack.c.b16 %v5666, %v5660
    %v6327 = vpack.c.b16 %v5667, %v5661
    %v6328 = vpack.c.b16 %v5668, %v5662
    %v6329 = vpack.c.b16 %v5669, %v5663
    %v6330 = vpack.c.b16 %v5676, %v5670
    %v6331 = vpack.c.b16 %v5677, %v5671
    %v6332 = vpack.c.b16 %v5678, %v5672
    %v6333 = vpack.c.b16 %v5679, %v5673
    %v6334 = vpack.c.b16 %v5680, %v5674
    %v6335 = vpack.c.b16 %v5681, %v5675
    %v6336 = vpack.c.b16 %v5688, %v5682
    %v6337 = vpack.c.b16 %v5689, %v5683
    %v6338 = vpack.c.b16 %v5690, %v5684
    %v6339 = vpack.c.b16 %v5691, %v5685
    %v6340 = vpack.c.b16 %v5692, %v5686
    %v6341 = vpack.c.b16 %v5693, %v5687
    %v6342 = vpack.c.b16 %v5700, %v5694
    %v6343 = vpack.c.b16 %v5701, %v5695
    %v6344 = vpack.c.b16 %v5702, %v5696
    %v6345 = vpack.c.b16 %v5703, %v5697
    %v6346 = vpack.c.b16 %v5704, %v5698
    %v6347 = vpack.c.b16 %v5705, %v5699
    %v6348 = vpack.c.b16 %v5712, %v5706
    %v6349 = vpack.c.b16 %v5713, %v5707
    %v6350 = vpack.c.b16 %v5714, %v5708
    %v6351 = vpack.c.b16 %v5715, %v5709
    %v6352 = vpack.c.b16 %v5716, %v5710
    %v6353 = vpack.c.b16 %v5717, %v5711
    %v6354 = vpack.c.b16 %v5724, %v5718
    %v6355 = vpack.c.b16 %v5725, %v5719
    %v6356 = vpack.c.b16 %v5726, %v5720
    %v6357 = vpack.c.b16 %v5727, %v5721
    %v6358 = vpack.c.b16 %v5728, %v5722
    %v6359 = vpack.c.b16 %v5729, %v5723
    %v6360 = vpack.c.b16 %v5736, %v5730
    %v6361 = vpack.c.b16 %v5737, %v5731
    %v6362 = vpack.c.b16 %v5738, %v5732
    %v6363 = vpack.c.b16 %v5739, %v5733
    %v6364 = vpack.c.b16 %v5740, %v5734
    %v6365 = vpack.c.b16 %v5741, %v5735
    %v6366 = vpack.c.b16 %v5748, %v5742
    %v6367 = vpack.c.b16 %v5749, %v5743
    %v6368 = vpack.c.b16 %v5750, %v5744
    %v6369 = vpack.c.b16 %v5751, %v5745
    %v6370 = vpack.c.b16 %v5752, %v5746
    %v6371 = vpack.c.b16 %v5753, %v5747
    %v6372 = vpack.c.b16 %v5760, %v5754
    %v6373 = vpack.c.b16 %v5761, %v5755
    %v6374 = vpack.c.b16 %v5762, %v5756
    %v6375 = vpack.c.b16 %v5763, %v5757
    %v6376 = vpack.c.b16 %v5764, %v5758
    %v6377 = vpack.c.b16 %v5765, %v5759
    %v6378 = vpack.c.b16 %v5772, %v5766
    %v6379 = vpack.c.b16 %v5773, %v5767
    %v6380 = vpack.c.b16 %v5774, %v5768
    %v6381 = vpack.c.b16 %v5775, %v5769
    %v6382 = vpack.c.b16 %v5776, %v5770
    %v6383 = vpack.c.b16 %v5777, %v5771
    %v6384 = vpack.c.b16 %v5784, %v5778
    %v6385 = vpack.c.b16 %v5785, %v5779
    %v6386 = vpack.c.b16 %v5786, %v5780
    %v6387 = vpack.c.b16 %v5787, %v5781
    %v6388 = vpack.c.b16 %v5788, %v5782
    %v6389 = vpack.c.b16 %v5789, %v5783
    %v6390 = vpack.c.b16 %v5796, %v5790
    %v6391 = vpack.c.b16 %v5797, %v5791
    %v6392 = vpack.c.b16 %v5798, %v5792
    %v6393 = vpack.c.b16 %v5799, %v5793
    %v6394 = vpack.c.b16 %v5800, %v5794
    %v6395 = vpack.c.b16 %v5801, %v5795
    %v6396 = vpack.c.b16 %v5808, %v5802
    %v6397 = vpack.c.b16 %v5809, %v5803
    %v6398 = vpack.c.b16 %v5810, %v5804
    %v6399 = vpack.c.b16 %v5811, %v5805
    %v6400 = vpack.c.b16 %v5812, %v5806
    %v6401 = vpack.c.b16 %v5813, %v5807
    %v6402 = vpack.c.b16 %v5820, %v5814
    %v6403 = vpack.c.b16 %v5821, %v5815
    %v6404 = vpack.c.b16 %v5822, %v5816
    %v6405 = vpack.c.b16 %v5823, %v5817
    %v6406 = vpack.c.b16 %v5824, %v5818
    %v6407 = vpack.c.b16 %v5825, %v5819
    %v6408 = vpack.c.b16 %v5832, %v5826
    %v6409 = vpack.c.b16 %v5833, %v5827
    %v6410 = vpack.c.b16 %v5834, %v5828
    %v6411 = vpack.c.b16 %v5835, %v5829
    %v6412 = vpack.c.b16 %v5836, %v5830
    %v6413 = vpack.c.b16 %v5837, %v5831
    %v6414 = vpack.c.b16 %v5844, %v5838
    %v6415 = vpack.c.b16 %v5845, %v5839
    %v6416 = vpack.c.b16 %v5846, %v5840
    %v6417 = vpack.c.b16 %v5847, %v5841
    %v6418 = vpack.c.b16 %v5848, %v5842
    %v6419 = vpack.c.b16 %v5849, %v5843
    %v6420 = vpack.c.b16 %v5856, %v5850
    %v6421 = vpack.c.b16 %v5857, %v5851
    %v6422 = vpack.c.b16 %v5858, %v5852
    %v6423 = vpack.c.b16 %v5859, %v5853
    %v6424 = vpack.c.b16 %v5860, %v5854
    %v6425 = vpack.c.b16 %v5861, %v5855
    %v6426 = vpack.c.b16 %v5868, %v5862
    %v6427 = vpack.c.b16 %v5869, %v5863
    %v6428 = vpack.c.b16 %v5870, %v5864
    %v6429 = vpack.c.b16 %v5871, %v5865
    %v6430 = vpack.c.b16 %v5872, %v5866
    %v6431 = vpack.c.b16 %v5873, %v5867
    %v6432 = vpack.c.b16 %v5880, %v5874
    %v6433 = vpack.c.b16 %v5881, %v5875
    %v6434 = vpack.c.b16 %v5882, %v5876
    %v6435 = vpack.c.b16 %v5883, %v5877
    %v6436 = vpack.c.b16 %v5884, %v5878
    %v6437 = vpack.c.b16 %v5885, %v5879
    %v6438 = vpack.c.b16 %v5892, %v5886
    %v6439 = vpack.c.b16 %v5893, %v5887
    %v6440 = vpack.c.b16 %v5894, %v5888
    %v6441 = vpack.c.b16 %v5895, %v5889
    %v6442 = vpack.c.b16 %v5896, %v5890
    %v6443 = vpack.c.b16 %v5897, %v5891
    %v6444 = vpack.c.b16 %v5904, %v5898
    %v6445 = vpack.c.b16 %v5905, %v5899
    %v6446 = vpack.c.b16 %v5906, %v5900
    %v6447 = vpack.c.b16 %v5907, %v5901
    %v6448 = vpack.c.b16 %v5908, %v5902
    %v6449 = vpack.c.b16 %v5909, %v5903
    %v6450 = vpack.c.b16 %v5916, %v5910
    %v6451 = vpack.c.b16 %v5917, %v5911
    %v6452 = vpack.c.b16 %v5918, %v5912
    %v6453 = vpack.c.b16 %v5919, %v5913
    %v6454 = vpack.c.b16 %v5920, %v5914
    %v6455 = vpack.c.b16 %v5921, %v5915
    %v6456 = vpack.c.b16 %v5928, %v5922
    %v6457 = vpack.c.b16 %v5929, %v5923
    %v6458 = vpack.c.b16 %v5930, %v5924
    %v6459 = vpack.c.b16 %v5931, %v5925
    %v6460 = vpack.c.b16 %v5932, %v5926
    %v6461 = vpack.c.b16 %v5933, %v5927
    %v6462 = vpack.c.b16 %v5940, %v5934
    %v6463 = vpack.c.b16 %v5941, %v5935
    %v6464 = vpack.c.b16 %v5942, %v5936
    %v6465 = vpack.c.b16 %v5943, %v5937
    %v6466 = vpack.c.b16 %v5944, %v5938
    %v6467 = vpack.c.b16 %v5945, %v5939
    %v6468 = vpack.c.b16 %v5952, %v5946
    %v6469 = vpack.c.b16 %v5953, %v5947
    %v6470 = vpack.c.b16 %v5954, %v5948
    %v6471 = vpack.c.b16 %v5955, %v5949
    %v6472 = vpack.c.b16 %v5956, %v5950
    %v6473 = vpack.c.b16 %v5957, %v5951
    %v6474 = vpack.c.b16 %v5964, %v5958
    %v6475 = vpack.c.b16 %v5965, %v5959
    %v6476 = vpack.c.b16 %v5966, %v5960
    %v6477 = vpack.c.b16 %v5967, %v5961
    %v6478 = vpack.c.b16 %v5968, %v5962
    %v6479 = vpack.c.b16 %v5969, %v5963
    %v6480 = vpack.c.b16 %v5976, %v5970
    %v6481 = vpack.c.b16 %v5977, %v5971
    %v6482 = vpack.c.b16 %v5978, %v5972
    %v6483 = vpack.c.b16 %v5979, %v5973
    %v6484 = vpack.c.b16 %v5980, %v5974
    %v6485 = vpack.c.b16 %v5981, %v5975
    %v6486 = vpack.c.b16 %v5988, %v5982
    %v6487 = vpack.c.b16 %v5989, %v5983
    %v6488 = vpack.c.b16 %v5990, %v5984
    %v6489 = vpack.c.b16 %v5991, %v5985
    %v6490 = vpack.c.b16 %v5992, %v5986
    %v6491 = vpack.c.b16 %v5993, %v5987
    %v6492 = vpack.c.b16 %v6000, %v5994
    %v6493 = vpack.c.b16 %v6001, %v5995
    %v6494 = vpack.c.b16 %v6002, %v5996
    %v6495 = vpack.c.b16 %v6003, %v5997
    %v6496 = vpack.c.b16 %v6004, %v5998
    %v6497 = vpack.c.b16 %v6005, %v5999
    %v6498 = vpack.c.b16 %v6012, %v6006
    %v6499 = vpack.c.b16 %v6013, %v6007
    %v6500 = vpack.c.b16 %v6014, %v6008
    %v6501 = vpack.c.b16 %v6015, %v6009
    %v6502 = vpack.c.b16 %v6016, %v6010
    %v6503 = vpack.c.b16 %v6017, %v6011
    %v6504 = vpack.c.b16 %v6024, %v6018
    %v6505 = vpack.c.b16 %v6025, %v6019
    %v6506 = vpack.c.b16 %v6026, %v6020
    %v6507 = vpack.c.b16 %v6027, %v6021
    %v6508 = vpack.c.b16 %v6028, %v6022
    %v6509 = vpack.c.b16 %v6029, %v6023
    %v6510 = vpack.c.b16 %v6036, %v6030
    %v6511 = vpack.c.b16 %v6037, %v6031
    %v6512 = vpack.c.b16 %v6038, %v6032
    %v6513 = vpack.c.b16 %v6039, %v6033
    %v6514 = vpack.c.b16 %v6040, %v6034
    %v6515 = vpack.c.b16 %v6041, %v6035
    %v6516 = vpack.c.b16 %v6048, %v6042
    %v6517 = vpack.c.b16 %v6049, %v6043
    %v6518 = vpack.c.b16 %v6050, %v6044
    %v6519 = vpack.c.b16 %v6051, %v6045
    %v6520 = vpack.c.b16 %v6052, %v6046
    %v6521 = vpack.c.b16 %v6053, %v6047
    %v6522 = vpack.c.b16 %v6060, %v6054
    %v6523 = vpack.c.b16 %v6061, %v6055
    %v6524 = vpack.c.b16 %v6062, %v6056
    %v6525 = vpack.c.b16 %v6063, %v6057
    %v6526 = vpack.c.b16 %v6064, %v6058
    %v6527 = vpack.c.b16 %v6065, %v6059
    %v6528 = vpack.c.b16 %v6072, %v6066
    %v6529 = vpack.c.b16 %v6073, %v6067
    %v6530 = vpack.c.b16 %v6074, %v6068
    %v6531 = vpack.c.b16 %v6075, %v6069
    %v6532 = vpack.c.b16 %v6076, %v6070
    %v6533 = vpack.c.b16 %v6077, %v6071
    %v6534 = vpack.c.b16 %v6084, %v6078
    %v6535 = vpack.c.b16 %v6085, %v6079
    %v6536 = vpack.c.b16 %v6086, %v6080
    %v6537 = vpack.c.b16 %v6087, %v6081
    %v6538 = vpack.c.b16 %v6088, %v6082
    %v6539 = vpack.c.b16 %v6089, %v6083
    %v6540 = vpack.c.b16 %v6096, %v6090
    %v6541 = vpack.c.b16 %v6097, %v6091
    %v6542 = vpack.c.b16 %v6098, %v6092
    %v6543 = vpack.c.b16 %v6099, %v6093
    %v6544 = vpack.c.b16 %v6100, %v6094
    %v6545 = vpack.c.b16 %v6101, %v6095
    %v6546 = vpack.c.b16 %v6108, %v6102
    %v6547 = vpack.c.b16 %v6109, %v6103
    %v6548 = vpack.c.b16 %v6110, %v6104
    %v6549 = vpack.c.b16 %v6111, %v6105
    %v6550 = vpack.c.b16 %v6112, %v6106
    %v6551 = vpack.c.b16 %v6113, %v6107
    %v6552 = vpack.c.b16 %v6120, %v6114
    %v6553 = vpack.c.b16 %v6121, %v6115
    %v6554 = vpack.c.b16 %v6122, %v6116
    %v6555 = vpack.c.b16 %v6123, %v6117
    %v6556 = vpack.c.b16 %v6124, %v6118
    %v6557 = vpack.c.b16 %v6125, %v6119
    %v6558 = vpack.c.b16 %v6132, %v6126
    %v6559 = vpack.c.b16 %v6133, %v6127
    %v6560 = vpack.c.b16 %v6134, %v6128
    %v6561 = vpack.c.b16 %v6135, %v6129
    %v6562 = vpack.c.b16 %v6136, %v6130
    %v6563 = vpack.c.b16 %v6137, %v6131
    %v6564 = vpack.c.b16 %v6144, %v6138
    %v6565 = vpack.c.b16 %v6145, %v6139
    %v6566 = vpack.c.b16 %v6146, %v6140
    %v6567 = vpack.c.b16 %v6147, %v6141
    %v6568 = vpack.c.b16 %v6148, %v6142
    %v6569 = vpack.c.b16 %v6149, %v6143
    %v6570 = vpack.c.b16 %v6156, %v6150
    %v6571 = vpack.c.b16 %v6157, %v6151
    %v6572 = vpack.c.b16 %v6158, %v6152
    %v6573 = vpack.c.b16 %v6159, %v6153
    %v6574 = vpack.c.b16 %v6160, %v6154
    %v6575 = vpack.c.b16 %v6161, %v6155
    %v6576 = vpack.c.b16 %v6168, %v6162
    %v6577 = vpack.c.b16 %v6169, %v6163
    %v6578 = vpack.c.b16 %v6170, %v6164
    %v6579 = vpack.c.b16 %v6171, %v6165
    %v6580 = vpack.c.b16 %v6172, %v6166
    %v6581 = vpack.c.b16 %v6173, %v6167
    %v6582 = vpack.c.b16 %v6180, %v6174
    %v6583 = vpack.c.b16 %v6181, %v6175
    %v6584 = vpack.c.b16 %v6182, %v6176
    %v6585 = vpack.c.b16 %v6183, %v6177
    %v6586 = vpack.c.b16 %v6184, %v6178
    %v6587 = vpack.c.b16 %v6185, %v6179
    %v6588 = vpack.c.b16 %v6192, %v6186
    %v6589 = vpack.c.b16 %v6193, %v6187
    %v6590 = vpack.c.b16 %v6194, %v6188
    %v6591 = vpack.c.b16 %v6195, %v6189
    %v6592 = vpack.c.b16 %v6196, %v6190
    %v6593 = vpack.c.b16 %v6197, %v6191
    %v6594 = vpack.c.b16 %v6204, %v6198
    %v6595 = vpack.c.b16 %v6205, %v6199
    %v6596 = vpack.c.b16 %v6206, %v6200
    %v6597 = vpack.c.b16 %v6207, %v6201
    %v6598 = vpack.c.b16 %v6208, %v6202
    %v6599 = vpack.c.b16 %v6209, %v6203
    %v6600 = vpack.c.b16 %v6216, %v6210
    %v6601 = vpack.c.b16 %v6217, %v6211
    %v6602 = vpack.c.b16 %v6218, %v6212
    %v6603 = vpack.c.b16 %v6219, %v6213
    %v6604 = vpack.c.b16 %v6220, %v6214
    %v6605 = vpack.c.b16 %v6221, %v6215
    %6990 = vmatprep.subr.bf16.mxu0 %v6265
    %6991 = vmatpush1.bf16.msra.mxu0 %v6264
    %6992 = vmatprep.subr.bf16.mxu0 %v6259
    %6993 = vmatpush1.bf16.msra.mxu0 %v6258
    %6994 = vmatprep.subr.bf16.mxu0 %v6253
    %6995 = vmatpush1.bf16.msra.mxu0 %v6252
    %6996 = vmatprep.subr.bf16.mxu0 %v6247
    %6997 = vmatpush1.bf16.msra.mxu0 %v6246
    %6998 = vmatprep.subr.bf16.mxu0 %v6241
    %6999 = vmatpush1.bf16.msra.mxu0 %v6240
    %7000 = vmatprep.subr.bf16.mxu0 %v6235
    %7001 = vmatpush1.bf16.msra.mxu0 %v6234
    %7002 = vmatprep.subr.bf16.mxu0 %v6229
    %7003 = vmatpush1.bf16.msra.mxu0 %v6228
    %7004 = vmatprep.subr.bf16.mxu0 %v6223
    %7005 = vmatpush1.bf16.msra.mxu0 %v6222
    %7006 = vmatprep.subr.bf16.mxu0 %v6313
    %7007 = vmatpush2.bf16.msra.mxu0 %v6312
    %7008 = vmatprep.subr.bf16.mxu0 %v6307
    %7009 = vmatpush2.bf16.msra.mxu0 %v6306
    %7010 = vmatprep.subr.bf16.mxu0 %v6301
    %7011 = vmatpush2.bf16.msra.mxu0 %v6300
    %7012 = vmatprep.subr.bf16.mxu0 %v6295
    %7013 = vmatpush2.bf16.msra.mxu0 %v6294
    %7014 = vmatprep.subr.bf16.mxu0 %v6289
    %7015 = vmatpush2.bf16.msra.mxu0 %v6288
    %7016 = vmatprep.subr.bf16.mxu0 %v6283
    %7017 = vmatpush2.bf16.msra.mxu0 %v6282
    %7018 = vmatprep.subr.bf16.mxu0 %v6277
    %7019 = vmatpush2.bf16.msra.mxu0 %v6276
    %7020 = vmatprep.subr.bf16.mxu0 %v6271
    %7021 = vmatpush2.bf16.msra.mxu0 %v6270
    %7022 = vmatprep.mubr.bf16.mxu0 %v5032
    %7023 = vmatmul.mubr.bf16.gmra.mxu0 %v5031
    %v7024 = vpop.f32.mrf.mxu0
    %v7025 = vadd.f32 %v5043, %v7024
    %v7026 = vpop.f32.mrf.mxu0
    %v7027 = vadd.f32 %v5047, %v7026
    %v7028 = vpop.f32.mrf.mxu0
    %v7029 = vpop.f32.mrf.mxu0
    %7030 = vdwg.mxu0
    %7031 = vmatprep.subr.bf16.mxu0 %v6361
    %7032 = vmatpush1.bf16.msra.mxu0 %v6360
    %7033 = vmatprep.subr.bf16.mxu0 %v6355
    %7034 = vmatpush1.bf16.msra.mxu0 %v6354
    %7035 = vmatprep.subr.bf16.mxu0 %v6349
    %7036 = vmatpush1.bf16.msra.mxu0 %v6348
    %7037 = vmatprep.subr.bf16.mxu0 %v6343
    %7038 = vmatpush1.bf16.msra.mxu0 %v6342
    %7039 = vmatprep.subr.bf16.mxu0 %v6337
    %7040 = vmatpush1.bf16.msra.mxu0 %v6336
    %7041 = vmatprep.subr.bf16.mxu0 %v6331
    %7042 = vmatpush1.bf16.msra.mxu0 %v6330
    %7043 = vmatprep.subr.bf16.mxu0 %v6325
    %7044 = vmatpush1.bf16.msra.mxu0 %v6324
    %7045 = vmatprep.subr.bf16.mxu0 %v6319
    %7046 = vmatpush1.bf16.msra.mxu0 %v6318
    %7047 = vmatprep.subr.bf16.mxu0 %v6409
    %7048 = vmatpush2.bf16.msra.mxu0 %v6408
    %7049 = vmatprep.subr.bf16.mxu0 %v6403
    %7050 = vmatpush2.bf16.msra.mxu0 %v6402
    %7051 = vmatprep.subr.bf16.mxu0 %v6397
    %7052 = vmatpush2.bf16.msra.mxu0 %v6396
    %7053 = vmatprep.subr.bf16.mxu0 %v6391
    %7054 = vmatpush2.bf16.msra.mxu0 %v6390
    %7055 = vmatprep.subr.bf16.mxu0 %v6385
    %7056 = vmatpush2.bf16.msra.mxu0 %v6384
    %7057 = vmatprep.subr.bf16.mxu0 %v6379
    %7058 = vmatpush2.bf16.msra.mxu0 %v6378
    %7059 = vmatprep.subr.bf16.mxu0 %v6373
    %7060 = vmatpush2.bf16.msra.mxu0 %v6372
    %7061 = vmatprep.subr.bf16.mxu0 %v6367
    %7062 = vmatpush2.bf16.msra.mxu0 %v6366
    %7063 = vmatprep.mubr.bf16.mxu0 %v5034
    %7064 = vmatmul.mubr.bf16.gmra.mxu0 %v5033
    %v7065 = vpop.f32.mrf.mxu0
    %v7066 = vadd.f32 %v7025, %v7065
    %v7067 = vpop.f32.mrf.mxu0
    %v7068 = vadd.f32 %v7027, %v7067
    %v7069 = vpop.f32.mrf.mxu0
    %v7070 = vpop.f32.mrf.mxu0
    %7071 = vdwg.mxu0
    %7072 = vmatprep.subr.bf16.mxu0 %v6457
    %7073 = vmatpush1.bf16.msra.mxu0 %v6456
    %7074 = vmatprep.subr.bf16.mxu0 %v6451
    %7075 = vmatpush1.bf16.msra.mxu0 %v6450
    %7076 = vmatprep.subr.bf16.mxu0 %v6445
    %7077 = vmatpush1.bf16.msra.mxu0 %v6444
    %7078 = vmatprep.subr.bf16.mxu0 %v6439
    %7079 = vmatpush1.bf16.msra.mxu0 %v6438
    %7080 = vmatprep.subr.bf16.mxu0 %v6433
    %7081 = vmatpush1.bf16.msra.mxu0 %v6432
    %7082 = vmatprep.subr.bf16.mxu0 %v6427
    %7083 = vmatpush1.bf16.msra.mxu0 %v6426
    %7084 = vmatprep.subr.bf16.mxu0 %v6421
    %7085 = vmatpush1.bf16.msra.mxu0 %v6420
    %7086 = vmatprep.subr.bf16.mxu0 %v6415
    %7087 = vmatpush1.bf16.msra.mxu0 %v6414
    %7088 = vmatprep.subr.bf16.mxu0 %v6505
    %7089 = vmatpush2.bf16.msra.mxu0 %v6504
    %7090 = vmatprep.subr.bf16.mxu0 %v6499
    %7091 = vmatpush2.bf16.msra.mxu0 %v6498
    %7092 = vmatprep.subr.bf16.mxu0 %v6493
    %7093 = vmatpush2.bf16.msra.mxu0 %v6492
    %7094 = vmatprep.subr.bf16.mxu0 %v6487
    %7095 = vmatpush2.bf16.msra.mxu0 %v6486
    %7096 = vmatprep.subr.bf16.mxu0 %v6481
    %7097 = vmatpush2.bf16.msra.mxu0 %v6480
    %7098 = vmatprep.subr.bf16.mxu0 %v6475
    %7099 = vmatpush2.bf16.msra.mxu0 %v6474
    %7100 = vmatprep.subr.bf16.mxu0 %v6469
    %7101 = vmatpush2.bf16.msra.mxu0 %v6468
    %7102 = vmatprep.subr.bf16.mxu0 %v6463
    %7103 = vmatpush2.bf16.msra.mxu0 %v6462
    %7104 = vmatprep.mubr.bf16.mxu0 %v5036
    %7105 = vmatmul.mubr.bf16.gmra.mxu0 %v5035
    %v7106 = vpop.f32.mrf.mxu0
    %v7107 = vadd.f32 %v7066, %v7106
    %v7108 = vpop.f32.mrf.mxu0
    %v7109 = vadd.f32 %v7068, %v7108
    %v7110 = vpop.f32.mrf.mxu0
    %v7111 = vpop.f32.mrf.mxu0
    %7112 = vdwg.mxu0
    %7113 = vmatprep.subr.bf16.mxu0 %v6553
    %7114 = vmatpush1.bf16.msra.mxu0 %v6552
    %7115 = vmatprep.subr.bf16.mxu0 %v6547
    %7116 = vmatpush1.bf16.msra.mxu0 %v6546
    %7117 = vmatprep.subr.bf16.mxu0 %v6541
    %7118 = vmatpush1.bf16.msra.mxu0 %v6540
    %7119 = vmatprep.subr.bf16.mxu0 %v6535
    %7120 = vmatpush1.bf16.msra.mxu0 %v6534
    %7121 = vmatprep.subr.bf16.mxu0 %v6529
    %7122 = vmatpush1.bf16.msra.mxu0 %v6528
    %7123 = vmatprep.subr.bf16.mxu0 %v6523
    %7124 = vmatpush1.bf16.msra.mxu0 %v6522
    %7125 = vmatprep.subr.bf16.mxu0 %v6517
    %7126 = vmatpush1.bf16.msra.mxu0 %v6516
    %7127 = vmatprep.subr.bf16.mxu0 %v6511
    %7128 = vmatpush1.bf16.msra.mxu0 %v6510
    %7129 = vmatprep.subr.bf16.mxu0 %v6601
    %7130 = vmatpush2.bf16.msra.mxu0 %v6600
    %7131 = vmatprep.subr.bf16.mxu0 %v6595
    %7132 = vmatpush2.bf16.msra.mxu0 %v6594
    %7133 = vmatprep.subr.bf16.mxu0 %v6589
    %7134 = vmatpush2.bf16.msra.mxu0 %v6588
    %7135 = vmatprep.subr.bf16.mxu0 %v6583
    %7136 = vmatpush2.bf16.msra.mxu0 %v6582
    %7137 = vmatprep.subr.bf16.mxu0 %v6577
    %7138 = vmatpush2.bf16.msra.mxu0 %v6576
    %7139 = vmatprep.subr.bf16.mxu0 %v6571
    %7140 = vmatpush2.bf16.msra.mxu0 %v6570
    %7141 = vmatprep.subr.bf16.mxu0 %v6565
    %7142 = vmatpush2.bf16.msra.mxu0 %v6564
    %7143 = vmatprep.subr.bf16.mxu0 %v6559
    %7144 = vmatpush2.bf16.msra.mxu0 %v6558
    %7145 = vmatprep.mubr.bf16.mxu0 %v5038
    %7146 = vmatmul.mubr.bf16.gmra.mxu0 %v5037
    %v7147 = vpop.f32.mrf.mxu0
    %v7148 = vadd.f32 %v7107, %v7147
    %v7149 = vpop.f32.mrf.mxu0
    %v7150 = vadd.f32 %v7109, %v7149
    %v7151 = vpop.f32.mrf.mxu0
    %v7152 = vpop.f32.mrf.mxu0
    %7153 = vdwg.mxu0
    %7154 = vmatprep.subr.bf16.mxu0 %v6267
    %7155 = vmatpush1.bf16.msra.mxu0 %v6266
    %7156 = vmatprep.subr.bf16.mxu0 %v6261
    %7157 = vmatpush1.bf16.msra.mxu0 %v6260
    %7158 = vmatprep.subr.bf16.mxu0 %v6255
    %7159 = vmatpush1.bf16.msra.mxu0 %v6254
    %7160 = vmatprep.subr.bf16.mxu0 %v6249
    %7161 = vmatpush1.bf16.msra.mxu0 %v6248
    %7162 = vmatprep.subr.bf16.mxu0 %v6243
    %7163 = vmatpush1.bf16.msra.mxu0 %v6242
    %7164 = vmatprep.subr.bf16.mxu0 %v6237
    %7165 = vmatpush1.bf16.msra.mxu0 %v6236
    %7166 = vmatprep.subr.bf16.mxu0 %v6231
    %7167 = vmatpush1.bf16.msra.mxu0 %v6230
    %7168 = vmatprep.subr.bf16.mxu0 %v6225
    %7169 = vmatpush1.bf16.msra.mxu0 %v6224
    %7170 = vmatprep.subr.bf16.mxu0 %v6315
    %7171 = vmatpush2.bf16.msra.mxu0 %v6314
    %7172 = vmatprep.subr.bf16.mxu0 %v6309
    %7173 = vmatpush2.bf16.msra.mxu0 %v6308
    %7174 = vmatprep.subr.bf16.mxu0 %v6303
    %7175 = vmatpush2.bf16.msra.mxu0 %v6302
    %7176 = vmatprep.subr.bf16.mxu0 %v6297
    %7177 = vmatpush2.bf16.msra.mxu0 %v6296
    %7178 = vmatprep.subr.bf16.mxu0 %v6291
    %7179 = vmatpush2.bf16.msra.mxu0 %v6290
    %7180 = vmatprep.subr.bf16.mxu0 %v6285
    %7181 = vmatpush2.bf16.msra.mxu0 %v6284
    %7182 = vmatprep.subr.bf16.mxu0 %v6279
    %7183 = vmatpush2.bf16.msra.mxu0 %v6278
    %7184 = vmatprep.subr.bf16.mxu0 %v6273
    %7185 = vmatpush2.bf16.msra.mxu0 %v6272
    %7186 = vmatprep.mubr.bf16.mxu0 %v5032
    %7187 = vmatmul.mubr.bf16.gmra.mxu0 %v5031
    %v7188 = vpop.f32.mrf.mxu0
    %v7189 = vadd.f32 %v5051, %v7188
    %v7190 = vpop.f32.mrf.mxu0
    %v7191 = vadd.f32 %v5055, %v7190
    %v7192 = vpop.f32.mrf.mxu0
    %v7193 = vpop.f32.mrf.mxu0
    %7194 = vdwg.mxu0
    %7195 = vmatprep.subr.bf16.mxu0 %v6363
    %7196 = vmatpush1.bf16.msra.mxu0 %v6362
    %7197 = vmatprep.subr.bf16.mxu0 %v6357
    %7198 = vmatpush1.bf16.msra.mxu0 %v6356
    %7199 = vmatprep.subr.bf16.mxu0 %v6351
    %7200 = vmatpush1.bf16.msra.mxu0 %v6350
    %7201 = vmatprep.subr.bf16.mxu0 %v6345
    %7202 = vmatpush1.bf16.msra.mxu0 %v6344
    %7203 = vmatprep.subr.bf16.mxu0 %v6339
    %7204 = vmatpush1.bf16.msra.mxu0 %v6338
    %7205 = vmatprep.subr.bf16.mxu0 %v6333
    %7206 = vmatpush1.bf16.msra.mxu0 %v6332
    %7207 = vmatprep.subr.bf16.mxu0 %v6327
    %7208 = vmatpush1.bf16.msra.mxu0 %v6326
    %7209 = vmatprep.subr.bf16.mxu0 %v6321
    %7210 = vmatpush1.bf16.msra.mxu0 %v6320
    %7211 = vmatprep.subr.bf16.mxu0 %v6411
    %7212 = vmatpush2.bf16.msra.mxu0 %v6410
    %7213 = vmatprep.subr.bf16.mxu0 %v6405
    %7214 = vmatpush2.bf16.msra.mxu0 %v6404
    %7215 = vmatprep.subr.bf16.mxu0 %v6399
    %7216 = vmatpush2.bf16.msra.mxu0 %v6398
    %7217 = vmatprep.subr.bf16.mxu0 %v6393
    %7218 = vmatpush2.bf16.msra.mxu0 %v6392
    %7219 = vmatprep.subr.bf16.mxu0 %v6387
    %7220 = vmatpush2.bf16.msra.mxu0 %v6386
    %7221 = vmatprep.subr.bf16.mxu0 %v6381
    %7222 = vmatpush2.bf16.msra.mxu0 %v6380
    %7223 = vmatprep.subr.bf16.mxu0 %v6375
    %7224 = vmatpush2.bf16.msra.mxu0 %v6374
    %7225 = vmatprep.subr.bf16.mxu0 %v6369
    %7226 = vmatpush2.bf16.msra.mxu0 %v6368
    %7227 = vmatprep.mubr.bf16.mxu0 %v5034
    %7228 = vmatmul.mubr.bf16.gmra.mxu0 %v5033
    %v7229 = vpop.f32.mrf.mxu0
    %v7230 = vadd.f32 %v7189, %v7229
    %v7231 = vpop.f32.mrf.mxu0
    %v7232 = vadd.f32 %v7191, %v7231
    %v7233 = vpop.f32.mrf.mxu0
    %v7234 = vpop.f32.mrf.mxu0
    %7235 = vdwg.mxu0
    %7236 = vmatprep.subr.bf16.mxu0 %v6459
    %7237 = vmatpush1.bf16.msra.mxu0 %v6458
    %7238 = vmatprep.subr.bf16.mxu0 %v6453
    %7239 = vmatpush1.bf16.msra.mxu0 %v6452
    %7240 = vmatprep.subr.bf16.mxu0 %v6447
    %7241 = vmatpush1.bf16.msra.mxu0 %v6446
    %7242 = vmatprep.subr.bf16.mxu0 %v6441
    %7243 = vmatpush1.bf16.msra.mxu0 %v6440
    %7244 = vmatprep.subr.bf16.mxu0 %v6435
    %7245 = vmatpush1.bf16.msra.mxu0 %v6434
    %7246 = vmatprep.subr.bf16.mxu0 %v6429
    %7247 = vmatpush1.bf16.msra.mxu0 %v6428
    %7248 = vmatprep.subr.bf16.mxu0 %v6423
    %7249 = vmatpush1.bf16.msra.mxu0 %v6422
    %7250 = vmatprep.subr.bf16.mxu0 %v6417
    %7251 = vmatpush1.bf16.msra.mxu0 %v6416
    %7252 = vmatprep.subr.bf16.mxu0 %v6507
    %7253 = vmatpush2.bf16.msra.mxu0 %v6506
    %7254 = vmatprep.subr.bf16.mxu0 %v6501
    %7255 = vmatpush2.bf16.msra.mxu0 %v6500
    %7256 = vmatprep.subr.bf16.mxu0 %v6495
    %7257 = vmatpush2.bf16.msra.mxu0 %v6494
    %7258 = vmatprep.subr.bf16.mxu0 %v6489
    %7259 = vmatpush2.bf16.msra.mxu0 %v6488
    %7260 = vmatprep.subr.bf16.mxu0 %v6483
    %7261 = vmatpush2.bf16.msra.mxu0 %v6482
    %7262 = vmatprep.subr.bf16.mxu0 %v6477
    %7263 = vmatpush2.bf16.msra.mxu0 %v6476
    %7264 = vmatprep.subr.bf16.mxu0 %v6471
    %7265 = vmatpush2.bf16.msra.mxu0 %v6470
    %7266 = vmatprep.subr.bf16.mxu0 %v6465
    %7267 = vmatpush2.bf16.msra.mxu0 %v6464
    %7268 = vmatprep.mubr.bf16.mxu0 %v5036
    %7269 = vmatmul.mubr.bf16.gmra.mxu0 %v5035
    %v7270 = vpop.f32.mrf.mxu0
    %v7271 = vadd.f32 %v7230, %v7270
    %v7272 = vpop.f32.mrf.mxu0
    %v7273 = vadd.f32 %v7232, %v7272
    %v7274 = vpop.f32.mrf.mxu0
    %v7275 = vpop.f32.mrf.mxu0
    %7276 = vdwg.mxu0
    %7277 = vmatprep.subr.bf16.mxu0 %v6555
    %7278 = vmatpush1.bf16.msra.mxu0 %v6554
    %7279 = vmatprep.subr.bf16.mxu0 %v6549
    %7280 = vmatpush1.bf16.msra.mxu0 %v6548
    %7281 = vmatprep.subr.bf16.mxu0 %v6543
    %7282 = vmatpush1.bf16.msra.mxu0 %v6542
    %7283 = vmatprep.subr.bf16.mxu0 %v6537
    %7284 = vmatpush1.bf16.msra.mxu0 %v6536
    %7285 = vmatprep.subr.bf16.mxu0 %v6531
    %7286 = vmatpush1.bf16.msra.mxu0 %v6530
    %7287 = vmatprep.subr.bf16.mxu0 %v6525
    %7288 = vmatpush1.bf16.msra.mxu0 %v6524
    %7289 = vmatprep.subr.bf16.mxu0 %v6519
    %7290 = vmatpush1.bf16.msra.mxu0 %v6518
    %7291 = vmatprep.subr.bf16.mxu0 %v6513
    %7292 = vmatpush1.bf16.msra.mxu0 %v6512
    %7293 = vmatprep.subr.bf16.mxu0 %v6603
    %7294 = vmatpush2.bf16.msra.mxu0 %v6602
    %7295 = vmatprep.subr.bf16.mxu0 %v6597
    %7296 = vmatpush2.bf16.msra.mxu0 %v6596
    %7297 = vmatprep.subr.bf16.mxu0 %v6591
    %7298 = vmatpush2.bf16.msra.mxu0 %v6590
    %7299 = vmatprep.subr.bf16.mxu0 %v6585
    %7300 = vmatpush2.bf16.msra.mxu0 %v6584
    %7301 = vmatprep.subr.bf16.mxu0 %v6579
    %7302 = vmatpush2.bf16.msra.mxu0 %v6578
    %7303 = vmatprep.subr.bf16.mxu0 %v6573
    %7304 = vmatpush2.bf16.msra.mxu0 %v6572
    %7305 = vmatprep.subr.bf16.mxu0 %v6567
    %7306 = vmatpush2.bf16.msra.mxu0 %v6566
    %7307 = vmatprep.subr.bf16.mxu0 %v6561
    %7308 = vmatpush2.bf16.msra.mxu0 %v6560
    %7309 = vmatprep.mubr.bf16.mxu0 %v5038
    %7310 = vmatmul.mubr.bf16.gmra.mxu0 %v5037
    %v7311 = vpop.f32.mrf.mxu0
    %v7312 = vadd.f32 %v7271, %v7311
    %v7313 = vpop.f32.mrf.mxu0
    %v7314 = vadd.f32 %v7273, %v7313
    %v7315 = vpop.f32.mrf.mxu0
    %v7316 = vpop.f32.mrf.mxu0
    %7317 = vdwg.mxu0
    %7318 = vmatprep.subr.bf16.mxu0 %v6269
    %7319 = vmatpush1.bf16.msra.mxu0 %v6268
    %7320 = vmatprep.subr.bf16.mxu0 %v6263
    %7321 = vmatpush1.bf16.msra.mxu0 %v6262
    %7322 = vmatprep.subr.bf16.mxu0 %v6257
    %7323 = vmatpush1.bf16.msra.mxu0 %v6256
    %7324 = vmatprep.subr.bf16.mxu0 %v6251
    %7325 = vmatpush1.bf16.msra.mxu0 %v6250
    %7326 = vmatprep.subr.bf16.mxu0 %v6245
    %7327 = vmatpush1.bf16.msra.mxu0 %v6244
    %7328 = vmatprep.subr.bf16.mxu0 %v6239
    %7329 = vmatpush1.bf16.msra.mxu0 %v6238
    %7330 = vmatprep.subr.bf16.mxu0 %v6233
    %7331 = vmatpush1.bf16.msra.mxu0 %v6232
    %7332 = vmatprep.subr.bf16.mxu0 %v6227
    %7333 = vmatpush1.bf16.msra.mxu0 %v6226
    %7334 = vmatprep.subr.bf16.mxu0 %v6317
    %7335 = vmatpush2.bf16.msra.mxu0 %v6316
    %7336 = vmatprep.subr.bf16.mxu0 %v6311
    %7337 = vmatpush2.bf16.msra.mxu0 %v6310
    %7338 = vmatprep.subr.bf16.mxu0 %v6305
    %7339 = vmatpush2.bf16.msra.mxu0 %v6304
    %7340 = vmatprep.subr.bf16.mxu0 %v6299
    %7341 = vmatpush2.bf16.msra.mxu0 %v6298
    %7342 = vmatprep.subr.bf16.mxu0 %v6293
    %7343 = vmatpush2.bf16.msra.mxu0 %v6292
    %7344 = vmatprep.subr.bf16.mxu0 %v6287
    %7345 = vmatpush2.bf16.msra.mxu0 %v6286
    %7346 = vmatprep.subr.bf16.mxu0 %v6281
    %7347 = vmatpush2.bf16.msra.mxu0 %v6280
    %7348 = vmatprep.subr.bf16.mxu0 %v6275
    %7349 = vmatpush2.bf16.msra.mxu0 %v6274
    %7350 = vmatprep.mubr.bf16.mxu0 %v5032
    %7351 = vmatmul.mubr.bf16.gmra.mxu0 %v5031
    %v7352 = vpop.f32.mrf.mxu0
    %v7353 = vadd.f32 %v5059, %v7352
    %v7354 = vpop.f32.mrf.mxu0
    %v7355 = vadd.f32 %v5063, %v7354
    %v7356 = vpop.f32.mrf.mxu0
    %v7357 = vpop.f32.mrf.mxu0
    %7358 = vdwg.mxu0
    %7359 = vmatprep.subr.bf16.mxu0 %v6365
    %7360 = vmatpush1.bf16.msra.mxu0 %v6364
    %7361 = vmatprep.subr.bf16.mxu0 %v6359
    %7362 = vmatpush1.bf16.msra.mxu0 %v6358
    %7363 = vmatprep.subr.bf16.mxu0 %v6353
    %7364 = vmatpush1.bf16.msra.mxu0 %v6352
    %7365 = vmatprep.subr.bf16.mxu0 %v6347
    %7366 = vmatpush1.bf16.msra.mxu0 %v6346
    %7367 = vmatprep.subr.bf16.mxu0 %v6341
    %7368 = vmatpush1.bf16.msra.mxu0 %v6340
    %7369 = vmatprep.subr.bf16.mxu0 %v6335
    %7370 = vmatpush1.bf16.msra.mxu0 %v6334
    %7371 = vmatprep.subr.bf16.mxu0 %v6329
    %7372 = vmatpush1.bf16.msra.mxu0 %v6328
    %7373 = vmatprep.subr.bf16.mxu0 %v6323
    %7374 = vmatpush1.bf16.msra.mxu0 %v6322
    %7375 = vmatprep.subr.bf16.mxu0 %v6413
    %7376 = vmatpush2.bf16.msra.mxu0 %v6412
    %7377 = vmatprep.subr.bf16.mxu0 %v6407
    %7378 = vmatpush2.bf16.msra.mxu0 %v6406
    %7379 = vmatprep.subr.bf16.mxu0 %v6401
    %7380 = vmatpush2.bf16.msra.mxu0 %v6400
    %7381 = vmatprep.subr.bf16.mxu0 %v6395
    %7382 = vmatpush2.bf16.msra.mxu0 %v6394
    %7383 = vmatprep.subr.bf16.mxu0 %v6389
    %7384 = vmatpush2.bf16.msra.mxu0 %v6388
    %7385 = vmatprep.subr.bf16.mxu0 %v6383
    %7386 = vmatpush2.bf16.msra.mxu0 %v6382
    %7387 = vmatprep.subr.bf16.mxu0 %v6377
    %7388 = vmatpush2.bf16.msra.mxu0 %v6376
    %7389 = vmatprep.subr.bf16.mxu0 %v6371
    %7390 = vmatpush2.bf16.msra.mxu0 %v6370
    %7391 = vmatprep.mubr.bf16.mxu0 %v5034
    %7392 = vmatmul.mubr.bf16.gmra.mxu0 %v5033
    %v7393 = vpop.f32.mrf.mxu0
    %v7394 = vadd.f32 %v7353, %v7393
    %v7395 = vpop.f32.mrf.mxu0
    %v7396 = vadd.f32 %v7355, %v7395
    %v7397 = vpop.f32.mrf.mxu0
    %v7398 = vpop.f32.mrf.mxu0
    %7399 = vdwg.mxu0
    %7400 = vmatprep.subr.bf16.mxu0 %v6461
    %7401 = vmatpush1.bf16.msra.mxu0 %v6460
    %7402 = vmatprep.subr.bf16.mxu0 %v6455
    %7403 = vmatpush1.bf16.msra.mxu0 %v6454
    %7404 = vmatprep.subr.bf16.mxu0 %v6449
    %7405 = vmatpush1.bf16.msra.mxu0 %v6448
    %7406 = vmatprep.subr.bf16.mxu0 %v6443
    %7407 = vmatpush1.bf16.msra.mxu0 %v6442
    %7408 = vmatprep.subr.bf16.mxu0 %v6437
    %7409 = vmatpush1.bf16.msra.mxu0 %v6436
    %7410 = vmatprep.subr.bf16.mxu0 %v6431
    %7411 = vmatpush1.bf16.msra.mxu0 %v6430
    %7412 = vmatprep.subr.bf16.mxu0 %v6425
    %7413 = vmatpush1.bf16.msra.mxu0 %v6424
    %7414 = vmatprep.subr.bf16.mxu0 %v6419
    %7415 = vmatpush1.bf16.msra.mxu0 %v6418
    %7416 = vmatprep.subr.bf16.mxu0 %v6509
    %7417 = vmatpush2.bf16.msra.mxu0 %v6508
    %7418 = vmatprep.subr.bf16.mxu0 %v6503
    %7419 = vmatpush2.bf16.msra.mxu0 %v6502
    %7420 = vmatprep.subr.bf16.mxu0 %v6497
    %7421 = vmatpush2.bf16.msra.mxu0 %v6496
    %7422 = vmatprep.subr.bf16.mxu0 %v6491
    %7423 = vmatpush2.bf16.msra.mxu0 %v6490
    %7424 = vmatprep.subr.bf16.mxu0 %v6485
    %7425 = vmatpush2.bf16.msra.mxu0 %v6484
    %7426 = vmatprep.subr.bf16.mxu0 %v6479
    %7427 = vmatpush2.bf16.msra.mxu0 %v6478
    %7428 = vmatprep.subr.bf16.mxu0 %v6473
    %7429 = vmatpush2.bf16.msra.mxu0 %v6472
    %7430 = vmatprep.subr.bf16.mxu0 %v6467
    %7431 = vmatpush2.bf16.msra.mxu0 %v6466
    %7432 = vmatprep.mubr.bf16.mxu0 %v5036
    %7433 = vmatmul.mubr.bf16.gmra.mxu0 %v5035
    %v7434 = vpop.f32.mrf.mxu0
    %v7435 = vadd.f32 %v7394, %v7434
    %v7436 = vpop.f32.mrf.mxu0
    %v7437 = vadd.f32 %v7396, %v7436
    %v7438 = vpop.f32.mrf.mxu0
    %v7439 = vpop.f32.mrf.mxu0
    %7440 = vdwg.mxu0
    %7441 = vmatprep.subr.bf16.mxu0 %v6557
    %7442 = vmatpush1.bf16.msra.mxu0 %v6556
    %7443 = vmatprep.subr.bf16.mxu0 %v6551
    %7444 = vmatpush1.bf16.msra.mxu0 %v6550
    %7445 = vmatprep.subr.bf16.mxu0 %v6545
    %7446 = vmatpush1.bf16.msra.mxu0 %v6544
    %7447 = vmatprep.subr.bf16.mxu0 %v6539
    %7448 = vmatpush1.bf16.msra.mxu0 %v6538
    %7449 = vmatprep.subr.bf16.mxu0 %v6533
    %7450 = vmatpush1.bf16.msra.mxu0 %v6532
    %7451 = vmatprep.subr.bf16.mxu0 %v6527
    %7452 = vmatpush1.bf16.msra.mxu0 %v6526
    %7453 = vmatprep.subr.bf16.mxu0 %v6521
    %7454 = vmatpush1.bf16.msra.mxu0 %v6520
    %7455 = vmatprep.subr.bf16.mxu0 %v6515
    %7456 = vmatpush1.bf16.msra.mxu0 %v6514
    %7457 = vmatprep.subr.bf16.mxu0 %v6605
    %7458 = vmatpush2.bf16.msra.mxu0 %v6604
    %7459 = vmatprep.subr.bf16.mxu0 %v6599
    %7460 = vmatpush2.bf16.msra.mxu0 %v6598
    %7461 = vmatprep.subr.bf16.mxu0 %v6593
    %7462 = vmatpush2.bf16.msra.mxu0 %v6592
    %7463 = vmatprep.subr.bf16.mxu0 %v6587
    %7464 = vmatpush2.bf16.msra.mxu0 %v6586
    %7465 = vmatprep.subr.bf16.mxu0 %v6581
    %7466 = vmatpush2.bf16.msra.mxu0 %v6580
    %7467 = vmatprep.subr.bf16.mxu0 %v6575
    %7468 = vmatpush2.bf16.msra.mxu0 %v6574
    %7469 = vmatprep.subr.bf16.mxu0 %v6569
    %7470 = vmatpush2.bf16.msra.mxu0 %v6568
    %7471 = vmatprep.subr.bf16.mxu0 %v6563
    %7472 = vmatpush2.bf16.msra.mxu0 %v6562
    %7473 = vmatprep.mubr.bf16.mxu0 %v5038
    %7474 = vmatmul.mubr.bf16.gmra.mxu0 %v5037
    %v7475 = vpop.f32.mrf.mxu0
    %v7476 = vadd.f32 %v7435, %v7475
    %v7477 = vpop.f32.mrf.mxu0
    %v7478 = vadd.f32 %v7437, %v7477
    %v7479 = vpop.f32.mrf.mxu0
    %v7480 = vpop.f32.mrf.mxu0
    %7481 = vdwg.mxu0
    %v7482 = vmax.f32 %v7148, 0.0
    %v7483 = vmax.f32 %v7150, 0.0
    %v7484 = vmax.f32 %v7312, 0.0
    %v7485 = vmax.f32 %v7314, 0.0
    %v7486 = vmax.f32 %v7476, 0.0
    %v7487 = vmax.f32 %v7478, 0.0
    %v7488 = vld [vmem:[#allocation14] sm:$0xff]
    %v7489 = vld [vmem:[#allocation14 + $0x8] sm:$0xff]
    %v7490 = vld [vmem:[#allocation14 + $0x10] sm:$0xff]
    %v7491 = vld [vmem:[#allocation14 + $0x18] sm:$0xff]
    %v7492 = vld [vmem:[#allocation14 + $0x20] sm:$0xff]
    %v7493 = vld [vmem:[#allocation14 + $0x28] sm:$0xff]
    %v7494 = vld [vmem:[#allocation14 + $0x30] sm:$0xff]
    %v7495 = vld [vmem:[#allocation14 + $0x38] sm:$0xff]
    %v7496 = vld [vmem:[#allocation14 + $0x40] sm:$0xff]
    %v7497 = vld [vmem:[#allocation14 + $0x48] sm:$0xff]
    %v7498 = vld [vmem:[#allocation14 + $0x50] sm:$0xff]
    %v7499 = vld [vmem:[#allocation14 + $0x58] sm:$0xff]
    %v7500 = vld [vmem:[#allocation14 + $0x60] sm:$0xff]
    %v7501 = vld [vmem:[#allocation14 + $0x68] sm:$0xff]
    %v7502 = vld [vmem:[#allocation14 + $0x70] sm:$0xff]
    %v7503 = vld [vmem:[#allocation14 + $0x78] sm:$0xff]
    %v7504 = vld [vmem:[#allocation14 + $0x80] sm:$0xff]
    %v7505 = vld [vmem:[#allocation14 + $0x88] sm:$0xff]
    %v7506 = vld [vmem:[#allocation14 + $0x90] sm:$0xff]
    %v7507 = vld [vmem:[#allocation14 + $0x98] sm:$0xff]
    %v7508 = vld [vmem:[#allocation14 + $0xa0] sm:$0xff]
    %v7509 = vld [vmem:[#allocation14 + $0xa8] sm:$0xff]
    %v7510 = vld [vmem:[#allocation14 + $0xb0] sm:$0xff]
    %v7511 = vld [vmem:[#allocation14 + $0xb8] sm:$0xff]
    %v7512 = vld [vmem:[#allocation14 + $0xc0] sm:$0xff]
    %v7513 = vld [vmem:[#allocation14 + $0xc8] sm:$0xff]
    %v7514 = vld [vmem:[#allocation14 + $0xd0] sm:$0xff]
    %v7515 = vld [vmem:[#allocation14 + $0xd8] sm:$0xff]
    %v7516 = vld [vmem:[#allocation14 + $0xe0] sm:$0xff]
    %v7517 = vld [vmem:[#allocation14 + $0xe8] sm:$0xff]
    %v7518 = vld [vmem:[#allocation14 + $0xf0] sm:$0xff]
    %v7519 = vld [vmem:[#allocation14 + $0xf8] sm:$0xff]
    %v7520 = vld [vmem:[#allocation14 + $0x100] sm:$0xff]
    %v7521 = vld [vmem:[#allocation14 + $0x108] sm:$0xff]
    %v7522 = vld [vmem:[#allocation14 + $0x110] sm:$0xff]
    %v7523 = vld [vmem:[#allocation14 + $0x118] sm:$0xff]
    %v7524 = vld [vmem:[#allocation14 + $0x120] sm:$0xff]
    %v7525 = vld [vmem:[#allocation14 + $0x128] sm:$0xff]
    %v7526 = vld [vmem:[#allocation14 + $0x130] sm:$0xff]
    %v7527 = vld [vmem:[#allocation14 + $0x138] sm:$0xff]
    %v7528 = vld [vmem:[#allocation14 + $0x140] sm:$0xff]
    %v7529 = vld [vmem:[#allocation14 + $0x148] sm:$0xff]
    %v7530 = vld [vmem:[#allocation14 + $0x150] sm:$0xff]
    %v7531 = vld [vmem:[#allocation14 + $0x158] sm:$0xff]
    %v7532 = vld [vmem:[#allocation14 + $0x160] sm:$0xff]
    %v7533 = vld [vmem:[#allocation14 + $0x168] sm:$0xff]
    %v7534 = vld [vmem:[#allocation14 + $0x170] sm:$0xff]
    %v7535 = vld [vmem:[#allocation14 + $0x178] sm:$0xff]
    %v7536 = vld [vmem:[#allocation14 + $0x180] sm:$0xff]
    %v7537 = vld [vmem:[#allocation14 + $0x188] sm:$0xff]
    %v7538 = vld [vmem:[#allocation14 + $0x190] sm:$0xff]
    %v7539 = vld [vmem:[#allocation14 + $0x198] sm:$0xff]
    %v7540 = vld [vmem:[#allocation14 + $0x1a0] sm:$0xff]
    %v7541 = vld [vmem:[#allocation14 + $0x1a8] sm:$0xff]
    %v7542 = vld [vmem:[#allocation14 + $0x1b0] sm:$0xff]
    %v7543 = vld [vmem:[#allocation14 + $0x1b8] sm:$0xff]
    %v7544 = vld [vmem:[#allocation14 + $0x1c0] sm:$0xff]
    %v7545 = vld [vmem:[#allocation14 + $0x1c8] sm:$0xff]
    %v7546 = vld [vmem:[#allocation14 + $0x1d0] sm:$0xff]
    %v7547 = vld [vmem:[#allocation14 + $0x1d8] sm:$0xff]
    %v7548 = vld [vmem:[#allocation14 + $0x1e0] sm:$0xff]
    %v7549 = vld [vmem:[#allocation14 + $0x1e8] sm:$0xff]
    %v7550 = vld [vmem:[#allocation14 + $0x1f0] sm:$0xff]
    %v7551 = vld [vmem:[#allocation14 + $0x1f8] sm:$0xff]
    %v7552 = vld [vmem:[#allocation14 + $0x200] sm:$0xff]
    %v7553 = vld [vmem:[#allocation14 + $0x208] sm:$0xff]
    %v7554 = vld [vmem:[#allocation14 + $0x210] sm:$0xff]
    %v7555 = vld [vmem:[#allocation14 + $0x218] sm:$0xff]
    %v7556 = vld [vmem:[#allocation14 + $0x220] sm:$0xff]
    %v7557 = vld [vmem:[#allocation14 + $0x228] sm:$0xff]
    %v7558 = vld [vmem:[#allocation14 + $0x230] sm:$0xff]
    %v7559 = vld [vmem:[#allocation14 + $0x238] sm:$0xff]
    %v7560 = vld [vmem:[#allocation14 + $0x240] sm:$0xff]
    %v7561 = vld [vmem:[#allocation14 + $0x248] sm:$0xff]
    %v7562 = vld [vmem:[#allocation14 + $0x250] sm:$0xff]
    %v7563 = vld [vmem:[#allocation14 + $0x258] sm:$0xff]
    %v7564 = vld [vmem:[#allocation14 + $0x260] sm:$0xff]
    %v7565 = vld [vmem:[#allocation14 + $0x268] sm:$0xff]
    %v7566 = vld [vmem:[#allocation14 + $0x270] sm:$0xff]
    %v7567 = vld [vmem:[#allocation14 + $0x278] sm:$0xff]
    %v7568 = vld [vmem:[#allocation14 + $0x280] sm:$0xff]
    %v7569 = vld [vmem:[#allocation14 + $0x288] sm:$0xff]
    %v7570 = vld [vmem:[#allocation14 + $0x290] sm:$0xff]
    %v7571 = vld [vmem:[#allocation14 + $0x298] sm:$0xff]
    %v7572 = vld [vmem:[#allocation14 + $0x2a0] sm:$0xff]
    %v7573 = vld [vmem:[#allocation14 + $0x2a8] sm:$0xff]
    %v7574 = vld [vmem:[#allocation14 + $0x2b0] sm:$0xff]
    %v7575 = vld [vmem:[#allocation14 + $0x2b8] sm:$0xff]
    %v7576 = vld [vmem:[#allocation14 + $0x2c0] sm:$0xff]
    %v7577 = vld [vmem:[#allocation14 + $0x2c8] sm:$0xff]
    %v7578 = vld [vmem:[#allocation14 + $0x2d0] sm:$0xff]
    %v7579 = vld [vmem:[#allocation14 + $0x2d8] sm:$0xff]
    %v7580 = vld [vmem:[#allocation14 + $0x2e0] sm:$0xff]
    %v7581 = vld [vmem:[#allocation14 + $0x2e8] sm:$0xff]
    %v7582 = vld [vmem:[#allocation14 + $0x2f0] sm:$0xff]
    %v7583 = vld [vmem:[#allocation14 + $0x2f8] sm:$0xff]
    %v7584 = vld [vmem:[#allocation14 + $0x300] sm:$0xff]
    %v7585 = vld [vmem:[#allocation14 + $0x308] sm:$0xff]
    %v7586 = vld [vmem:[#allocation14 + $0x310] sm:$0xff]
    %v7587 = vld [vmem:[#allocation14 + $0x318] sm:$0xff]
    %v7588 = vld [vmem:[#allocation14 + $0x320] sm:$0xff]
    %v7589 = vld [vmem:[#allocation14 + $0x328] sm:$0xff]
    %v7590 = vld [vmem:[#allocation14 + $0x330] sm:$0xff]
    %v7591 = vld [vmem:[#allocation14 + $0x338] sm:$0xff]
    %v7592 = vld [vmem:[#allocation14 + $0x340] sm:$0xff]
    %v7593 = vld [vmem:[#allocation14 + $0x348] sm:$0xff]
    %v7594 = vld [vmem:[#allocation14 + $0x350] sm:$0xff]
    %v7595 = vld [vmem:[#allocation14 + $0x358] sm:$0xff]
    %v7596 = vld [vmem:[#allocation14 + $0x360] sm:$0xff]
    %v7597 = vld [vmem:[#allocation14 + $0x368] sm:$0xff]
    %v7598 = vld [vmem:[#allocation14 + $0x370] sm:$0xff]
    %v7599 = vld [vmem:[#allocation14 + $0x378] sm:$0xff]
    %v7600 = vld [vmem:[#allocation14 + $0x380] sm:$0xff]
    %v7601 = vld [vmem:[#allocation14 + $0x388] sm:$0xff]
    %v7602 = vld [vmem:[#allocation14 + $0x390] sm:$0xff]
    %v7603 = vld [vmem:[#allocation14 + $0x398] sm:$0xff]
    %v7604 = vld [vmem:[#allocation14 + $0x3a0] sm:$0xff]
    %v7605 = vld [vmem:[#allocation14 + $0x3a8] sm:$0xff]
    %v7606 = vld [vmem:[#allocation14 + $0x3b0] sm:$0xff]
    %v7607 = vld [vmem:[#allocation14 + $0x3b8] sm:$0xff]
    %v7608 = vld [vmem:[#allocation14 + $0x3c0] sm:$0xff]
    %v7609 = vld [vmem:[#allocation14 + $0x3c8] sm:$0xff]
    %v7610 = vld [vmem:[#allocation14 + $0x3d0] sm:$0xff]
    %v7611 = vld [vmem:[#allocation14 + $0x3d8] sm:$0xff]
    %v7612 = vld [vmem:[#allocation14 + $0x3e0] sm:$0xff]
    %v7613 = vld [vmem:[#allocation14 + $0x3e8] sm:$0xff]
    %v7614 = vld [vmem:[#allocation14 + $0x3f0] sm:$0xff]
    %v7615 = vld [vmem:[#allocation14 + $0x3f8] sm:$0xff]
    %v7616 = vld [vmem:[#allocation14 + $0x400] sm:$0xff]
    %v7617 = vld [vmem:[#allocation14 + $0x408] sm:$0xff]
    %v7618 = vld [vmem:[#allocation14 + $0x410] sm:$0xff]
    %v7619 = vld [vmem:[#allocation14 + $0x418] sm:$0xff]
    %v7620 = vld [vmem:[#allocation14 + $0x420] sm:$0xff]
    %v7621 = vld [vmem:[#allocation14 + $0x428] sm:$0xff]
    %v7622 = vld [vmem:[#allocation14 + $0x430] sm:$0xff]
    %v7623 = vld [vmem:[#allocation14 + $0x438] sm:$0xff]
    %v7624 = vld [vmem:[#allocation14 + $0x440] sm:$0xff]
    %v7625 = vld [vmem:[#allocation14 + $0x448] sm:$0xff]
    %v7626 = vld [vmem:[#allocation14 + $0x450] sm:$0xff]
    %v7627 = vld [vmem:[#allocation14 + $0x458] sm:$0xff]
    %v7628 = vld [vmem:[#allocation14 + $0x460] sm:$0xff]
    %v7629 = vld [vmem:[#allocation14 + $0x468] sm:$0xff]
    %v7630 = vld [vmem:[#allocation14 + $0x470] sm:$0xff]
    %v7631 = vld [vmem:[#allocation14 + $0x478] sm:$0xff]
    %v7632 = vld [vmem:[#allocation14 + $0x480] sm:$0xff]
    %v7633 = vld [vmem:[#allocation14 + $0x488] sm:$0xff]
    %v7634 = vld [vmem:[#allocation14 + $0x490] sm:$0xff]
    %v7635 = vld [vmem:[#allocation14 + $0x498] sm:$0xff]
    %v7636 = vld [vmem:[#allocation14 + $0x4a0] sm:$0xff]
    %v7637 = vld [vmem:[#allocation14 + $0x4a8] sm:$0xff]
    %v7638 = vld [vmem:[#allocation14 + $0x4b0] sm:$0xff]
    %v7639 = vld [vmem:[#allocation14 + $0x4b8] sm:$0xff]
    %v7640 = vld [vmem:[#allocation14 + $0x4c0] sm:$0xff]
    %v7641 = vld [vmem:[#allocation14 + $0x4c8] sm:$0xff]
    %v7642 = vld [vmem:[#allocation14 + $0x4d0] sm:$0xff]
    %v7643 = vld [vmem:[#allocation14 + $0x4d8] sm:$0xff]
    %v7644 = vld [vmem:[#allocation14 + $0x4e0] sm:$0xff]
    %v7645 = vld [vmem:[#allocation14 + $0x4e8] sm:$0xff]
    %v7646 = vld [vmem:[#allocation14 + $0x4f0] sm:$0xff]
    %v7647 = vld [vmem:[#allocation14 + $0x4f8] sm:$0xff]
    %v7648 = vld [vmem:[#allocation14 + $0x500] sm:$0xff]
    %v7649 = vld [vmem:[#allocation14 + $0x508] sm:$0xff]
    %v7650 = vld [vmem:[#allocation14 + $0x510] sm:$0xff]
    %v7651 = vld [vmem:[#allocation14 + $0x518] sm:$0xff]
    %v7652 = vld [vmem:[#allocation14 + $0x520] sm:$0xff]
    %v7653 = vld [vmem:[#allocation14 + $0x528] sm:$0xff]
    %v7654 = vld [vmem:[#allocation14 + $0x530] sm:$0xff]
    %v7655 = vld [vmem:[#allocation14 + $0x538] sm:$0xff]
    %v7656 = vld [vmem:[#allocation14 + $0x540] sm:$0xff]
    %v7657 = vld [vmem:[#allocation14 + $0x548] sm:$0xff]
    %v7658 = vld [vmem:[#allocation14 + $0x550] sm:$0xff]
    %v7659 = vld [vmem:[#allocation14 + $0x558] sm:$0xff]
    %v7660 = vld [vmem:[#allocation14 + $0x560] sm:$0xff]
    %v7661 = vld [vmem:[#allocation14 + $0x568] sm:$0xff]
    %v7662 = vld [vmem:[#allocation14 + $0x570] sm:$0xff]
    %v7663 = vld [vmem:[#allocation14 + $0x578] sm:$0xff]
    %v7664 = vld [vmem:[#allocation14 + $0x580] sm:$0xff]
    %v7665 = vld [vmem:[#allocation14 + $0x588] sm:$0xff]
    %v7666 = vld [vmem:[#allocation14 + $0x590] sm:$0xff]
    %v7667 = vld [vmem:[#allocation14 + $0x598] sm:$0xff]
    %v7668 = vld [vmem:[#allocation14 + $0x5a0] sm:$0xff]
    %v7669 = vld [vmem:[#allocation14 + $0x5a8] sm:$0xff]
    %v7670 = vld [vmem:[#allocation14 + $0x5b0] sm:$0xff]
    %v7671 = vld [vmem:[#allocation14 + $0x5b8] sm:$0xff]
    %v7672 = vld [vmem:[#allocation14 + $0x5c0] sm:$0xff]
    %v7673 = vld [vmem:[#allocation14 + $0x5c8] sm:$0xff]
    %v7674 = vld [vmem:[#allocation14 + $0x5d0] sm:$0xff]
    %v7675 = vld [vmem:[#allocation14 + $0x5d8] sm:$0xff]
    %v7676 = vld [vmem:[#allocation14 + $0x5e0] sm:$0xff]
    %v7677 = vld [vmem:[#allocation14 + $0x5e8] sm:$0xff]
    %v7678 = vld [vmem:[#allocation14 + $0x5f0] sm:$0xff]
    %v7679 = vld [vmem:[#allocation14 + $0x5f8] sm:$0xff]
    %v7680 = vld [vmem:[#allocation16] sm:$0xf]
    %v7681 = vpack.c.bf16 %v7482, %v7482
    %v7682 = vpack.c.bf16 %v7483, %v7483
    %v7683 = vpack.c.bf16 %v7484, %v7484
    %v7684 = vpack.c.bf16 %v7485, %v7485
    %v7685 = vpack.c.bf16 %v7486, %v7486
    %v7686 = vpack.c.bf16 %v7487, %v7487
    %v7688 = vlaneseq
    %v7689 = vshrl.u32 %v7688, 7
    %v7690 = vsub.s32 0, %v7689
    %v7691 = vrot.slane %v7680, %v7690
    %v7692 = vlaneseq
    %v7693 = vshrl.u32 %v7692, 7
    %v7694 = vsub.s32 1, %v7693
    %v7695 = vrot.slane %v7680, %v7694
    %v7696 = vlaneseq
    %v7697 = vshrl.u32 %v7696, 7
    %v7698 = vsub.s32 2, %v7697
    %v7699 = vrot.slane %v7680, %v7698
    %v7700 = vlaneseq
    %v7701 = vshrl.u32 %v7700, 7
    %v7702 = vsub.s32 3, %v7701
    %v7703 = vrot.slane %v7680, %v7702
    %v7900 = vunpack.c.l.b16 %v7488
    %v7901 = vunpack.c.h.b16 %v7488
    %v7902 = vunpack.c.l.b16 %v7489
    %v7903 = vunpack.c.h.b16 %v7489
    %v7904 = vunpack.c.l.b16 %v7490
    %v7905 = vunpack.c.h.b16 %v7490
    %v7906 = vunpack.c.l.b16 %v7491
    %v7907 = vunpack.c.h.b16 %v7491
    %v7908 = vunpack.c.l.b16 %v7492
    %v7909 = vunpack.c.h.b16 %v7492
    %v7910 = vunpack.c.l.b16 %v7493
    %v7911 = vunpack.c.h.b16 %v7493
    %v7912 = vunpack.c.l.b16 %v7494
    %v7913 = vunpack.c.h.b16 %v7494
    %v7914 = vunpack.c.l.b16 %v7495
    %v7915 = vunpack.c.h.b16 %v7495
    %v7916 = vunpack.c.l.b16 %v7496
    %v7917 = vunpack.c.h.b16 %v7496
    %v7918 = vunpack.c.l.b16 %v7497
    %v7919 = vunpack.c.h.b16 %v7497
    %v7920 = vunpack.c.l.b16 %v7498
    %v7921 = vunpack.c.h.b16 %v7498
    %v7922 = vunpack.c.l.b16 %v7499
    %v7923 = vunpack.c.h.b16 %v7499
    %v7924 = vunpack.c.l.b16 %v7500
    %v7925 = vunpack.c.h.b16 %v7500
    %v7926 = vunpack.c.l.b16 %v7501
    %v7927 = vunpack.c.h.b16 %v7501
    %v7928 = vunpack.c.l.b16 %v7502
    %v7929 = vunpack.c.h.b16 %v7502
    %v7930 = vunpack.c.l.b16 %v7503
    %v7931 = vunpack.c.h.b16 %v7503
    %v7932 = vunpack.c.l.b16 %v7504
    %v7933 = vunpack.c.h.b16 %v7504
    %v7934 = vunpack.c.l.b16 %v7505
    %v7935 = vunpack.c.h.b16 %v7505
    %v7936 = vunpack.c.l.b16 %v7506
    %v7937 = vunpack.c.h.b16 %v7506
    %v7938 = vunpack.c.l.b16 %v7507
    %v7939 = vunpack.c.h.b16 %v7507
    %v7940 = vunpack.c.l.b16 %v7508
    %v7941 = vunpack.c.h.b16 %v7508
    %v7942 = vunpack.c.l.b16 %v7509
    %v7943 = vunpack.c.h.b16 %v7509
    %v7944 = vunpack.c.l.b16 %v7510
    %v7945 = vunpack.c.h.b16 %v7510
    %v7946 = vunpack.c.l.b16 %v7511
    %v7947 = vunpack.c.h.b16 %v7511
    %v7948 = vunpack.c.l.b16 %v7512
    %v7949 = vunpack.c.h.b16 %v7512
    %v7950 = vunpack.c.l.b16 %v7513
    %v7951 = vunpack.c.h.b16 %v7513
    %v7952 = vunpack.c.l.b16 %v7514
    %v7953 = vunpack.c.h.b16 %v7514
    %v7954 = vunpack.c.l.b16 %v7515
    %v7955 = vunpack.c.h.b16 %v7515
    %v7956 = vunpack.c.l.b16 %v7516
    %v7957 = vunpack.c.h.b16 %v7516
    %v7958 = vunpack.c.l.b16 %v7517
    %v7959 = vunpack.c.h.b16 %v7517
    %v7960 = vunpack.c.l.b16 %v7518
    %v7961 = vunpack.c.h.b16 %v7518
    %v7962 = vunpack.c.l.b16 %v7519
    %v7963 = vunpack.c.h.b16 %v7519
    %v7964 = vunpack.c.l.b16 %v7520
    %v7965 = vunpack.c.h.b16 %v7520
    %v7966 = vunpack.c.l.b16 %v7521
    %v7967 = vunpack.c.h.b16 %v7521
    %v7968 = vunpack.c.l.b16 %v7522
    %v7969 = vunpack.c.h.b16 %v7522
    %v7970 = vunpack.c.l.b16 %v7523
    %v7971 = vunpack.c.h.b16 %v7523
    %v7972 = vunpack.c.l.b16 %v7524
    %v7973 = vunpack.c.h.b16 %v7524
    %v7974 = vunpack.c.l.b16 %v7525
    %v7975 = vunpack.c.h.b16 %v7525
    %v7976 = vunpack.c.l.b16 %v7526
    %v7977 = vunpack.c.h.b16 %v7526
    %v7978 = vunpack.c.l.b16 %v7527
    %v7979 = vunpack.c.h.b16 %v7527
    %v7980 = vunpack.c.l.b16 %v7528
    %v7981 = vunpack.c.h.b16 %v7528
    %v7982 = vunpack.c.l.b16 %v7529
    %v7983 = vunpack.c.h.b16 %v7529
    %v7984 = vunpack.c.l.b16 %v7530
    %v7985 = vunpack.c.h.b16 %v7530
    %v7986 = vunpack.c.l.b16 %v7531
    %v7987 = vunpack.c.h.b16 %v7531
    %v7988 = vunpack.c.l.b16 %v7532
    %v7989 = vunpack.c.h.b16 %v7532
    %v7990 = vunpack.c.l.b16 %v7533
    %v7991 = vunpack.c.h.b16 %v7533
    %v7992 = vunpack.c.l.b16 %v7534
    %v7993 = vunpack.c.h.b16 %v7534
    %v7994 = vunpack.c.l.b16 %v7535
    %v7995 = vunpack.c.h.b16 %v7535
    %v7996 = vunpack.c.l.b16 %v7536
    %v7997 = vunpack.c.h.b16 %v7536
    %v7998 = vunpack.c.l.b16 %v7537
    %v7999 = vunpack.c.h.b16 %v7537
    %v8000 = vunpack.c.l.b16 %v7538
    %v8001 = vunpack.c.h.b16 %v7538
    %v8002 = vunpack.c.l.b16 %v7539
    %v8003 = vunpack.c.h.b16 %v7539
    %v8004 = vunpack.c.l.b16 %v7540
    %v8005 = vunpack.c.h.b16 %v7540
    %v8006 = vunpack.c.l.b16 %v7541
    %v8007 = vunpack.c.h.b16 %v7541
    %v8008 = vunpack.c.l.b16 %v7542
    %v8009 = vunpack.c.h.b16 %v7542
    %v8010 = vunpack.c.l.b16 %v7543
    %v8011 = vunpack.c.h.b16 %v7543
    %v8012 = vunpack.c.l.b16 %v7544
    %v8013 = vunpack.c.h.b16 %v7544
    %v8014 = vunpack.c.l.b16 %v7545
    %v8015 = vunpack.c.h.b16 %v7545
    %v8016 = vunpack.c.l.b16 %v7546
    %v8017 = vunpack.c.h.b16 %v7546
    %v8018 = vunpack.c.l.b16 %v7547
    %v8019 = vunpack.c.h.b16 %v7547
    %v8020 = vunpack.c.l.b16 %v7548
    %v8021 = vunpack.c.h.b16 %v7548
    %v8022 = vunpack.c.l.b16 %v7549
    %v8023 = vunpack.c.h.b16 %v7549
    %v8024 = vunpack.c.l.b16 %v7550
    %v8025 = vunpack.c.h.b16 %v7550
    %v8026 = vunpack.c.l.b16 %v7551
    %v8027 = vunpack.c.h.b16 %v7551
    %v8028 = vunpack.c.l.b16 %v7552
    %v8029 = vunpack.c.h.b16 %v7552
    %v8030 = vunpack.c.l.b16 %v7553
    %v8031 = vunpack.c.h.b16 %v7553
    %v8032 = vunpack.c.l.b16 %v7554
    %v8033 = vunpack.c.h.b16 %v7554
    %v8034 = vunpack.c.l.b16 %v7555
    %v8035 = vunpack.c.h.b16 %v7555
    %v8036 = vunpack.c.l.b16 %v7556
    %v8037 = vunpack.c.h.b16 %v7556
    %v8038 = vunpack.c.l.b16 %v7557
    %v8039 = vunpack.c.h.b16 %v7557
    %v8040 = vunpack.c.l.b16 %v7558
    %v8041 = vunpack.c.h.b16 %v7558
    %v8042 = vunpack.c.l.b16 %v7559
    %v8043 = vunpack.c.h.b16 %v7559
    %v8044 = vunpack.c.l.b16 %v7560
    %v8045 = vunpack.c.h.b16 %v7560
    %v8046 = vunpack.c.l.b16 %v7561
    %v8047 = vunpack.c.h.b16 %v7561
    %v8048 = vunpack.c.l.b16 %v7562
    %v8049 = vunpack.c.h.b16 %v7562
    %v8050 = vunpack.c.l.b16 %v7563
    %v8051 = vunpack.c.h.b16 %v7563
    %v8052 = vunpack.c.l.b16 %v7564
    %v8053 = vunpack.c.h.b16 %v7564
    %v8054 = vunpack.c.l.b16 %v7565
    %v8055 = vunpack.c.h.b16 %v7565
    %v8056 = vunpack.c.l.b16 %v7566
    %v8057 = vunpack.c.h.b16 %v7566
    %v8058 = vunpack.c.l.b16 %v7567
    %v8059 = vunpack.c.h.b16 %v7567
    %v8060 = vunpack.c.l.b16 %v7568
    %v8061 = vunpack.c.h.b16 %v7568
    %v8062 = vunpack.c.l.b16 %v7569
    %v8063 = vunpack.c.h.b16 %v7569
    %v8064 = vunpack.c.l.b16 %v7570
    %v8065 = vunpack.c.h.b16 %v7570
    %v8066 = vunpack.c.l.b16 %v7571
    %v8067 = vunpack.c.h.b16 %v7571
    %v8068 = vunpack.c.l.b16 %v7572
    %v8069 = vunpack.c.h.b16 %v7572
    %v8070 = vunpack.c.l.b16 %v7573
    %v8071 = vunpack.c.h.b16 %v7573
    %v8072 = vunpack.c.l.b16 %v7574
    %v8073 = vunpack.c.h.b16 %v7574
    %v8074 = vunpack.c.l.b16 %v7575
    %v8075 = vunpack.c.h.b16 %v7575
    %v8076 = vunpack.c.l.b16 %v7576
    %v8077 = vunpack.c.h.b16 %v7576
    %v8078 = vunpack.c.l.b16 %v7577
    %v8079 = vunpack.c.h.b16 %v7577
    %v8080 = vunpack.c.l.b16 %v7578
    %v8081 = vunpack.c.h.b16 %v7578
    %v8082 = vunpack.c.l.b16 %v7579
    %v8083 = vunpack.c.h.b16 %v7579
    %v8084 = vunpack.c.l.b16 %v7580
    %v8085 = vunpack.c.h.b16 %v7580
    %v8086 = vunpack.c.l.b16 %v7581
    %v8087 = vunpack.c.h.b16 %v7581
    %v8088 = vunpack.c.l.b16 %v7582
    %v8089 = vunpack.c.h.b16 %v7582
    %v8090 = vunpack.c.l.b16 %v7583
    %v8091 = vunpack.c.h.b16 %v7583
    %v8092 = vunpack.c.l.b16 %v7584
    %v8093 = vunpack.c.h.b16 %v7584
    %v8094 = vunpack.c.l.b16 %v7585
    %v8095 = vunpack.c.h.b16 %v7585
    %v8096 = vunpack.c.l.b16 %v7586
    %v8097 = vunpack.c.h.b16 %v7586
    %v8098 = vunpack.c.l.b16 %v7587
    %v8099 = vunpack.c.h.b16 %v7587
    %v8100 = vunpack.c.l.b16 %v7588
    %v8101 = vunpack.c.h.b16 %v7588
    %v8102 = vunpack.c.l.b16 %v7589
    %v8103 = vunpack.c.h.b16 %v7589
    %v8104 = vunpack.c.l.b16 %v7590
    %v8105 = vunpack.c.h.b16 %v7590
    %v8106 = vunpack.c.l.b16 %v7591
    %v8107 = vunpack.c.h.b16 %v7591
    %v8108 = vunpack.c.l.b16 %v7592
    %v8109 = vunpack.c.h.b16 %v7592
    %v8110 = vunpack.c.l.b16 %v7593
    %v8111 = vunpack.c.h.b16 %v7593
    %v8112 = vunpack.c.l.b16 %v7594
    %v8113 = vunpack.c.h.b16 %v7594
    %v8114 = vunpack.c.l.b16 %v7595
    %v8115 = vunpack.c.h.b16 %v7595
    %v8116 = vunpack.c.l.b16 %v7596
    %v8117 = vunpack.c.h.b16 %v7596
    %v8118 = vunpack.c.l.b16 %v7597
    %v8119 = vunpack.c.h.b16 %v7597
    %v8120 = vunpack.c.l.b16 %v7598
    %v8121 = vunpack.c.h.b16 %v7598
    %v8122 = vunpack.c.l.b16 %v7599
    %v8123 = vunpack.c.h.b16 %v7599
    %v8124 = vunpack.c.l.b16 %v7600
    %v8125 = vunpack.c.h.b16 %v7600
    %v8126 = vunpack.c.l.b16 %v7601
    %v8127 = vunpack.c.h.b16 %v7601
    %v8128 = vunpack.c.l.b16 %v7602
    %v8129 = vunpack.c.h.b16 %v7602
    %v8130 = vunpack.c.l.b16 %v7603
    %v8131 = vunpack.c.h.b16 %v7603
    %v8132 = vunpack.c.l.b16 %v7604
    %v8133 = vunpack.c.h.b16 %v7604
    %v8134 = vunpack.c.l.b16 %v7605
    %v8135 = vunpack.c.h.b16 %v7605
    %v8136 = vunpack.c.l.b16 %v7606
    %v8137 = vunpack.c.h.b16 %v7606
    %v8138 = vunpack.c.l.b16 %v7607
    %v8139 = vunpack.c.h.b16 %v7607
    %v8140 = vunpack.c.l.b16 %v7608
    %v8141 = vunpack.c.h.b16 %v7608
    %v8142 = vunpack.c.l.b16 %v7609
    %v8143 = vunpack.c.h.b16 %v7609
    %v8144 = vunpack.c.l.b16 %v7610
    %v8145 = vunpack.c.h.b16 %v7610
    %v8146 = vunpack.c.l.b16 %v7611
    %v8147 = vunpack.c.h.b16 %v7611
    %v8148 = vunpack.c.l.b16 %v7612
    %v8149 = vunpack.c.h.b16 %v7612
    %v8150 = vunpack.c.l.b16 %v7613
    %v8151 = vunpack.c.h.b16 %v7613
    %v8152 = vunpack.c.l.b16 %v7614
    %v8153 = vunpack.c.h.b16 %v7614
    %v8154 = vunpack.c.l.b16 %v7615
    %v8155 = vunpack.c.h.b16 %v7615
    %v8156 = vunpack.c.l.b16 %v7616
    %v8157 = vunpack.c.h.b16 %v7616
    %v8158 = vunpack.c.l.b16 %v7617
    %v8159 = vunpack.c.h.b16 %v7617
    %v8160 = vunpack.c.l.b16 %v7618
    %v8161 = vunpack.c.h.b16 %v7618
    %v8162 = vunpack.c.l.b16 %v7619
    %v8163 = vunpack.c.h.b16 %v7619
    %v8164 = vunpack.c.l.b16 %v7620
    %v8165 = vunpack.c.h.b16 %v7620
    %v8166 = vunpack.c.l.b16 %v7621
    %v8167 = vunpack.c.h.b16 %v7621
    %v8168 = vunpack.c.l.b16 %v7622
    %v8169 = vunpack.c.h.b16 %v7622
    %v8170 = vunpack.c.l.b16 %v7623
    %v8171 = vunpack.c.h.b16 %v7623
    %v8172 = vunpack.c.l.b16 %v7624
    %v8173 = vunpack.c.h.b16 %v7624
    %v8174 = vunpack.c.l.b16 %v7625
    %v8175 = vunpack.c.h.b16 %v7625
    %v8176 = vunpack.c.l.b16 %v7626
    %v8177 = vunpack.c.h.b16 %v7626
    %v8178 = vunpack.c.l.b16 %v7627
    %v8179 = vunpack.c.h.b16 %v7627
    %v8180 = vunpack.c.l.b16 %v7628
    %v8181 = vunpack.c.h.b16 %v7628
    %v8182 = vunpack.c.l.b16 %v7629
    %v8183 = vunpack.c.h.b16 %v7629
    %v8184 = vunpack.c.l.b16 %v7630
    %v8185 = vunpack.c.h.b16 %v7630
    %v8186 = vunpack.c.l.b16 %v7631
    %v8187 = vunpack.c.h.b16 %v7631
    %v8188 = vunpack.c.l.b16 %v7632
    %v8189 = vunpack.c.h.b16 %v7632
    %v8190 = vunpack.c.l.b16 %v7633
    %v8191 = vunpack.c.h.b16 %v7633
    %v8192 = vunpack.c.l.b16 %v7634
    %v8193 = vunpack.c.h.b16 %v7634
    %v8194 = vunpack.c.l.b16 %v7635
    %v8195 = vunpack.c.h.b16 %v7635
    %v8196 = vunpack.c.l.b16 %v7636
    %v8197 = vunpack.c.h.b16 %v7636
    %v8198 = vunpack.c.l.b16 %v7637
    %v8199 = vunpack.c.h.b16 %v7637
    %v8200 = vunpack.c.l.b16 %v7638
    %v8201 = vunpack.c.h.b16 %v7638
    %v8202 = vunpack.c.l.b16 %v7639
    %v8203 = vunpack.c.h.b16 %v7639
    %v8204 = vunpack.c.l.b16 %v7640
    %v8205 = vunpack.c.h.b16 %v7640
    %v8206 = vunpack.c.l.b16 %v7641
    %v8207 = vunpack.c.h.b16 %v7641
    %v8208 = vunpack.c.l.b16 %v7642
    %v8209 = vunpack.c.h.b16 %v7642
    %v8210 = vunpack.c.l.b16 %v7643
    %v8211 = vunpack.c.h.b16 %v7643
    %v8212 = vunpack.c.l.b16 %v7644
    %v8213 = vunpack.c.h.b16 %v7644
    %v8214 = vunpack.c.l.b16 %v7645
    %v8215 = vunpack.c.h.b16 %v7645
    %v8216 = vunpack.c.l.b16 %v7646
    %v8217 = vunpack.c.h.b16 %v7646
    %v8218 = vunpack.c.l.b16 %v7647
    %v8219 = vunpack.c.h.b16 %v7647
    %v8220 = vunpack.c.l.b16 %v7648
    %v8221 = vunpack.c.h.b16 %v7648
    %v8222 = vunpack.c.l.b16 %v7649
    %v8223 = vunpack.c.h.b16 %v7649
    %v8224 = vunpack.c.l.b16 %v7650
    %v8225 = vunpack.c.h.b16 %v7650
    %v8226 = vunpack.c.l.b16 %v7651
    %v8227 = vunpack.c.h.b16 %v7651
    %v8228 = vunpack.c.l.b16 %v7652
    %v8229 = vunpack.c.h.b16 %v7652
    %v8230 = vunpack.c.l.b16 %v7653
    %v8231 = vunpack.c.h.b16 %v7653
    %v8232 = vunpack.c.l.b16 %v7654
    %v8233 = vunpack.c.h.b16 %v7654
    %v8234 = vunpack.c.l.b16 %v7655
    %v8235 = vunpack.c.h.b16 %v7655
    %v8236 = vunpack.c.l.b16 %v7656
    %v8237 = vunpack.c.h.b16 %v7656
    %v8238 = vunpack.c.l.b16 %v7657
    %v8239 = vunpack.c.h.b16 %v7657
    %v8240 = vunpack.c.l.b16 %v7658
    %v8241 = vunpack.c.h.b16 %v7658
    %v8242 = vunpack.c.l.b16 %v7659
    %v8243 = vunpack.c.h.b16 %v7659
    %v8244 = vunpack.c.l.b16 %v7660
    %v8245 = vunpack.c.h.b16 %v7660
    %v8246 = vunpack.c.l.b16 %v7661
    %v8247 = vunpack.c.h.b16 %v7661
    %v8248 = vunpack.c.l.b16 %v7662
    %v8249 = vunpack.c.h.b16 %v7662
    %v8250 = vunpack.c.l.b16 %v7663
    %v8251 = vunpack.c.h.b16 %v7663
    %v8252 = vunpack.c.l.b16 %v7664
    %v8253 = vunpack.c.h.b16 %v7664
    %v8254 = vunpack.c.l.b16 %v7665
    %v8255 = vunpack.c.h.b16 %v7665
    %v8256 = vunpack.c.l.b16 %v7666
    %v8257 = vunpack.c.h.b16 %v7666
    %v8258 = vunpack.c.l.b16 %v7667
    %v8259 = vunpack.c.h.b16 %v7667
    %v8260 = vunpack.c.l.b16 %v7668
    %v8261 = vunpack.c.h.b16 %v7668
    %v8262 = vunpack.c.l.b16 %v7669
    %v8263 = vunpack.c.h.b16 %v7669
    %v8264 = vunpack.c.l.b16 %v7670
    %v8265 = vunpack.c.h.b16 %v7670
    %v8266 = vunpack.c.l.b16 %v7671
    %v8267 = vunpack.c.h.b16 %v7671
    %v8268 = vunpack.c.l.b16 %v7672
    %v8269 = vunpack.c.h.b16 %v7672
    %v8270 = vunpack.c.l.b16 %v7673
    %v8271 = vunpack.c.h.b16 %v7673
    %v8272 = vunpack.c.l.b16 %v7674
    %v8273 = vunpack.c.h.b16 %v7674
    %v8274 = vunpack.c.l.b16 %v7675
    %v8275 = vunpack.c.h.b16 %v7675
    %v8276 = vunpack.c.l.b16 %v7676
    %v8277 = vunpack.c.h.b16 %v7676
    %v8278 = vunpack.c.l.b16 %v7677
    %v8279 = vunpack.c.h.b16 %v7677
    %v8280 = vunpack.c.l.b16 %v7678
    %v8281 = vunpack.c.h.b16 %v7678
    %v8282 = vunpack.c.l.b16 %v7679
    %v8283 = vunpack.c.h.b16 %v7679
    %v8284 = vpack.c.b16 %v7904, %v7900
    %v8285 = vpack.c.b16 %v7905, %v7901
    %v8286 = vpack.c.b16 %v7906, %v7902
    %v8287 = vpack.c.b16 %v7907, %v7903
    %v8288 = vpack.c.b16 %v7912, %v7908
    %v8289 = vpack.c.b16 %v7913, %v7909
    %v8290 = vpack.c.b16 %v7914, %v7910
    %v8291 = vpack.c.b16 %v7915, %v7911
    %v8292 = vpack.c.b16 %v7920, %v7916
    %v8293 = vpack.c.b16 %v7921, %v7917
    %v8294 = vpack.c.b16 %v7922, %v7918
    %v8295 = vpack.c.b16 %v7923, %v7919
    %v8296 = vpack.c.b16 %v7928, %v7924
    %v8297 = vpack.c.b16 %v7929, %v7925
    %v8298 = vpack.c.b16 %v7930, %v7926
    %v8299 = vpack.c.b16 %v7931, %v7927
    %v8300 = vpack.c.b16 %v7936, %v7932
    %v8301 = vpack.c.b16 %v7937, %v7933
    %v8302 = vpack.c.b16 %v7938, %v7934
    %v8303 = vpack.c.b16 %v7939, %v7935
    %v8304 = vpack.c.b16 %v7944, %v7940
    %v8305 = vpack.c.b16 %v7945, %v7941
    %v8306 = vpack.c.b16 %v7946, %v7942
    %v8307 = vpack.c.b16 %v7947, %v7943
    %v8308 = vpack.c.b16 %v7952, %v7948
    %v8309 = vpack.c.b16 %v7953, %v7949
    %v8310 = vpack.c.b16 %v7954, %v7950
    %v8311 = vpack.c.b16 %v7955, %v7951
    %v8312 = vpack.c.b16 %v7960, %v7956
    %v8313 = vpack.c.b16 %v7961, %v7957
    %v8314 = vpack.c.b16 %v7962, %v7958
    %v8315 = vpack.c.b16 %v7963, %v7959
    %v8316 = vpack.c.b16 %v7968, %v7964
    %v8317 = vpack.c.b16 %v7969, %v7965
    %v8318 = vpack.c.b16 %v7970, %v7966
    %v8319 = vpack.c.b16 %v7971, %v7967
    %v8320 = vpack.c.b16 %v7976, %v7972
    %v8321 = vpack.c.b16 %v7977, %v7973
    %v8322 = vpack.c.b16 %v7978, %v7974
    %v8323 = vpack.c.b16 %v7979, %v7975
    %v8324 = vpack.c.b16 %v7984, %v7980
    %v8325 = vpack.c.b16 %v7985, %v7981
    %v8326 = vpack.c.b16 %v7986, %v7982
    %v8327 = vpack.c.b16 %v7987, %v7983
    %v8328 = vpack.c.b16 %v7992, %v7988
    %v8329 = vpack.c.b16 %v7993, %v7989
    %v8330 = vpack.c.b16 %v7994, %v7990
    %v8331 = vpack.c.b16 %v7995, %v7991
    %v8332 = vpack.c.b16 %v8000, %v7996
    %v8333 = vpack.c.b16 %v8001, %v7997
    %v8334 = vpack.c.b16 %v8002, %v7998
    %v8335 = vpack.c.b16 %v8003, %v7999
    %v8336 = vpack.c.b16 %v8008, %v8004
    %v8337 = vpack.c.b16 %v8009, %v8005
    %v8338 = vpack.c.b16 %v8010, %v8006
    %v8339 = vpack.c.b16 %v8011, %v8007
    %v8340 = vpack.c.b16 %v8016, %v8012
    %v8341 = vpack.c.b16 %v8017, %v8013
    %v8342 = vpack.c.b16 %v8018, %v8014
    %v8343 = vpack.c.b16 %v8019, %v8015
    %v8344 = vpack.c.b16 %v8024, %v8020
    %v8345 = vpack.c.b16 %v8025, %v8021
    %v8346 = vpack.c.b16 %v8026, %v8022
    %v8347 = vpack.c.b16 %v8027, %v8023
    %v8348 = vpack.c.b16 %v8032, %v8028
    %v8349 = vpack.c.b16 %v8033, %v8029
    %v8350 = vpack.c.b16 %v8034, %v8030
    %v8351 = vpack.c.b16 %v8035, %v8031
    %v8352 = vpack.c.b16 %v8040, %v8036
    %v8353 = vpack.c.b16 %v8041, %v8037
    %v8354 = vpack.c.b16 %v8042, %v8038
    %v8355 = vpack.c.b16 %v8043, %v8039
    %v8356 = vpack.c.b16 %v8048, %v8044
    %v8357 = vpack.c.b16 %v8049, %v8045
    %v8358 = vpack.c.b16 %v8050, %v8046
    %v8359 = vpack.c.b16 %v8051, %v8047
    %v8360 = vpack.c.b16 %v8056, %v8052
    %v8361 = vpack.c.b16 %v8057, %v8053
    %v8362 = vpack.c.b16 %v8058, %v8054
    %v8363 = vpack.c.b16 %v8059, %v8055
    %v8364 = vpack.c.b16 %v8064, %v8060
    %v8365 = vpack.c.b16 %v8065, %v8061
    %v8366 = vpack.c.b16 %v8066, %v8062
    %v8367 = vpack.c.b16 %v8067, %v8063
    %v8368 = vpack.c.b16 %v8072, %v8068
    %v8369 = vpack.c.b16 %v8073, %v8069
    %v8370 = vpack.c.b16 %v8074, %v8070
    %v8371 = vpack.c.b16 %v8075, %v8071
    %v8372 = vpack.c.b16 %v8080, %v8076
    %v8373 = vpack.c.b16 %v8081, %v8077
    %v8374 = vpack.c.b16 %v8082, %v8078
    %v8375 = vpack.c.b16 %v8083, %v8079
    %v8376 = vpack.c.b16 %v8088, %v8084
    %v8377 = vpack.c.b16 %v8089, %v8085
    %v8378 = vpack.c.b16 %v8090, %v8086
    %v8379 = vpack.c.b16 %v8091, %v8087
    %v8380 = vpack.c.b16 %v8096, %v8092
    %v8381 = vpack.c.b16 %v8097, %v8093
    %v8382 = vpack.c.b16 %v8098, %v8094
    %v8383 = vpack.c.b16 %v8099, %v8095
    %v8384 = vpack.c.b16 %v8104, %v8100
    %v8385 = vpack.c.b16 %v8105, %v8101
    %v8386 = vpack.c.b16 %v8106, %v8102
    %v8387 = vpack.c.b16 %v8107, %v8103
    %v8388 = vpack.c.b16 %v8112, %v8108
    %v8389 = vpack.c.b16 %v8113, %v8109
    %v8390 = vpack.c.b16 %v8114, %v8110
    %v8391 = vpack.c.b16 %v8115, %v8111
    %v8392 = vpack.c.b16 %v8120, %v8116
    %v8393 = vpack.c.b16 %v8121, %v8117
    %v8394 = vpack.c.b16 %v8122, %v8118
    %v8395 = vpack.c.b16 %v8123, %v8119
    %v8396 = vpack.c.b16 %v8128, %v8124
    %v8397 = vpack.c.b16 %v8129, %v8125
    %v8398 = vpack.c.b16 %v8130, %v8126
    %v8399 = vpack.c.b16 %v8131, %v8127
    %v8400 = vpack.c.b16 %v8136, %v8132
    %v8401 = vpack.c.b16 %v8137, %v8133
    %v8402 = vpack.c.b16 %v8138, %v8134
    %v8403 = vpack.c.b16 %v8139, %v8135
    %v8404 = vpack.c.b16 %v8144, %v8140
    %v8405 = vpack.c.b16 %v8145, %v8141
    %v8406 = vpack.c.b16 %v8146, %v8142
    %v8407 = vpack.c.b16 %v8147, %v8143
    %v8408 = vpack.c.b16 %v8152, %v8148
    %v8409 = vpack.c.b16 %v8153, %v8149
    %v8410 = vpack.c.b16 %v8154, %v8150
    %v8411 = vpack.c.b16 %v8155, %v8151
    %v8412 = vpack.c.b16 %v8160, %v8156
    %v8413 = vpack.c.b16 %v8161, %v8157
    %v8414 = vpack.c.b16 %v8162, %v8158
    %v8415 = vpack.c.b16 %v8163, %v8159
    %v8416 = vpack.c.b16 %v8168, %v8164
    %v8417 = vpack.c.b16 %v8169, %v8165
    %v8418 = vpack.c.b16 %v8170, %v8166
    %v8419 = vpack.c.b16 %v8171, %v8167
    %v8420 = vpack.c.b16 %v8176, %v8172
    %v8421 = vpack.c.b16 %v8177, %v8173
    %v8422 = vpack.c.b16 %v8178, %v8174
    %v8423 = vpack.c.b16 %v8179, %v8175
    %v8424 = vpack.c.b16 %v8184, %v8180
    %v8425 = vpack.c.b16 %v8185, %v8181
    %v8426 = vpack.c.b16 %v8186, %v8182
    %v8427 = vpack.c.b16 %v8187, %v8183
    %v8428 = vpack.c.b16 %v8192, %v8188
    %v8429 = vpack.c.b16 %v8193, %v8189
    %v8430 = vpack.c.b16 %v8194, %v8190
    %v8431 = vpack.c.b16 %v8195, %v8191
    %v8432 = vpack.c.b16 %v8200, %v8196
    %v8433 = vpack.c.b16 %v8201, %v8197
    %v8434 = vpack.c.b16 %v8202, %v8198
    %v8435 = vpack.c.b16 %v8203, %v8199
    %v8436 = vpack.c.b16 %v8208, %v8204
    %v8437 = vpack.c.b16 %v8209, %v8205
    %v8438 = vpack.c.b16 %v8210, %v8206
    %v8439 = vpack.c.b16 %v8211, %v8207
    %v8440 = vpack.c.b16 %v8216, %v8212
    %v8441 = vpack.c.b16 %v8217, %v8213
    %v8442 = vpack.c.b16 %v8218, %v8214
    %v8443 = vpack.c.b16 %v8219, %v8215
    %v8444 = vpack.c.b16 %v8224, %v8220
    %v8445 = vpack.c.b16 %v8225, %v8221
    %v8446 = vpack.c.b16 %v8226, %v8222
    %v8447 = vpack.c.b16 %v8227, %v8223
    %v8448 = vpack.c.b16 %v8232, %v8228
    %v8449 = vpack.c.b16 %v8233, %v8229
    %v8450 = vpack.c.b16 %v8234, %v8230
    %v8451 = vpack.c.b16 %v8235, %v8231
    %v8452 = vpack.c.b16 %v8240, %v8236
    %v8453 = vpack.c.b16 %v8241, %v8237
    %v8454 = vpack.c.b16 %v8242, %v8238
    %v8455 = vpack.c.b16 %v8243, %v8239
    %v8456 = vpack.c.b16 %v8248, %v8244
    %v8457 = vpack.c.b16 %v8249, %v8245
    %v8458 = vpack.c.b16 %v8250, %v8246
    %v8459 = vpack.c.b16 %v8251, %v8247
    %v8460 = vpack.c.b16 %v8256, %v8252
    %v8461 = vpack.c.b16 %v8257, %v8253
    %v8462 = vpack.c.b16 %v8258, %v8254
    %v8463 = vpack.c.b16 %v8259, %v8255
    %v8464 = vpack.c.b16 %v8264, %v8260
    %v8465 = vpack.c.b16 %v8265, %v8261
    %v8466 = vpack.c.b16 %v8266, %v8262
    %v8467 = vpack.c.b16 %v8267, %v8263
    %v8468 = vpack.c.b16 %v8272, %v8268
    %v8469 = vpack.c.b16 %v8273, %v8269
    %v8470 = vpack.c.b16 %v8274, %v8270
    %v8471 = vpack.c.b16 %v8275, %v8271
    %v8472 = vpack.c.b16 %v8280, %v8276
    %v8473 = vpack.c.b16 %v8281, %v8277
    %v8474 = vpack.c.b16 %v8282, %v8278
    %v8475 = vpack.c.b16 %v8283, %v8279
    %8668 = vmatprep.subr.bf16.mxu0 %v8313
    %8669 = vmatpush1.bf16.msra.mxu0 %v8312
    %8670 = vmatprep.subr.bf16.mxu0 %v8309
    %8671 = vmatpush1.bf16.msra.mxu0 %v8308
    %8672 = vmatprep.subr.bf16.mxu0 %v8305
    %8673 = vmatpush1.bf16.msra.mxu0 %v8304
    %8674 = vmatprep.subr.bf16.mxu0 %v8301
    %8675 = vmatpush1.bf16.msra.mxu0 %v8300
    %8676 = vmatprep.subr.bf16.mxu0 %v8297
    %8677 = vmatpush1.bf16.msra.mxu0 %v8296
    %8678 = vmatprep.subr.bf16.mxu0 %v8293
    %8679 = vmatpush1.bf16.msra.mxu0 %v8292
    %8680 = vmatprep.subr.bf16.mxu0 %v8289
    %8681 = vmatpush1.bf16.msra.mxu0 %v8288
    %8682 = vmatprep.subr.bf16.mxu0 %v8285
    %8683 = vmatpush1.bf16.msra.mxu0 %v8284
    %8684 = vmatprep.subr.bf16.mxu0 %v8345
    %8685 = vmatpush2.bf16.msra.mxu0 %v8344
    %8686 = vmatprep.subr.bf16.mxu0 %v8341
    %8687 = vmatpush2.bf16.msra.mxu0 %v8340
    %8688 = vmatprep.subr.bf16.mxu0 %v8337
    %8689 = vmatpush2.bf16.msra.mxu0 %v8336
    %8690 = vmatprep.subr.bf16.mxu0 %v8333
    %8691 = vmatpush2.bf16.msra.mxu0 %v8332
    %8692 = vmatprep.subr.bf16.mxu0 %v8329
    %8693 = vmatpush2.bf16.msra.mxu0 %v8328
    %8694 = vmatprep.subr.bf16.mxu0 %v8325
    %8695 = vmatpush2.bf16.msra.mxu0 %v8324
    %8696 = vmatprep.subr.bf16.mxu0 %v8321
    %8697 = vmatpush2.bf16.msra.mxu0 %v8320
    %8698 = vmatprep.subr.bf16.mxu0 %v8317
    %8699 = vmatpush2.bf16.msra.mxu0 %v8316
    %8700 = vmatprep.mubr.bf16.mxu0 %v7682
    %8701 = vmatmul.mubr.bf16.gmra.mxu0 %v7681
    %v8702 = vpop.f32.mrf.mxu0
    %v8703 = vadd.f32 %v7691, %v8702
    %v8704 = vpop.f32.mrf.mxu0
    %v8705 = vadd.f32 %v7695, %v8704
    %v8706 = vpop.f32.mrf.mxu0
    %v8707 = vpop.f32.mrf.mxu0
    %8708 = vdwg.mxu0
    %8709 = vmatprep.subr.bf16.mxu0 %v8377
    %8710 = vmatpush1.bf16.msra.mxu0 %v8376
    %8711 = vmatprep.subr.bf16.mxu0 %v8373
    %8712 = vmatpush1.bf16.msra.mxu0 %v8372
    %8713 = vmatprep.subr.bf16.mxu0 %v8369
    %8714 = vmatpush1.bf16.msra.mxu0 %v8368
    %8715 = vmatprep.subr.bf16.mxu0 %v8365
    %8716 = vmatpush1.bf16.msra.mxu0 %v8364
    %8717 = vmatprep.subr.bf16.mxu0 %v8361
    %8718 = vmatpush1.bf16.msra.mxu0 %v8360
    %8719 = vmatprep.subr.bf16.mxu0 %v8357
    %8720 = vmatpush1.bf16.msra.mxu0 %v8356
    %8721 = vmatprep.subr.bf16.mxu0 %v8353
    %8722 = vmatpush1.bf16.msra.mxu0 %v8352
    %8723 = vmatprep.subr.bf16.mxu0 %v8349
    %8724 = vmatpush1.bf16.msra.mxu0 %v8348
    %8725 = vmatprep.subr.bf16.mxu0 %v8409
    %8726 = vmatpush2.bf16.msra.mxu0 %v8408
    %8727 = vmatprep.subr.bf16.mxu0 %v8405
    %8728 = vmatpush2.bf16.msra.mxu0 %v8404
    %8729 = vmatprep.subr.bf16.mxu0 %v8401
    %8730 = vmatpush2.bf16.msra.mxu0 %v8400
    %8731 = vmatprep.subr.bf16.mxu0 %v8397
    %8732 = vmatpush2.bf16.msra.mxu0 %v8396
    %8733 = vmatprep.subr.bf16.mxu0 %v8393
    %8734 = vmatpush2.bf16.msra.mxu0 %v8392
    %8735 = vmatprep.subr.bf16.mxu0 %v8389
    %8736 = vmatpush2.bf16.msra.mxu0 %v8388
    %8737 = vmatprep.subr.bf16.mxu0 %v8385
    %8738 = vmatpush2.bf16.msra.mxu0 %v8384
    %8739 = vmatprep.subr.bf16.mxu0 %v8381
    %8740 = vmatpush2.bf16.msra.mxu0 %v8380
    %8741 = vmatprep.mubr.bf16.mxu0 %v7684
    %8742 = vmatmul.mubr.bf16.gmra.mxu0 %v7683
    %v8743 = vpop.f32.mrf.mxu0
    %v8744 = vadd.f32 %v8703, %v8743
    %v8745 = vpop.f32.mrf.mxu0
    %v8746 = vadd.f32 %v8705, %v8745
    %v8747 = vpop.f32.mrf.mxu0
    %v8748 = vpop.f32.mrf.mxu0
    %8749 = vdwg.mxu0
    %8750 = vmatprep.subr.bf16.mxu0 %v8441
    %8751 = vmatpush1.bf16.msra.mxu0 %v8440
    %8752 = vmatprep.subr.bf16.mxu0 %v8437
    %8753 = vmatpush1.bf16.msra.mxu0 %v8436
    %8754 = vmatprep.subr.bf16.mxu0 %v8433
    %8755 = vmatpush1.bf16.msra.mxu0 %v8432
    %8756 = vmatprep.subr.bf16.mxu0 %v8429
    %8757 = vmatpush1.bf16.msra.mxu0 %v8428
    %8758 = vmatprep.subr.bf16.mxu0 %v8425
    %8759 = vmatpush1.bf16.msra.mxu0 %v8424
    %8760 = vmatprep.subr.bf16.mxu0 %v8421
    %8761 = vmatpush1.bf16.msra.mxu0 %v8420
    %8762 = vmatprep.subr.bf16.mxu0 %v8417
    %8763 = vmatpush1.bf16.msra.mxu0 %v8416
    %8764 = vmatprep.subr.bf16.mxu0 %v8413
    %8765 = vmatpush1.bf16.msra.mxu0 %v8412
    %8766 = vmatprep.subr.bf16.mxu0 %v8473
    %8767 = vmatpush2.bf16.msra.mxu0 %v8472
    %8768 = vmatprep.subr.bf16.mxu0 %v8469
    %8769 = vmatpush2.bf16.msra.mxu0 %v8468
    %8770 = vmatprep.subr.bf16.mxu0 %v8465
    %8771 = vmatpush2.bf16.msra.mxu0 %v8464
    %8772 = vmatprep.subr.bf16.mxu0 %v8461
    %8773 = vmatpush2.bf16.msra.mxu0 %v8460
    %8774 = vmatprep.subr.bf16.mxu0 %v8457
    %8775 = vmatpush2.bf16.msra.mxu0 %v8456
    %8776 = vmatprep.subr.bf16.mxu0 %v8453
    %8777 = vmatpush2.bf16.msra.mxu0 %v8452
    %8778 = vmatprep.subr.bf16.mxu0 %v8449
    %8779 = vmatpush2.bf16.msra.mxu0 %v8448
    %8780 = vmatprep.subr.bf16.mxu0 %v8445
    %8781 = vmatpush2.bf16.msra.mxu0 %v8444
    %8782 = vmatprep.mubr.bf16.mxu0 %v7686
    %8783 = vmatmul.mubr.bf16.gmra.mxu0 %v7685
    %v8784 = vpop.f32.mrf.mxu0
    %v8785 = vadd.f32 %v8744, %v8784
    %v8786 = vpop.f32.mrf.mxu0
    %v8787 = vadd.f32 %v8746, %v8786
    %v8788 = vpop.f32.mrf.mxu0
    %v8789 = vpop.f32.mrf.mxu0
    %8790 = vdwg.mxu0
    %8791 = vmatprep.subr.bf16.mxu0 %v8315
    %8792 = vmatpush1.bf16.msra.mxu0 %v8314
    %8793 = vmatprep.subr.bf16.mxu0 %v8311
    %8794 = vmatpush1.bf16.msra.mxu0 %v8310
    %8795 = vmatprep.subr.bf16.mxu0 %v8307
    %8796 = vmatpush1.bf16.msra.mxu0 %v8306
    %8797 = vmatprep.subr.bf16.mxu0 %v8303
    %8798 = vmatpush1.bf16.msra.mxu0 %v8302
    %8799 = vmatprep.subr.bf16.mxu0 %v8299
    %8800 = vmatpush1.bf16.msra.mxu0 %v8298
    %8801 = vmatprep.subr.bf16.mxu0 %v8295
    %8802 = vmatpush1.bf16.msra.mxu0 %v8294
    %8803 = vmatprep.subr.bf16.mxu0 %v8291
    %8804 = vmatpush1.bf16.msra.mxu0 %v8290
    %8805 = vmatprep.subr.bf16.mxu0 %v8287
    %8806 = vmatpush1.bf16.msra.mxu0 %v8286
    %8807 = vmatprep.subr.bf16.mxu0 %v8347
    %8808 = vmatpush2.bf16.msra.mxu0 %v8346
    %8809 = vmatprep.subr.bf16.mxu0 %v8343
    %8810 = vmatpush2.bf16.msra.mxu0 %v8342
    %8811 = vmatprep.subr.bf16.mxu0 %v8339
    %8812 = vmatpush2.bf16.msra.mxu0 %v8338
    %8813 = vmatprep.subr.bf16.mxu0 %v8335
    %8814 = vmatpush2.bf16.msra.mxu0 %v8334
    %8815 = vmatprep.subr.bf16.mxu0 %v8331
    %8816 = vmatpush2.bf16.msra.mxu0 %v8330
    %8817 = vmatprep.subr.bf16.mxu0 %v8327
    %8818 = vmatpush2.bf16.msra.mxu0 %v8326
    %8819 = vmatprep.subr.bf16.mxu0 %v8323
    %8820 = vmatpush2.bf16.msra.mxu0 %v8322
    %8821 = vmatprep.subr.bf16.mxu0 %v8319
    %8822 = vmatpush2.bf16.msra.mxu0 %v8318
    %8823 = vmatprep.mubr.bf16.mxu0 %v7682
    %8824 = vmatmul.mubr.bf16.gmra.mxu0 %v7681
    %v8825 = vpop.f32.mrf.mxu0
    %v8826 = vadd.f32 %v7699, %v8825
    %v8827 = vpop.f32.mrf.mxu0
    %v8828 = vadd.f32 %v7703, %v8827
    %v8829 = vpop.f32.mrf.mxu0
    %v8830 = vpop.f32.mrf.mxu0
    %8831 = vdwg.mxu0
    %8832 = vmatprep.subr.bf16.mxu0 %v8379
    %8833 = vmatpush1.bf16.msra.mxu0 %v8378
    %8834 = vmatprep.subr.bf16.mxu0 %v8375
    %8835 = vmatpush1.bf16.msra.mxu0 %v8374
    %8836 = vmatprep.subr.bf16.mxu0 %v8371
    %8837 = vmatpush1.bf16.msra.mxu0 %v8370
    %8838 = vmatprep.subr.bf16.mxu0 %v8367
    %8839 = vmatpush1.bf16.msra.mxu0 %v8366
    %8840 = vmatprep.subr.bf16.mxu0 %v8363
    %8841 = vmatpush1.bf16.msra.mxu0 %v8362
    %8842 = vmatprep.subr.bf16.mxu0 %v8359
    %8843 = vmatpush1.bf16.msra.mxu0 %v8358
    %8844 = vmatprep.subr.bf16.mxu0 %v8355
    %8845 = vmatpush1.bf16.msra.mxu0 %v8354
    %8846 = vmatprep.subr.bf16.mxu0 %v8351
    %8847 = vmatpush1.bf16.msra.mxu0 %v8350
    %8848 = vmatprep.subr.bf16.mxu0 %v8411
    %8849 = vmatpush2.bf16.msra.mxu0 %v8410
    %8850 = vmatprep.subr.bf16.mxu0 %v8407
    %8851 = vmatpush2.bf16.msra.mxu0 %v8406
    %8852 = vmatprep.subr.bf16.mxu0 %v8403
    %8853 = vmatpush2.bf16.msra.mxu0 %v8402
    %8854 = vmatprep.subr.bf16.mxu0 %v8399
    %8855 = vmatpush2.bf16.msra.mxu0 %v8398
    %8856 = vmatprep.subr.bf16.mxu0 %v8395
    %8857 = vmatpush2.bf16.msra.mxu0 %v8394
    %8858 = vmatprep.subr.bf16.mxu0 %v8391
    %8859 = vmatpush2.bf16.msra.mxu0 %v8390
    %8860 = vmatprep.subr.bf16.mxu0 %v8387
    %8861 = vmatpush2.bf16.msra.mxu0 %v8386
    %8862 = vmatprep.subr.bf16.mxu0 %v8383
    %8863 = vmatpush2.bf16.msra.mxu0 %v8382
    %8864 = vmatprep.mubr.bf16.mxu0 %v7684
    %8865 = vmatmul.mubr.bf16.gmra.mxu0 %v7683
    %v8866 = vpop.f32.mrf.mxu0
    %v8867 = vadd.f32 %v8826, %v8866
    %v8868 = vpop.f32.mrf.mxu0
    %v8869 = vadd.f32 %v8828, %v8868
    %v8870 = vpop.f32.mrf.mxu0
    %v8871 = vpop.f32.mrf.mxu0
    %8872 = vdwg.mxu0
    %8873 = vmatprep.subr.bf16.mxu0 %v8443
    %8874 = vmatpush1.bf16.msra.mxu0 %v8442
    %8875 = vmatprep.subr.bf16.mxu0 %v8439
    %8876 = vmatpush1.bf16.msra.mxu0 %v8438
    %8877 = vmatprep.subr.bf16.mxu0 %v8435
    %8878 = vmatpush1.bf16.msra.mxu0 %v8434
    %8879 = vmatprep.subr.bf16.mxu0 %v8431
    %8880 = vmatpush1.bf16.msra.mxu0 %v8430
    %8881 = vmatprep.subr.bf16.mxu0 %v8427
    %8882 = vmatpush1.bf16.msra.mxu0 %v8426
    %8883 = vmatprep.subr.bf16.mxu0 %v8423
    %8884 = vmatpush1.bf16.msra.mxu0 %v8422
    %8885 = vmatprep.subr.bf16.mxu0 %v8419
    %8886 = vmatpush1.bf16.msra.mxu0 %v8418
    %8887 = vmatprep.subr.bf16.mxu0 %v8415
    %8888 = vmatpush1.bf16.msra.mxu0 %v8414
    %8889 = vmatprep.subr.bf16.mxu0 %v8475
    %8890 = vmatpush2.bf16.msra.mxu0 %v8474
    %8891 = vmatprep.subr.bf16.mxu0 %v8471
    %8892 = vmatpush2.bf16.msra.mxu0 %v8470
    %8893 = vmatprep.subr.bf16.mxu0 %v8467
    %8894 = vmatpush2.bf16.msra.mxu0 %v8466
    %8895 = vmatprep.subr.bf16.mxu0 %v8463
    %8896 = vmatpush2.bf16.msra.mxu0 %v8462
    %8897 = vmatprep.subr.bf16.mxu0 %v8459
    %8898 = vmatpush2.bf16.msra.mxu0 %v8458
    %8899 = vmatprep.subr.bf16.mxu0 %v8455
    %8900 = vmatpush2.bf16.msra.mxu0 %v8454
    %8901 = vmatprep.subr.bf16.mxu0 %v8451
    %8902 = vmatpush2.bf16.msra.mxu0 %v8450
    %8903 = vmatprep.subr.bf16.mxu0 %v8447
    %8904 = vmatpush2.bf16.msra.mxu0 %v8446
    %8905 = vmatprep.mubr.bf16.mxu0 %v7686
    %8906 = vmatmul.mubr.bf16.gmra.mxu0 %v7685
    %v8907 = vpop.f32.mrf.mxu0
    %v8908 = vadd.f32 %v8867, %v8907
    %v8909 = vpop.f32.mrf.mxu0
    %v8910 = vadd.f32 %v8869, %v8909
    %v8911 = vpop.f32.mrf.mxu0
    %v8912 = vpop.f32.mrf.mxu0
    %8913 = vdwg.mxu0
    %v8914 = vmax.f32 %v8785, 0.0
    %v8915 = vmax.f32 %v8787, 0.0
    %v8916 = vmax.f32 %v8908, 0.0
    %v8917 = vmax.f32 %v8910, 0.0
    %v8918 = vld [vmem:[#allocation17] sm:$0xff]
    %v8919 = vld [vmem:[#allocation17 + $0x8] sm:$0xff]
    %v8920 = vld [vmem:[#allocation17 + $0x10] sm:$0xff]
    %v8921 = vld [vmem:[#allocation17 + $0x18] sm:$0xff]
    %v8922 = vld [vmem:[#allocation17 + $0x20] sm:$0xff]
    %v8923 = vld [vmem:[#allocation17 + $0x28] sm:$0xff]
    %v8924 = vld [vmem:[#allocation17 + $0x30] sm:$0xff]
    %v8925 = vld [vmem:[#allocation17 + $0x38] sm:$0xff]
    %v8926 = vld [vmem:[#allocation17 + $0x40] sm:$0xff]
    %v8927 = vld [vmem:[#allocation17 + $0x48] sm:$0xff]
    %v8928 = vld [vmem:[#allocation17 + $0x50] sm:$0xff]
    %v8929 = vld [vmem:[#allocation17 + $0x58] sm:$0xff]
    %v8930 = vld [vmem:[#allocation17 + $0x60] sm:$0xff]
    %v8931 = vld [vmem:[#allocation17 + $0x68] sm:$0xff]
    %v8932 = vld [vmem:[#allocation17 + $0x70] sm:$0xff]
    %v8933 = vld [vmem:[#allocation17 + $0x78] sm:$0xff]
    %v8934 = vld [vmem:[#allocation17 + $0x80] sm:$0xff]
    %v8935 = vld [vmem:[#allocation17 + $0x88] sm:$0xff]
    %v8936 = vld [vmem:[#allocation17 + $0x90] sm:$0xff]
    %v8937 = vld [vmem:[#allocation17 + $0x98] sm:$0xff]
    %v8938 = vld [vmem:[#allocation17 + $0xa0] sm:$0xff]
    %v8939 = vld [vmem:[#allocation17 + $0xa8] sm:$0xff]
    %v8940 = vld [vmem:[#allocation17 + $0xb0] sm:$0xff]
    %v8941 = vld [vmem:[#allocation17 + $0xb8] sm:$0xff]
    %v8942 = vld [vmem:[#allocation17 + $0xc0] sm:$0xff]
    %v8943 = vld [vmem:[#allocation17 + $0xc8] sm:$0xff]
    %v8944 = vld [vmem:[#allocation17 + $0xd0] sm:$0xff]
    %v8945 = vld [vmem:[#allocation17 + $0xd8] sm:$0xff]
    %v8946 = vld [vmem:[#allocation17 + $0xe0] sm:$0xff]
    %v8947 = vld [vmem:[#allocation17 + $0xe8] sm:$0xff]
    %v8948 = vld [vmem:[#allocation17 + $0xf0] sm:$0xff]
    %v8949 = vld [vmem:[#allocation17 + $0xf8] sm:$0xff]
    %v8950 = vld [vmem:[#allocation17 + $0x100] sm:$0xff]
    %v8951 = vld [vmem:[#allocation17 + $0x108] sm:$0xff]
    %v8952 = vld [vmem:[#allocation17 + $0x110] sm:$0xff]
    %v8953 = vld [vmem:[#allocation17 + $0x118] sm:$0xff]
    %v8954 = vld [vmem:[#allocation17 + $0x120] sm:$0xff]
    %v8955 = vld [vmem:[#allocation17 + $0x128] sm:$0xff]
    %v8956 = vld [vmem:[#allocation17 + $0x130] sm:$0xff]
    %v8957 = vld [vmem:[#allocation17 + $0x138] sm:$0xff]
    %v8958 = vld [vmem:[#allocation17 + $0x140] sm:$0xff]
    %v8959 = vld [vmem:[#allocation17 + $0x148] sm:$0xff]
    %v8960 = vld [vmem:[#allocation17 + $0x150] sm:$0xff]
    %v8961 = vld [vmem:[#allocation17 + $0x158] sm:$0xff]
    %v8962 = vld [vmem:[#allocation17 + $0x160] sm:$0xff]
    %v8963 = vld [vmem:[#allocation17 + $0x168] sm:$0xff]
    %v8964 = vld [vmem:[#allocation17 + $0x170] sm:$0xff]
    %v8965 = vld [vmem:[#allocation17 + $0x178] sm:$0xff]
    %v8966 = vld [vmem:[#allocation17 + $0x180] sm:$0xff]
    %v8967 = vld [vmem:[#allocation17 + $0x188] sm:$0xff]
    %v8968 = vld [vmem:[#allocation17 + $0x190] sm:$0xff]
    %v8969 = vld [vmem:[#allocation17 + $0x198] sm:$0xff]
    %v8970 = vld [vmem:[#allocation17 + $0x1a0] sm:$0xff]
    %v8971 = vld [vmem:[#allocation17 + $0x1a8] sm:$0xff]
    %v8972 = vld [vmem:[#allocation17 + $0x1b0] sm:$0xff]
    %v8973 = vld [vmem:[#allocation17 + $0x1b8] sm:$0xff]
    %v8974 = vld [vmem:[#allocation17 + $0x1c0] sm:$0xff]
    %v8975 = vld [vmem:[#allocation17 + $0x1c8] sm:$0xff]
    %v8976 = vld [vmem:[#allocation17 + $0x1d0] sm:$0xff]
    %v8977 = vld [vmem:[#allocation17 + $0x1d8] sm:$0xff]
    %v8978 = vld [vmem:[#allocation17 + $0x1e0] sm:$0xff]
    %v8979 = vld [vmem:[#allocation17 + $0x1e8] sm:$0xff]
    %v8980 = vld [vmem:[#allocation17 + $0x1f0] sm:$0xff]
    %v8981 = vld [vmem:[#allocation17 + $0x1f8] sm:$0xff]
    %v8982 = vld [vmem:[#allocation19] sm:$0x3]
    %v8983 = vpack.c.bf16 %v8914, %v8914
    %v8984 = vpack.c.bf16 %v8915, %v8915
    %v8985 = vpack.c.bf16 %v8916, %v8916
    %v8986 = vpack.c.bf16 %v8917, %v8917
    %v8988 = vlaneseq
    %v8989 = vshrl.u32 %v8988, 7
    %v8990 = vsub.s32 0, %v8989
    %v8991 = vrot.slane %v8982, %v8990
    %v8992 = vlaneseq
    %v8993 = vshrl.u32 %v8992, 7
    %v8994 = vsub.s32 1, %v8993
    %v8995 = vrot.slane %v8982, %v8994
    %v9062 = vunpack.c.l.b16 %v8918
    %v9063 = vunpack.c.h.b16 %v8918
    %v9064 = vunpack.c.l.b16 %v8919
    %v9065 = vunpack.c.h.b16 %v8919
    %v9066 = vunpack.c.l.b16 %v8920
    %v9067 = vunpack.c.h.b16 %v8920
    %v9068 = vunpack.c.l.b16 %v8921
    %v9069 = vunpack.c.h.b16 %v8921
    %v9070 = vunpack.c.l.b16 %v8922
    %v9071 = vunpack.c.h.b16 %v8922
    %v9072 = vunpack.c.l.b16 %v8923
    %v9073 = vunpack.c.h.b16 %v8923
    %v9074 = vunpack.c.l.b16 %v8924
    %v9075 = vunpack.c.h.b16 %v8924
    %v9076 = vunpack.c.l.b16 %v8925
    %v9077 = vunpack.c.h.b16 %v8925
    %v9078 = vunpack.c.l.b16 %v8926
    %v9079 = vunpack.c.h.b16 %v8926
    %v9080 = vunpack.c.l.b16 %v8927
    %v9081 = vunpack.c.h.b16 %v8927
    %v9082 = vunpack.c.l.b16 %v8928
    %v9083 = vunpack.c.h.b16 %v8928
    %v9084 = vunpack.c.l.b16 %v8929
    %v9085 = vunpack.c.h.b16 %v8929
    %v9086 = vunpack.c.l.b16 %v8930
    %v9087 = vunpack.c.h.b16 %v8930
    %v9088 = vunpack.c.l.b16 %v8931
    %v9089 = vunpack.c.h.b16 %v8931
    %v9090 = vunpack.c.l.b16 %v8932
    %v9091 = vunpack.c.h.b16 %v8932
    %v9092 = vunpack.c.l.b16 %v8933
    %v9093 = vunpack.c.h.b16 %v8933
    %v9094 = vunpack.c.l.b16 %v8934
    %v9095 = vunpack.c.h.b16 %v8934
    %v9096 = vunpack.c.l.b16 %v8935
    %v9097 = vunpack.c.h.b16 %v8935
    %v9098 = vunpack.c.l.b16 %v8936
    %v9099 = vunpack.c.h.b16 %v8936
    %v9100 = vunpack.c.l.b16 %v8937
    %v9101 = vunpack.c.h.b16 %v8937
    %v9102 = vunpack.c.l.b16 %v8938
    %v9103 = vunpack.c.h.b16 %v8938
    %v9104 = vunpack.c.l.b16 %v8939
    %v9105 = vunpack.c.h.b16 %v8939
    %v9106 = vunpack.c.l.b16 %v8940
    %v9107 = vunpack.c.h.b16 %v8940
    %v9108 = vunpack.c.l.b16 %v8941
    %v9109 = vunpack.c.h.b16 %v8941
    %v9110 = vunpack.c.l.b16 %v8942
    %v9111 = vunpack.c.h.b16 %v8942
    %v9112 = vunpack.c.l.b16 %v8943
    %v9113 = vunpack.c.h.b16 %v8943
    %v9114 = vunpack.c.l.b16 %v8944
    %v9115 = vunpack.c.h.b16 %v8944
    %v9116 = vunpack.c.l.b16 %v8945
    %v9117 = vunpack.c.h.b16 %v8945
    %v9118 = vunpack.c.l.b16 %v8946
    %v9119 = vunpack.c.h.b16 %v8946
    %v9120 = vunpack.c.l.b16 %v8947
    %v9121 = vunpack.c.h.b16 %v8947
    %v9122 = vunpack.c.l.b16 %v8948
    %v9123 = vunpack.c.h.b16 %v8948
    %v9124 = vunpack.c.l.b16 %v8949
    %v9125 = vunpack.c.h.b16 %v8949
    %v9126 = vunpack.c.l.b16 %v8950
    %v9127 = vunpack.c.h.b16 %v8950
    %v9128 = vunpack.c.l.b16 %v8951
    %v9129 = vunpack.c.h.b16 %v8951
    %v9130 = vunpack.c.l.b16 %v8952
    %v9131 = vunpack.c.h.b16 %v8952
    %v9132 = vunpack.c.l.b16 %v8953
    %v9133 = vunpack.c.h.b16 %v8953
    %v9134 = vunpack.c.l.b16 %v8954
    %v9135 = vunpack.c.h.b16 %v8954
    %v9136 = vunpack.c.l.b16 %v8955
    %v9137 = vunpack.c.h.b16 %v8955
    %v9138 = vunpack.c.l.b16 %v8956
    %v9139 = vunpack.c.h.b16 %v8956
    %v9140 = vunpack.c.l.b16 %v8957
    %v9141 = vunpack.c.h.b16 %v8957
    %v9142 = vunpack.c.l.b16 %v8958
    %v9143 = vunpack.c.h.b16 %v8958
    %v9144 = vunpack.c.l.b16 %v8959
    %v9145 = vunpack.c.h.b16 %v8959
    %v9146 = vunpack.c.l.b16 %v8960
    %v9147 = vunpack.c.h.b16 %v8960
    %v9148 = vunpack.c.l.b16 %v8961
    %v9149 = vunpack.c.h.b16 %v8961
    %v9150 = vunpack.c.l.b16 %v8962
    %v9151 = vunpack.c.h.b16 %v8962
    %v9152 = vunpack.c.l.b16 %v8963
    %v9153 = vunpack.c.h.b16 %v8963
    %v9154 = vunpack.c.l.b16 %v8964
    %v9155 = vunpack.c.h.b16 %v8964
    %v9156 = vunpack.c.l.b16 %v8965
    %v9157 = vunpack.c.h.b16 %v8965
    %v9158 = vunpack.c.l.b16 %v8966
    %v9159 = vunpack.c.h.b16 %v8966
    %v9160 = vunpack.c.l.b16 %v8967
    %v9161 = vunpack.c.h.b16 %v8967
    %v9162 = vunpack.c.l.b16 %v8968
    %v9163 = vunpack.c.h.b16 %v8968
    %v9164 = vunpack.c.l.b16 %v8969
    %v9165 = vunpack.c.h.b16 %v8969
    %v9166 = vunpack.c.l.b16 %v8970
    %v9167 = vunpack.c.h.b16 %v8970
    %v9168 = vunpack.c.l.b16 %v8971
    %v9169 = vunpack.c.h.b16 %v8971
    %v9170 = vunpack.c.l.b16 %v8972
    %v9171 = vunpack.c.h.b16 %v8972
    %v9172 = vunpack.c.l.b16 %v8973
    %v9173 = vunpack.c.h.b16 %v8973
    %v9174 = vunpack.c.l.b16 %v8974
    %v9175 = vunpack.c.h.b16 %v8974
    %v9176 = vunpack.c.l.b16 %v8975
    %v9177 = vunpack.c.h.b16 %v8975
    %v9178 = vunpack.c.l.b16 %v8976
    %v9179 = vunpack.c.h.b16 %v8976
    %v9180 = vunpack.c.l.b16 %v8977
    %v9181 = vunpack.c.h.b16 %v8977
    %v9182 = vunpack.c.l.b16 %v8978
    %v9183 = vunpack.c.h.b16 %v8978
    %v9184 = vunpack.c.l.b16 %v8979
    %v9185 = vunpack.c.h.b16 %v8979
    %v9186 = vunpack.c.l.b16 %v8980
    %v9187 = vunpack.c.h.b16 %v8980
    %v9188 = vunpack.c.l.b16 %v8981
    %v9189 = vunpack.c.h.b16 %v8981
    %v9190 = vpack.c.b16 %v9064, %v9062
    %v9191 = vpack.c.b16 %v9065, %v9063
    %v9192 = vpack.c.b16 %v9068, %v9066
    %v9193 = vpack.c.b16 %v9069, %v9067
    %v9194 = vpack.c.b16 %v9072, %v9070
    %v9195 = vpack.c.b16 %v9073, %v9071
    %v9196 = vpack.c.b16 %v9076, %v9074
    %v9197 = vpack.c.b16 %v9077, %v9075
    %v9198 = vpack.c.b16 %v9080, %v9078
    %v9199 = vpack.c.b16 %v9081, %v9079
    %v9200 = vpack.c.b16 %v9084, %v9082
    %v9201 = vpack.c.b16 %v9085, %v9083
    %v9202 = vpack.c.b16 %v9088, %v9086
    %v9203 = vpack.c.b16 %v9089, %v9087
    %v9204 = vpack.c.b16 %v9092, %v9090
    %v9205 = vpack.c.b16 %v9093, %v9091
    %v9206 = vpack.c.b16 %v9096, %v9094
    %v9207 = vpack.c.b16 %v9097, %v9095
    %v9208 = vpack.c.b16 %v9100, %v9098
    %v9209 = vpack.c.b16 %v9101, %v9099
    %v9210 = vpack.c.b16 %v9104, %v9102
    %v9211 = vpack.c.b16 %v9105, %v9103
    %v9212 = vpack.c.b16 %v9108, %v9106
    %v9213 = vpack.c.b16 %v9109, %v9107
    %v9214 = vpack.c.b16 %v9112, %v9110
    %v9215 = vpack.c.b16 %v9113, %v9111
    %v9216 = vpack.c.b16 %v9116, %v9114
    %v9217 = vpack.c.b16 %v9117, %v9115
    %v9218 = vpack.c.b16 %v9120, %v9118
    %v9219 = vpack.c.b16 %v9121, %v9119
    %v9220 = vpack.c.b16 %v9124, %v9122
    %v9221 = vpack.c.b16 %v9125, %v9123
    %v9222 = vpack.c.b16 %v9128, %v9126
    %v9223 = vpack.c.b16 %v9129, %v9127
    %v9224 = vpack.c.b16 %v9132, %v9130
    %v9225 = vpack.c.b16 %v9133, %v9131
    %v9226 = vpack.c.b16 %v9136, %v9134
    %v9227 = vpack.c.b16 %v9137, %v9135
    %v9228 = vpack.c.b16 %v9140, %v9138
    %v9229 = vpack.c.b16 %v9141, %v9139
    %v9230 = vpack.c.b16 %v9144, %v9142
    %v9231 = vpack.c.b16 %v9145, %v9143
    %v9232 = vpack.c.b16 %v9148, %v9146
    %v9233 = vpack.c.b16 %v9149, %v9147
    %v9234 = vpack.c.b16 %v9152, %v9150
    %v9235 = vpack.c.b16 %v9153, %v9151
    %v9236 = vpack.c.b16 %v9156, %v9154
    %v9237 = vpack.c.b16 %v9157, %v9155
    %v9238 = vpack.c.b16 %v9160, %v9158
    %v9239 = vpack.c.b16 %v9161, %v9159
    %v9240 = vpack.c.b16 %v9164, %v9162
    %v9241 = vpack.c.b16 %v9165, %v9163
    %v9242 = vpack.c.b16 %v9168, %v9166
    %v9243 = vpack.c.b16 %v9169, %v9167
    %v9244 = vpack.c.b16 %v9172, %v9170
    %v9245 = vpack.c.b16 %v9173, %v9171
    %v9246 = vpack.c.b16 %v9176, %v9174
    %v9247 = vpack.c.b16 %v9177, %v9175
    %v9248 = vpack.c.b16 %v9180, %v9178
    %v9249 = vpack.c.b16 %v9181, %v9179
    %v9250 = vpack.c.b16 %v9184, %v9182
    %v9251 = vpack.c.b16 %v9185, %v9183
    %v9252 = vpack.c.b16 %v9188, %v9186
    %v9253 = vpack.c.b16 %v9189, %v9187
    %9318 = vmatprep.subr.bf16.mxu0 %v9205
    %9319 = vmatpush1.bf16.msra.mxu0 %v9204
    %9320 = vmatprep.subr.bf16.mxu0 %v9203
    %9321 = vmatpush1.bf16.msra.mxu0 %v9202
    %9322 = vmatprep.subr.bf16.mxu0 %v9201
    %9323 = vmatpush1.bf16.msra.mxu0 %v9200
    %9324 = vmatprep.subr.bf16.mxu0 %v9199
    %9325 = vmatpush1.bf16.msra.mxu0 %v9198
    %9326 = vmatprep.subr.bf16.mxu0 %v9197
    %9327 = vmatpush1.bf16.msra.mxu0 %v9196
    %9328 = vmatprep.subr.bf16.mxu0 %v9195
    %9329 = vmatpush1.bf16.msra.mxu0 %v9194
    %9330 = vmatprep.subr.bf16.mxu0 %v9193
    %9331 = vmatpush1.bf16.msra.mxu0 %v9192
    %9332 = vmatprep.subr.bf16.mxu0 %v9191
    %9333 = vmatpush1.bf16.msra.mxu0 %v9190
    %9334 = vmatprep.subr.bf16.mxu0 %v9221
    %9335 = vmatpush2.bf16.msra.mxu0 %v9220
    %9336 = vmatprep.subr.bf16.mxu0 %v9219
    %9337 = vmatpush2.bf16.msra.mxu0 %v9218
    %9338 = vmatprep.subr.bf16.mxu0 %v9217
    %9339 = vmatpush2.bf16.msra.mxu0 %v9216
    %9340 = vmatprep.subr.bf16.mxu0 %v9215
    %9341 = vmatpush2.bf16.msra.mxu0 %v9214
    %9342 = vmatprep.subr.bf16.mxu0 %v9213
    %9343 = vmatpush2.bf16.msra.mxu0 %v9212
    %9344 = vmatprep.subr.bf16.mxu0 %v9211
    %9345 = vmatpush2.bf16.msra.mxu0 %v9210
    %9346 = vmatprep.subr.bf16.mxu0 %v9209
    %9347 = vmatpush2.bf16.msra.mxu0 %v9208
    %9348 = vmatprep.subr.bf16.mxu0 %v9207
    %9349 = vmatpush2.bf16.msra.mxu0 %v9206
    %9350 = vmatprep.mubr.bf16.mxu0 %v8984
    %9351 = vmatmul.mubr.bf16.gmra.mxu0 %v8983
    %v9352 = vpop.f32.mrf.mxu0
    %v9353 = vadd.f32 %v8991, %v9352
    %v9354 = vpop.f32.mrf.mxu0
    %v9355 = vadd.f32 %v8995, %v9354
    %v9356 = vpop.f32.mrf.mxu0
    %v9357 = vpop.f32.mrf.mxu0
    %9358 = vdwg.mxu0
    %9359 = vmatprep.subr.bf16.mxu0 %v9237
    %9360 = vmatpush1.bf16.msra.mxu0 %v9236
    %9361 = vmatprep.subr.bf16.mxu0 %v9235
    %9362 = vmatpush1.bf16.msra.mxu0 %v9234
    %9363 = vmatprep.subr.bf16.mxu0 %v9233
    %9364 = vmatpush1.bf16.msra.mxu0 %v9232
    %9365 = vmatprep.subr.bf16.mxu0 %v9231
    %9366 = vmatpush1.bf16.msra.mxu0 %v9230
    %9367 = vmatprep.subr.bf16.mxu0 %v9229
    %9368 = vmatpush1.bf16.msra.mxu0 %v9228
    %9369 = vmatprep.subr.bf16.mxu0 %v9227
    %9370 = vmatpush1.bf16.msra.mxu0 %v9226
    %9371 = vmatprep.subr.bf16.mxu0 %v9225
    %9372 = vmatpush1.bf16.msra.mxu0 %v9224
    %9373 = vmatprep.subr.bf16.mxu0 %v9223
    %9374 = vmatpush1.bf16.msra.mxu0 %v9222
    %9375 = vmatprep.subr.bf16.mxu0 %v9253
    %9376 = vmatpush2.bf16.msra.mxu0 %v9252
    %9377 = vmatprep.subr.bf16.mxu0 %v9251
    %9378 = vmatpush2.bf16.msra.mxu0 %v9250
    %9379 = vmatprep.subr.bf16.mxu0 %v9249
    %9380 = vmatpush2.bf16.msra.mxu0 %v9248
    %9381 = vmatprep.subr.bf16.mxu0 %v9247
    %9382 = vmatpush2.bf16.msra.mxu0 %v9246
    %9383 = vmatprep.subr.bf16.mxu0 %v9245
    %9384 = vmatpush2.bf16.msra.mxu0 %v9244
    %9385 = vmatprep.subr.bf16.mxu0 %v9243
    %9386 = vmatpush2.bf16.msra.mxu0 %v9242
    %9387 = vmatprep.subr.bf16.mxu0 %v9241
    %9388 = vmatpush2.bf16.msra.mxu0 %v9240
    %9389 = vmatprep.subr.bf16.mxu0 %v9239
    %9390 = vmatpush2.bf16.msra.mxu0 %v9238
    %9391 = vmatprep.mubr.bf16.mxu0 %v8986
    %9392 = vmatmul.mubr.bf16.gmra.mxu0 %v8985
    %v9393 = vpop.f32.mrf.mxu0
    %v9394 = vadd.f32 %v9353, %v9393
    %v9395 = vpop.f32.mrf.mxu0
    %v9396 = vadd.f32 %v9355, %v9395
    %v9397 = vpop.f32.mrf.mxu0
    %v9398 = vpop.f32.mrf.mxu0
    %9399 = vdwg.mxu0
    %v9400 = vmax.f32 %v9394, 0.0
    %v9401 = vmax.f32 %v9396, 0.0
    %v9402 = vld [vmem:[%s13] sm:$0xf]
    %v9403 = vld [vmem:[%s13 + $0x4] sm:$0xf]
    %v9404 = vld [vmem:[%s13 + $0x8] sm:$0xf]
    %v9405 = vld [vmem:[%s13 + $0xc] sm:$0xf]
    %v9406 = vld [vmem:[%s13 + $0x10] sm:$0xf]
    %v9407 = vld [vmem:[%s13 + $0x14] sm:$0xf]
    %v9408 = vld [vmem:[%s13 + $0x18] sm:$0xf]
    %v9409 = vld [vmem:[%s13 + $0x1c] sm:$0xf]
    %v9410 = vld [vmem:[%s13 + $0x20] sm:$0xf]
    %v9411 = vld [vmem:[%s13 + $0x24] sm:$0xf]
    %v9412 = vld [vmem:[%s13 + $0x28] sm:$0xf]
    %v9413 = vld [vmem:[%s13 + $0x2c] sm:$0xf]
    %v9414 = vld [vmem:[%s13 + $0x30] sm:$0xf]
    %v9415 = vld [vmem:[%s13 + $0x34] sm:$0xf]
    %v9416 = vld [vmem:[%s13 + $0x38] sm:$0xf]
    %v9417 = vld [vmem:[%s13 + $0x3c] sm:$0xf]
    %v9418 = vld [vmem:[%s13 + $0x40] sm:$0xf]
    %v9419 = vld [vmem:[%s13 + $0x44] sm:$0xf]
    %v9420 = vld [vmem:[%s13 + $0x48] sm:$0xf]
    %v9421 = vld [vmem:[%s13 + $0x4c] sm:$0xf]
    %v9422 = vld [vmem:[%s13 + $0x50] sm:$0xf]
    %v9423 = vld [vmem:[%s13 + $0x54] sm:$0xf]
    %v9424 = vld [vmem:[%s13 + $0x58] sm:$0xf]
    %v9425 = vld [vmem:[%s13 + $0x5c] sm:$0xf]
    %v9426 = vld [vmem:[%s13 + $0x60] sm:$0xf]
    %v9427 = vld [vmem:[%s13 + $0x64] sm:$0xf]
    %v9428 = vld [vmem:[%s13 + $0x68] sm:$0xf]
    %v9429 = vld [vmem:[%s13 + $0x6c] sm:$0xf]
    %v9430 = vld [vmem:[%s13 + $0x70] sm:$0xf]
    %v9431 = vld [vmem:[%s13 + $0x74] sm:$0xf]
    %v9432 = vld [vmem:[%s13 + $0x78] sm:$0xf]
    %v9433 = vld [vmem:[%s13 + $0x7c] sm:$0xf]
    %v9434 = vld [vmem:[#allocation2] sm:$0x1]
    %v9435 = vpack.c.bf16 %v9400, %v9400
    %v9436 = vpack.c.bf16 %v9401, %v9401
    %v9438 = vlaneseq
    %v9439 = vshrl.u32 %v9438, 7
    %v9440 = vsub.s32 0, %v9439
    %v9441 = vrot.slane %v9434, %v9440
    %v9475 = vunpack.c.l.b16 %v9402
    %v9476 = vunpack.c.l.b16 %v9403
    %v9477 = vunpack.c.l.b16 %v9404
    %v9478 = vunpack.c.l.b16 %v9405
    %v9479 = vunpack.c.l.b16 %v9406
    %v9480 = vunpack.c.l.b16 %v9407
    %v9481 = vunpack.c.l.b16 %v9408
    %v9482 = vunpack.c.l.b16 %v9409
    %v9483 = vunpack.c.l.b16 %v9410
    %v9484 = vunpack.c.l.b16 %v9411
    %v9485 = vunpack.c.l.b16 %v9412
    %v9486 = vunpack.c.l.b16 %v9413
    %v9487 = vunpack.c.l.b16 %v9414
    %v9488 = vunpack.c.l.b16 %v9415
    %v9489 = vunpack.c.l.b16 %v9416
    %v9490 = vunpack.c.l.b16 %v9417
    %v9491 = vunpack.c.l.b16 %v9418
    %v9492 = vunpack.c.l.b16 %v9419
    %v9493 = vunpack.c.l.b16 %v9420
    %v9494 = vunpack.c.l.b16 %v9421
    %v9495 = vunpack.c.l.b16 %v9422
    %v9496 = vunpack.c.l.b16 %v9423
    %v9497 = vunpack.c.l.b16 %v9424
    %v9498 = vunpack.c.l.b16 %v9425
    %v9499 = vunpack.c.l.b16 %v9426
    %v9500 = vunpack.c.l.b16 %v9427
    %v9501 = vunpack.c.l.b16 %v9428
    %v9502 = vunpack.c.l.b16 %v9429
    %v9503 = vunpack.c.l.b16 %v9430
    %v9504 = vunpack.c.l.b16 %v9431
    %v9505 = vunpack.c.l.b16 %v9432
    %v9506 = vunpack.c.l.b16 %v9433
    %v9507 = vpack.c.b16 %v9476, %v9475
    %v9508 = vpack.c.b16 %v9478, %v9477
    %v9509 = vpack.c.b16 %v9480, %v9479
    %v9510 = vpack.c.b16 %v9482, %v9481
    %v9511 = vpack.c.b16 %v9484, %v9483
    %v9512 = vpack.c.b16 %v9486, %v9485
    %v9513 = vpack.c.b16 %v9488, %v9487
    %v9514 = vpack.c.b16 %v9490, %v9489
    %v9515 = vpack.c.b16 %v9492, %v9491
    %v9516 = vpack.c.b16 %v9494, %v9493
    %v9517 = vpack.c.b16 %v9496, %v9495
    %v9518 = vpack.c.b16 %v9498, %v9497
    %v9519 = vpack.c.b16 %v9500, %v9499
    %v9520 = vpack.c.b16 %v9502, %v9501
    %v9521 = vpack.c.b16 %v9504, %v9503
    %v9522 = vpack.c.b16 %v9506, %v9505
    %9539 = vmatprep.subr.bf16.mxu0 0
    %9540 = vmatpush1.bf16.msra.mxu0 %v9514
    %9541 = vmatprep.subr.bf16.mxu0 0
    %9542 = vmatpush1.bf16.msra.mxu0 %v9513
    %9543 = vmatprep.subr.bf16.mxu0 0
    %9544 = vmatpush1.bf16.msra.mxu0 %v9512
    %9545 = vmatprep.subr.bf16.mxu0 0
    %9546 = vmatpush1.bf16.msra.mxu0 %v9511
    %9547 = vmatprep.subr.bf16.mxu0 0
    %9548 = vmatpush1.bf16.msra.mxu0 %v9510
    %9549 = vmatprep.subr.bf16.mxu0 0
    %9550 = vmatpush1.bf16.msra.mxu0 %v9509
    %9551 = vmatprep.subr.bf16.mxu0 0
    %9552 = vmatpush1.bf16.msra.mxu0 %v9508
    %9553 = vmatprep.subr.bf16.mxu0 0
    %9554 = vmatpush1.bf16.msra.mxu0 %v9507
    %9555 = vmatprep.subr.bf16.mxu0 0
    %9556 = vmatpush2.bf16.msra.mxu0 %v9522
    %9557 = vmatprep.subr.bf16.mxu0 0
    %9558 = vmatpush2.bf16.msra.mxu0 %v9521
    %9559 = vmatprep.subr.bf16.mxu0 0
    %9560 = vmatpush2.bf16.msra.mxu0 %v9520
    %9561 = vmatprep.subr.bf16.mxu0 0
    %9562 = vmatpush2.bf16.msra.mxu0 %v9519
    %9563 = vmatprep.subr.bf16.mxu0 0
    %9564 = vmatpush2.bf16.msra.mxu0 %v9518
    %9565 = vmatprep.subr.bf16.mxu0 0
    %9566 = vmatpush2.bf16.msra.mxu0 %v9517
    %9567 = vmatprep.subr.bf16.mxu0 0
    %9568 = vmatpush2.bf16.msra.mxu0 %v9516
    %9569 = vmatprep.subr.bf16.mxu0 0
    %9570 = vmatpush2.bf16.msra.mxu0 %v9515
    %9571 = vmatprep.mubr.bf16.mxu0 %v9436
    %9572 = vmatmul.mubr.bf16.gmra.mxu0 %v9435
    %v9573 = vpop.f32.mrf.mxu0
    %v9574 = vadd.f32 %v9441, %v9573
    %v9575 = vpop.f32.mrf.mxu0
    %v9576 = vpop.f32.mrf.mxu0
    %v9577 = vpop.f32.mrf.mxu0
    %9578 = vdwg.mxu0
    %vm9579 = vcmask 7168
    %9580 = vst.msk [vmem:[%s15] sm:$0xff] %vm9579, %v9574
    // Predicated region
    $region106: #{mlp_forward.1} parent=1 // pred_check
      _
    $region107: #{mlp_forward.1} parent=1 // pred_check_branch
      %9582 = sbr.rel (0) target = $region109
    $region108: #{mlp_forward.1} parent=1 // pred_region
      _
    $region109: #{mlp_forward.1} parent=1 // pred_fallthru
      _
    // Predicated region
    $region110: #{mlp_forward.1} parent=1 // pred_check
      _
    $region111: #{mlp_forward.1} parent=1 // pred_check_branch
      %9584 = sbr.rel (0) target = $region113
    $region112: #{mlp_forward.1} parent=1 // pred_region
      _
    $region113: #{mlp_forward.1} parent=1 // pred_fallthru
      _
    %9585 = vsyncpa [#allocation4], 1
    %9586 = vsyncpa [#allocation6], 1
    %9587 = vsyncpa [#allocation9], 1
    %9588 = vsyncpa [#allocation12], 1
    %9589 = vsyncpa [#allocation15], 1
    %9590 = vsyncpa [#allocation18], 1

</llo_original>
